<compile_context>
chip_gen: v5e
topology: v5e:2x2
jax: 0.10.0
libtpu: 0.0.40
codegen_flags: <defaults>
</compile_context>

<pallas_src>
import math
from functools import partial

import numpy as np
import jax
import jax.numpy as jnp
from jax.experimental import pallas as pl
from jax.experimental.pallas import tpu as pltpu

H_MAX = 0.05  # same as ode_solve() in the PyTorch reference


def _num_rk4_steps(t0, t1):
    """n_steps = ceil((abs(t1 - t0) / h_max)) computed in float32 like torch."""
    d = np.float32(abs(np.float32(t1) - np.float32(t0)))
    return int(math.ceil(float(d / np.float32(H_MAX))))


# ----------------------------------------------------------------------------
# Pallas kernel: RK4 integration of the MLP ODE over the WHOLE time grid.
# ----------------------------------------------------------------------------
def _node_rk4_kernel(t_ref,          # SMEM (T,)   : time grid
                     z0_ref,         # VMEM (B, D) : initial state
                     w1_ref,         # VMEM (D, H)
                     wt1_ref,        # VMEM (1, H) : time-input column of layer 1
                     b1_ref,         # VMEM (1, H)
                     w2_ref,         # VMEM (H, H)
                     b2_ref,         # VMEM (1, H)
                     w3_ref,         # VMEM (H, D)
                     b3_ref,         # VMEM (1, D)
                     out_ref,        # VMEM (T, B, D) : z at every time point
                     *, steps_per_interval, compute_dtype):
    f32 = jnp.float32
    cdt = compute_dtype

    # Load parameters once for the whole sequence; cast the matmul operands to
    # the MXU compute dtype once (bf16 on v6e/v7x).  Biases / time term / RK4
    # state stay in f32.
    w1 = w1_ref[...].astype(cdt)
    w2 = w2_ref[...].astype(cdt)
    w3 = w3_ref[...].astype(cdt)
    wt1 = wt1_ref[...]
    b1 = b1_ref[...]
    b2 = b2_ref[...]
    b3 = b3_ref[...]

    def elu(x):
        return jnp.where(x > 0, x, jnp.exp(x) - 1.0)

    def f(z, tb1):
        # tb1 = t * wt1 + b1 is hoisted/precomputed outside this stage.
        h1 = elu(jnp.dot(z.astype(cdt), w1, preferred_element_type=f32) + tb1)
        h2 = elu(jnp.dot(h1.astype(cdt), w2, preferred_element_type=f32) + b2)
        return jnp.dot(h2.astype(cdt), w3, preferred_element_type=f32) + b3

    z = z0_ref[...]
    out_ref[0] = z

    for it, n_steps in enumerate(steps_per_interval):
        if n_steps == 0:                      # degenerate interval t[i+1]==t[i]
            out_ref[it + 1] = z
            continue

        t0 = t_ref[it]
        t1 = t_ref[it + 1]
        h = (t1 - t0) / float(n_steps)

        # Hoisted per-interval constants.
        c2 = 0.5 * h
        c6 = h * (1.0 / 6.0)
        c3 = h * (1.0 / 3.0)
        hw_half = c2 * wt1                    # (0.5*h) * wt1
        tb_start = t0 * wt1 + b1              # layer-1 bias at interval start

        def rk4_step(_, carry, c2=c2, c6=c6, c3=c3, h=h, hw_half=hw_half):
            z, tb_a = carry                   # tb_a : layer-1 bias at time t
            tb_m = tb_a + hw_half             # bias at t + h/2 (shared k2/k3)
            tb_b = tb_m + hw_half             # bias at t + h   (k4; carried)
            f1 = f(z, tb_a)
            f2 = f(z + c2 * f1, tb_m)
            f3 = f(z + c2 * f2, tb_m)
            f4 = f(z + h * f3, tb_b)
            z = z + c6 * (f1 + f4) + c3 * (f2 + f3)
            return (z, tb_b)

        unroll = True if n_steps <= 64 else 8
        z, _ = jax.lax.fori_loop(0, n_steps, rk4_step, (z, tb_start),
                                 unroll=unroll)
        out_ref[it + 1] = z


def node_forward_pallas(z0, t, params, *, compute_dtype=jnp.bfloat16):
    """Whole-sequence NeuralODE forward in a single pallas_call.

    Returns z of shape (time_len, batch, dim) — z[0] = z0, z[i] = z(t[i]).
    """
    t_np = np.asarray(t, dtype=np.float32)
    time_len = int(t_np.shape[0])
    steps = tuple(_num_rk4_steps(t_np[i], t_np[i + 1])
                  for i in range(time_len - 1))
    B, D = z0.shape

    kernel = partial(_node_rk4_kernel,
                     steps_per_interval=steps,
                     compute_dtype=compute_dtype)
    n_vmem_inputs = 1 + len(params)   # z0 + parameters
    return pl.pallas_call(
        kernel,
        out_shape=jax.ShapeDtypeStruct((time_len, B, D), jnp.float32),
        in_specs=[pl.BlockSpec(memory_space=pltpu.MemorySpace.SMEM)]
        + [pl.BlockSpec(memory_space=pltpu.MemorySpace.VMEM)] * n_vmem_inputs,
        out_specs=pl.BlockSpec(memory_space=pltpu.MemorySpace.VMEM),
    )(jnp.asarray(t_np), jnp.asarray(z0, jnp.float32), *params)


# ----------------------------------------------------------------------------
# NeuralODE forward wrapper (mirrors NeuralODE.forward semantics)
# ----------------------------------------------------------------------------
class NeuralODEPallas:
    def __init__(self, params, compute_dtype=jnp.bfloat16):
        self.params = tuple(jnp.asarray(p, jnp.float32) for p in params)
        self.compute_dtype = compute_dtype

    def __call__(self, z0, t=None, return_whole_sequence=False):
        if t is None:
            t = np.array([0.0, 1.0], dtype=np.float32)   # default of forward()
        zs = node_forward_pallas(jnp.asarray(z0, jnp.float32), t, self.params,
                                 compute_dtype=self.compute_dtype)
        if return_whole_sequence:
            return zs                 # (time_len, bs, dim)
        return zs[-1]                 # z[-1], like the PyTorch module


# ----------------------------------------------------------------------------
# Pure-JAX reference (silent correctness check)
# ----------------------------------------------------------------------------
def _ref_forward(z0, t, params, compute_dtype=jnp.float32):
    w1, wt1, b1, w2, b2, w3, b3 = params
    cdt = compute_dtype
    f32 = jnp.float32

    def elu(x):
        return jnp.where(x > 0, x, jnp.exp(x) - 1.0)

    def f(z, tb1):
        h1 = elu(jnp.dot(z.astype(cdt), w1.astype(cdt),
                         preferred_element_type=f32) + tb1)
        h2 = elu(jnp.dot(h1.astype(cdt), w2.astype(cdt),
                         preferred_element_type=f32) + b2)
        return jnp.dot(h2.astype(cdt), w3.astype(cdt),
                       preferred_element_type=f32) + b3

    z = jnp.asarray(z0, f32)
    t_np = np.asarray(t, np.float32)
    zs = [z]
    for i in range(len(t_np) - 1):
        n_steps = _num_rk4_steps(t_np[i], t_np[i + 1])
        if n_steps == 0:
            zs.append(z)
            continue
        h = (float(t_np[i + 1]) - float(t_np[i])) / n_steps
        tt = float(t_np[i])
        for _ in range(n_steps):
            tb_a = tt * wt1 + b1
            tb_m = (tt + 0.5 * h) * wt1 + b1
            tb_b = (tt + h) * wt1 + b1
            f1 = f(z, tb_a)
            f2 = f(z + 0.5 * h * f1, tb_m)
            f3 = f(z + 0.5 * h * f2, tb_m)
            f4 = f(z + h * f3, tb_b)
            z = z + (h / 6.0) * (f1 + f4) + (h / 3.0) * (f2 + f3)
            tt = tt + h
        zs.append(z)
    return jnp.stack(zs, axis=0)


# ----------------------------------------------------------------------------
# Deterministic parameter init + demo run
# ----------------------------------------------------------------------------
def init_params(key, in_dim, hid_dim):
    ks = jax.random.split(key, 7)
    # nn.Linear-style uniform(-1/sqrt(fan_in), 1/sqrt(fan_in)) init.
    s1 = 1.0 / math.sqrt(in_dim + 1)   # layer 1 sees [z, t]
    s2 = 1.0 / math.sqrt(hid_dim)
    w1 = jax.random.uniform(ks[0], (in_dim, hid_dim), jnp.float32, -s1, s1)
    wt1 = jax.random.uniform(ks[1], (1, hid_dim), jnp.float32, -s1, s1)
    b1 = jax.random.uniform(ks[2], (1, hid_dim), jnp.float32, -s1, s1)
    w2 = jax.random.uniform(ks[3], (hid_dim, hid_dim), jnp.float32, -s2, s2)
    b2 = jax.random.uniform(ks[4], (1, hid_dim), jnp.float32, -s2, s2)
    w3 = jax.random.uniform(ks[5], (hid_dim, in_dim), jnp.float32, -s2, s2)
    b3 = jax.random.uniform(ks[6], (1, in_dim), jnp.float32, -s2, s2)
    return (w1, wt1, b1, w2, b2, w3, b3)


if __name__ == "__main__":
    key = jax.random.PRNGKey(0)
    k_z, k_p = jax.random.split(key)

    batch = 8
    in_dim = 4
    hid_dim = 32

    z0 = jax.random.normal(k_z, (batch, in_dim), dtype=jnp.float32)
    params = init_params(k_p, in_dim, hid_dim)

    t_default = np.array([0.0, 1.0], dtype=np.float32)      # forward() default
    t_seq = np.linspace(0.0, 1.0, 5).astype(np.float32)     # multi-interval t

    node_bf16 = NeuralODEPallas(params, compute_dtype=jnp.bfloat16)  # v6e/v7x path
    node_f32 = NeuralODEPallas(params, compute_dtype=jnp.float32)

    # Default call: z at the final time (return_whole_sequence=False).
    out_last = jax.block_until_ready(node_bf16(z0, t_default))
    # Whole-sequence call over a multi-point t grid (single pallas_call).
    zs_bf16 = jax.block_until_ready(node_bf16(z0, t_seq, return_whole_sequence=True))
    zs_f32 = jax.block_until_ready(node_f32(z0, t_seq, return_whole_sequence=True))

    ref_f32_seq = _ref_forward(z0, t_seq, params, jnp.float32)
    ref_bf16_seq = _ref_forward(z0, t_seq, params, jnp.bfloat16)
    ref_f32_last = _ref_forward(z0, t_default, params, jnp.float32)[-1]

    assert out_last.shape == (batch, in_dim)
    assert zs_bf16.shape == (len(t_seq), batch, in_dim)

    # Structural correctness: f32 kernel vs f32 reference (tight).
    assert np.allclose(np.asarray(zs_f32), np.asarray(ref_f32_seq),
                       rtol=1e-4, atol=1e-4)
    # Matched-precision check for the bf16-MXU path (tight).
    assert np.allclose(np.asarray(zs_bf16), np.asarray(ref_bf16_seq),
                       rtol=1e-4, atol=1e-4)
    # bf16-input integration stays close to the full-f32 integration (loose).
    assert np.allclose(np.asarray(zs_bf16), np.asarray(ref_f32_seq),
                       rtol=5e-2, atol=5e-2)
    assert np.allclose(np.asarray(out_last), np.asarray(ref_f32_last),
                       rtol=5e-2, atol=5e-2)

    print("KERNEL_OK")
</pallas_src>

<mosaic_0001>
module attributes {stable_mosaic.version = 11 : i64} {
  func.func @_node_rk4_kernel(%arg0: memref<2xf32, #tpu.memory_space<smem>>, %arg1: memref<8x4xf32, #tpu.memory_space<vmem>>, %arg2: memref<4x32xf32, #tpu.memory_space<vmem>>, %arg3: memref<1x32xf32, #tpu.memory_space<vmem>>, %arg4: memref<1x32xf32, #tpu.memory_space<vmem>>, %arg5: memref<32x32xf32, #tpu.memory_space<vmem>>, %arg6: memref<1x32xf32, #tpu.memory_space<vmem>>, %arg7: memref<32x4xf32, #tpu.memory_space<vmem>>, %arg8: memref<1x4xf32, #tpu.memory_space<vmem>>, %arg9: memref<2x8x4xf32, #tpu.memory_space<vmem>>) attributes {dimension_semantics = [], scalar_prefetch = 0 : i64, scratch_operands = 0 : i64, tpu.core_type = #tpu.core_type<tc>} {
    %c0 = arith.constant 0 : index
    %c0_0 = arith.constant 0 : index
    %0 = vector.load %arg2[%c0, %c0_0] : memref<4x32xf32, #tpu.memory_space<vmem>>, vector<4x32xf32>
    %1 = arith.truncf %0 : vector<4x32xf32> to vector<4x32xbf16>
    %c0_1 = arith.constant 0 : index
    %c0_2 = arith.constant 0 : index
    %2 = vector.load %arg5[%c0_1, %c0_2] : memref<32x32xf32, #tpu.memory_space<vmem>>, vector<32x32xf32>
    %3 = arith.truncf %2 : vector<32x32xf32> to vector<32x32xbf16>
    %c0_3 = arith.constant 0 : index
    %c0_4 = arith.constant 0 : index
    %4 = vector.load %arg7[%c0_3, %c0_4] : memref<32x4xf32, #tpu.memory_space<vmem>>, vector<32x4xf32>
    %5 = arith.truncf %4 : vector<32x4xf32> to vector<32x4xbf16>
    %c0_5 = arith.constant 0 : index
    %c0_6 = arith.constant 0 : index
    %6 = vector.load %arg3[%c0_5, %c0_6] : memref<1x32xf32, #tpu.memory_space<vmem>>, vector<1x32xf32>
    %c0_7 = arith.constant 0 : index
    %c0_8 = arith.constant 0 : index
    %7 = vector.load %arg4[%c0_7, %c0_8] : memref<1x32xf32, #tpu.memory_space<vmem>>, vector<1x32xf32>
    %c0_9 = arith.constant 0 : index
    %c0_10 = arith.constant 0 : index
    %8 = vector.load %arg6[%c0_9, %c0_10] : memref<1x32xf32, #tpu.memory_space<vmem>>, vector<1x32xf32>
    %c0_11 = arith.constant 0 : index
    %c0_12 = arith.constant 0 : index
    %9 = vector.load %arg8[%c0_11, %c0_12] : memref<1x4xf32, #tpu.memory_space<vmem>>, vector<1x4xf32>
    %c0_13 = arith.constant 0 : index
    %c0_14 = arith.constant 0 : index
    %10 = vector.load %arg1[%c0_13, %c0_14] : memref<8x4xf32, #tpu.memory_space<vmem>>, vector<8x4xf32>
    %c0_15 = arith.constant 0 : index
    %c0_16 = arith.constant 0 : index
    %c0_17 = arith.constant 0 : index
    %11 = vector.load %arg9[%c0_15, %c0_16, %c0_17] : memref<2x8x4xf32, #tpu.memory_space<vmem>>, vector<1x8x4xf32>
    %12 = vector.shape_cast %11 : vector<1x8x4xf32> to vector<8x4xf32>
    %13 = vector.shape_cast %10 : vector<8x4xf32> to vector<1x8x4xf32>
    tpu.vector_store %arg9[%c0_15, %c0_16, %c0_17], %13 {strides = array<i32>} : memref<2x8x4xf32, #tpu.memory_space<vmem>>, vector<1x8x4xf32>,
    %c0_18 = arith.constant 0 : index
    %14 = memref.load %arg0[%c0_18] : memref<2xf32, #tpu.memory_space<smem>>
    %c1 = arith.constant 1 : index
    %15 = memref.load %arg0[%c1] : memref<2xf32, #tpu.memory_space<smem>>
    %16 = arith.subf %15, %14 : f32
    %cst = arith.constant 2.000000e+01 : f32
    %17 = arith.divf %16, %cst : f32
    %cst_19 = arith.constant 5.000000e-01 : f32
    %18 = arith.mulf %cst_19, %17 : f32
    %cst_20 = arith.constant 0.166666672 : f32
    %19 = arith.mulf %17, %cst_20 : f32
    %cst_21 = arith.constant 0.333333343 : f32
    %20 = arith.mulf %17, %cst_21 : f32
    %21 = vector.broadcast %18 : f32 to vector<1x32xf32>
    %22 = arith.mulf %21, %6 : vector<1x32xf32>
    %23 = vector.broadcast %14 : f32 to vector<1x32xf32>
    %24 = arith.mulf %23, %6 : vector<1x32xf32>
    %25 = arith.addf %24, %7 : vector<1x32xf32>
    %c0_i32 = arith.constant 0 : i32
    %26 = arith.addf %25, %22 : vector<1x32xf32>
    %27 = arith.addf %26, %22 : vector<1x32xf32>
    %28 = arith.truncf %10 : vector<8x4xf32> to vector<8x4xbf16>
    %cst_22 = arith.constant dense<0.000000e+00> : vector<8x32xf32>
    %29 = tpu.matmul %28, %1, %cst_22 {dimension_numbers = #tpu.dot_dimension_numbers<[1], [0], [0], [1], [0, 0, 1, 1], [], []>} : vector<8x4xbf16>, vector<4x32xbf16>, vector<8x32xf32> -> vector<8x32xf32>
    %30 = vector.broadcast %25 : vector<1x32xf32> to vector<8x32xf32>
    %31 = arith.addf %29, %30 : vector<8x32xf32>
    %cst_23 = arith.constant 0.000000e+00 : f32
    %32 = vector.broadcast %cst_23 : f32 to vector<8x32xf32>
    %33 = arith.cmpf ogt, %31, %32 : vector<8x32xf32>
    %34 = math.exp %31 : vector<8x32xf32>
    %cst_24 = arith.constant 1.000000e+00 : f32
    %35 = vector.broadcast %cst_24 : f32 to vector<8x32xf32>
    %36 = arith.subf %34, %35 : vector<8x32xf32>
    %37 = arith.select %33, %31, %36 : vector<8x32xi1>, vector<8x32xf32>
    %38 = arith.truncf %37 : vector<8x32xf32> to vector<8x32xbf16>
    %cst_25 = arith.constant dense<0.000000e+00> : vector<8x32xf32>
    %39 = tpu.matmul %38, %3, %cst_25 {dimension_numbers = #tpu.dot_dimension_numbers<[1], [0], [0], [1], [0, 0, 1, 1], [], []>} : vector<8x32xbf16>, vector<32x32xbf16>, vector<8x32xf32> -> vector<8x32xf32>
    %40 = vector.broadcast %8 : vector<1x32xf32> to vector<8x32xf32>
    %41 = arith.addf %39, %40 : vector<8x32xf32>
    %cst_26 = arith.constant 0.000000e+00 : f32
    %42 = vector.broadcast %cst_26 : f32 to vector<8x32xf32>
    %43 = arith.cmpf ogt, %41, %42 : vector<8x32xf32>
    %44 = math.exp %41 : vector<8x32xf32>
    %cst_27 = arith.constant 1.000000e+00 : f32
    %45 = vector.broadcast %cst_27 : f32 to vector<8x32xf32>
    %46 = arith.subf %44, %45 : vector<8x32xf32>
    %47 = arith.select %43, %41, %46 : vector<8x32xi1>, vector<8x32xf32>
    %48 = arith.truncf %47 : vector<8x32xf32> to vector<8x32xbf16>
    %cst_28 = arith.constant dense<0.000000e+00> : vector<8x4xf32>
    %49 = tpu.matmul %48, %5, %cst_28 {dimension_numbers = #tpu.dot_dimension_numbers<[1], [0], [0], [1], [0, 0, 1, 1], [], []>} : vector<8x32xbf16>, vector<32x4xbf16>, vector<8x4xf32> -> vector<8x4xf32>
    %50 = vector.broadcast %9 : vector<1x4xf32> to vector<8x4xf32>
    %51 = arith.addf %49, %50 : vector<8x4xf32>
    %52 = vector.broadcast %18 : f32 to vector<8x4xf32>
    %53 = arith.mulf %52, %51 : vector<8x4xf32>
    %54 = arith.addf %10, %53 : vector<8x4xf32>
    %55 = arith.truncf %54 : vector<8x4xf32> to vector<8x4xbf16>
    %cst_29 = arith.constant dense<0.000000e+00> : vector<8x32xf32>
    %56 = tpu.matmul %55, %1, %cst_29 {dimension_numbers = #tpu.dot_dimension_numbers<[1], [0], [0], [1], [0, 0, 1, 1], [], []>} : vector<8x4xbf16>, vector<4x32xbf16>, vector<8x32xf32> -> vector<8x32xf32>
    %57 = vector.broadcast %26 : vector<1x32xf32> to vector<8x32xf32>
    %58 = arith.addf %56, %57 : vector<8x32xf32>
    %cst_30 = arith.constant 0.000000e+00 : f32
    %59 = vector.broadcast %cst_30 : f32 to vector<8x32xf32>
    %60 = arith.cmpf ogt, %58, %59 : vector<8x32xf32>
    %61 = math.exp %58 : vector<8x32xf32>
    %cst_31 = arith.constant 1.000000e+00 : f32
    %62 = vector.broadcast %cst_31 : f32 to vector<8x32xf32>
    %63 = arith.subf %61, %62 : vector<8x32xf32>
    %64 = arith.select %60, %58, %63 : vector<8x32xi1>, vector<8x32xf32>
    %65 = arith.truncf %64 : vector<8x32xf32> to vector<8x32xbf16>
    %cst_32 = arith.constant dense<0.000000e+00> : vector<8x32xf32>
    %66 = tpu.matmul %65, %3, %cst_32 {dimension_numbers = #tpu.dot_dimension_numbers<[1], [0], [0], [1], [0, 0, 1, 1], [], []>} : vector<8x32xbf16>, vector<32x32xbf16>, vector<8x32xf32> -> vector<8x32xf32>
    %67 = vector.broadcast %8 : vector<1x32xf32> to vector<8x32xf32>
    %68 = arith.addf %66, %67 : vector<8x32xf32>
    %cst_33 = arith.constant 0.000000e+00 : f32
    %69 = vector.broadcast %cst_33 : f32 to vector<8x32xf32>
    %70 = arith.cmpf ogt, %68, %69 : vector<8x32xf32>
    %71 = math.exp %68 : vector<8x32xf32>
    %cst_34 = arith.constant 1.000000e+00 : f32
    %72 = vector.broadcast %cst_34 : f32 to vector<8x32xf32>
    %73 = arith.subf %71, %72 : vector<8x32xf32>
    %74 = arith.select %70, %68, %73 : vector<8x32xi1>, vector<8x32xf32>
    %75 = arith.truncf %74 : vector<8x32xf32> to vector<8x32xbf16>
    %cst_35 = arith.constant dense<0.000000e+00> : vector<8x4xf32>
    %76 = tpu.matmul %75, %5, %cst_35 {dimension_numbers = #tpu.dot_dimension_numbers<[1], [0], [0], [1], [0, 0, 1, 1], [], []>} : vector<8x32xbf16>, vector<32x4xbf16>, vector<8x4xf32> -> vector<8x4xf32>
    %77 = vector.broadcast %9 : vector<1x4xf32> to vector<8x4xf32>
    %78 = arith.addf %76, %77 : vector<8x4xf32>
    %79 = vector.broadcast %18 : f32 to vector<8x4xf32>
    %80 = arith.mulf %79, %78 : vector<8x4xf32>
    %81 = arith.addf %10, %80 : vector<8x4xf32>
    %82 = arith.truncf %81 : vector<8x4xf32> to vector<8x4xbf16>
    %cst_36 = arith.constant dense<0.000000e+00> : vector<8x32xf32>
    %83 = tpu.matmul %82, %1, %cst_36 {dimension_numbers = #tpu.dot_dimension_numbers<[1], [0], [0], [1], [0, 0, 1, 1], [], []>} : vector<8x4xbf16>, vector<4x32xbf16>, vector<8x32xf32> -> vector<8x32xf32>
    %84 = vector.broadcast %26 : vector<1x32xf32> to vector<8x32xf32>
    %85 = arith.addf %83, %84 : vector<8x32xf32>
    %cst_37 = arith.constant 0.000000e+00 : f32
    %86 = vector.broadcast %cst_37 : f32 to vector<8x32xf32>
    %87 = arith.cmpf ogt, %85, %86 : vector<8x32xf32>
    %88 = math.exp %85 : vector<8x32xf32>
    %cst_38 = arith.constant 1.000000e+00 : f32
    %89 = vector.broadcast %cst_38 : f32 to vector<8x32xf32>
    %90 = arith.subf %88, %89 : vector<8x32xf32>
    %91 = arith.select %87, %85, %90 : vector<8x32xi1>, vector<8x32xf32>
    %92 = arith.truncf %91 : vector<8x32xf32> to vector<8x32xbf16>
    %cst_39 = arith.constant dense<0.000000e+00> : vector<8x32xf32>
    %93 = tpu.matmul %92, %3, %cst_39 {dimension_numbers = #tpu.dot_dimension_numbers<[1], [0], [0], [1], [0, 0, 1, 1], [], []>} : vector<8x32xbf16>, vector<32x32xbf16>, vector<8x32xf32> -> vector<8x32xf32>
    %94 = vector.broadcast %8 : vector<1x32xf32> to vector<8x32xf32>
    %95 = arith.addf %93, %94 : vector<8x32xf32>
    %cst_40 = arith.constant 0.000000e+00 : f32
    %96 = vector.broadcast %cst_40 : f32 to vector<8x32xf32>
    %97 = arith.cmpf ogt, %95, %96 : vector<8x32xf32>
    %98 = math.exp %95 : vector<8x32xf32>
    %cst_41 = arith.constant 1.000000e+00 : f32
    %99 = vector.broadcast %cst_41 : f32 to vector<8x32xf32>
    %100 = arith.subf %98, %99 : vector<8x32xf32>
    %101 = arith.select %97, %95, %100 : vector<8x32xi1>, vector<8x32xf32>
    %102 = arith.truncf %101 : vector<8x32xf32> to vector<8x32xbf16>
    %cst_42 = arith.constant dense<0.000000e+00> : vector<8x4xf32>
    %103 = tpu.matmul %102, %5, %cst_42 {dimension_numbers = #tpu.dot_dimension_numbers<[1], [0], [0], [1], [0, 0, 1, 1], [], []>} : vector<8x32xbf16>, vector<32x4xbf16>, vector<8x4xf32> -> vector<8x4xf32>
    %104 = vector.broadcast %9 : vector<1x4xf32> to vector<8x4xf32>
    %105 = arith.addf %103, %104 : vector<8x4xf32>
    %106 = vector.broadcast %17 : f32 to vector<8x4xf32>
    %107 = arith.mulf %106, %105 : vector<8x4xf32>
    %108 = arith.addf %10, %107 : vector<8x4xf32>
    %109 = arith.truncf %108 : vector<8x4xf32> to vector<8x4xbf16>
    %cst_43 = arith.constant dense<0.000000e+00> : vector<8x32xf32>
    %110 = tpu.matmul %109, %1, %cst_43 {dimension_numbers = #tpu.dot_dimension_numbers<[1], [0], [0], [1], [0, 0, 1, 1], [], []>} : vector<8x4xbf16>, vector<4x32xbf16>, vector<8x32xf32> -> vector<8x32xf32>
    %111 = vector.broadcast %27 : vector<1x32xf32> to vector<8x32xf32>
    %112 = arith.addf %110, %111 : vector<8x32xf32>
    %cst_44 = arith.constant 0.000000e+00 : f32
    %113 = vector.broadcast %cst_44 : f32 to vector<8x32xf32>
    %114 = arith.cmpf ogt, %112, %113 : vector<8x32xf32>
    %115 = math.exp %112 : vector<8x32xf32>
    %cst_45 = arith.constant 1.000000e+00 : f32
    %116 = vector.broadcast %cst_45 : f32 to vector<8x32xf32>
    %117 = arith.subf %115, %116 : vector<8x32xf32>
    %118 = arith.select %114, %112, %117 : vector<8x32xi1>, vector<8x32xf32>
    %119 = arith.truncf %118 : vector<8x32xf32> to vector<8x32xbf16>
    %cst_46 = arith.constant dense<0.000000e+00> : vector<8x32xf32>
    %120 = tpu.matmul %119, %3, %cst_46 {dimension_numbers = #tpu.dot_dimension_numbers<[1], [0], [0], [1], [0, 0, 1, 1], [], []>} : vector<8x32xbf16>, vector<32x32xbf16>, vector<8x32xf32> -> vector<8x32xf32>
    %121 = vector.broadcast %8 : vector<1x32xf32> to vector<8x32xf32>
    %122 = arith.addf %120, %121 : vector<8x32xf32>
    %cst_47 = arith.constant 0.000000e+00 : f32
    %123 = vector.broadcast %cst_47 : f32 to vector<8x32xf32>
    %124 = arith.cmpf ogt, %122, %123 : vector<8x32xf32>
    %125 = math.exp %122 : vector<8x32xf32>
    %cst_48 = arith.constant 1.000000e+00 : f32
    %126 = vector.broadcast %cst_48 : f32 to vector<8x32xf32>
    %127 = arith.subf %125, %126 : vector<8x32xf32>
    %128 = arith.select %124, %122, %127 : vector<8x32xi1>, vector<8x32xf32>
    %129 = arith.truncf %128 : vector<8x32xf32> to vector<8x32xbf16>
    %cst_49 = arith.constant dense<0.000000e+00> : vector<8x4xf32>
    %130 = tpu.matmul %129, %5, %cst_49 {dimension_numbers = #tpu.dot_dimension_numbers<[1], [0], [0], [1], [0, 0, 1, 1], [], []>} : vector<8x32xbf16>, vector<32x4xbf16>, vector<8x4xf32> -> vector<8x4xf32>
    %131 = vector.broadcast %9 : vector<1x4xf32> to vector<8x4xf32>
    %132 = arith.addf %130, %131 : vector<8x4xf32>
    %133 = arith.addf %51, %132 : vector<8x4xf32>
    %134 = vector.broadcast %19 : f32 to vector<8x4xf32>
    %135 = arith.mulf %134, %133 : vector<8x4xf32>
    %136 = arith.addf %10, %135 : vector<8x4xf32>
    %137 = arith.addf %78, %105 : vector<8x4xf32>
    %138 = vector.broadcast %20 : f32 to vector<8x4xf32>
    %139 = arith.mulf %138, %137 : vector<8x4xf32>
    %140 = arith.addf %136, %139 : vector<8x4xf32>
    %c1_i32 = arith.constant 1 : i32
    %141 = arith.addf %27, %22 : vector<1x32xf32>
    %142 = arith.addf %141, %22 : vector<1x32xf32>
    %143 = arith.truncf %140 : vector<8x4xf32> to vector<8x4xbf16>
    %cst_50 = arith.constant dense<0.000000e+00> : vector<8x32xf32>
    %144 = tpu.matmul %143, %1, %cst_50 {dimension_numbers = #tpu.dot_dimension_numbers<[1], [0], [0], [1], [0, 0, 1, 1], [], []>} : vector<8x4xbf16>, vector<4x32xbf16>, vector<8x32xf32> -> vector<8x32xf32>
    %145 = vector.broadcast %27 : vector<1x32xf32> to vector<8x32xf32>
    %146 = arith.addf %144, %145 : vector<8x32xf32>
    %cst_51 = arith.constant 0.000000e+00 : f32
    %147 = vector.broadcast %cst_51 : f32 to vector<8x32xf32>
    %148 = arith.cmpf ogt, %146, %147 : vector<8x32xf32>
    %149 = math.exp %146 : vector<8x32xf32>
    %cst_52 = arith.constant 1.000000e+00 : f32
    %150 = vector.broadcast %cst_52 : f32 to vector<8x32xf32>
    %151 = arith.subf %149, %150 : vector<8x32xf32>
    %152 = arith.select %148, %146, %151 : vector<8x32xi1>, vector<8x32xf32>
    %153 = arith.truncf %152 : vector<8x32xf32> to vector<8x32xbf16>
    %cst_53 = arith.constant dense<0.000000e+00> : vector<8x32xf32>
    %154 = tpu.matmul %153, %3, %cst_53 {dimension_numbers = #tpu.dot_dimension_numbers<[1], [0], [0], [1], [0, 0, 1, 1], [], []>} : vector<8x32xbf16>, vector<32x32xbf16>, vector<8x32xf32> -> vector<8x32xf32>
    %155 = vector.broadcast %8 : vector<1x32xf32> to vector<8x32xf32>
    %156 = arith.addf %154, %155 : vector<8x32xf32>
    %cst_54 = arith.constant 0.000000e+00 : f32
    %157 = vector.broadcast %cst_54 : f32 to vector<8x32xf32>
    %158 = arith.cmpf ogt, %156, %157 : vector<8x32xf32>
    %159 = math.exp %156 : vector<8x32xf32>
    %cst_55 = arith.constant 1.000000e+00 : f32
    %160 = vector.broadcast %cst_55 : f32 to vector<8x32xf32>
    %161 = arith.subf %159, %160 : vector<8x32xf32>
    %162 = arith.select %158, %156, %161 : vector<8x32xi1>, vector<8x32xf32>
    %163 = arith.truncf %162 : vector<8x32xf32> to vector<8x32xbf16>
    %cst_56 = arith.constant dense<0.000000e+00> : vector<8x4xf32>
    %164 = tpu.matmul %163, %5, %cst_56 {dimension_numbers = #tpu.dot_dimension_numbers<[1], [0], [0], [1], [0, 0, 1, 1], [], []>} : vector<8x32xbf16>, vector<32x4xbf16>, vector<8x4xf32> -> vector<8x4xf32>
    %165 = vector.broadcast %9 : vector<1x4xf32> to vector<8x4xf32>
    %166 = arith.addf %164, %165 : vector<8x4xf32>
    %167 = vector.broadcast %18 : f32 to vector<8x4xf32>
    %168 = arith.mulf %167, %166 : vector<8x4xf32>
    %169 = arith.addf %140, %168 : vector<8x4xf32>
    %170 = arith.truncf %169 : vector<8x4xf32> to vector<8x4xbf16>
    %cst_57 = arith.constant dense<0.000000e+00> : vector<8x32xf32>
    %171 = tpu.matmul %170, %1, %cst_57 {dimension_numbers = #tpu.dot_dimension_numbers<[1], [0], [0], [1], [0, 0, 1, 1], [], []>} : vector<8x4xbf16>, vector<4x32xbf16>, vector<8x32xf32> -> vector<8x32xf32>
    %172 = vector.broadcast %141 : vector<1x32xf32> to vector<8x32xf32>
    %173 = arith.addf %171, %172 : vector<8x32xf32>
    %cst_58 = arith.constant 0.000000e+00 : f32
    %174 = vector.broadcast %cst_58 : f32 to vector<8x32xf32>
    %175 = arith.cmpf ogt, %173, %174 : vector<8x32xf32>
    %176 = math.exp %173 : vector<8x32xf32>
    %cst_59 = arith.constant 1.000000e+00 : f32
    %177 = vector.broadcast %cst_59 : f32 to vector<8x32xf32>
    %178 = arith.subf %176, %177 : vector<8x32xf32>
    %179 = arith.select %175, %173, %178 : vector<8x32xi1>, vector<8x32xf32>
    %180 = arith.truncf %179 : vector<8x32xf32> to vector<8x32xbf16>
    %cst_60 = arith.constant dense<0.000000e+00> : vector<8x32xf32>
    %181 = tpu.matmul %180, %3, %cst_60 {dimension_numbers = #tpu.dot_dimension_numbers<[1], [0], [0], [1], [0, 0, 1, 1], [], []>} : vector<8x32xbf16>, vector<32x32xbf16>, vector<8x32xf32> -> vector<8x32xf32>
    %182 = vector.broadcast %8 : vector<1x32xf32> to vector<8x32xf32>
    %183 = arith.addf %181, %182 : vector<8x32xf32>
    %cst_61 = arith.constant 0.000000e+00 : f32
    %184 = vector.broadcast %cst_61 : f32 to vector<8x32xf32>
    %185 = arith.cmpf ogt, %183, %184 : vector<8x32xf32>
    %186 = math.exp %183 : vector<8x32xf32>
    %cst_62 = arith.constant 1.000000e+00 : f32
    %187 = vector.broadcast %cst_62 : f32 to vector<8x32xf32>
    %188 = arith.subf %186, %187 : vector<8x32xf32>
    %189 = arith.select %185, %183, %188 : vector<8x32xi1>, vector<8x32xf32>
    %190 = arith.truncf %189 : vector<8x32xf32> to vector<8x32xbf16>
    %cst_63 = arith.constant dense<0.000000e+00> : vector<8x4xf32>
    %191 = tpu.matmul %190, %5, %cst_63 {dimension_numbers = #tpu.dot_dimension_numbers<[1], [0], [0], [1], [0, 0, 1, 1], [], []>} : vector<8x32xbf16>, vector<32x4xbf16>, vector<8x4xf32> -> vector<8x4xf32>
    %192 = vector.broadcast %9 : vector<1x4xf32> to vector<8x4xf32>
    %193 = arith.addf %191, %192 : vector<8x4xf32>
    %194 = vector.broadcast %18 : f32 to vector<8x4xf32>
    %195 = arith.mulf %194, %193 : vector<8x4xf32>
    %196 = arith.addf %140, %195 : vector<8x4xf32>
    %197 = arith.truncf %196 : vector<8x4xf32> to vector<8x4xbf16>
    %cst_64 = arith.constant dense<0.000000e+00> : vector<8x32xf32>
    %198 = tpu.matmul %197, %1, %cst_64 {dimension_numbers = #tpu.dot_dimension_numbers<[1], [0], [0], [1], [0, 0, 1, 1], [], []>} : vector<8x4xbf16>, vector<4x32xbf16>, vector<8x32xf32> -> vector<8x32xf32>
    %199 = vector.broadcast %141 : vector<1x32xf32> to vector<8x32xf32>
    %200 = arith.addf %198, %199 : vector<8x32xf32>
    %cst_65 = arith.constant 0.000000e+00 : f32
    %201 = vector.broadcast %cst_65 : f32 to vector<8x32xf32>
    %202 = arith.cmpf ogt, %200, %201 : vector<8x32xf32>
    %203 = math.exp %200 : vector<8x32xf32>
    %cst_66 = arith.constant 1.000000e+00 : f32
    %204 = vector.broadcast %cst_66 : f32 to vector<8x32xf32>
    %205 = arith.subf %203, %204 : vector<8x32xf32>
    %206 = arith.select %202, %200, %205 : vector<8x32xi1>, vector<8x32xf32>
    %207 = arith.truncf %206 : vector<8x32xf32> to vector<8x32xbf16>
    %cst_67 = arith.constant dense<0.000000e+00> : vector<8x32xf32>
    %208 = tpu.matmul %207, %3, %cst_67 {dimension_numbers = #tpu.dot_dimension_numbers<[1], [0], [0], [1], [0, 0, 1, 1], [], []>} : vector<8x32xbf16>, vector<32x32xbf16>, vector<8x32xf32> -> vector<8x32xf32>
    %209 = vector.broadcast %8 : vector<1x32xf32> to vector<8x32xf32>
    %210 = arith.addf %208, %209 : vector<8x32xf32>
    %cst_68 = arith.constant 0.000000e+00 : f32
    %211 = vector.broadcast %cst_68 : f32 to vector<8x32xf32>
    %212 = arith.cmpf ogt, %210, %211 : vector<8x32xf32>
    %213 = math.exp %210 : vector<8x32xf32>
    %cst_69 = arith.constant 1.000000e+00 : f32
    %214 = vector.broadcast %cst_69 : f32 to vector<8x32xf32>
    %215 = arith.subf %213, %214 : vector<8x32xf32>
    %216 = arith.select %212, %210, %215 : vector<8x32xi1>, vector<8x32xf32>
    %217 = arith.truncf %216 : vector<8x32xf32> to vector<8x32xbf16>
    %cst_70 = arith.constant dense<0.000000e+00> : vector<8x4xf32>
    %218 = tpu.matmul %217, %5, %cst_70 {dimension_numbers = #tpu.dot_dimension_numbers<[1], [0], [0], [1], [0, 0, 1, 1], [], []>} : vector<8x32xbf16>, vector<32x4xbf16>, vector<8x4xf32> -> vector<8x4xf32>
    %219 = vector.broadcast %9 : vector<1x4xf32> to vector<8x4xf32>
    %220 = arith.addf %218, %219 : vector<8x4xf32>
    %221 = vector.broadcast %17 : f32 to vector<8x4xf32>
    %222 = arith.mulf %221, %220 : vector<8x4xf32>
    %223 = arith.addf %140, %222 : vector<8x4xf32>
    %224 = arith.truncf %223 : vector<8x4xf32> to vector<8x4xbf16>
    %cst_71 = arith.constant dense<0.000000e+00> : vector<8x32xf32>
    %225 = tpu.matmul %224, %1, %cst_71 {dimension_numbers = #tpu.dot_dimension_numbers<[1], [0], [0], [1], [0, 0, 1, 1], [], []>} : vector<8x4xbf16>, vector<4x32xbf16>, vector<8x32xf32> -> vector<8x32xf32>
    %226 = vector.broadcast %142 : vector<1x32xf32> to vector<8x32xf32>
    %227 = arith.addf %225, %226 : vector<8x32xf32>
    %cst_72 = arith.constant 0.000000e+00 : f32
    %228 = vector.broadcast %cst_72 : f32 to vector<8x32xf32>
    %229 = arith.cmpf ogt, %227, %228 : vector<8x32xf32>
    %230 = math.exp %227 : vector<8x32xf32>
    %cst_73 = arith.constant 1.000000e+00 : f32
    %231 = vector.broadcast %cst_73 : f32 to vector<8x32xf32>
    %232 = arith.subf %230, %231 : vector<8x32xf32>
    %233 = arith.select %229, %227, %232 : vector<8x32xi1>, vector<8x32xf32>
    %234 = arith.truncf %233 : vector<8x32xf32> to vector<8x32xbf16>
    %cst_74 = arith.constant dense<0.000000e+00> : vector<8x32xf32>
    %235 = tpu.matmul %234, %3, %cst_74 {dimension_numbers = #tpu.dot_dimension_numbers<[1], [0], [0], [1], [0, 0, 1, 1], [], []>} : vector<8x32xbf16>, vector<32x32xbf16>, vector<8x32xf32> -> vector<8x32xf32>
    %236 = vector.broadcast %8 : vector<1x32xf32> to vector<8x32xf32>
    %237 = arith.addf %235, %236 : vector<8x32xf32>
    %cst_75 = arith.constant 0.000000e+00 : f32
    %238 = vector.broadcast %cst_75 : f32 to vector<8x32xf32>
    %239 = arith.cmpf ogt, %237, %238 : vector<8x32xf32>
    %240 = math.exp %237 : vector<8x32xf32>
    %cst_76 = arith.constant 1.000000e+00 : f32
    %241 = vector.broadcast %cst_76 : f32 to vector<8x32xf32>
    %242 = arith.subf %240, %241 : vector<8x32xf32>
    %243 = arith.select %239, %237, %242 : vector<8x32xi1>, vector<8x32xf32>
    %244 = arith.truncf %243 : vector<8x32xf32> to vector<8x32xbf16>
    %cst_77 = arith.constant dense<0.000000e+00> : vector<8x4xf32>
    %245 = tpu.matmul %244, %5, %cst_77 {dimension_numbers = #tpu.dot_dimension_numbers<[1], [0], [0], [1], [0, 0, 1, 1], [], []>} : vector<8x32xbf16>, vector<32x4xbf16>, vector<8x4xf32> -> vector<8x4xf32>
    %246 = vector.broadcast %9 : vector<1x4xf32> to vector<8x4xf32>
    %247 = arith.addf %245, %246 : vector<8x4xf32>
    %248 = arith.addf %166, %247 : vector<8x4xf32>
    %249 = vector.broadcast %19 : f32 to vector<8x4xf32>
    %250 = arith.mulf %249, %248 : vector<8x4xf32>
    %251 = arith.addf %140, %250 : vector<8x4xf32>
    %252 = arith.addf %193, %220 : vector<8x4xf32>
    %253 = vector.broadcast %20 : f32 to vector<8x4xf32>
    %254 = arith.mulf %253, %252 : vector<8x4xf32>
    %255 = arith.addf %251, %254 : vector<8x4xf32>
    %c2_i32 = arith.constant 2 : i32
    %256 = arith.addf %142, %22 : vector<1x32xf32>
    %257 = arith.addf %256, %22 : vector<1x32xf32>
    %258 = arith.truncf %255 : vector<8x4xf32> to vector<8x4xbf16>
    %cst_78 = arith.constant dense<0.000000e+00> : vector<8x32xf32>
    %259 = tpu.matmul %258, %1, %cst_78 {dimension_numbers = #tpu.dot_dimension_numbers<[1], [0], [0], [1], [0, 0, 1, 1], [], []>} : vector<8x4xbf16>, vector<4x32xbf16>, vector<8x32xf32> -> vector<8x32xf32>
    %260 = vector.broadcast %142 : vector<1x32xf32> to vector<8x32xf32>
    %261 = arith.addf %259, %260 : vector<8x32xf32>
    %cst_79 = arith.constant 0.000000e+00 : f32
    %262 = vector.broadcast %cst_79 : f32 to vector<8x32xf32>
    %263 = arith.cmpf ogt, %261, %262 : vector<8x32xf32>
    %264 = math.exp %261 : vector<8x32xf32>
    %cst_80 = arith.constant 1.000000e+00 : f32
    %265 = vector.broadcast %cst_80 : f32 to vector<8x32xf32>
    %266 = arith.subf %264, %265 : vector<8x32xf32>
    %267 = arith.select %263, %261, %266 : vector<8x32xi1>, vector<8x32xf32>
    %268 = arith.truncf %267 : vector<8x32xf32> to vector<8x32xbf16>
    %cst_81 = arith.constant dense<0.000000e+00> : vector<8x32xf32>
    %269 = tpu.matmul %268, %3, %cst_81 {dimension_numbers = #tpu.dot_dimension_numbers<[1], [0], [0], [1], [0, 0, 1, 1], [], []>} : vector<8x32xbf16>, vector<32x32xbf16>, vector<8x32xf32> -> vector<8x32xf32>
    %270 = vector.broadcast %8 : vector<1x32xf32> to vector<8x32xf32>
    %271 = arith.addf %269, %270 : vector<8x32xf32>
    %cst_82 = arith.constant 0.000000e+00 : f32
    %272 = vector.broadcast %cst_82 : f32 to vector<8x32xf32>
    %273 = arith.cmpf ogt, %271, %272 : vector<8x32xf32>
    %274 = math.exp %271 : vector<8x32xf32>
    %cst_83 = arith.constant 1.000000e+00 : f32
    %275 = vector.broadcast %cst_83 : f32 to vector<8x32xf32>
    %276 = arith.subf %274, %275 : vector<8x32xf32>
    %277 = arith.select %273, %271, %276 : vector<8x32xi1>, vector<8x32xf32>
    %278 = arith.truncf %277 : vector<8x32xf32> to vector<8x32xbf16>
    %cst_84 = arith.constant dense<0.000000e+00> : vector<8x4xf32>
    %279 = tpu.matmul %278, %5, %cst_84 {dimension_numbers = #tpu.dot_dimension_numbers<[1], [0], [0], [1], [0, 0, 1, 1], [], []>} : vector<8x32xbf16>, vector<32x4xbf16>, vector<8x4xf32> -> vector<8x4xf32>
    %280 = vector.broadcast %9 : vector<1x4xf32> to vector<8x4xf32>
    %281 = arith.addf %279, %280 : vector<8x4xf32>
    %282 = vector.broadcast %18 : f32 to vector<8x4xf32>
    %283 = arith.mulf %282, %281 : vector<8x4xf32>
    %284 = arith.addf %255, %283 : vector<8x4xf32>
    %285 = arith.truncf %284 : vector<8x4xf32> to vector<8x4xbf16>
    %cst_85 = arith.constant dense<0.000000e+00> : vector<8x32xf32>
    %286 = tpu.matmul %285, %1, %cst_85 {dimension_numbers = #tpu.dot_dimension_numbers<[1], [0], [0], [1], [0, 0, 1, 1], [], []>} : vector<8x4xbf16>, vector<4x32xbf16>, vector<8x32xf32> -> vector<8x32xf32>
    %287 = vector.broadcast %256 : vector<1x32xf32> to vector<8x32xf32>
    %288 = arith.addf %286, %287 : vector<8x32xf32>
    %cst_86 = arith.constant 0.000000e+00 : f32
    %289 = vector.broadcast %cst_86 : f32 to vector<8x32xf32>
    %290 = arith.cmpf ogt, %288, %289 : vector<8x32xf32>
    %291 = math.exp %288 : vector<8x32xf32>
    %cst_87 = arith.constant 1.000000e+00 : f32
    %292 = vector.broadcast %cst_87 : f32 to vector<8x32xf32>
    %293 = arith.subf %291, %292 : vector<8x32xf32>
    %294 = arith.select %290, %288, %293 : vector<8x32xi1>, vector<8x32xf32>
    %295 = arith.truncf %294 : vector<8x32xf32> to vector<8x32xbf16>
    %cst_88 = arith.constant dense<0.000000e+00> : vector<8x32xf32>
    %296 = tpu.matmul %295, %3, %cst_88 {dimension_numbers = #tpu.dot_dimension_numbers<[1], [0], [0], [1], [0, 0, 1, 1], [], []>} : vector<8x32xbf16>, vector<32x32xbf16>, vector<8x32xf32> -> vector<8x32xf32>
    %297 = vector.broadcast %8 : vector<1x32xf32> to vector<8x32xf32>
    %298 = arith.addf %296, %297 : vector<8x32xf32>
    %cst_89 = arith.constant 0.000000e+00 : f32
    %299 = vector.broadcast %cst_89 : f32 to vector<8x32xf32>
    %300 = arith.cmpf ogt, %298, %299 : vector<8x32xf32>
    %301 = math.exp %298 : vector<8x32xf32>
    %cst_90 = arith.constant 1.000000e+00 : f32
    %302 = vector.broadcast %cst_90 : f32 to vector<8x32xf32>
    %303 = arith.subf %301, %302 : vector<8x32xf32>
    %304 = arith.select %300, %298, %303 : vector<8x32xi1>, vector<8x32xf32>
    %305 = arith.truncf %304 : vector<8x32xf32> to vector<8x32xbf16>
    %cst_91 = arith.constant dense<0.000000e+00> : vector<8x4xf32>
    %306 = tpu.matmul %305, %5, %cst_91 {dimension_numbers = #tpu.dot_dimension_numbers<[1], [0], [0], [1], [0, 0, 1, 1], [], []>} : vector<8x32xbf16>, vector<32x4xbf16>, vector<8x4xf32> -> vector<8x4xf32>
    %307 = vector.broadcast %9 : vector<1x4xf32> to vector<8x4xf32>
    %308 = arith.addf %306, %307 : vector<8x4xf32>
    %309 = vector.broadcast %18 : f32 to vector<8x4xf32>
    %310 = arith.mulf %309, %308 : vector<8x4xf32>
    %311 = arith.addf %255, %310 : vector<8x4xf32>
    %312 = arith.truncf %311 : vector<8x4xf32> to vector<8x4xbf16>
    %cst_92 = arith.constant dense<0.000000e+00> : vector<8x32xf32>
    %313 = tpu.matmul %312, %1, %cst_92 {dimension_numbers = #tpu.dot_dimension_numbers<[1], [0], [0], [1], [0, 0, 1, 1], [], []>} : vector<8x4xbf16>, vector<4x32xbf16>, vector<8x32xf32> -> vector<8x32xf32>
    %314 = vector.broadcast %256 : vector<1x32xf32> to vector<8x32xf32>
    %315 = arith.addf %313, %314 : vector<8x32xf32>
    %cst_93 = arith.constant 0.000000e+00 : f32
    %316 = vector.broadcast %cst_93 : f32 to vector<8x32xf32>
    %317 = arith.cmpf ogt, %315, %316 : vector<8x32xf32>
    %318 = math.exp %315 : vector<8x32xf32>
    %cst_94 = arith.constant 1.000000e+00 : f32
    %319 = vector.broadcast %cst_94 : f32 to vector<8x32xf32>
    %320 = arith.subf %318, %319 : vector<8x32xf32>
    %321 = arith.select %317, %315, %320 : vector<8x32xi1>, vector<8x32xf32>
    %322 = arith.truncf %321 : vector<8x32xf32> to vector<8x32xbf16>
    %cst_95 = arith.constant dense<0.000000e+00> : vector<8x32xf32>
    %323 = tpu.matmul %322, %3, %cst_95 {dimension_numbers = #tpu.dot_dimension_numbers<[1], [0], [0], [1], [0, 0, 1, 1], [], []>} : vector<8x32xbf16>, vector<32x32xbf16>, vector<8x32xf32> -> vector<8x32xf32>
    %324 = vector.broadcast %8 : vector<1x32xf32> to vector<8x32xf32>
    %325 = arith.addf %323, %324 : vector<8x32xf32>
    %cst_96 = arith.constant 0.000000e+00 : f32
    %326 = vector.broadcast %cst_96 : f32 to vector<8x32xf32>
    %327 = arith.cmpf ogt, %325, %326 : vector<8x32xf32>
    %328 = math.exp %325 : vector<8x32xf32>
    %cst_97 = arith.constant 1.000000e+00 : f32
    %329 = vector.broadcast %cst_97 : f32 to vector<8x32xf32>
    %330 = arith.subf %328, %329 : vector<8x32xf32>
    %331 = arith.select %327, %325, %330 : vector<8x32xi1>, vector<8x32xf32>
    %332 = arith.truncf %331 : vector<8x32xf32> to vector<8x32xbf16>
    %cst_98 = arith.constant dense<0.000000e+00> : vector<8x4xf32>
    %333 = tpu.matmul %332, %5, %cst_98 {dimension_numbers = #tpu.dot_dimension_numbers<[1], [0], [0], [1], [0, 0, 1, 1], [], []>} : vector<8x32xbf16>, vector<32x4xbf16>, vector<8x4xf32> -> vector<8x4xf32>
    %334 = vector.broadcast %9 : vector<1x4xf32> to vector<8x4xf32>
    %335 = arith.addf %333, %334 : vector<8x4xf32>
    %336 = vector.broadcast %17 : f32 to vector<8x4xf32>
    %337 = arith.mulf %336, %335 : vector<8x4xf32>
    %338 = arith.addf %255, %337 : vector<8x4xf32>
    %339 = arith.truncf %338 : vector<8x4xf32> to vector<8x4xbf16>
    %cst_99 = arith.constant dense<0.000000e+00> : vector<8x32xf32>
    %340 = tpu.matmul %339, %1, %cst_99 {dimension_numbers = #tpu.dot_dimension_numbers<[1], [0], [0], [1], [0, 0, 1, 1], [], []>} : vector<8x4xbf16>, vector<4x32xbf16>, vector<8x32xf32> -> vector<8x32xf32>
    %341 = vector.broadcast %257 : vector<1x32xf32> to vector<8x32xf32>
    %342 = arith.addf %340, %341 : vector<8x32xf32>
    %cst_100 = arith.constant 0.000000e+00 : f32
    %343 = vector.broadcast %cst_100 : f32 to vector<8x32xf32>
    %344 = arith.cmpf ogt, %342, %343 : vector<8x32xf32>
    %345 = math.exp %342 : vector<8x32xf32>
    %cst_101 = arith.constant 1.000000e+00 : f32
    %346 = vector.broadcast %cst_101 : f32 to vector<8x32xf32>
    %347 = arith.subf %345, %346 : vector<8x32xf32>
    %348 = arith.select %344, %342, %347 : vector<8x32xi1>, vector<8x32xf32>
    %349 = arith.truncf %348 : vector<8x32xf32> to vector<8x32xbf16>
    %cst_102 = arith.constant dense<0.000000e+00> : vector<8x32xf32>
    %350 = tpu.matmul %349, %3, %cst_102 {dimension_numbers = #tpu.dot_dimension_numbers<[1], [0], [0], [1], [0, 0, 1, 1], [], []>} : vector<8x32xbf16>, vector<32x32xbf16>, vector<8x32xf32> -> vector<8x32xf32>
    %351 = vector.broadcast %8 : vector<1x32xf32> to vector<8x32xf32>
    %352 = arith.addf %350, %351 : vector<8x32xf32>
    %cst_103 = arith.constant 0.000000e+00 : f32
    %353 = vector.broadcast %cst_103 : f32 to vector<8x32xf32>
    %354 = arith.cmpf ogt, %352, %353 : vector<8x32xf32>
    %355 = math.exp %352 : vector<8x32xf32>
    %cst_104 = arith.constant 1.000000e+00 : f32
    %356 = vector.broadcast %cst_104 : f32 to vector<8x32xf32>
    %357 = arith.subf %355, %356 : vector<8x32xf32>
    %358 = arith.select %354, %352, %357 : vector<8x32xi1>, vector<8x32xf32>
    %359 = arith.truncf %358 : vector<8x32xf32> to vector<8x32xbf16>
    %cst_105 = arith.constant dense<0.000000e+00> : vector<8x4xf32>
    %360 = tpu.matmul %359, %5, %cst_105 {dimension_numbers = #tpu.dot_dimension_numbers<[1], [0], [0], [1], [0, 0, 1, 1], [], []>} : vector<8x32xbf16>, vector<32x4xbf16>, vector<8x4xf32> -> vector<8x4xf32>
    %361 = vector.broadcast %9 : vector<1x4xf32> to vector<8x4xf32>
    %362 = arith.addf %360, %361 : vector<8x4xf32>
    %363 = arith.addf %281, %362 : vector<8x4xf32>
    %364 = vector.broadcast %19 : f32 to vector<8x4xf32>
    %365 = arith.mulf %364, %363 : vector<8x4xf32>
    %366 = arith.addf %255, %365 : vector<8x4xf32>
    %367 = arith.addf %308, %335 : vector<8x4xf32>
    %368 = vector.broadcast %20 : f32 to vector<8x4xf32>
    %369 = arith.mulf %368, %367 : vector<8x4xf32>
    %370 = arith.addf %366, %369 : vector<8x4xf32>
    %c3_i32 = arith.constant 3 : i32
    %371 = arith.addf %257, %22 : vector<1x32xf32>
    %372 = arith.addf %371, %22 : vector<1x32xf32>
    %373 = arith.truncf %370 : vector<8x4xf32> to vector<8x4xbf16>
    %cst_106 = arith.constant dense<0.000000e+00> : vector<8x32xf32>
    %374 = tpu.matmul %373, %1, %cst_106 {dimension_numbers = #tpu.dot_dimension_numbers<[1], [0], [0], [1], [0, 0, 1, 1], [], []>} : vector<8x4xbf16>, vector<4x32xbf16>, vector<8x32xf32> -> vector<8x32xf32>
    %375 = vector.broadcast %257 : vector<1x32xf32> to vector<8x32xf32>
    %376 = arith.addf %374, %375 : vector<8x32xf32>
    %cst_107 = arith.constant 0.000000e+00 : f32
    %377 = vector.broadcast %cst_107 : f32 to vector<8x32xf32>
    %378 = arith.cmpf ogt, %376, %377 : vector<8x32xf32>
    %379 = math.exp %376 : vector<8x32xf32>
    %cst_108 = arith.constant 1.000000e+00 : f32
    %380 = vector.broadcast %cst_108 : f32 to vector<8x32xf32>
    %381 = arith.subf %379, %380 : vector<8x32xf32>
    %382 = arith.select %378, %376, %381 : vector<8x32xi1>, vector<8x32xf32>
    %383 = arith.truncf %382 : vector<8x32xf32> to vector<8x32xbf16>
    %cst_109 = arith.constant dense<0.000000e+00> : vector<8x32xf32>
    %384 = tpu.matmul %383, %3, %cst_109 {dimension_numbers = #tpu.dot_dimension_numbers<[1], [0], [0], [1], [0, 0, 1, 1], [], []>} : vector<8x32xbf16>, vector<32x32xbf16>, vector<8x32xf32> -> vector<8x32xf32>
    %385 = vector.broadcast %8 : vector<1x32xf32> to vector<8x32xf32>
    %386 = arith.addf %384, %385 : vector<8x32xf32>
    %cst_110 = arith.constant 0.000000e+00 : f32
    %387 = vector.broadcast %cst_110 : f32 to vector<8x32xf32>
    %388 = arith.cmpf ogt, %386, %387 : vector<8x32xf32>
    %389 = math.exp %386 : vector<8x32xf32>
    %cst_111 = arith.constant 1.000000e+00 : f32
    %390 = vector.broadcast %cst_111 : f32 to vector<8x32xf32>
    %391 = arith.subf %389, %390 : vector<8x32xf32>
    %392 = arith.select %388, %386, %391 : vector<8x32xi1>, vector<8x32xf32>
    %393 = arith.truncf %392 : vector<8x32xf32> to vector<8x32xbf16>
    %cst_112 = arith.constant dense<0.000000e+00> : vector<8x4xf32>
    %394 = tpu.matmul %393, %5, %cst_112 {dimension_numbers = #tpu.dot_dimension_numbers<[1], [0], [0], [1], [0, 0, 1, 1], [], []>} : vector<8x32xbf16>, vector<32x4xbf16>, vector<8x4xf32> -> vector<8x4xf32>
    %395 = vector.broadcast %9 : vector<1x4xf32> to vector<8x4xf32>
    %396 = arith.addf %394, %395 : vector<8x4xf32>
    %397 = vector.broadcast %18 : f32 to vector<8x4xf32>
    %398 = arith.mulf %397, %396 : vector<8x4xf32>
    %399 = arith.addf %370, %398 : vector<8x4xf32>
    %400 = arith.truncf %399 : vector<8x4xf32> to vector<8x4xbf16>
    %cst_113 = arith.constant dense<0.000000e+00> : vector<8x32xf32>
    %401 = tpu.matmul %400, %1, %cst_113 {dimension_numbers = #tpu.dot_dimension_numbers<[1], [0], [0], [1], [0, 0, 1, 1], [], []>} : vector<8x4xbf16>, vector<4x32xbf16>, vector<8x32xf32> -> vector<8x32xf32>
    %402 = vector.broadcast %371 : vector<1x32xf32> to vector<8x32xf32>
    %403 = arith.addf %401, %402 : vector<8x32xf32>
    %cst_114 = arith.constant 0.000000e+00 : f32
    %404 = vector.broadcast %cst_114 : f32 to vector<8x32xf32>
    %405 = arith.cmpf ogt, %403, %404 : vector<8x32xf32>
    %406 = math.exp %403 : vector<8x32xf32>
    %cst_115 = arith.constant 1.000000e+00 : f32
    %407 = vector.broadcast %cst_115 : f32 to vector<8x32xf32>
    %408 = arith.subf %406, %407 : vector<8x32xf32>
    %409 = arith.select %405, %403, %408 : vector<8x32xi1>, vector<8x32xf32>
    %410 = arith.truncf %409 : vector<8x32xf32> to vector<8x32xbf16>
    %cst_116 = arith.constant dense<0.000000e+00> : vector<8x32xf32>
    %411 = tpu.matmul %410, %3, %cst_116 {dimension_numbers = #tpu.dot_dimension_numbers<[1], [0], [0], [1], [0, 0, 1, 1], [], []>} : vector<8x32xbf16>, vector<32x32xbf16>, vector<8x32xf32> -> vector<8x32xf32>
    %412 = vector.broadcast %8 : vector<1x32xf32> to vector<8x32xf32>
    %413 = arith.addf %411, %412 : vector<8x32xf32>
    %cst_117 = arith.constant 0.000000e+00 : f32
    %414 = vector.broadcast %cst_117 : f32 to vector<8x32xf32>
    %415 = arith.cmpf ogt, %413, %414 : vector<8x32xf32>
    %416 = math.exp %413 : vector<8x32xf32>
    %cst_118 = arith.constant 1.000000e+00 : f32
    %417 = vector.broadcast %cst_118 : f32 to vector<8x32xf32>
    %418 = arith.subf %416, %417 : vector<8x32xf32>
    %419 = arith.select %415, %413, %418 : vector<8x32xi1>, vector<8x32xf32>
    %420 = arith.truncf %419 : vector<8x32xf32> to vector<8x32xbf16>
    %cst_119 = arith.constant dense<0.000000e+00> : vector<8x4xf32>
    %421 = tpu.matmul %420, %5, %cst_119 {dimension_numbers = #tpu.dot_dimension_numbers<[1], [0], [0], [1], [0, 0, 1, 1], [], []>} : vector<8x32xbf16>, vector<32x4xbf16>, vector<8x4xf32> -> vector<8x4xf32>
    %422 = vector.broadcast %9 : vector<1x4xf32> to vector<8x4xf32>
    %423 = arith.addf %421, %422 : vector<8x4xf32>
    %424 = vector.broadcast %18 : f32 to vector<8x4xf32>
    %425 = arith.mulf %424, %423 : vector<8x4xf32>
    %426 = arith.addf %370, %425 : vector<8x4xf32>
    %427 = arith.truncf %426 : vector<8x4xf32> to vector<8x4xbf16>
    %cst_120 = arith.constant dense<0.000000e+00> : vector<8x32xf32>
    %428 = tpu.matmul %427, %1, %cst_120 {dimension_numbers = #tpu.dot_dimension_numbers<[1], [0], [0], [1], [0, 0, 1, 1], [], []>} : vector<8x4xbf16>, vector<4x32xbf16>, vector<8x32xf32> -> vector<8x32xf32>
    %429 = vector.broadcast %371 : vector<1x32xf32> to vector<8x32xf32>
    %430 = arith.addf %428, %429 : vector<8x32xf32>
    %cst_121 = arith.constant 0.000000e+00 : f32
    %431 = vector.broadcast %cst_121 : f32 to vector<8x32xf32>
    %432 = arith.cmpf ogt, %430, %431 : vector<8x32xf32>
    %433 = math.exp %430 : vector<8x32xf32>
    %cst_122 = arith.constant 1.000000e+00 : f32
    %434 = vector.broadcast %cst_122 : f32 to vector<8x32xf32>
    %435 = arith.subf %433, %434 : vector<8x32xf32>
    %436 = arith.select %432, %430, %435 : vector<8x32xi1>, vector<8x32xf32>
    %437 = arith.truncf %436 : vector<8x32xf32> to vector<8x32xbf16>
    %cst_123 = arith.constant dense<0.000000e+00> : vector<8x32xf32>
    %438 = tpu.matmul %437, %3, %cst_123 {dimension_numbers = #tpu.dot_dimension_numbers<[1], [0], [0], [1], [0, 0, 1, 1], [], []>} : vector<8x32xbf16>, vector<32x32xbf16>, vector<8x32xf32> -> vector<8x32xf32>
    %439 = vector.broadcast %8 : vector<1x32xf32> to vector<8x32xf32>
    %440 = arith.addf %438, %439 : vector<8x32xf32>
    %cst_124 = arith.constant 0.000000e+00 : f32
    %441 = vector.broadcast %cst_124 : f32 to vector<8x32xf32>
    %442 = arith.cmpf ogt, %440, %441 : vector<8x32xf32>
    %443 = math.exp %440 : vector<8x32xf32>
    %cst_125 = arith.constant 1.000000e+00 : f32
    %444 = vector.broadcast %cst_125 : f32 to vector<8x32xf32>
    %445 = arith.subf %443, %444 : vector<8x32xf32>
    %446 = arith.select %442, %440, %445 : vector<8x32xi1>, vector<8x32xf32>
    %447 = arith.truncf %446 : vector<8x32xf32> to vector<8x32xbf16>
    %cst_126 = arith.constant dense<0.000000e+00> : vector<8x4xf32>
    %448 = tpu.matmul %447, %5, %cst_126 {dimension_numbers = #tpu.dot_dimension_numbers<[1], [0], [0], [1], [0, 0, 1, 1], [], []>} : vector<8x32xbf16>, vector<32x4xbf16>, vector<8x4xf32> -> vector<8x4xf32>
    %449 = vector.broadcast %9 : vector<1x4xf32> to vector<8x4xf32>
    %450 = arith.addf %448, %449 : vector<8x4xf32>
    %451 = vector.broadcast %17 : f32 to vector<8x4xf32>
    %452 = arith.mulf %451, %450 : vector<8x4xf32>
    %453 = arith.addf %370, %452 : vector<8x4xf32>
    %454 = arith.truncf %453 : vector<8x4xf32> to vector<8x4xbf16>
    %cst_127 = arith.constant dense<0.000000e+00> : vector<8x32xf32>
    %455 = tpu.matmul %454, %1, %cst_127 {dimension_numbers = #tpu.dot_dimension_numbers<[1], [0], [0], [1], [0, 0, 1, 1], [], []>} : vector<8x4xbf16>, vector<4x32xbf16>, vector<8x32xf32> -> vector<8x32xf32>
    %456 = vector.broadcast %372 : vector<1x32xf32> to vector<8x32xf32>
    %457 = arith.addf %455, %456 : vector<8x32xf32>
    %cst_128 = arith.constant 0.000000e+00 : f32
    %458 = vector.broadcast %cst_128 : f32 to vector<8x32xf32>
    %459 = arith.cmpf ogt, %457, %458 : vector<8x32xf32>
    %460 = math.exp %457 : vector<8x32xf32>
    %cst_129 = arith.constant 1.000000e+00 : f32
    %461 = vector.broadcast %cst_129 : f32 to vector<8x32xf32>
    %462 = arith.subf %460, %461 : vector<8x32xf32>
    %463 = arith.select %459, %457, %462 : vector<8x32xi1>, vector<8x32xf32>
    %464 = arith.truncf %463 : vector<8x32xf32> to vector<8x32xbf16>
    %cst_130 = arith.constant dense<0.000000e+00> : vector<8x32xf32>
    %465 = tpu.matmul %464, %3, %cst_130 {dimension_numbers = #tpu.dot_dimension_numbers<[1], [0], [0], [1], [0, 0, 1, 1], [], []>} : vector<8x32xbf16>, vector<32x32xbf16>, vector<8x32xf32> -> vector<8x32xf32>
    %466 = vector.broadcast %8 : vector<1x32xf32> to vector<8x32xf32>
    %467 = arith.addf %465, %466 : vector<8x32xf32>
    %cst_131 = arith.constant 0.000000e+00 : f32
    %468 = vector.broadcast %cst_131 : f32 to vector<8x32xf32>
    %469 = arith.cmpf ogt, %467, %468 : vector<8x32xf32>
    %470 = math.exp %467 : vector<8x32xf32>
    %cst_132 = arith.constant 1.000000e+00 : f32
    %471 = vector.broadcast %cst_132 : f32 to vector<8x32xf32>
    %472 = arith.subf %470, %471 : vector<8x32xf32>
    %473 = arith.select %469, %467, %472 : vector<8x32xi1>, vector<8x32xf32>
    %474 = arith.truncf %473 : vector<8x32xf32> to vector<8x32xbf16>
    %cst_133 = arith.constant dense<0.000000e+00> : vector<8x4xf32>
    %475 = tpu.matmul %474, %5, %cst_133 {dimension_numbers = #tpu.dot_dimension_numbers<[1], [0], [0], [1], [0, 0, 1, 1], [], []>} : vector<8x32xbf16>, vector<32x4xbf16>, vector<8x4xf32> -> vector<8x4xf32>
    %476 = vector.broadcast %9 : vector<1x4xf32> to vector<8x4xf32>
    %477 = arith.addf %475, %476 : vector<8x4xf32>
    %478 = arith.addf %396, %477 : vector<8x4xf32>
    %479 = vector.broadcast %19 : f32 to vector<8x4xf32>
    %480 = arith.mulf %479, %478 : vector<8x4xf32>
    %481 = arith.addf %370, %480 : vector<8x4xf32>
    %482 = arith.addf %423, %450 : vector<8x4xf32>
    %483 = vector.broadcast %20 : f32 to vector<8x4xf32>
    %484 = arith.mulf %483, %482 : vector<8x4xf32>
    %485 = arith.addf %481, %484 : vector<8x4xf32>
    %c4_i32 = arith.constant 4 : i32
    %486 = arith.addf %372, %22 : vector<1x32xf32>
    %487 = arith.addf %486, %22 : vector<1x32xf32>
    %488 = arith.truncf %485 : vector<8x4xf32> to vector<8x4xbf16>
    %cst_134 = arith.constant dense<0.000000e+00> : vector<8x32xf32>
    %489 = tpu.matmul %488, %1, %cst_134 {dimension_numbers = #tpu.dot_dimension_numbers<[1], [0], [0], [1], [0, 0, 1, 1], [], []>} : vector<8x4xbf16>, vector<4x32xbf16>, vector<8x32xf32> -> vector<8x32xf32>
    %490 = vector.broadcast %372 : vector<1x32xf32> to vector<8x32xf32>
    %491 = arith.addf %489, %490 : vector<8x32xf32>
    %cst_135 = arith.constant 0.000000e+00 : f32
    %492 = vector.broadcast %cst_135 : f32 to vector<8x32xf32>
    %493 = arith.cmpf ogt, %491, %492 : vector<8x32xf32>
    %494 = math.exp %491 : vector<8x32xf32>
    %cst_136 = arith.constant 1.000000e+00 : f32
    %495 = vector.broadcast %cst_136 : f32 to vector<8x32xf32>
    %496 = arith.subf %494, %495 : vector<8x32xf32>
    %497 = arith.select %493, %491, %496 : vector<8x32xi1>, vector<8x32xf32>
    %498 = arith.truncf %497 : vector<8x32xf32> to vector<8x32xbf16>
    %cst_137 = arith.constant dense<0.000000e+00> : vector<8x32xf32>
    %499 = tpu.matmul %498, %3, %cst_137 {dimension_numbers = #tpu.dot_dimension_numbers<[1], [0], [0], [1], [0, 0, 1, 1], [], []>} : vector<8x32xbf16>, vector<32x32xbf16>, vector<8x32xf32> -> vector<8x32xf32>
    %500 = vector.broadcast %8 : vector<1x32xf32> to vector<8x32xf32>
    %501 = arith.addf %499, %500 : vector<8x32xf32>
    %cst_138 = arith.constant 0.000000e+00 : f32
    %502 = vector.broadcast %cst_138 : f32 to vector<8x32xf32>
    %503 = arith.cmpf ogt, %501, %502 : vector<8x32xf32>
    %504 = math.exp %501 : vector<8x32xf32>
    %cst_139 = arith.constant 1.000000e+00 : f32
    %505 = vector.broadcast %cst_139 : f32 to vector<8x32xf32>
    %506 = arith.subf %504, %505 : vector<8x32xf32>
    %507 = arith.select %503, %501, %506 : vector<8x32xi1>, vector<8x32xf32>
    %508 = arith.truncf %507 : vector<8x32xf32> to vector<8x32xbf16>
    %cst_140 = arith.constant dense<0.000000e+00> : vector<8x4xf32>
    %509 = tpu.matmul %508, %5, %cst_140 {dimension_numbers = #tpu.dot_dimension_numbers<[1], [0], [0], [1], [0, 0, 1, 1], [], []>} : vector<8x32xbf16>, vector<32x4xbf16>, vector<8x4xf32> -> vector<8x4xf32>
    %510 = vector.broadcast %9 : vector<1x4xf32> to vector<8x4xf32>
    %511 = arith.addf %509, %510 : vector<8x4xf32>
    %512 = vector.broadcast %18 : f32 to vector<8x4xf32>
    %513 = arith.mulf %512, %511 : vector<8x4xf32>
    %514 = arith.addf %485, %513 : vector<8x4xf32>
    %515 = arith.truncf %514 : vector<8x4xf32> to vector<8x4xbf16>
    %cst_141 = arith.constant dense<0.000000e+00> : vector<8x32xf32>
    %516 = tpu.matmul %515, %1, %cst_141 {dimension_numbers = #tpu.dot_dimension_numbers<[1], [0], [0], [1], [0, 0, 1, 1], [], []>} : vector<8x4xbf16>, vector<4x32xbf16>, vector<8x32xf32> -> vector<8x32xf32>
    %517 = vector.broadcast %486 : vector<1x32xf32> to vector<8x32xf32>
    %518 = arith.addf %516, %517 : vector<8x32xf32>
    %cst_142 = arith.constant 0.000000e+00 : f32
    %519 = vector.broadcast %cst_142 : f32 to vector<8x32xf32>
    %520 = arith.cmpf ogt, %518, %519 : vector<8x32xf32>
    %521 = math.exp %518 : vector<8x32xf32>
    %cst_143 = arith.constant 1.000000e+00 : f32
    %522 = vector.broadcast %cst_143 : f32 to vector<8x32xf32>
    %523 = arith.subf %521, %522 : vector<8x32xf32>
    %524 = arith.select %520, %518, %523 : vector<8x32xi1>, vector<8x32xf32>
    %525 = arith.truncf %524 : vector<8x32xf32> to vector<8x32xbf16>
    %cst_144 = arith.constant dense<0.000000e+00> : vector<8x32xf32>
    %526 = tpu.matmul %525, %3, %cst_144 {dimension_numbers = #tpu.dot_dimension_numbers<[1], [0], [0], [1], [0, 0, 1, 1], [], []>} : vector<8x32xbf16>, vector<32x32xbf16>, vector<8x32xf32> -> vector<8x32xf32>
    %527 = vector.broadcast %8 : vector<1x32xf32> to vector<8x32xf32>
    %528 = arith.addf %526, %527 : vector<8x32xf32>
    %cst_145 = arith.constant 0.000000e+00 : f32
    %529 = vector.broadcast %cst_145 : f32 to vector<8x32xf32>
    %530 = arith.cmpf ogt, %528, %529 : vector<8x32xf32>
    %531 = math.exp %528 : vector<8x32xf32>
    %cst_146 = arith.constant 1.000000e+00 : f32
    %532 = vector.broadcast %cst_146 : f32 to vector<8x32xf32>
    %533 = arith.subf %531, %532 : vector<8x32xf32>
    %534 = arith.select %530, %528, %533 : vector<8x32xi1>, vector<8x32xf32>
    %535 = arith.truncf %534 : vector<8x32xf32> to vector<8x32xbf16>
    %cst_147 = arith.constant dense<0.000000e+00> : vector<8x4xf32>
    %536 = tpu.matmul %535, %5, %cst_147 {dimension_numbers = #tpu.dot_dimension_numbers<[1], [0], [0], [1], [0, 0, 1, 1], [], []>} : vector<8x32xbf16>, vector<32x4xbf16>, vector<8x4xf32> -> vector<8x4xf32>
    %537 = vector.broadcast %9 : vector<1x4xf32> to vector<8x4xf32>
    %538 = arith.addf %536, %537 : vector<8x4xf32>
    %539 = vector.broadcast %18 : f32 to vector<8x4xf32>
    %540 = arith.mulf %539, %538 : vector<8x4xf32>
    %541 = arith.addf %485, %540 : vector<8x4xf32>
    %542 = arith.truncf %541 : vector<8x4xf32> to vector<8x4xbf16>
    %cst_148 = arith.constant dense<0.000000e+00> : vector<8x32xf32>
    %543 = tpu.matmul %542, %1, %cst_148 {dimension_numbers = #tpu.dot_dimension_numbers<[1], [0], [0], [1], [0, 0, 1, 1], [], []>} : vector<8x4xbf16>, vector<4x32xbf16>, vector<8x32xf32> -> vector<8x32xf32>
    %544 = vector.broadcast %486 : vector<1x32xf32> to vector<8x32xf32>
    %545 = arith.addf %543, %544 : vector<8x32xf32>
    %cst_149 = arith.constant 0.000000e+00 : f32
    %546 = vector.broadcast %cst_149 : f32 to vector<8x32xf32>
    %547 = arith.cmpf ogt, %545, %546 : vector<8x32xf32>
    %548 = math.exp %545 : vector<8x32xf32>
    %cst_150 = arith.constant 1.000000e+00 : f32
    %549 = vector.broadcast %cst_150 : f32 to vector<8x32xf32>
    %550 = arith.subf %548, %549 : vector<8x32xf32>
    %551 = arith.select %547, %545, %550 : vector<8x32xi1>, vector<8x32xf32>
    %552 = arith.truncf %551 : vector<8x32xf32> to vector<8x32xbf16>
    %cst_151 = arith.constant dense<0.000000e+00> : vector<8x32xf32>
    %553 = tpu.matmul %552, %3, %cst_151 {dimension_numbers = #tpu.dot_dimension_numbers<[1], [0], [0], [1], [0, 0, 1, 1], [], []>} : vector<8x32xbf16>, vector<32x32xbf16>, vector<8x32xf32> -> vector<8x32xf32>
    %554 = vector.broadcast %8 : vector<1x32xf32> to vector<8x32xf32>
    %555 = arith.addf %553, %554 : vector<8x32xf32>
    %cst_152 = arith.constant 0.000000e+00 : f32
    %556 = vector.broadcast %cst_152 : f32 to vector<8x32xf32>
    %557 = arith.cmpf ogt, %555, %556 : vector<8x32xf32>
    %558 = math.exp %555 : vector<8x32xf32>
    %cst_153 = arith.constant 1.000000e+00 : f32
    %559 = vector.broadcast %cst_153 : f32 to vector<8x32xf32>
    %560 = arith.subf %558, %559 : vector<8x32xf32>
    %561 = arith.select %557, %555, %560 : vector<8x32xi1>, vector<8x32xf32>
    %562 = arith.truncf %561 : vector<8x32xf32> to vector<8x32xbf16>
    %cst_154 = arith.constant dense<0.000000e+00> : vector<8x4xf32>
    %563 = tpu.matmul %562, %5, %cst_154 {dimension_numbers = #tpu.dot_dimension_numbers<[1], [0], [0], [1], [0, 0, 1, 1], [], []>} : vector<8x32xbf16>, vector<32x4xbf16>, vector<8x4xf32> -> vector<8x4xf32>
    %564 = vector.broadcast %9 : vector<1x4xf32> to vector<8x4xf32>
    %565 = arith.addf %563, %564 : vector<8x4xf32>
    %566 = vector.broadcast %17 : f32 to vector<8x4xf32>
    %567 = arith.mulf %566, %565 : vector<8x4xf32>
    %568 = arith.addf %485, %567 : vector<8x4xf32>
    %569 = arith.truncf %568 : vector<8x4xf32> to vector<8x4xbf16>
    %cst_155 = arith.constant dense<0.000000e+00> : vector<8x32xf32>
    %570 = tpu.matmul %569, %1, %cst_155 {dimension_numbers = #tpu.dot_dimension_numbers<[1], [0], [0], [1], [0, 0, 1, 1], [], []>} : vector<8x4xbf16>, vector<4x32xbf16>, vector<8x32xf32> -> vector<8x32xf32>
    %571 = vector.broadcast %487 : vector<1x32xf32> to vector<8x32xf32>
    %572 = arith.addf %570, %571 : vector<8x32xf32>
    %cst_156 = arith.constant 0.000000e+00 : f32
    %573 = vector.broadcast %cst_156 : f32 to vector<8x32xf32>
    %574 = arith.cmpf ogt, %572, %573 : vector<8x32xf32>
    %575 = math.exp %572 : vector<8x32xf32>
    %cst_157 = arith.constant 1.000000e+00 : f32
    %576 = vector.broadcast %cst_157 : f32 to vector<8x32xf32>
    %577 = arith.subf %575, %576 : vector<8x32xf32>
    %578 = arith.select %574, %572, %577 : vector<8x32xi1>, vector<8x32xf32>
    %579 = arith.truncf %578 : vector<8x32xf32> to vector<8x32xbf16>
    %cst_158 = arith.constant dense<0.000000e+00> : vector<8x32xf32>
    %580 = tpu.matmul %579, %3, %cst_158 {dimension_numbers = #tpu.dot_dimension_numbers<[1], [0], [0], [1], [0, 0, 1, 1], [], []>} : vector<8x32xbf16>, vector<32x32xbf16>, vector<8x32xf32> -> vector<8x32xf32>
    %581 = vector.broadcast %8 : vector<1x32xf32> to vector<8x32xf32>
    %582 = arith.addf %580, %581 : vector<8x32xf32>
    %cst_159 = arith.constant 0.000000e+00 : f32
    %583 = vector.broadcast %cst_159 : f32 to vector<8x32xf32>
    %584 = arith.cmpf ogt, %582, %583 : vector<8x32xf32>
    %585 = math.exp %582 : vector<8x32xf32>
    %cst_160 = arith.constant 1.000000e+00 : f32
    %586 = vector.broadcast %cst_160 : f32 to vector<8x32xf32>
    %587 = arith.subf %585, %586 : vector<8x32xf32>
    %588 = arith.select %584, %582, %587 : vector<8x32xi1>, vector<8x32xf32>
    %589 = arith.truncf %588 : vector<8x32xf32> to vector<8x32xbf16>
    %cst_161 = arith.constant dense<0.000000e+00> : vector<8x4xf32>
    %590 = tpu.matmul %589, %5, %cst_161 {dimension_numbers = #tpu.dot_dimension_numbers<[1], [0], [0], [1], [0, 0, 1, 1], [], []>} : vector<8x32xbf16>, vector<32x4xbf16>, vector<8x4xf32> -> vector<8x4xf32>
    %591 = vector.broadcast %9 : vector<1x4xf32> to vector<8x4xf32>
    %592 = arith.addf %590, %591 : vector<8x4xf32>
    %593 = arith.addf %511, %592 : vector<8x4xf32>
    %594 = vector.broadcast %19 : f32 to vector<8x4xf32>
    %595 = arith.mulf %594, %593 : vector<8x4xf32>
    %596 = arith.addf %485, %595 : vector<8x4xf32>
    %597 = arith.addf %538, %565 : vector<8x4xf32>
    %598 = vector.broadcast %20 : f32 to vector<8x4xf32>
    %599 = arith.mulf %598, %597 : vector<8x4xf32>
    %600 = arith.addf %596, %599 : vector<8x4xf32>
    %c5_i32 = arith.constant 5 : i32
    %601 = arith.addf %487, %22 : vector<1x32xf32>
    %602 = arith.addf %601, %22 : vector<1x32xf32>
    %603 = arith.truncf %600 : vector<8x4xf32> to vector<8x4xbf16>
    %cst_162 = arith.constant dense<0.000000e+00> : vector<8x32xf32>
    %604 = tpu.matmul %603, %1, %cst_162 {dimension_numbers = #tpu.dot_dimension_numbers<[1], [0], [0], [1], [0, 0, 1, 1], [], []>} : vector<8x4xbf16>, vector<4x32xbf16>, vector<8x32xf32> -> vector<8x32xf32>
    %605 = vector.broadcast %487 : vector<1x32xf32> to vector<8x32xf32>
    %606 = arith.addf %604, %605 : vector<8x32xf32>
    %cst_163 = arith.constant 0.000000e+00 : f32
    %607 = vector.broadcast %cst_163 : f32 to vector<8x32xf32>
    %608 = arith.cmpf ogt, %606, %607 : vector<8x32xf32>
    %609 = math.exp %606 : vector<8x32xf32>
    %cst_164 = arith.constant 1.000000e+00 : f32
    %610 = vector.broadcast %cst_164 : f32 to vector<8x32xf32>
    %611 = arith.subf %609, %610 : vector<8x32xf32>
    %612 = arith.select %608, %606, %611 : vector<8x32xi1>, vector<8x32xf32>
    %613 = arith.truncf %612 : vector<8x32xf32> to vector<8x32xbf16>
    %cst_165 = arith.constant dense<0.000000e+00> : vector<8x32xf32>
    %614 = tpu.matmul %613, %3, %cst_165 {dimension_numbers = #tpu.dot_dimension_numbers<[1], [0], [0], [1], [0, 0, 1, 1], [], []>} : vector<8x32xbf16>, vector<32x32xbf16>, vector<8x32xf32> -> vector<8x32xf32>
    %615 = vector.broadcast %8 : vector<1x32xf32> to vector<8x32xf32>
    %616 = arith.addf %614, %615 : vector<8x32xf32>
    %cst_166 = arith.constant 0.000000e+00 : f32
    %617 = vector.broadcast %cst_166 : f32 to vector<8x32xf32>
    %618 = arith.cmpf ogt, %616, %617 : vector<8x32xf32>
    %619 = math.exp %616 : vector<8x32xf32>
    %cst_167 = arith.constant 1.000000e+00 : f32
    %620 = vector.broadcast %cst_167 : f32 to vector<8x32xf32>
    %621 = arith.subf %619, %620 : vector<8x32xf32>
    %622 = arith.select %618, %616, %621 : vector<8x32xi1>, vector<8x32xf32>
    %623 = arith.truncf %622 : vector<8x32xf32> to vector<8x32xbf16>
    %cst_168 = arith.constant dense<0.000000e+00> : vector<8x4xf32>
    %624 = tpu.matmul %623, %5, %cst_168 {dimension_numbers = #tpu.dot_dimension_numbers<[1], [0], [0], [1], [0, 0, 1, 1], [], []>} : vector<8x32xbf16>, vector<32x4xbf16>, vector<8x4xf32> -> vector<8x4xf32>
    %625 = vector.broadcast %9 : vector<1x4xf32> to vector<8x4xf32>
    %626 = arith.addf %624, %625 : vector<8x4xf32>
    %627 = vector.broadcast %18 : f32 to vector<8x4xf32>
    %628 = arith.mulf %627, %626 : vector<8x4xf32>
    %629 = arith.addf %600, %628 : vector<8x4xf32>
    %630 = arith.truncf %629 : vector<8x4xf32> to vector<8x4xbf16>
    %cst_169 = arith.constant dense<0.000000e+00> : vector<8x32xf32>
    %631 = tpu.matmul %630, %1, %cst_169 {dimension_numbers = #tpu.dot_dimension_numbers<[1], [0], [0], [1], [0, 0, 1, 1], [], []>} : vector<8x4xbf16>, vector<4x32xbf16>, vector<8x32xf32> -> vector<8x32xf32>
    %632 = vector.broadcast %601 : vector<1x32xf32> to vector<8x32xf32>
    %633 = arith.addf %631, %632 : vector<8x32xf32>
    %cst_170 = arith.constant 0.000000e+00 : f32
    %634 = vector.broadcast %cst_170 : f32 to vector<8x32xf32>
    %635 = arith.cmpf ogt, %633, %634 : vector<8x32xf32>
    %636 = math.exp %633 : vector<8x32xf32>
    %cst_171 = arith.constant 1.000000e+00 : f32
    %637 = vector.broadcast %cst_171 : f32 to vector<8x32xf32>
    %638 = arith.subf %636, %637 : vector<8x32xf32>
    %639 = arith.select %635, %633, %638 : vector<8x32xi1>, vector<8x32xf32>
    %640 = arith.truncf %639 : vector<8x32xf32> to vector<8x32xbf16>
    %cst_172 = arith.constant dense<0.000000e+00> : vector<8x32xf32>
    %641 = tpu.matmul %640, %3, %cst_172 {dimension_numbers = #tpu.dot_dimension_numbers<[1], [0], [0], [1], [0, 0, 1, 1], [], []>} : vector<8x32xbf16>, vector<32x32xbf16>, vector<8x32xf32> -> vector<8x32xf32>
    %642 = vector.broadcast %8 : vector<1x32xf32> to vector<8x32xf32>
    %643 = arith.addf %641, %642 : vector<8x32xf32>
    %cst_173 = arith.constant 0.000000e+00 : f32
    %644 = vector.broadcast %cst_173 : f32 to vector<8x32xf32>
    %645 = arith.cmpf ogt, %643, %644 : vector<8x32xf32>
    %646 = math.exp %643 : vector<8x32xf32>
    %cst_174 = arith.constant 1.000000e+00 : f32
    %647 = vector.broadcast %cst_174 : f32 to vector<8x32xf32>
    %648 = arith.subf %646, %647 : vector<8x32xf32>
    %649 = arith.select %645, %643, %648 : vector<8x32xi1>, vector<8x32xf32>
    %650 = arith.truncf %649 : vector<8x32xf32> to vector<8x32xbf16>
    %cst_175 = arith.constant dense<0.000000e+00> : vector<8x4xf32>
    %651 = tpu.matmul %650, %5, %cst_175 {dimension_numbers = #tpu.dot_dimension_numbers<[1], [0], [0], [1], [0, 0, 1, 1], [], []>} : vector<8x32xbf16>, vector<32x4xbf16>, vector<8x4xf32> -> vector<8x4xf32>
    %652 = vector.broadcast %9 : vector<1x4xf32> to vector<8x4xf32>
    %653 = arith.addf %651, %652 : vector<8x4xf32>
    %654 = vector.broadcast %18 : f32 to vector<8x4xf32>
    %655 = arith.mulf %654, %653 : vector<8x4xf32>
    %656 = arith.addf %600, %655 : vector<8x4xf32>
    %657 = arith.truncf %656 : vector<8x4xf32> to vector<8x4xbf16>
    %cst_176 = arith.constant dense<0.000000e+00> : vector<8x32xf32>
    %658 = tpu.matmul %657, %1, %cst_176 {dimension_numbers = #tpu.dot_dimension_numbers<[1], [0], [0], [1], [0, 0, 1, 1], [], []>} : vector<8x4xbf16>, vector<4x32xbf16>, vector<8x32xf32> -> vector<8x32xf32>
    %659 = vector.broadcast %601 : vector<1x32xf32> to vector<8x32xf32>
    %660 = arith.addf %658, %659 : vector<8x32xf32>
    %cst_177 = arith.constant 0.000000e+00 : f32
    %661 = vector.broadcast %cst_177 : f32 to vector<8x32xf32>
    %662 = arith.cmpf ogt, %660, %661 : vector<8x32xf32>
    %663 = math.exp %660 : vector<8x32xf32>
    %cst_178 = arith.constant 1.000000e+00 : f32
    %664 = vector.broadcast %cst_178 : f32 to vector<8x32xf32>
    %665 = arith.subf %663, %664 : vector<8x32xf32>
    %666 = arith.select %662, %660, %665 : vector<8x32xi1>, vector<8x32xf32>
    %667 = arith.truncf %666 : vector<8x32xf32> to vector<8x32xbf16>
    %cst_179 = arith.constant dense<0.000000e+00> : vector<8x32xf32>
    %668 = tpu.matmul %667, %3, %cst_179 {dimension_numbers = #tpu.dot_dimension_numbers<[1], [0], [0], [1], [0, 0, 1, 1], [], []>} : vector<8x32xbf16>, vector<32x32xbf16>, vector<8x32xf32> -> vector<8x32xf32>
    %669 = vector.broadcast %8 : vector<1x32xf32> to vector<8x32xf32>
    %670 = arith.addf %668, %669 : vector<8x32xf32>
    %cst_180 = arith.constant 0.000000e+00 : f32
    %671 = vector.broadcast %cst_180 : f32 to vector<8x32xf32>
    %672 = arith.cmpf ogt, %670, %671 : vector<8x32xf32>
    %673 = math.exp %670 : vector<8x32xf32>
    %cst_181 = arith.constant 1.000000e+00 : f32
    %674 = vector.broadcast %cst_181 : f32 to vector<8x32xf32>
    %675 = arith.subf %673, %674 : vector<8x32xf32>
    %676 = arith.select %672, %670, %675 : vector<8x32xi1>, vector<8x32xf32>
    %677 = arith.truncf %676 : vector<8x32xf32> to vector<8x32xbf16>
    %cst_182 = arith.constant dense<0.000000e+00> : vector<8x4xf32>
    %678 = tpu.matmul %677, %5, %cst_182 {dimension_numbers = #tpu.dot_dimension_numbers<[1], [0], [0], [1], [0, 0, 1, 1], [], []>} : vector<8x32xbf16>, vector<32x4xbf16>, vector<8x4xf32> -> vector<8x4xf32>
    %679 = vector.broadcast %9 : vector<1x4xf32> to vector<8x4xf32>
    %680 = arith.addf %678, %679 : vector<8x4xf32>
    %681 = vector.broadcast %17 : f32 to vector<8x4xf32>
    %682 = arith.mulf %681, %680 : vector<8x4xf32>
    %683 = arith.addf %600, %682 : vector<8x4xf32>
    %684 = arith.truncf %683 : vector<8x4xf32> to vector<8x4xbf16>
    %cst_183 = arith.constant dense<0.000000e+00> : vector<8x32xf32>
    %685 = tpu.matmul %684, %1, %cst_183 {dimension_numbers = #tpu.dot_dimension_numbers<[1], [0], [0], [1], [0, 0, 1, 1], [], []>} : vector<8x4xbf16>, vector<4x32xbf16>, vector<8x32xf32> -> vector<8x32xf32>
    %686 = vector.broadcast %602 : vector<1x32xf32> to vector<8x32xf32>
    %687 = arith.addf %685, %686 : vector<8x32xf32>
    %cst_184 = arith.constant 0.000000e+00 : f32
    %688 = vector.broadcast %cst_184 : f32 to vector<8x32xf32>
    %689 = arith.cmpf ogt, %687, %688 : vector<8x32xf32>
    %690 = math.exp %687 : vector<8x32xf32>
    %cst_185 = arith.constant 1.000000e+00 : f32
    %691 = vector.broadcast %cst_185 : f32 to vector<8x32xf32>
    %692 = arith.subf %690, %691 : vector<8x32xf32>
    %693 = arith.select %689, %687, %692 : vector<8x32xi1>, vector<8x32xf32>
    %694 = arith.truncf %693 : vector<8x32xf32> to vector<8x32xbf16>
    %cst_186 = arith.constant dense<0.000000e+00> : vector<8x32xf32>
    %695 = tpu.matmul %694, %3, %cst_186 {dimension_numbers = #tpu.dot_dimension_numbers<[1], [0], [0], [1], [0, 0, 1, 1], [], []>} : vector<8x32xbf16>, vector<32x32xbf16>, vector<8x32xf32> -> vector<8x32xf32>
    %696 = vector.broadcast %8 : vector<1x32xf32> to vector<8x32xf32>
    %697 = arith.addf %695, %696 : vector<8x32xf32>
    %cst_187 = arith.constant 0.000000e+00 : f32
    %698 = vector.broadcast %cst_187 : f32 to vector<8x32xf32>
    %699 = arith.cmpf ogt, %697, %698 : vector<8x32xf32>
    %700 = math.exp %697 : vector<8x32xf32>
    %cst_188 = arith.constant 1.000000e+00 : f32
    %701 = vector.broadcast %cst_188 : f32 to vector<8x32xf32>
    %702 = arith.subf %700, %701 : vector<8x32xf32>
    %703 = arith.select %699, %697, %702 : vector<8x32xi1>, vector<8x32xf32>
    %704 = arith.truncf %703 : vector<8x32xf32> to vector<8x32xbf16>
    %cst_189 = arith.constant dense<0.000000e+00> : vector<8x4xf32>
    %705 = tpu.matmul %704, %5, %cst_189 {dimension_numbers = #tpu.dot_dimension_numbers<[1], [0], [0], [1], [0, 0, 1, 1], [], []>} : vector<8x32xbf16>, vector<32x4xbf16>, vector<8x4xf32> -> vector<8x4xf32>
    %706 = vector.broadcast %9 : vector<1x4xf32> to vector<8x4xf32>
    %707 = arith.addf %705, %706 : vector<8x4xf32>
    %708 = arith.addf %626, %707 : vector<8x4xf32>
    %709 = vector.broadcast %19 : f32 to vector<8x4xf32>
    %710 = arith.mulf %709, %708 : vector<8x4xf32>
    %711 = arith.addf %600, %710 : vector<8x4xf32>
    %712 = arith.addf %653, %680 : vector<8x4xf32>
    %713 = vector.broadcast %20 : f32 to vector<8x4xf32>
    %714 = arith.mulf %713, %712 : vector<8x4xf32>
    %715 = arith.addf %711, %714 : vector<8x4xf32>
    %c6_i32 = arith.constant 6 : i32
    %716 = arith.addf %602, %22 : vector<1x32xf32>
    %717 = arith.addf %716, %22 : vector<1x32xf32>
    %718 = arith.truncf %715 : vector<8x4xf32> to vector<8x4xbf16>
    %cst_190 = arith.constant dense<0.000000e+00> : vector<8x32xf32>
    %719 = tpu.matmul %718, %1, %cst_190 {dimension_numbers = #tpu.dot_dimension_numbers<[1], [0], [0], [1], [0, 0, 1, 1], [], []>} : vector<8x4xbf16>, vector<4x32xbf16>, vector<8x32xf32> -> vector<8x32xf32>
    %720 = vector.broadcast %602 : vector<1x32xf32> to vector<8x32xf32>
    %721 = arith.addf %719, %720 : vector<8x32xf32>
    %cst_191 = arith.constant 0.000000e+00 : f32
    %722 = vector.broadcast %cst_191 : f32 to vector<8x32xf32>
    %723 = arith.cmpf ogt, %721, %722 : vector<8x32xf32>
    %724 = math.exp %721 : vector<8x32xf32>
    %cst_192 = arith.constant 1.000000e+00 : f32
    %725 = vector.broadcast %cst_192 : f32 to vector<8x32xf32>
    %726 = arith.subf %724, %725 : vector<8x32xf32>
    %727 = arith.select %723, %721, %726 : vector<8x32xi1>, vector<8x32xf32>
    %728 = arith.truncf %727 : vector<8x32xf32> to vector<8x32xbf16>
    %cst_193 = arith.constant dense<0.000000e+00> : vector<8x32xf32>
    %729 = tpu.matmul %728, %3, %cst_193 {dimension_numbers = #tpu.dot_dimension_numbers<[1], [0], [0], [1], [0, 0, 1, 1], [], []>} : vector<8x32xbf16>, vector<32x32xbf16>, vector<8x32xf32> -> vector<8x32xf32>
    %730 = vector.broadcast %8 : vector<1x32xf32> to vector<8x32xf32>
    %731 = arith.addf %729, %730 : vector<8x32xf32>
    %cst_194 = arith.constant 0.000000e+00 : f32
    %732 = vector.broadcast %cst_194 : f32 to vector<8x32xf32>
    %733 = arith.cmpf ogt, %731, %732 : vector<8x32xf32>
    %734 = math.exp %731 : vector<8x32xf32>
    %cst_195 = arith.constant 1.000000e+00 : f32
    %735 = vector.broadcast %cst_195 : f32 to vector<8x32xf32>
    %736 = arith.subf %734, %735 : vector<8x32xf32>
    %737 = arith.select %733, %731, %736 : vector<8x32xi1>, vector<8x32xf32>
    %738 = arith.truncf %737 : vector<8x32xf32> to vector<8x32xbf16>
    %cst_196 = arith.constant dense<0.000000e+00> : vector<8x4xf32>
    %739 = tpu.matmul %738, %5, %cst_196 {dimension_numbers = #tpu.dot_dimension_numbers<[1], [0], [0], [1], [0, 0, 1, 1], [], []>} : vector<8x32xbf16>, vector<32x4xbf16>, vector<8x4xf32> -> vector<8x4xf32>
    %740 = vector.broadcast %9 : vector<1x4xf32> to vector<8x4xf32>
    %741 = arith.addf %739, %740 : vector<8x4xf32>
    %742 = vector.broadcast %18 : f32 to vector<8x4xf32>
    %743 = arith.mulf %742, %741 : vector<8x4xf32>
    %744 = arith.addf %715, %743 : vector<8x4xf32>
    %745 = arith.truncf %744 : vector<8x4xf32> to vector<8x4xbf16>
    %cst_197 = arith.constant dense<0.000000e+00> : vector<8x32xf32>
    %746 = tpu.matmul %745, %1, %cst_197 {dimension_numbers = #tpu.dot_dimension_numbers<[1], [0], [0], [1], [0, 0, 1, 1], [], []>} : vector<8x4xbf16>, vector<4x32xbf16>, vector<8x32xf32> -> vector<8x32xf32>
    %747 = vector.broadcast %716 : vector<1x32xf32> to vector<8x32xf32>
    %748 = arith.addf %746, %747 : vector<8x32xf32>
    %cst_198 = arith.constant 0.000000e+00 : f32
    %749 = vector.broadcast %cst_198 : f32 to vector<8x32xf32>
    %750 = arith.cmpf ogt, %748, %749 : vector<8x32xf32>
    %751 = math.exp %748 : vector<8x32xf32>
    %cst_199 = arith.constant 1.000000e+00 : f32
    %752 = vector.broadcast %cst_199 : f32 to vector<8x32xf32>
    %753 = arith.subf %751, %752 : vector<8x32xf32>
    %754 = arith.select %750, %748, %753 : vector<8x32xi1>, vector<8x32xf32>
    %755 = arith.truncf %754 : vector<8x32xf32> to vector<8x32xbf16>
    %cst_200 = arith.constant dense<0.000000e+00> : vector<8x32xf32>
    %756 = tpu.matmul %755, %3, %cst_200 {dimension_numbers = #tpu.dot_dimension_numbers<[1], [0], [0], [1], [0, 0, 1, 1], [], []>} : vector<8x32xbf16>, vector<32x32xbf16>, vector<8x32xf32> -> vector<8x32xf32>
    %757 = vector.broadcast %8 : vector<1x32xf32> to vector<8x32xf32>
    %758 = arith.addf %756, %757 : vector<8x32xf32>
    %cst_201 = arith.constant 0.000000e+00 : f32
    %759 = vector.broadcast %cst_201 : f32 to vector<8x32xf32>
    %760 = arith.cmpf ogt, %758, %759 : vector<8x32xf32>
    %761 = math.exp %758 : vector<8x32xf32>
    %cst_202 = arith.constant 1.000000e+00 : f32
    %762 = vector.broadcast %cst_202 : f32 to vector<8x32xf32>
    %763 = arith.subf %761, %762 : vector<8x32xf32>
    %764 = arith.select %760, %758, %763 : vector<8x32xi1>, vector<8x32xf32>
    %765 = arith.truncf %764 : vector<8x32xf32> to vector<8x32xbf16>
    %cst_203 = arith.constant dense<0.000000e+00> : vector<8x4xf32>
    %766 = tpu.matmul %765, %5, %cst_203 {dimension_numbers = #tpu.dot_dimension_numbers<[1], [0], [0], [1], [0, 0, 1, 1], [], []>} : vector<8x32xbf16>, vector<32x4xbf16>, vector<8x4xf32> -> vector<8x4xf32>
    %767 = vector.broadcast %9 : vector<1x4xf32> to vector<8x4xf32>
    %768 = arith.addf %766, %767 : vector<8x4xf32>
    %769 = vector.broadcast %18 : f32 to vector<8x4xf32>
    %770 = arith.mulf %769, %768 : vector<8x4xf32>
    %771 = arith.addf %715, %770 : vector<8x4xf32>
    %772 = arith.truncf %771 : vector<8x4xf32> to vector<8x4xbf16>
    %cst_204 = arith.constant dense<0.000000e+00> : vector<8x32xf32>
    %773 = tpu.matmul %772, %1, %cst_204 {dimension_numbers = #tpu.dot_dimension_numbers<[1], [0], [0], [1], [0, 0, 1, 1], [], []>} : vector<8x4xbf16>, vector<4x32xbf16>, vector<8x32xf32> -> vector<8x32xf32>
    %774 = vector.broadcast %716 : vector<1x32xf32> to vector<8x32xf32>
    %775 = arith.addf %773, %774 : vector<8x32xf32>
    %cst_205 = arith.constant 0.000000e+00 : f32
    %776 = vector.broadcast %cst_205 : f32 to vector<8x32xf32>
    %777 = arith.cmpf ogt, %775, %776 : vector<8x32xf32>
    %778 = math.exp %775 : vector<8x32xf32>
    %cst_206 = arith.constant 1.000000e+00 : f32
    %779 = vector.broadcast %cst_206 : f32 to vector<8x32xf32>
    %780 = arith.subf %778, %779 : vector<8x32xf32>
    %781 = arith.select %777, %775, %780 : vector<8x32xi1>, vector<8x32xf32>
    %782 = arith.truncf %781 : vector<8x32xf32> to vector<8x32xbf16>
    %cst_207 = arith.constant dense<0.000000e+00> : vector<8x32xf32>
    %783 = tpu.matmul %782, %3, %cst_207 {dimension_numbers = #tpu.dot_dimension_numbers<[1], [0], [0], [1], [0, 0, 1, 1], [], []>} : vector<8x32xbf16>, vector<32x32xbf16>, vector<8x32xf32> -> vector<8x32xf32>
    %784 = vector.broadcast %8 : vector<1x32xf32> to vector<8x32xf32>
    %785 = arith.addf %783, %784 : vector<8x32xf32>
    %cst_208 = arith.constant 0.000000e+00 : f32
    %786 = vector.broadcast %cst_208 : f32 to vector<8x32xf32>
    %787 = arith.cmpf ogt, %785, %786 : vector<8x32xf32>
    %788 = math.exp %785 : vector<8x32xf32>
    %cst_209 = arith.constant 1.000000e+00 : f32
    %789 = vector.broadcast %cst_209 : f32 to vector<8x32xf32>
    %790 = arith.subf %788, %789 : vector<8x32xf32>
    %791 = arith.select %787, %785, %790 : vector<8x32xi1>, vector<8x32xf32>
    %792 = arith.truncf %791 : vector<8x32xf32> to vector<8x32xbf16>
    %cst_210 = arith.constant dense<0.000000e+00> : vector<8x4xf32>
    %793 = tpu.matmul %792, %5, %cst_210 {dimension_numbers = #tpu.dot_dimension_numbers<[1], [0], [0], [1], [0, 0, 1, 1], [], []>} : vector<8x32xbf16>, vector<32x4xbf16>, vector<8x4xf32> -> vector<8x4xf32>
    %794 = vector.broadcast %9 : vector<1x4xf32> to vector<8x4xf32>
    %795 = arith.addf %793, %794 : vector<8x4xf32>
    %796 = vector.broadcast %17 : f32 to vector<8x4xf32>
    %797 = arith.mulf %796, %795 : vector<8x4xf32>
    %798 = arith.addf %715, %797 : vector<8x4xf32>
    %799 = arith.truncf %798 : vector<8x4xf32> to vector<8x4xbf16>
    %cst_211 = arith.constant dense<0.000000e+00> : vector<8x32xf32>
    %800 = tpu.matmul %799, %1, %cst_211 {dimension_numbers = #tpu.dot_dimension_numbers<[1], [0], [0], [1], [0, 0, 1, 1], [], []>} : vector<8x4xbf16>, vector<4x32xbf16>, vector<8x32xf32> -> vector<8x32xf32>
    %801 = vector.broadcast %717 : vector<1x32xf32> to vector<8x32xf32>
    %802 = arith.addf %800, %801 : vector<8x32xf32>
    %cst_212 = arith.constant 0.000000e+00 : f32
    %803 = vector.broadcast %cst_212 : f32 to vector<8x32xf32>
    %804 = arith.cmpf ogt, %802, %803 : vector<8x32xf32>
    %805 = math.exp %802 : vector<8x32xf32>
    %cst_213 = arith.constant 1.000000e+00 : f32
    %806 = vector.broadcast %cst_213 : f32 to vector<8x32xf32>
    %807 = arith.subf %805, %806 : vector<8x32xf32>
    %808 = arith.select %804, %802, %807 : vector<8x32xi1>, vector<8x32xf32>
    %809 = arith.truncf %808 : vector<8x32xf32> to vector<8x32xbf16>
    %cst_214 = arith.constant dense<0.000000e+00> : vector<8x32xf32>
    %810 = tpu.matmul %809, %3, %cst_214 {dimension_numbers = #tpu.dot_dimension_numbers<[1], [0], [0], [1], [0, 0, 1, 1], [], []>} : vector<8x32xbf16>, vector<32x32xbf16>, vector<8x32xf32> -> vector<8x32xf32>
    %811 = vector.broadcast %8 : vector<1x32xf32> to vector<8x32xf32>
    %812 = arith.addf %810, %811 : vector<8x32xf32>
    %cst_215 = arith.constant 0.000000e+00 : f32
    %813 = vector.broadcast %cst_215 : f32 to vector<8x32xf32>
    %814 = arith.cmpf ogt, %812, %813 : vector<8x32xf32>
    %815 = math.exp %812 : vector<8x32xf32>
    %cst_216 = arith.constant 1.000000e+00 : f32
    %816 = vector.broadcast %cst_216 : f32 to vector<8x32xf32>
    %817 = arith.subf %815, %816 : vector<8x32xf32>
    %818 = arith.select %814, %812, %817 : vector<8x32xi1>, vector<8x32xf32>
    %819 = arith.truncf %818 : vector<8x32xf32> to vector<8x32xbf16>
    %cst_217 = arith.constant dense<0.000000e+00> : vector<8x4xf32>
    %820 = tpu.matmul %819, %5, %cst_217 {dimension_numbers = #tpu.dot_dimension_numbers<[1], [0], [0], [1], [0, 0, 1, 1], [], []>} : vector<8x32xbf16>, vector<32x4xbf16>, vector<8x4xf32> -> vector<8x4xf32>
    %821 = vector.broadcast %9 : vector<1x4xf32> to vector<8x4xf32>
    %822 = arith.addf %820, %821 : vector<8x4xf32>
    %823 = arith.addf %741, %822 : vector<8x4xf32>
    %824 = vector.broadcast %19 : f32 to vector<8x4xf32>
    %825 = arith.mulf %824, %823 : vector<8x4xf32>
    %826 = arith.addf %715, %825 : vector<8x4xf32>
    %827 = arith.addf %768, %795 : vector<8x4xf32>
    %828 = vector.broadcast %20 : f32 to vector<8x4xf32>
    %829 = arith.mulf %828, %827 : vector<8x4xf32>
    %830 = arith.addf %826, %829 : vector<8x4xf32>
    %c7_i32 = arith.constant 7 : i32
    %831 = arith.addf %717, %22 : vector<1x32xf32>
    %832 = arith.addf %831, %22 : vector<1x32xf32>
    %833 = arith.truncf %830 : vector<8x4xf32> to vector<8x4xbf16>
    %cst_218 = arith.constant dense<0.000000e+00> : vector<8x32xf32>
    %834 = tpu.matmul %833, %1, %cst_218 {dimension_numbers = #tpu.dot_dimension_numbers<[1], [0], [0], [1], [0, 0, 1, 1], [], []>} : vector<8x4xbf16>, vector<4x32xbf16>, vector<8x32xf32> -> vector<8x32xf32>
    %835 = vector.broadcast %717 : vector<1x32xf32> to vector<8x32xf32>
    %836 = arith.addf %834, %835 : vector<8x32xf32>
    %cst_219 = arith.constant 0.000000e+00 : f32
    %837 = vector.broadcast %cst_219 : f32 to vector<8x32xf32>
    %838 = arith.cmpf ogt, %836, %837 : vector<8x32xf32>
    %839 = math.exp %836 : vector<8x32xf32>
    %cst_220 = arith.constant 1.000000e+00 : f32
    %840 = vector.broadcast %cst_220 : f32 to vector<8x32xf32>
    %841 = arith.subf %839, %840 : vector<8x32xf32>
    %842 = arith.select %838, %836, %841 : vector<8x32xi1>, vector<8x32xf32>
    %843 = arith.truncf %842 : vector<8x32xf32> to vector<8x32xbf16>
    %cst_221 = arith.constant dense<0.000000e+00> : vector<8x32xf32>
    %844 = tpu.matmul %843, %3, %cst_221 {dimension_numbers = #tpu.dot_dimension_numbers<[1], [0], [0], [1], [0, 0, 1, 1], [], []>} : vector<8x32xbf16>, vector<32x32xbf16>, vector<8x32xf32> -> vector<8x32xf32>
    %845 = vector.broadcast %8 : vector<1x32xf32> to vector<8x32xf32>
    %846 = arith.addf %844, %845 : vector<8x32xf32>
    %cst_222 = arith.constant 0.000000e+00 : f32
    %847 = vector.broadcast %cst_222 : f32 to vector<8x32xf32>
    %848 = arith.cmpf ogt, %846, %847 : vector<8x32xf32>
    %849 = math.exp %846 : vector<8x32xf32>
    %cst_223 = arith.constant 1.000000e+00 : f32
    %850 = vector.broadcast %cst_223 : f32 to vector<8x32xf32>
    %851 = arith.subf %849, %850 : vector<8x32xf32>
    %852 = arith.select %848, %846, %851 : vector<8x32xi1>, vector<8x32xf32>
    %853 = arith.truncf %852 : vector<8x32xf32> to vector<8x32xbf16>
    %cst_224 = arith.constant dense<0.000000e+00> : vector<8x4xf32>
    %854 = tpu.matmul %853, %5, %cst_224 {dimension_numbers = #tpu.dot_dimension_numbers<[1], [0], [0], [1], [0, 0, 1, 1], [], []>} : vector<8x32xbf16>, vector<32x4xbf16>, vector<8x4xf32> -> vector<8x4xf32>
    %855 = vector.broadcast %9 : vector<1x4xf32> to vector<8x4xf32>
    %856 = arith.addf %854, %855 : vector<8x4xf32>
    %857 = vector.broadcast %18 : f32 to vector<8x4xf32>
    %858 = arith.mulf %857, %856 : vector<8x4xf32>
    %859 = arith.addf %830, %858 : vector<8x4xf32>
    %860 = arith.truncf %859 : vector<8x4xf32> to vector<8x4xbf16>
    %cst_225 = arith.constant dense<0.000000e+00> : vector<8x32xf32>
    %861 = tpu.matmul %860, %1, %cst_225 {dimension_numbers = #tpu.dot_dimension_numbers<[1], [0], [0], [1], [0, 0, 1, 1], [], []>} : vector<8x4xbf16>, vector<4x32xbf16>, vector<8x32xf32> -> vector<8x32xf32>
    %862 = vector.broadcast %831 : vector<1x32xf32> to vector<8x32xf32>
    %863 = arith.addf %861, %862 : vector<8x32xf32>
    %cst_226 = arith.constant 0.000000e+00 : f32
    %864 = vector.broadcast %cst_226 : f32 to vector<8x32xf32>
    %865 = arith.cmpf ogt, %863, %864 : vector<8x32xf32>
    %866 = math.exp %863 : vector<8x32xf32>
    %cst_227 = arith.constant 1.000000e+00 : f32
    %867 = vector.broadcast %cst_227 : f32 to vector<8x32xf32>
    %868 = arith.subf %866, %867 : vector<8x32xf32>
    %869 = arith.select %865, %863, %868 : vector<8x32xi1>, vector<8x32xf32>
    %870 = arith.truncf %869 : vector<8x32xf32> to vector<8x32xbf16>
    %cst_228 = arith.constant dense<0.000000e+00> : vector<8x32xf32>
    %871 = tpu.matmul %870, %3, %cst_228 {dimension_numbers = #tpu.dot_dimension_numbers<[1], [0], [0], [1], [0, 0, 1, 1], [], []>} : vector<8x32xbf16>, vector<32x32xbf16>, vector<8x32xf32> -> vector<8x32xf32>
    %872 = vector.broadcast %8 : vector<1x32xf32> to vector<8x32xf32>
    %873 = arith.addf %871, %872 : vector<8x32xf32>
    %cst_229 = arith.constant 0.000000e+00 : f32
    %874 = vector.broadcast %cst_229 : f32 to vector<8x32xf32>
    %875 = arith.cmpf ogt, %873, %874 : vector<8x32xf32>
    %876 = math.exp %873 : vector<8x32xf32>
    %cst_230 = arith.constant 1.000000e+00 : f32
    %877 = vector.broadcast %cst_230 : f32 to vector<8x32xf32>
    %878 = arith.subf %876, %877 : vector<8x32xf32>
    %879 = arith.select %875, %873, %878 : vector<8x32xi1>, vector<8x32xf32>
    %880 = arith.truncf %879 : vector<8x32xf32> to vector<8x32xbf16>
    %cst_231 = arith.constant dense<0.000000e+00> : vector<8x4xf32>
    %881 = tpu.matmul %880, %5, %cst_231 {dimension_numbers = #tpu.dot_dimension_numbers<[1], [0], [0], [1], [0, 0, 1, 1], [], []>} : vector<8x32xbf16>, vector<32x4xbf16>, vector<8x4xf32> -> vector<8x4xf32>
    %882 = vector.broadcast %9 : vector<1x4xf32> to vector<8x4xf32>
    %883 = arith.addf %881, %882 : vector<8x4xf32>
    %884 = vector.broadcast %18 : f32 to vector<8x4xf32>
    %885 = arith.mulf %884, %883 : vector<8x4xf32>
    %886 = arith.addf %830, %885 : vector<8x4xf32>
    %887 = arith.truncf %886 : vector<8x4xf32> to vector<8x4xbf16>
    %cst_232 = arith.constant dense<0.000000e+00> : vector<8x32xf32>
    %888 = tpu.matmul %887, %1, %cst_232 {dimension_numbers = #tpu.dot_dimension_numbers<[1], [0], [0], [1], [0, 0, 1, 1], [], []>} : vector<8x4xbf16>, vector<4x32xbf16>, vector<8x32xf32> -> vector<8x32xf32>
    %889 = vector.broadcast %831 : vector<1x32xf32> to vector<8x32xf32>
    %890 = arith.addf %888, %889 : vector<8x32xf32>
    %cst_233 = arith.constant 0.000000e+00 : f32
    %891 = vector.broadcast %cst_233 : f32 to vector<8x32xf32>
    %892 = arith.cmpf ogt, %890, %891 : vector<8x32xf32>
    %893 = math.exp %890 : vector<8x32xf32>
    %cst_234 = arith.constant 1.000000e+00 : f32
    %894 = vector.broadcast %cst_234 : f32 to vector<8x32xf32>
    %895 = arith.subf %893, %894 : vector<8x32xf32>
    %896 = arith.select %892, %890, %895 : vector<8x32xi1>, vector<8x32xf32>
    %897 = arith.truncf %896 : vector<8x32xf32> to vector<8x32xbf16>
    %cst_235 = arith.constant dense<0.000000e+00> : vector<8x32xf32>
    %898 = tpu.matmul %897, %3, %cst_235 {dimension_numbers = #tpu.dot_dimension_numbers<[1], [0], [0], [1], [0, 0, 1, 1], [], []>} : vector<8x32xbf16>, vector<32x32xbf16>, vector<8x32xf32> -> vector<8x32xf32>
    %899 = vector.broadcast %8 : vector<1x32xf32> to vector<8x32xf32>
    %900 = arith.addf %898, %899 : vector<8x32xf32>
    %cst_236 = arith.constant 0.000000e+00 : f32
    %901 = vector.broadcast %cst_236 : f32 to vector<8x32xf32>
    %902 = arith.cmpf ogt, %900, %901 : vector<8x32xf32>
    %903 = math.exp %900 : vector<8x32xf32>
    %cst_237 = arith.constant 1.000000e+00 : f32
    %904 = vector.broadcast %cst_237 : f32 to vector<8x32xf32>
    %905 = arith.subf %903, %904 : vector<8x32xf32>
    %906 = arith.select %902, %900, %905 : vector<8x32xi1>, vector<8x32xf32>
    %907 = arith.truncf %906 : vector<8x32xf32> to vector<8x32xbf16>
    %cst_238 = arith.constant dense<0.000000e+00> : vector<8x4xf32>
    %908 = tpu.matmul %907, %5, %cst_238 {dimension_numbers = #tpu.dot_dimension_numbers<[1], [0], [0], [1], [0, 0, 1, 1], [], []>} : vector<8x32xbf16>, vector<32x4xbf16>, vector<8x4xf32> -> vector<8x4xf32>
    %909 = vector.broadcast %9 : vector<1x4xf32> to vector<8x4xf32>
    %910 = arith.addf %908, %909 : vector<8x4xf32>
    %911 = vector.broadcast %17 : f32 to vector<8x4xf32>
    %912 = arith.mulf %911, %910 : vector<8x4xf32>
    %913 = arith.addf %830, %912 : vector<8x4xf32>
    %914 = arith.truncf %913 : vector<8x4xf32> to vector<8x4xbf16>
    %cst_239 = arith.constant dense<0.000000e+00> : vector<8x32xf32>
    %915 = tpu.matmul %914, %1, %cst_239 {dimension_numbers = #tpu.dot_dimension_numbers<[1], [0], [0], [1], [0, 0, 1, 1], [], []>} : vector<8x4xbf16>, vector<4x32xbf16>, vector<8x32xf32> -> vector<8x32xf32>
    %916 = vector.broadcast %832 : vector<1x32xf32> to vector<8x32xf32>
    %917 = arith.addf %915, %916 : vector<8x32xf32>
    %cst_240 = arith.constant 0.000000e+00 : f32
    %918 = vector.broadcast %cst_240 : f32 to vector<8x32xf32>
    %919 = arith.cmpf ogt, %917, %918 : vector<8x32xf32>
    %920 = math.exp %917 : vector<8x32xf32>
    %cst_241 = arith.constant 1.000000e+00 : f32
    %921 = vector.broadcast %cst_241 : f32 to vector<8x32xf32>
    %922 = arith.subf %920, %921 : vector<8x32xf32>
    %923 = arith.select %919, %917, %922 : vector<8x32xi1>, vector<8x32xf32>
    %924 = arith.truncf %923 : vector<8x32xf32> to vector<8x32xbf16>
    %cst_242 = arith.constant dense<0.000000e+00> : vector<8x32xf32>
    %925 = tpu.matmul %924, %3, %cst_242 {dimension_numbers = #tpu.dot_dimension_numbers<[1], [0], [0], [1], [0, 0, 1, 1], [], []>} : vector<8x32xbf16>, vector<32x32xbf16>, vector<8x32xf32> -> vector<8x32xf32>
    %926 = vector.broadcast %8 : vector<1x32xf32> to vector<8x32xf32>
    %927 = arith.addf %925, %926 : vector<8x32xf32>
    %cst_243 = arith.constant 0.000000e+00 : f32
    %928 = vector.broadcast %cst_243 : f32 to vector<8x32xf32>
    %929 = arith.cmpf ogt, %927, %928 : vector<8x32xf32>
    %930 = math.exp %927 : vector<8x32xf32>
    %cst_244 = arith.constant 1.000000e+00 : f32
    %931 = vector.broadcast %cst_244 : f32 to vector<8x32xf32>
    %932 = arith.subf %930, %931 : vector<8x32xf32>
    %933 = arith.select %929, %927, %932 : vector<8x32xi1>, vector<8x32xf32>
    %934 = arith.truncf %933 : vector<8x32xf32> to vector<8x32xbf16>
    %cst_245 = arith.constant dense<0.000000e+00> : vector<8x4xf32>
    %935 = tpu.matmul %934, %5, %cst_245 {dimension_numbers = #tpu.dot_dimension_numbers<[1], [0], [0], [1], [0, 0, 1, 1], [], []>} : vector<8x32xbf16>, vector<32x4xbf16>, vector<8x4xf32> -> vector<8x4xf32>
    %936 = vector.broadcast %9 : vector<1x4xf32> to vector<8x4xf32>
    %937 = arith.addf %935, %936 : vector<8x4xf32>
    %938 = arith.addf %856, %937 : vector<8x4xf32>
    %939 = vector.broadcast %19 : f32 to vector<8x4xf32>
    %940 = arith.mulf %939, %938 : vector<8x4xf32>
    %941 = arith.addf %830, %940 : vector<8x4xf32>
    %942 = arith.addf %883, %910 : vector<8x4xf32>
    %943 = vector.broadcast %20 : f32 to vector<8x4xf32>
    %944 = arith.mulf %943, %942 : vector<8x4xf32>
    %945 = arith.addf %941, %944 : vector<8x4xf32>
    %c8_i32 = arith.constant 8 : i32
    %946 = arith.addf %832, %22 : vector<1x32xf32>
    %947 = arith.addf %946, %22 : vector<1x32xf32>
    %948 = arith.truncf %945 : vector<8x4xf32> to vector<8x4xbf16>
    %cst_246 = arith.constant dense<0.000000e+00> : vector<8x32xf32>
    %949 = tpu.matmul %948, %1, %cst_246 {dimension_numbers = #tpu.dot_dimension_numbers<[1], [0], [0], [1], [0, 0, 1, 1], [], []>} : vector<8x4xbf16>, vector<4x32xbf16>, vector<8x32xf32> -> vector<8x32xf32>
    %950 = vector.broadcast %832 : vector<1x32xf32> to vector<8x32xf32>
    %951 = arith.addf %949, %950 : vector<8x32xf32>
    %cst_247 = arith.constant 0.000000e+00 : f32
    %952 = vector.broadcast %cst_247 : f32 to vector<8x32xf32>
    %953 = arith.cmpf ogt, %951, %952 : vector<8x32xf32>
    %954 = math.exp %951 : vector<8x32xf32>
    %cst_248 = arith.constant 1.000000e+00 : f32
    %955 = vector.broadcast %cst_248 : f32 to vector<8x32xf32>
    %956 = arith.subf %954, %955 : vector<8x32xf32>
    %957 = arith.select %953, %951, %956 : vector<8x32xi1>, vector<8x32xf32>
    %958 = arith.truncf %957 : vector<8x32xf32> to vector<8x32xbf16>
    %cst_249 = arith.constant dense<0.000000e+00> : vector<8x32xf32>
    %959 = tpu.matmul %958, %3, %cst_249 {dimension_numbers = #tpu.dot_dimension_numbers<[1], [0], [0], [1], [0, 0, 1, 1], [], []>} : vector<8x32xbf16>, vector<32x32xbf16>, vector<8x32xf32> -> vector<8x32xf32>
    %960 = vector.broadcast %8 : vector<1x32xf32> to vector<8x32xf32>
    %961 = arith.addf %959, %960 : vector<8x32xf32>
    %cst_250 = arith.constant 0.000000e+00 : f32
    %962 = vector.broadcast %cst_250 : f32 to vector<8x32xf32>
    %963 = arith.cmpf ogt, %961, %962 : vector<8x32xf32>
    %964 = math.exp %961 : vector<8x32xf32>
    %cst_251 = arith.constant 1.000000e+00 : f32
    %965 = vector.broadcast %cst_251 : f32 to vector<8x32xf32>
    %966 = arith.subf %964, %965 : vector<8x32xf32>
    %967 = arith.select %963, %961, %966 : vector<8x32xi1>, vector<8x32xf32>
    %968 = arith.truncf %967 : vector<8x32xf32> to vector<8x32xbf16>
    %cst_252 = arith.constant dense<0.000000e+00> : vector<8x4xf32>
    %969 = tpu.matmul %968, %5, %cst_252 {dimension_numbers = #tpu.dot_dimension_numbers<[1], [0], [0], [1], [0, 0, 1, 1], [], []>} : vector<8x32xbf16>, vector<32x4xbf16>, vector<8x4xf32> -> vector<8x4xf32>
    %970 = vector.broadcast %9 : vector<1x4xf32> to vector<8x4xf32>
    %971 = arith.addf %969, %970 : vector<8x4xf32>
    %972 = vector.broadcast %18 : f32 to vector<8x4xf32>
    %973 = arith.mulf %972, %971 : vector<8x4xf32>
    %974 = arith.addf %945, %973 : vector<8x4xf32>
    %975 = arith.truncf %974 : vector<8x4xf32> to vector<8x4xbf16>
    %cst_253 = arith.constant dense<0.000000e+00> : vector<8x32xf32>
    %976 = tpu.matmul %975, %1, %cst_253 {dimension_numbers = #tpu.dot_dimension_numbers<[1], [0], [0], [1], [0, 0, 1, 1], [], []>} : vector<8x4xbf16>, vector<4x32xbf16>, vector<8x32xf32> -> vector<8x32xf32>
    %977 = vector.broadcast %946 : vector<1x32xf32> to vector<8x32xf32>
    %978 = arith.addf %976, %977 : vector<8x32xf32>
    %cst_254 = arith.constant 0.000000e+00 : f32
    %979 = vector.broadcast %cst_254 : f32 to vector<8x32xf32>
    %980 = arith.cmpf ogt, %978, %979 : vector<8x32xf32>
    %981 = math.exp %978 : vector<8x32xf32>
    %cst_255 = arith.constant 1.000000e+00 : f32
    %982 = vector.broadcast %cst_255 : f32 to vector<8x32xf32>
    %983 = arith.subf %981, %982 : vector<8x32xf32>
    %984 = arith.select %980, %978, %983 : vector<8x32xi1>, vector<8x32xf32>
    %985 = arith.truncf %984 : vector<8x32xf32> to vector<8x32xbf16>
    %cst_256 = arith.constant dense<0.000000e+00> : vector<8x32xf32>
    %986 = tpu.matmul %985, %3, %cst_256 {dimension_numbers = #tpu.dot_dimension_numbers<[1], [0], [0], [1], [0, 0, 1, 1], [], []>} : vector<8x32xbf16>, vector<32x32xbf16>, vector<8x32xf32> -> vector<8x32xf32>
    %987 = vector.broadcast %8 : vector<1x32xf32> to vector<8x32xf32>
    %988 = arith.addf %986, %987 : vector<8x32xf32>
    %cst_257 = arith.constant 0.000000e+00 : f32
    %989 = vector.broadcast %cst_257 : f32 to vector<8x32xf32>
    %990 = arith.cmpf ogt, %988, %989 : vector<8x32xf32>
    %991 = math.exp %988 : vector<8x32xf32>
    %cst_258 = arith.constant 1.000000e+00 : f32
    %992 = vector.broadcast %cst_258 : f32 to vector<8x32xf32>
    %993 = arith.subf %991, %992 : vector<8x32xf32>
    %994 = arith.select %990, %988, %993 : vector<8x32xi1>, vector<8x32xf32>
    %995 = arith.truncf %994 : vector<8x32xf32> to vector<8x32xbf16>
    %cst_259 = arith.constant dense<0.000000e+00> : vector<8x4xf32>
    %996 = tpu.matmul %995, %5, %cst_259 {dimension_numbers = #tpu.dot_dimension_numbers<[1], [0], [0], [1], [0, 0, 1, 1], [], []>} : vector<8x32xbf16>, vector<32x4xbf16>, vector<8x4xf32> -> vector<8x4xf32>
    %997 = vector.broadcast %9 : vector<1x4xf32> to vector<8x4xf32>
    %998 = arith.addf %996, %997 : vector<8x4xf32>
    %999 = vector.broadcast %18 : f32 to vector<8x4xf32>
    %1000 = arith.mulf %999, %998 : vector<8x4xf32>
    %1001 = arith.addf %945, %1000 : vector<8x4xf32>
    %1002 = arith.truncf %1001 : vector<8x4xf32> to vector<8x4xbf16>
    %cst_260 = arith.constant dense<0.000000e+00> : vector<8x32xf32>
    %1003 = tpu.matmul %1002, %1, %cst_260 {dimension_numbers = #tpu.dot_dimension_numbers<[1], [0], [0], [1], [0, 0, 1, 1], [], []>} : vector<8x4xbf16>, vector<4x32xbf16>, vector<8x32xf32> -> vector<8x32xf32>
    %1004 = vector.broadcast %946 : vector<1x32xf32> to vector<8x32xf32>
    %1005 = arith.addf %1003, %1004 : vector<8x32xf32>
    %cst_261 = arith.constant 0.000000e+00 : f32
    %1006 = vector.broadcast %cst_261 : f32 to vector<8x32xf32>
    %1007 = arith.cmpf ogt, %1005, %1006 : vector<8x32xf32>
    %1008 = math.exp %1005 : vector<8x32xf32>
    %cst_262 = arith.constant 1.000000e+00 : f32
    %1009 = vector.broadcast %cst_262 : f32 to vector<8x32xf32>
    %1010 = arith.subf %1008, %1009 : vector<8x32xf32>
    %1011 = arith.select %1007, %1005, %1010 : vector<8x32xi1>, vector<8x32xf32>
    %1012 = arith.truncf %1011 : vector<8x32xf32> to vector<8x32xbf16>
    %cst_263 = arith.constant dense<0.000000e+00> : vector<8x32xf32>
    %1013 = tpu.matmul %1012, %3, %cst_263 {dimension_numbers = #tpu.dot_dimension_numbers<[1], [0], [0], [1], [0, 0, 1, 1], [], []>} : vector<8x32xbf16>, vector<32x32xbf16>, vector<8x32xf32> -> vector<8x32xf32>
    %1014 = vector.broadcast %8 : vector<1x32xf32> to vector<8x32xf32>
    %1015 = arith.addf %1013, %1014 : vector<8x32xf32>
    %cst_264 = arith.constant 0.000000e+00 : f32
    %1016 = vector.broadcast %cst_264 : f32 to vector<8x32xf32>
    %1017 = arith.cmpf ogt, %1015, %1016 : vector<8x32xf32>
    %1018 = math.exp %1015 : vector<8x32xf32>
    %cst_265 = arith.constant 1.000000e+00 : f32
    %1019 = vector.broadcast %cst_265 : f32 to vector<8x32xf32>
    %1020 = arith.subf %1018, %1019 : vector<8x32xf32>
    %1021 = arith.select %1017, %1015, %1020 : vector<8x32xi1>, vector<8x32xf32>
    %1022 = arith.truncf %1021 : vector<8x32xf32> to vector<8x32xbf16>
    %cst_266 = arith.constant dense<0.000000e+00> : vector<8x4xf32>
    %1023 = tpu.matmul %1022, %5, %cst_266 {dimension_numbers = #tpu.dot_dimension_numbers<[1], [0], [0], [1], [0, 0, 1, 1], [], []>} : vector<8x32xbf16>, vector<32x4xbf16>, vector<8x4xf32> -> vector<8x4xf32>
    %1024 = vector.broadcast %9 : vector<1x4xf32> to vector<8x4xf32>
    %1025 = arith.addf %1023, %1024 : vector<8x4xf32>
    %1026 = vector.broadcast %17 : f32 to vector<8x4xf32>
    %1027 = arith.mulf %1026, %1025 : vector<8x4xf32>
    %1028 = arith.addf %945, %1027 : vector<8x4xf32>
    %1029 = arith.truncf %1028 : vector<8x4xf32> to vector<8x4xbf16>
    %cst_267 = arith.constant dense<0.000000e+00> : vector<8x32xf32>
    %1030 = tpu.matmul %1029, %1, %cst_267 {dimension_numbers = #tpu.dot_dimension_numbers<[1], [0], [0], [1], [0, 0, 1, 1], [], []>} : vector<8x4xbf16>, vector<4x32xbf16>, vector<8x32xf32> -> vector<8x32xf32>
    %1031 = vector.broadcast %947 : vector<1x32xf32> to vector<8x32xf32>
    %1032 = arith.addf %1030, %1031 : vector<8x32xf32>
    %cst_268 = arith.constant 0.000000e+00 : f32
    %1033 = vector.broadcast %cst_268 : f32 to vector<8x32xf32>
    %1034 = arith.cmpf ogt, %1032, %1033 : vector<8x32xf32>
    %1035 = math.exp %1032 : vector<8x32xf32>
    %cst_269 = arith.constant 1.000000e+00 : f32
    %1036 = vector.broadcast %cst_269 : f32 to vector<8x32xf32>
    %1037 = arith.subf %1035, %1036 : vector<8x32xf32>
    %1038 = arith.select %1034, %1032, %1037 : vector<8x32xi1>, vector<8x32xf32>
    %1039 = arith.truncf %1038 : vector<8x32xf32> to vector<8x32xbf16>
    %cst_270 = arith.constant dense<0.000000e+00> : vector<8x32xf32>
    %1040 = tpu.matmul %1039, %3, %cst_270 {dimension_numbers = #tpu.dot_dimension_numbers<[1], [0], [0], [1], [0, 0, 1, 1], [], []>} : vector<8x32xbf16>, vector<32x32xbf16>, vector<8x32xf32> -> vector<8x32xf32>
    %1041 = vector.broadcast %8 : vector<1x32xf32> to vector<8x32xf32>
    %1042 = arith.addf %1040, %1041 : vector<8x32xf32>
    %cst_271 = arith.constant 0.000000e+00 : f32
    %1043 = vector.broadcast %cst_271 : f32 to vector<8x32xf32>
    %1044 = arith.cmpf ogt, %1042, %1043 : vector<8x32xf32>
    %1045 = math.exp %1042 : vector<8x32xf32>
    %cst_272 = arith.constant 1.000000e+00 : f32
    %1046 = vector.broadcast %cst_272 : f32 to vector<8x32xf32>
    %1047 = arith.subf %1045, %1046 : vector<8x32xf32>
    %1048 = arith.select %1044, %1042, %1047 : vector<8x32xi1>, vector<8x32xf32>
    %1049 = arith.truncf %1048 : vector<8x32xf32> to vector<8x32xbf16>
    %cst_273 = arith.constant dense<0.000000e+00> : vector<8x4xf32>
    %1050 = tpu.matmul %1049, %5, %cst_273 {dimension_numbers = #tpu.dot_dimension_numbers<[1], [0], [0], [1], [0, 0, 1, 1], [], []>} : vector<8x32xbf16>, vector<32x4xbf16>, vector<8x4xf32> -> vector<8x4xf32>
    %1051 = vector.broadcast %9 : vector<1x4xf32> to vector<8x4xf32>
    %1052 = arith.addf %1050, %1051 : vector<8x4xf32>
    %1053 = arith.addf %971, %1052 : vector<8x4xf32>
    %1054 = vector.broadcast %19 : f32 to vector<8x4xf32>
    %1055 = arith.mulf %1054, %1053 : vector<8x4xf32>
    %1056 = arith.addf %945, %1055 : vector<8x4xf32>
    %1057 = arith.addf %998, %1025 : vector<8x4xf32>
    %1058 = vector.broadcast %20 : f32 to vector<8x4xf32>
    %1059 = arith.mulf %1058, %1057 : vector<8x4xf32>
    %1060 = arith.addf %1056, %1059 : vector<8x4xf32>
    %c9_i32 = arith.constant 9 : i32
    %1061 = arith.addf %947, %22 : vector<1x32xf32>
    %1062 = arith.addf %1061, %22 : vector<1x32xf32>
    %1063 = arith.truncf %1060 : vector<8x4xf32> to vector<8x4xbf16>
    %cst_274 = arith.constant dense<0.000000e+00> : vector<8x32xf32>
    %1064 = tpu.matmul %1063, %1, %cst_274 {dimension_numbers = #tpu.dot_dimension_numbers<[1], [0], [0], [1], [0, 0, 1, 1], [], []>} : vector<8x4xbf16>, vector<4x32xbf16>, vector<8x32xf32> -> vector<8x32xf32>
    %1065 = vector.broadcast %947 : vector<1x32xf32> to vector<8x32xf32>
    %1066 = arith.addf %1064, %1065 : vector<8x32xf32>
    %cst_275 = arith.constant 0.000000e+00 : f32
    %1067 = vector.broadcast %cst_275 : f32 to vector<8x32xf32>
    %1068 = arith.cmpf ogt, %1066, %1067 : vector<8x32xf32>
    %1069 = math.exp %1066 : vector<8x32xf32>
    %cst_276 = arith.constant 1.000000e+00 : f32
    %1070 = vector.broadcast %cst_276 : f32 to vector<8x32xf32>
    %1071 = arith.subf %1069, %1070 : vector<8x32xf32>
    %1072 = arith.select %1068, %1066, %1071 : vector<8x32xi1>, vector<8x32xf32>
    %1073 = arith.truncf %1072 : vector<8x32xf32> to vector<8x32xbf16>
    %cst_277 = arith.constant dense<0.000000e+00> : vector<8x32xf32>
    %1074 = tpu.matmul %1073, %3, %cst_277 {dimension_numbers = #tpu.dot_dimension_numbers<[1], [0], [0], [1], [0, 0, 1, 1], [], []>} : vector<8x32xbf16>, vector<32x32xbf16>, vector<8x32xf32> -> vector<8x32xf32>
    %1075 = vector.broadcast %8 : vector<1x32xf32> to vector<8x32xf32>
    %1076 = arith.addf %1074, %1075 : vector<8x32xf32>
    %cst_278 = arith.constant 0.000000e+00 : f32
    %1077 = vector.broadcast %cst_278 : f32 to vector<8x32xf32>
    %1078 = arith.cmpf ogt, %1076, %1077 : vector<8x32xf32>
    %1079 = math.exp %1076 : vector<8x32xf32>
    %cst_279 = arith.constant 1.000000e+00 : f32
    %1080 = vector.broadcast %cst_279 : f32 to vector<8x32xf32>
    %1081 = arith.subf %1079, %1080 : vector<8x32xf32>
    %1082 = arith.select %1078, %1076, %1081 : vector<8x32xi1>, vector<8x32xf32>
    %1083 = arith.truncf %1082 : vector<8x32xf32> to vector<8x32xbf16>
    %cst_280 = arith.constant dense<0.000000e+00> : vector<8x4xf32>
    %1084 = tpu.matmul %1083, %5, %cst_280 {dimension_numbers = #tpu.dot_dimension_numbers<[1], [0], [0], [1], [0, 0, 1, 1], [], []>} : vector<8x32xbf16>, vector<32x4xbf16>, vector<8x4xf32> -> vector<8x4xf32>
    %1085 = vector.broadcast %9 : vector<1x4xf32> to vector<8x4xf32>
    %1086 = arith.addf %1084, %1085 : vector<8x4xf32>
    %1087 = vector.broadcast %18 : f32 to vector<8x4xf32>
    %1088 = arith.mulf %1087, %1086 : vector<8x4xf32>
    %1089 = arith.addf %1060, %1088 : vector<8x4xf32>
    %1090 = arith.truncf %1089 : vector<8x4xf32> to vector<8x4xbf16>
    %cst_281 = arith.constant dense<0.000000e+00> : vector<8x32xf32>
    %1091 = tpu.matmul %1090, %1, %cst_281 {dimension_numbers = #tpu.dot_dimension_numbers<[1], [0], [0], [1], [0, 0, 1, 1], [], []>} : vector<8x4xbf16>, vector<4x32xbf16>, vector<8x32xf32> -> vector<8x32xf32>
    %1092 = vector.broadcast %1061 : vector<1x32xf32> to vector<8x32xf32>
    %1093 = arith.addf %1091, %1092 : vector<8x32xf32>
    %cst_282 = arith.constant 0.000000e+00 : f32
    %1094 = vector.broadcast %cst_282 : f32 to vector<8x32xf32>
    %1095 = arith.cmpf ogt, %1093, %1094 : vector<8x32xf32>
    %1096 = math.exp %1093 : vector<8x32xf32>
    %cst_283 = arith.constant 1.000000e+00 : f32
    %1097 = vector.broadcast %cst_283 : f32 to vector<8x32xf32>
    %1098 = arith.subf %1096, %1097 : vector<8x32xf32>
    %1099 = arith.select %1095, %1093, %1098 : vector<8x32xi1>, vector<8x32xf32>
    %1100 = arith.truncf %1099 : vector<8x32xf32> to vector<8x32xbf16>
    %cst_284 = arith.constant dense<0.000000e+00> : vector<8x32xf32>
    %1101 = tpu.matmul %1100, %3, %cst_284 {dimension_numbers = #tpu.dot_dimension_numbers<[1], [0], [0], [1], [0, 0, 1, 1], [], []>} : vector<8x32xbf16>, vector<32x32xbf16>, vector<8x32xf32> -> vector<8x32xf32>
    %1102 = vector.broadcast %8 : vector<1x32xf32> to vector<8x32xf32>
    %1103 = arith.addf %1101, %1102 : vector<8x32xf32>
    %cst_285 = arith.constant 0.000000e+00 : f32
    %1104 = vector.broadcast %cst_285 : f32 to vector<8x32xf32>
    %1105 = arith.cmpf ogt, %1103, %1104 : vector<8x32xf32>
    %1106 = math.exp %1103 : vector<8x32xf32>
    %cst_286 = arith.constant 1.000000e+00 : f32
    %1107 = vector.broadcast %cst_286 : f32 to vector<8x32xf32>
    %1108 = arith.subf %1106, %1107 : vector<8x32xf32>
    %1109 = arith.select %1105, %1103, %1108 : vector<8x32xi1>, vector<8x32xf32>
    %1110 = arith.truncf %1109 : vector<8x32xf32> to vector<8x32xbf16>
    %cst_287 = arith.constant dense<0.000000e+00> : vector<8x4xf32>
    %1111 = tpu.matmul %1110, %5, %cst_287 {dimension_numbers = #tpu.dot_dimension_numbers<[1], [0], [0], [1], [0, 0, 1, 1], [], []>} : vector<8x32xbf16>, vector<32x4xbf16>, vector<8x4xf32> -> vector<8x4xf32>
    %1112 = vector.broadcast %9 : vector<1x4xf32> to vector<8x4xf32>
    %1113 = arith.addf %1111, %1112 : vector<8x4xf32>
    %1114 = vector.broadcast %18 : f32 to vector<8x4xf32>
    %1115 = arith.mulf %1114, %1113 : vector<8x4xf32>
    %1116 = arith.addf %1060, %1115 : vector<8x4xf32>
    %1117 = arith.truncf %1116 : vector<8x4xf32> to vector<8x4xbf16>
    %cst_288 = arith.constant dense<0.000000e+00> : vector<8x32xf32>
    %1118 = tpu.matmul %1117, %1, %cst_288 {dimension_numbers = #tpu.dot_dimension_numbers<[1], [0], [0], [1], [0, 0, 1, 1], [], []>} : vector<8x4xbf16>, vector<4x32xbf16>, vector<8x32xf32> -> vector<8x32xf32>
    %1119 = vector.broadcast %1061 : vector<1x32xf32> to vector<8x32xf32>
    %1120 = arith.addf %1118, %1119 : vector<8x32xf32>
    %cst_289 = arith.constant 0.000000e+00 : f32
    %1121 = vector.broadcast %cst_289 : f32 to vector<8x32xf32>
    %1122 = arith.cmpf ogt, %1120, %1121 : vector<8x32xf32>
    %1123 = math.exp %1120 : vector<8x32xf32>
    %cst_290 = arith.constant 1.000000e+00 : f32
    %1124 = vector.broadcast %cst_290 : f32 to vector<8x32xf32>
    %1125 = arith.subf %1123, %1124 : vector<8x32xf32>
    %1126 = arith.select %1122, %1120, %1125 : vector<8x32xi1>, vector<8x32xf32>
    %1127 = arith.truncf %1126 : vector<8x32xf32> to vector<8x32xbf16>
    %cst_291 = arith.constant dense<0.000000e+00> : vector<8x32xf32>
    %1128 = tpu.matmul %1127, %3, %cst_291 {dimension_numbers = #tpu.dot_dimension_numbers<[1], [0], [0], [1], [0, 0, 1, 1], [], []>} : vector<8x32xbf16>, vector<32x32xbf16>, vector<8x32xf32> -> vector<8x32xf32>
    %1129 = vector.broadcast %8 : vector<1x32xf32> to vector<8x32xf32>
    %1130 = arith.addf %1128, %1129 : vector<8x32xf32>
    %cst_292 = arith.constant 0.000000e+00 : f32
    %1131 = vector.broadcast %cst_292 : f32 to vector<8x32xf32>
    %1132 = arith.cmpf ogt, %1130, %1131 : vector<8x32xf32>
    %1133 = math.exp %1130 : vector<8x32xf32>
    %cst_293 = arith.constant 1.000000e+00 : f32
    %1134 = vector.broadcast %cst_293 : f32 to vector<8x32xf32>
    %1135 = arith.subf %1133, %1134 : vector<8x32xf32>
    %1136 = arith.select %1132, %1130, %1135 : vector<8x32xi1>, vector<8x32xf32>
    %1137 = arith.truncf %1136 : vector<8x32xf32> to vector<8x32xbf16>
    %cst_294 = arith.constant dense<0.000000e+00> : vector<8x4xf32>
    %1138 = tpu.matmul %1137, %5, %cst_294 {dimension_numbers = #tpu.dot_dimension_numbers<[1], [0], [0], [1], [0, 0, 1, 1], [], []>} : vector<8x32xbf16>, vector<32x4xbf16>, vector<8x4xf32> -> vector<8x4xf32>
    %1139 = vector.broadcast %9 : vector<1x4xf32> to vector<8x4xf32>
    %1140 = arith.addf %1138, %1139 : vector<8x4xf32>
    %1141 = vector.broadcast %17 : f32 to vector<8x4xf32>
    %1142 = arith.mulf %1141, %1140 : vector<8x4xf32>
    %1143 = arith.addf %1060, %1142 : vector<8x4xf32>
    %1144 = arith.truncf %1143 : vector<8x4xf32> to vector<8x4xbf16>
    %cst_295 = arith.constant dense<0.000000e+00> : vector<8x32xf32>
    %1145 = tpu.matmul %1144, %1, %cst_295 {dimension_numbers = #tpu.dot_dimension_numbers<[1], [0], [0], [1], [0, 0, 1, 1], [], []>} : vector<8x4xbf16>, vector<4x32xbf16>, vector<8x32xf32> -> vector<8x32xf32>
    %1146 = vector.broadcast %1062 : vector<1x32xf32> to vector<8x32xf32>
    %1147 = arith.addf %1145, %1146 : vector<8x32xf32>
    %cst_296 = arith.constant 0.000000e+00 : f32
    %1148 = vector.broadcast %cst_296 : f32 to vector<8x32xf32>
    %1149 = arith.cmpf ogt, %1147, %1148 : vector<8x32xf32>
    %1150 = math.exp %1147 : vector<8x32xf32>
    %cst_297 = arith.constant 1.000000e+00 : f32
    %1151 = vector.broadcast %cst_297 : f32 to vector<8x32xf32>
    %1152 = arith.subf %1150, %1151 : vector<8x32xf32>
    %1153 = arith.select %1149, %1147, %1152 : vector<8x32xi1>, vector<8x32xf32>
    %1154 = arith.truncf %1153 : vector<8x32xf32> to vector<8x32xbf16>
    %cst_298 = arith.constant dense<0.000000e+00> : vector<8x32xf32>
    %1155 = tpu.matmul %1154, %3, %cst_298 {dimension_numbers = #tpu.dot_dimension_numbers<[1], [0], [0], [1], [0, 0, 1, 1], [], []>} : vector<8x32xbf16>, vector<32x32xbf16>, vector<8x32xf32> -> vector<8x32xf32>
    %1156 = vector.broadcast %8 : vector<1x32xf32> to vector<8x32xf32>
    %1157 = arith.addf %1155, %1156 : vector<8x32xf32>
    %cst_299 = arith.constant 0.000000e+00 : f32
    %1158 = vector.broadcast %cst_299 : f32 to vector<8x32xf32>
    %1159 = arith.cmpf ogt, %1157, %1158 : vector<8x32xf32>
    %1160 = math.exp %1157 : vector<8x32xf32>
    %cst_300 = arith.constant 1.000000e+00 : f32
    %1161 = vector.broadcast %cst_300 : f32 to vector<8x32xf32>
    %1162 = arith.subf %1160, %1161 : vector<8x32xf32>
    %1163 = arith.select %1159, %1157, %1162 : vector<8x32xi1>, vector<8x32xf32>
    %1164 = arith.truncf %1163 : vector<8x32xf32> to vector<8x32xbf16>
    %cst_301 = arith.constant dense<0.000000e+00> : vector<8x4xf32>
    %1165 = tpu.matmul %1164, %5, %cst_301 {dimension_numbers = #tpu.dot_dimension_numbers<[1], [0], [0], [1], [0, 0, 1, 1], [], []>} : vector<8x32xbf16>, vector<32x4xbf16>, vector<8x4xf32> -> vector<8x4xf32>
    %1166 = vector.broadcast %9 : vector<1x4xf32> to vector<8x4xf32>
    %1167 = arith.addf %1165, %1166 : vector<8x4xf32>
    %1168 = arith.addf %1086, %1167 : vector<8x4xf32>
    %1169 = vector.broadcast %19 : f32 to vector<8x4xf32>
    %1170 = arith.mulf %1169, %1168 : vector<8x4xf32>
    %1171 = arith.addf %1060, %1170 : vector<8x4xf32>
    %1172 = arith.addf %1113, %1140 : vector<8x4xf32>
    %1173 = vector.broadcast %20 : f32 to vector<8x4xf32>
    %1174 = arith.mulf %1173, %1172 : vector<8x4xf32>
    %1175 = arith.addf %1171, %1174 : vector<8x4xf32>
    %c10_i32 = arith.constant 10 : i32
    %1176 = arith.addf %1062, %22 : vector<1x32xf32>
    %1177 = arith.addf %1176, %22 : vector<1x32xf32>
    %1178 = arith.truncf %1175 : vector<8x4xf32> to vector<8x4xbf16>
    %cst_302 = arith.constant dense<0.000000e+00> : vector<8x32xf32>
    %1179 = tpu.matmul %1178, %1, %cst_302 {dimension_numbers = #tpu.dot_dimension_numbers<[1], [0], [0], [1], [0, 0, 1, 1], [], []>} : vector<8x4xbf16>, vector<4x32xbf16>, vector<8x32xf32> -> vector<8x32xf32>
    %1180 = vector.broadcast %1062 : vector<1x32xf32> to vector<8x32xf32>
    %1181 = arith.addf %1179, %1180 : vector<8x32xf32>
    %cst_303 = arith.constant 0.000000e+00 : f32
    %1182 = vector.broadcast %cst_303 : f32 to vector<8x32xf32>
    %1183 = arith.cmpf ogt, %1181, %1182 : vector<8x32xf32>
    %1184 = math.exp %1181 : vector<8x32xf32>
    %cst_304 = arith.constant 1.000000e+00 : f32
    %1185 = vector.broadcast %cst_304 : f32 to vector<8x32xf32>
    %1186 = arith.subf %1184, %1185 : vector<8x32xf32>
    %1187 = arith.select %1183, %1181, %1186 : vector<8x32xi1>, vector<8x32xf32>
    %1188 = arith.truncf %1187 : vector<8x32xf32> to vector<8x32xbf16>
    %cst_305 = arith.constant dense<0.000000e+00> : vector<8x32xf32>
    %1189 = tpu.matmul %1188, %3, %cst_305 {dimension_numbers = #tpu.dot_dimension_numbers<[1], [0], [0], [1], [0, 0, 1, 1], [], []>} : vector<8x32xbf16>, vector<32x32xbf16>, vector<8x32xf32> -> vector<8x32xf32>
    %1190 = vector.broadcast %8 : vector<1x32xf32> to vector<8x32xf32>
    %1191 = arith.addf %1189, %1190 : vector<8x32xf32>
    %cst_306 = arith.constant 0.000000e+00 : f32
    %1192 = vector.broadcast %cst_306 : f32 to vector<8x32xf32>
    %1193 = arith.cmpf ogt, %1191, %1192 : vector<8x32xf32>
    %1194 = math.exp %1191 : vector<8x32xf32>
    %cst_307 = arith.constant 1.000000e+00 : f32
    %1195 = vector.broadcast %cst_307 : f32 to vector<8x32xf32>
    %1196 = arith.subf %1194, %1195 : vector<8x32xf32>
    %1197 = arith.select %1193, %1191, %1196 : vector<8x32xi1>, vector<8x32xf32>
    %1198 = arith.truncf %1197 : vector<8x32xf32> to vector<8x32xbf16>
    %cst_308 = arith.constant dense<0.000000e+00> : vector<8x4xf32>
    %1199 = tpu.matmul %1198, %5, %cst_308 {dimension_numbers = #tpu.dot_dimension_numbers<[1], [0], [0], [1], [0, 0, 1, 1], [], []>} : vector<8x32xbf16>, vector<32x4xbf16>, vector<8x4xf32> -> vector<8x4xf32>
    %1200 = vector.broadcast %9 : vector<1x4xf32> to vector<8x4xf32>
    %1201 = arith.addf %1199, %1200 : vector<8x4xf32>
    %1202 = vector.broadcast %18 : f32 to vector<8x4xf32>
    %1203 = arith.mulf %1202, %1201 : vector<8x4xf32>
    %1204 = arith.addf %1175, %1203 : vector<8x4xf32>
    %1205 = arith.truncf %1204 : vector<8x4xf32> to vector<8x4xbf16>
    %cst_309 = arith.constant dense<0.000000e+00> : vector<8x32xf32>
    %1206 = tpu.matmul %1205, %1, %cst_309 {dimension_numbers = #tpu.dot_dimension_numbers<[1], [0], [0], [1], [0, 0, 1, 1], [], []>} : vector<8x4xbf16>, vector<4x32xbf16>, vector<8x32xf32> -> vector<8x32xf32>
    %1207 = vector.broadcast %1176 : vector<1x32xf32> to vector<8x32xf32>
    %1208 = arith.addf %1206, %1207 : vector<8x32xf32>
    %cst_310 = arith.constant 0.000000e+00 : f32
    %1209 = vector.broadcast %cst_310 : f32 to vector<8x32xf32>
    %1210 = arith.cmpf ogt, %1208, %1209 : vector<8x32xf32>
    %1211 = math.exp %1208 : vector<8x32xf32>
    %cst_311 = arith.constant 1.000000e+00 : f32
    %1212 = vector.broadcast %cst_311 : f32 to vector<8x32xf32>
    %1213 = arith.subf %1211, %1212 : vector<8x32xf32>
    %1214 = arith.select %1210, %1208, %1213 : vector<8x32xi1>, vector<8x32xf32>
    %1215 = arith.truncf %1214 : vector<8x32xf32> to vector<8x32xbf16>
    %cst_312 = arith.constant dense<0.000000e+00> : vector<8x32xf32>
    %1216 = tpu.matmul %1215, %3, %cst_312 {dimension_numbers = #tpu.dot_dimension_numbers<[1], [0], [0], [1], [0, 0, 1, 1], [], []>} : vector<8x32xbf16>, vector<32x32xbf16>, vector<8x32xf32> -> vector<8x32xf32>
    %1217 = vector.broadcast %8 : vector<1x32xf32> to vector<8x32xf32>
    %1218 = arith.addf %1216, %1217 : vector<8x32xf32>
    %cst_313 = arith.constant 0.000000e+00 : f32
    %1219 = vector.broadcast %cst_313 : f32 to vector<8x32xf32>
    %1220 = arith.cmpf ogt, %1218, %1219 : vector<8x32xf32>
    %1221 = math.exp %1218 : vector<8x32xf32>
    %cst_314 = arith.constant 1.000000e+00 : f32
    %1222 = vector.broadcast %cst_314 : f32 to vector<8x32xf32>
    %1223 = arith.subf %1221, %1222 : vector<8x32xf32>
    %1224 = arith.select %1220, %1218, %1223 : vector<8x32xi1>, vector<8x32xf32>
    %1225 = arith.truncf %1224 : vector<8x32xf32> to vector<8x32xbf16>
    %cst_315 = arith.constant dense<0.000000e+00> : vector<8x4xf32>
    %1226 = tpu.matmul %1225, %5, %cst_315 {dimension_numbers = #tpu.dot_dimension_numbers<[1], [0], [0], [1], [0, 0, 1, 1], [], []>} : vector<8x32xbf16>, vector<32x4xbf16>, vector<8x4xf32> -> vector<8x4xf32>
    %1227 = vector.broadcast %9 : vector<1x4xf32> to vector<8x4xf32>
    %1228 = arith.addf %1226, %1227 : vector<8x4xf32>
    %1229 = vector.broadcast %18 : f32 to vector<8x4xf32>
    %1230 = arith.mulf %1229, %1228 : vector<8x4xf32>
    %1231 = arith.addf %1175, %1230 : vector<8x4xf32>
    %1232 = arith.truncf %1231 : vector<8x4xf32> to vector<8x4xbf16>
    %cst_316 = arith.constant dense<0.000000e+00> : vector<8x32xf32>
    %1233 = tpu.matmul %1232, %1, %cst_316 {dimension_numbers = #tpu.dot_dimension_numbers<[1], [0], [0], [1], [0, 0, 1, 1], [], []>} : vector<8x4xbf16>, vector<4x32xbf16>, vector<8x32xf32> -> vector<8x32xf32>
    %1234 = vector.broadcast %1176 : vector<1x32xf32> to vector<8x32xf32>
    %1235 = arith.addf %1233, %1234 : vector<8x32xf32>
    %cst_317 = arith.constant 0.000000e+00 : f32
    %1236 = vector.broadcast %cst_317 : f32 to vector<8x32xf32>
    %1237 = arith.cmpf ogt, %1235, %1236 : vector<8x32xf32>
    %1238 = math.exp %1235 : vector<8x32xf32>
    %cst_318 = arith.constant 1.000000e+00 : f32
    %1239 = vector.broadcast %cst_318 : f32 to vector<8x32xf32>
    %1240 = arith.subf %1238, %1239 : vector<8x32xf32>
    %1241 = arith.select %1237, %1235, %1240 : vector<8x32xi1>, vector<8x32xf32>
    %1242 = arith.truncf %1241 : vector<8x32xf32> to vector<8x32xbf16>
    %cst_319 = arith.constant dense<0.000000e+00> : vector<8x32xf32>
    %1243 = tpu.matmul %1242, %3, %cst_319 {dimension_numbers = #tpu.dot_dimension_numbers<[1], [0], [0], [1], [0, 0, 1, 1], [], []>} : vector<8x32xbf16>, vector<32x32xbf16>, vector<8x32xf32> -> vector<8x32xf32>
    %1244 = vector.broadcast %8 : vector<1x32xf32> to vector<8x32xf32>
    %1245 = arith.addf %1243, %1244 : vector<8x32xf32>
    %cst_320 = arith.constant 0.000000e+00 : f32
    %1246 = vector.broadcast %cst_320 : f32 to vector<8x32xf32>
    %1247 = arith.cmpf ogt, %1245, %1246 : vector<8x32xf32>
    %1248 = math.exp %1245 : vector<8x32xf32>
    %cst_321 = arith.constant 1.000000e+00 : f32
    %1249 = vector.broadcast %cst_321 : f32 to vector<8x32xf32>
    %1250 = arith.subf %1248, %1249 : vector<8x32xf32>
    %1251 = arith.select %1247, %1245, %1250 : vector<8x32xi1>, vector<8x32xf32>
    %1252 = arith.truncf %1251 : vector<8x32xf32> to vector<8x32xbf16>
    %cst_322 = arith.constant dense<0.000000e+00> : vector<8x4xf32>
    %1253 = tpu.matmul %1252, %5, %cst_322 {dimension_numbers = #tpu.dot_dimension_numbers<[1], [0], [0], [1], [0, 0, 1, 1], [], []>} : vector<8x32xbf16>, vector<32x4xbf16>, vector<8x4xf32> -> vector<8x4xf32>
    %1254 = vector.broadcast %9 : vector<1x4xf32> to vector<8x4xf32>
    %1255 = arith.addf %1253, %1254 : vector<8x4xf32>
    %1256 = vector.broadcast %17 : f32 to vector<8x4xf32>
    %1257 = arith.mulf %1256, %1255 : vector<8x4xf32>
    %1258 = arith.addf %1175, %1257 : vector<8x4xf32>
    %1259 = arith.truncf %1258 : vector<8x4xf32> to vector<8x4xbf16>
    %cst_323 = arith.constant dense<0.000000e+00> : vector<8x32xf32>
    %1260 = tpu.matmul %1259, %1, %cst_323 {dimension_numbers = #tpu.dot_dimension_numbers<[1], [0], [0], [1], [0, 0, 1, 1], [], []>} : vector<8x4xbf16>, vector<4x32xbf16>, vector<8x32xf32> -> vector<8x32xf32>
    %1261 = vector.broadcast %1177 : vector<1x32xf32> to vector<8x32xf32>
    %1262 = arith.addf %1260, %1261 : vector<8x32xf32>
    %cst_324 = arith.constant 0.000000e+00 : f32
    %1263 = vector.broadcast %cst_324 : f32 to vector<8x32xf32>
    %1264 = arith.cmpf ogt, %1262, %1263 : vector<8x32xf32>
    %1265 = math.exp %1262 : vector<8x32xf32>
    %cst_325 = arith.constant 1.000000e+00 : f32
    %1266 = vector.broadcast %cst_325 : f32 to vector<8x32xf32>
    %1267 = arith.subf %1265, %1266 : vector<8x32xf32>
    %1268 = arith.select %1264, %1262, %1267 : vector<8x32xi1>, vector<8x32xf32>
    %1269 = arith.truncf %1268 : vector<8x32xf32> to vector<8x32xbf16>
    %cst_326 = arith.constant dense<0.000000e+00> : vector<8x32xf32>
    %1270 = tpu.matmul %1269, %3, %cst_326 {dimension_numbers = #tpu.dot_dimension_numbers<[1], [0], [0], [1], [0, 0, 1, 1], [], []>} : vector<8x32xbf16>, vector<32x32xbf16>, vector<8x32xf32> -> vector<8x32xf32>
    %1271 = vector.broadcast %8 : vector<1x32xf32> to vector<8x32xf32>
    %1272 = arith.addf %1270, %1271 : vector<8x32xf32>
    %cst_327 = arith.constant 0.000000e+00 : f32
    %1273 = vector.broadcast %cst_327 : f32 to vector<8x32xf32>
    %1274 = arith.cmpf ogt, %1272, %1273 : vector<8x32xf32>
    %1275 = math.exp %1272 : vector<8x32xf32>
    %cst_328 = arith.constant 1.000000e+00 : f32
    %1276 = vector.broadcast %cst_328 : f32 to vector<8x32xf32>
    %1277 = arith.subf %1275, %1276 : vector<8x32xf32>
    %1278 = arith.select %1274, %1272, %1277 : vector<8x32xi1>, vector<8x32xf32>
    %1279 = arith.truncf %1278 : vector<8x32xf32> to vector<8x32xbf16>
    %cst_329 = arith.constant dense<0.000000e+00> : vector<8x4xf32>
    %1280 = tpu.matmul %1279, %5, %cst_329 {dimension_numbers = #tpu.dot_dimension_numbers<[1], [0], [0], [1], [0, 0, 1, 1], [], []>} : vector<8x32xbf16>, vector<32x4xbf16>, vector<8x4xf32> -> vector<8x4xf32>
    %1281 = vector.broadcast %9 : vector<1x4xf32> to vector<8x4xf32>
    %1282 = arith.addf %1280, %1281 : vector<8x4xf32>
    %1283 = arith.addf %1201, %1282 : vector<8x4xf32>
    %1284 = vector.broadcast %19 : f32 to vector<8x4xf32>
    %1285 = arith.mulf %1284, %1283 : vector<8x4xf32>
    %1286 = arith.addf %1175, %1285 : vector<8x4xf32>
    %1287 = arith.addf %1228, %1255 : vector<8x4xf32>
    %1288 = vector.broadcast %20 : f32 to vector<8x4xf32>
    %1289 = arith.mulf %1288, %1287 : vector<8x4xf32>
    %1290 = arith.addf %1286, %1289 : vector<8x4xf32>
    %c11_i32 = arith.constant 11 : i32
    %1291 = arith.addf %1177, %22 : vector<1x32xf32>
    %1292 = arith.addf %1291, %22 : vector<1x32xf32>
    %1293 = arith.truncf %1290 : vector<8x4xf32> to vector<8x4xbf16>
    %cst_330 = arith.constant dense<0.000000e+00> : vector<8x32xf32>
    %1294 = tpu.matmul %1293, %1, %cst_330 {dimension_numbers = #tpu.dot_dimension_numbers<[1], [0], [0], [1], [0, 0, 1, 1], [], []>} : vector<8x4xbf16>, vector<4x32xbf16>, vector<8x32xf32> -> vector<8x32xf32>
    %1295 = vector.broadcast %1177 : vector<1x32xf32> to vector<8x32xf32>
    %1296 = arith.addf %1294, %1295 : vector<8x32xf32>
    %cst_331 = arith.constant 0.000000e+00 : f32
    %1297 = vector.broadcast %cst_331 : f32 to vector<8x32xf32>
    %1298 = arith.cmpf ogt, %1296, %1297 : vector<8x32xf32>
    %1299 = math.exp %1296 : vector<8x32xf32>
    %cst_332 = arith.constant 1.000000e+00 : f32
    %1300 = vector.broadcast %cst_332 : f32 to vector<8x32xf32>
    %1301 = arith.subf %1299, %1300 : vector<8x32xf32>
    %1302 = arith.select %1298, %1296, %1301 : vector<8x32xi1>, vector<8x32xf32>
    %1303 = arith.truncf %1302 : vector<8x32xf32> to vector<8x32xbf16>
    %cst_333 = arith.constant dense<0.000000e+00> : vector<8x32xf32>
    %1304 = tpu.matmul %1303, %3, %cst_333 {dimension_numbers = #tpu.dot_dimension_numbers<[1], [0], [0], [1], [0, 0, 1, 1], [], []>} : vector<8x32xbf16>, vector<32x32xbf16>, vector<8x32xf32> -> vector<8x32xf32>
    %1305 = vector.broadcast %8 : vector<1x32xf32> to vector<8x32xf32>
    %1306 = arith.addf %1304, %1305 : vector<8x32xf32>
    %cst_334 = arith.constant 0.000000e+00 : f32
    %1307 = vector.broadcast %cst_334 : f32 to vector<8x32xf32>
    %1308 = arith.cmpf ogt, %1306, %1307 : vector<8x32xf32>
    %1309 = math.exp %1306 : vector<8x32xf32>
    %cst_335 = arith.constant 1.000000e+00 : f32
    %1310 = vector.broadcast %cst_335 : f32 to vector<8x32xf32>
    %1311 = arith.subf %1309, %1310 : vector<8x32xf32>
    %1312 = arith.select %1308, %1306, %1311 : vector<8x32xi1>, vector<8x32xf32>
    %1313 = arith.truncf %1312 : vector<8x32xf32> to vector<8x32xbf16>
    %cst_336 = arith.constant dense<0.000000e+00> : vector<8x4xf32>
    %1314 = tpu.matmul %1313, %5, %cst_336 {dimension_numbers = #tpu.dot_dimension_numbers<[1], [0], [0], [1], [0, 0, 1, 1], [], []>} : vector<8x32xbf16>, vector<32x4xbf16>, vector<8x4xf32> -> vector<8x4xf32>
    %1315 = vector.broadcast %9 : vector<1x4xf32> to vector<8x4xf32>
    %1316 = arith.addf %1314, %1315 : vector<8x4xf32>
    %1317 = vector.broadcast %18 : f32 to vector<8x4xf32>
    %1318 = arith.mulf %1317, %1316 : vector<8x4xf32>
    %1319 = arith.addf %1290, %1318 : vector<8x4xf32>
    %1320 = arith.truncf %1319 : vector<8x4xf32> to vector<8x4xbf16>
    %cst_337 = arith.constant dense<0.000000e+00> : vector<8x32xf32>
    %1321 = tpu.matmul %1320, %1, %cst_337 {dimension_numbers = #tpu.dot_dimension_numbers<[1], [0], [0], [1], [0, 0, 1, 1], [], []>} : vector<8x4xbf16>, vector<4x32xbf16>, vector<8x32xf32> -> vector<8x32xf32>
    %1322 = vector.broadcast %1291 : vector<1x32xf32> to vector<8x32xf32>
    %1323 = arith.addf %1321, %1322 : vector<8x32xf32>
    %cst_338 = arith.constant 0.000000e+00 : f32
    %1324 = vector.broadcast %cst_338 : f32 to vector<8x32xf32>
    %1325 = arith.cmpf ogt, %1323, %1324 : vector<8x32xf32>
    %1326 = math.exp %1323 : vector<8x32xf32>
    %cst_339 = arith.constant 1.000000e+00 : f32
    %1327 = vector.broadcast %cst_339 : f32 to vector<8x32xf32>
    %1328 = arith.subf %1326, %1327 : vector<8x32xf32>
    %1329 = arith.select %1325, %1323, %1328 : vector<8x32xi1>, vector<8x32xf32>
    %1330 = arith.truncf %1329 : vector<8x32xf32> to vector<8x32xbf16>
    %cst_340 = arith.constant dense<0.000000e+00> : vector<8x32xf32>
    %1331 = tpu.matmul %1330, %3, %cst_340 {dimension_numbers = #tpu.dot_dimension_numbers<[1], [0], [0], [1], [0, 0, 1, 1], [], []>} : vector<8x32xbf16>, vector<32x32xbf16>, vector<8x32xf32> -> vector<8x32xf32>
    %1332 = vector.broadcast %8 : vector<1x32xf32> to vector<8x32xf32>
    %1333 = arith.addf %1331, %1332 : vector<8x32xf32>
    %cst_341 = arith.constant 0.000000e+00 : f32
    %1334 = vector.broadcast %cst_341 : f32 to vector<8x32xf32>
    %1335 = arith.cmpf ogt, %1333, %1334 : vector<8x32xf32>
    %1336 = math.exp %1333 : vector<8x32xf32>
    %cst_342 = arith.constant 1.000000e+00 : f32
    %1337 = vector.broadcast %cst_342 : f32 to vector<8x32xf32>
    %1338 = arith.subf %1336, %1337 : vector<8x32xf32>
    %1339 = arith.select %1335, %1333, %1338 : vector<8x32xi1>, vector<8x32xf32>
    %1340 = arith.truncf %1339 : vector<8x32xf32> to vector<8x32xbf16>
    %cst_343 = arith.constant dense<0.000000e+00> : vector<8x4xf32>
    %1341 = tpu.matmul %1340, %5, %cst_343 {dimension_numbers = #tpu.dot_dimension_numbers<[1], [0], [0], [1], [0, 0, 1, 1], [], []>} : vector<8x32xbf16>, vector<32x4xbf16>, vector<8x4xf32> -> vector<8x4xf32>
    %1342 = vector.broadcast %9 : vector<1x4xf32> to vector<8x4xf32>
    %1343 = arith.addf %1341, %1342 : vector<8x4xf32>
    %1344 = vector.broadcast %18 : f32 to vector<8x4xf32>
    %1345 = arith.mulf %1344, %1343 : vector<8x4xf32>
    %1346 = arith.addf %1290, %1345 : vector<8x4xf32>
    %1347 = arith.truncf %1346 : vector<8x4xf32> to vector<8x4xbf16>
    %cst_344 = arith.constant dense<0.000000e+00> : vector<8x32xf32>
    %1348 = tpu.matmul %1347, %1, %cst_344 {dimension_numbers = #tpu.dot_dimension_numbers<[1], [0], [0], [1], [0, 0, 1, 1], [], []>} : vector<8x4xbf16>, vector<4x32xbf16>, vector<8x32xf32> -> vector<8x32xf32>
    %1349 = vector.broadcast %1291 : vector<1x32xf32> to vector<8x32xf32>
    %1350 = arith.addf %1348, %1349 : vector<8x32xf32>
    %cst_345 = arith.constant 0.000000e+00 : f32
    %1351 = vector.broadcast %cst_345 : f32 to vector<8x32xf32>
    %1352 = arith.cmpf ogt, %1350, %1351 : vector<8x32xf32>
    %1353 = math.exp %1350 : vector<8x32xf32>
    %cst_346 = arith.constant 1.000000e+00 : f32
    %1354 = vector.broadcast %cst_346 : f32 to vector<8x32xf32>
    %1355 = arith.subf %1353, %1354 : vector<8x32xf32>
    %1356 = arith.select %1352, %1350, %1355 : vector<8x32xi1>, vector<8x32xf32>
    %1357 = arith.truncf %1356 : vector<8x32xf32> to vector<8x32xbf16>
    %cst_347 = arith.constant dense<0.000000e+00> : vector<8x32xf32>
    %1358 = tpu.matmul %1357, %3, %cst_347 {dimension_numbers = #tpu.dot_dimension_numbers<[1], [0], [0], [1], [0, 0, 1, 1], [], []>} : vector<8x32xbf16>, vector<32x32xbf16>, vector<8x32xf32> -> vector<8x32xf32>
    %1359 = vector.broadcast %8 : vector<1x32xf32> to vector<8x32xf32>
    %1360 = arith.addf %1358, %1359 : vector<8x32xf32>
    %cst_348 = arith.constant 0.000000e+00 : f32
    %1361 = vector.broadcast %cst_348 : f32 to vector<8x32xf32>
    %1362 = arith.cmpf ogt, %1360, %1361 : vector<8x32xf32>
    %1363 = math.exp %1360 : vector<8x32xf32>
    %cst_349 = arith.constant 1.000000e+00 : f32
    %1364 = vector.broadcast %cst_349 : f32 to vector<8x32xf32>
    %1365 = arith.subf %1363, %1364 : vector<8x32xf32>
    %1366 = arith.select %1362, %1360, %1365 : vector<8x32xi1>, vector<8x32xf32>
    %1367 = arith.truncf %1366 : vector<8x32xf32> to vector<8x32xbf16>
    %cst_350 = arith.constant dense<0.000000e+00> : vector<8x4xf32>
    %1368 = tpu.matmul %1367, %5, %cst_350 {dimension_numbers = #tpu.dot_dimension_numbers<[1], [0], [0], [1], [0, 0, 1, 1], [], []>} : vector<8x32xbf16>, vector<32x4xbf16>, vector<8x4xf32> -> vector<8x4xf32>
    %1369 = vector.broadcast %9 : vector<1x4xf32> to vector<8x4xf32>
    %1370 = arith.addf %1368, %1369 : vector<8x4xf32>
    %1371 = vector.broadcast %17 : f32 to vector<8x4xf32>
    %1372 = arith.mulf %1371, %1370 : vector<8x4xf32>
    %1373 = arith.addf %1290, %1372 : vector<8x4xf32>
    %1374 = arith.truncf %1373 : vector<8x4xf32> to vector<8x4xbf16>
    %cst_351 = arith.constant dense<0.000000e+00> : vector<8x32xf32>
    %1375 = tpu.matmul %1374, %1, %cst_351 {dimension_numbers = #tpu.dot_dimension_numbers<[1], [0], [0], [1], [0, 0, 1, 1], [], []>} : vector<8x4xbf16>, vector<4x32xbf16>, vector<8x32xf32> -> vector<8x32xf32>
    %1376 = vector.broadcast %1292 : vector<1x32xf32> to vector<8x32xf32>
    %1377 = arith.addf %1375, %1376 : vector<8x32xf32>
    %cst_352 = arith.constant 0.000000e+00 : f32
    %1378 = vector.broadcast %cst_352 : f32 to vector<8x32xf32>
    %1379 = arith.cmpf ogt, %1377, %1378 : vector<8x32xf32>
    %1380 = math.exp %1377 : vector<8x32xf32>
    %cst_353 = arith.constant 1.000000e+00 : f32
    %1381 = vector.broadcast %cst_353 : f32 to vector<8x32xf32>
    %1382 = arith.subf %1380, %1381 : vector<8x32xf32>
    %1383 = arith.select %1379, %1377, %1382 : vector<8x32xi1>, vector<8x32xf32>
    %1384 = arith.truncf %1383 : vector<8x32xf32> to vector<8x32xbf16>
    %cst_354 = arith.constant dense<0.000000e+00> : vector<8x32xf32>
    %1385 = tpu.matmul %1384, %3, %cst_354 {dimension_numbers = #tpu.dot_dimension_numbers<[1], [0], [0], [1], [0, 0, 1, 1], [], []>} : vector<8x32xbf16>, vector<32x32xbf16>, vector<8x32xf32> -> vector<8x32xf32>
    %1386 = vector.broadcast %8 : vector<1x32xf32> to vector<8x32xf32>
    %1387 = arith.addf %1385, %1386 : vector<8x32xf32>
    %cst_355 = arith.constant 0.000000e+00 : f32
    %1388 = vector.broadcast %cst_355 : f32 to vector<8x32xf32>
    %1389 = arith.cmpf ogt, %1387, %1388 : vector<8x32xf32>
    %1390 = math.exp %1387 : vector<8x32xf32>
    %cst_356 = arith.constant 1.000000e+00 : f32
    %1391 = vector.broadcast %cst_356 : f32 to vector<8x32xf32>
    %1392 = arith.subf %1390, %1391 : vector<8x32xf32>
    %1393 = arith.select %1389, %1387, %1392 : vector<8x32xi1>, vector<8x32xf32>
    %1394 = arith.truncf %1393 : vector<8x32xf32> to vector<8x32xbf16>
    %cst_357 = arith.constant dense<0.000000e+00> : vector<8x4xf32>
    %1395 = tpu.matmul %1394, %5, %cst_357 {dimension_numbers = #tpu.dot_dimension_numbers<[1], [0], [0], [1], [0, 0, 1, 1], [], []>} : vector<8x32xbf16>, vector<32x4xbf16>, vector<8x4xf32> -> vector<8x4xf32>
    %1396 = vector.broadcast %9 : vector<1x4xf32> to vector<8x4xf32>
    %1397 = arith.addf %1395, %1396 : vector<8x4xf32>
    %1398 = arith.addf %1316, %1397 : vector<8x4xf32>
    %1399 = vector.broadcast %19 : f32 to vector<8x4xf32>
    %1400 = arith.mulf %1399, %1398 : vector<8x4xf32>
    %1401 = arith.addf %1290, %1400 : vector<8x4xf32>
    %1402 = arith.addf %1343, %1370 : vector<8x4xf32>
    %1403 = vector.broadcast %20 : f32 to vector<8x4xf32>
    %1404 = arith.mulf %1403, %1402 : vector<8x4xf32>
    %1405 = arith.addf %1401, %1404 : vector<8x4xf32>
    %c12_i32 = arith.constant 12 : i32
    %1406 = arith.addf %1292, %22 : vector<1x32xf32>
    %1407 = arith.addf %1406, %22 : vector<1x32xf32>
    %1408 = arith.truncf %1405 : vector<8x4xf32> to vector<8x4xbf16>
    %cst_358 = arith.constant dense<0.000000e+00> : vector<8x32xf32>
    %1409 = tpu.matmul %1408, %1, %cst_358 {dimension_numbers = #tpu.dot_dimension_numbers<[1], [0], [0], [1], [0, 0, 1, 1], [], []>} : vector<8x4xbf16>, vector<4x32xbf16>, vector<8x32xf32> -> vector<8x32xf32>
    %1410 = vector.broadcast %1292 : vector<1x32xf32> to vector<8x32xf32>
    %1411 = arith.addf %1409, %1410 : vector<8x32xf32>
    %cst_359 = arith.constant 0.000000e+00 : f32
    %1412 = vector.broadcast %cst_359 : f32 to vector<8x32xf32>
    %1413 = arith.cmpf ogt, %1411, %1412 : vector<8x32xf32>
    %1414 = math.exp %1411 : vector<8x32xf32>
    %cst_360 = arith.constant 1.000000e+00 : f32
    %1415 = vector.broadcast %cst_360 : f32 to vector<8x32xf32>
    %1416 = arith.subf %1414, %1415 : vector<8x32xf32>
    %1417 = arith.select %1413, %1411, %1416 : vector<8x32xi1>, vector<8x32xf32>
    %1418 = arith.truncf %1417 : vector<8x32xf32> to vector<8x32xbf16>
    %cst_361 = arith.constant dense<0.000000e+00> : vector<8x32xf32>
    %1419 = tpu.matmul %1418, %3, %cst_361 {dimension_numbers = #tpu.dot_dimension_numbers<[1], [0], [0], [1], [0, 0, 1, 1], [], []>} : vector<8x32xbf16>, vector<32x32xbf16>, vector<8x32xf32> -> vector<8x32xf32>
    %1420 = vector.broadcast %8 : vector<1x32xf32> to vector<8x32xf32>
    %1421 = arith.addf %1419, %1420 : vector<8x32xf32>
    %cst_362 = arith.constant 0.000000e+00 : f32
    %1422 = vector.broadcast %cst_362 : f32 to vector<8x32xf32>
    %1423 = arith.cmpf ogt, %1421, %1422 : vector<8x32xf32>
    %1424 = math.exp %1421 : vector<8x32xf32>
    %cst_363 = arith.constant 1.000000e+00 : f32
    %1425 = vector.broadcast %cst_363 : f32 to vector<8x32xf32>
    %1426 = arith.subf %1424, %1425 : vector<8x32xf32>
    %1427 = arith.select %1423, %1421, %1426 : vector<8x32xi1>, vector<8x32xf32>
    %1428 = arith.truncf %1427 : vector<8x32xf32> to vector<8x32xbf16>
    %cst_364 = arith.constant dense<0.000000e+00> : vector<8x4xf32>
    %1429 = tpu.matmul %1428, %5, %cst_364 {dimension_numbers = #tpu.dot_dimension_numbers<[1], [0], [0], [1], [0, 0, 1, 1], [], []>} : vector<8x32xbf16>, vector<32x4xbf16>, vector<8x4xf32> -> vector<8x4xf32>
    %1430 = vector.broadcast %9 : vector<1x4xf32> to vector<8x4xf32>
    %1431 = arith.addf %1429, %1430 : vector<8x4xf32>
    %1432 = vector.broadcast %18 : f32 to vector<8x4xf32>
    %1433 = arith.mulf %1432, %1431 : vector<8x4xf32>
    %1434 = arith.addf %1405, %1433 : vector<8x4xf32>
    %1435 = arith.truncf %1434 : vector<8x4xf32> to vector<8x4xbf16>
    %cst_365 = arith.constant dense<0.000000e+00> : vector<8x32xf32>
    %1436 = tpu.matmul %1435, %1, %cst_365 {dimension_numbers = #tpu.dot_dimension_numbers<[1], [0], [0], [1], [0, 0, 1, 1], [], []>} : vector<8x4xbf16>, vector<4x32xbf16>, vector<8x32xf32> -> vector<8x32xf32>
    %1437 = vector.broadcast %1406 : vector<1x32xf32> to vector<8x32xf32>
    %1438 = arith.addf %1436, %1437 : vector<8x32xf32>
    %cst_366 = arith.constant 0.000000e+00 : f32
    %1439 = vector.broadcast %cst_366 : f32 to vector<8x32xf32>
    %1440 = arith.cmpf ogt, %1438, %1439 : vector<8x32xf32>
    %1441 = math.exp %1438 : vector<8x32xf32>
    %cst_367 = arith.constant 1.000000e+00 : f32
    %1442 = vector.broadcast %cst_367 : f32 to vector<8x32xf32>
    %1443 = arith.subf %1441, %1442 : vector<8x32xf32>
    %1444 = arith.select %1440, %1438, %1443 : vector<8x32xi1>, vector<8x32xf32>
    %1445 = arith.truncf %1444 : vector<8x32xf32> to vector<8x32xbf16>
    %cst_368 = arith.constant dense<0.000000e+00> : vector<8x32xf32>
    %1446 = tpu.matmul %1445, %3, %cst_368 {dimension_numbers = #tpu.dot_dimension_numbers<[1], [0], [0], [1], [0, 0, 1, 1], [], []>} : vector<8x32xbf16>, vector<32x32xbf16>, vector<8x32xf32> -> vector<8x32xf32>
    %1447 = vector.broadcast %8 : vector<1x32xf32> to vector<8x32xf32>
    %1448 = arith.addf %1446, %1447 : vector<8x32xf32>
    %cst_369 = arith.constant 0.000000e+00 : f32
    %1449 = vector.broadcast %cst_369 : f32 to vector<8x32xf32>
    %1450 = arith.cmpf ogt, %1448, %1449 : vector<8x32xf32>
    %1451 = math.exp %1448 : vector<8x32xf32>
    %cst_370 = arith.constant 1.000000e+00 : f32
    %1452 = vector.broadcast %cst_370 : f32 to vector<8x32xf32>
    %1453 = arith.subf %1451, %1452 : vector<8x32xf32>
    %1454 = arith.select %1450, %1448, %1453 : vector<8x32xi1>, vector<8x32xf32>
    %1455 = arith.truncf %1454 : vector<8x32xf32> to vector<8x32xbf16>
    %cst_371 = arith.constant dense<0.000000e+00> : vector<8x4xf32>
    %1456 = tpu.matmul %1455, %5, %cst_371 {dimension_numbers = #tpu.dot_dimension_numbers<[1], [0], [0], [1], [0, 0, 1, 1], [], []>} : vector<8x32xbf16>, vector<32x4xbf16>, vector<8x4xf32> -> vector<8x4xf32>
    %1457 = vector.broadcast %9 : vector<1x4xf32> to vector<8x4xf32>
    %1458 = arith.addf %1456, %1457 : vector<8x4xf32>
    %1459 = vector.broadcast %18 : f32 to vector<8x4xf32>
    %1460 = arith.mulf %1459, %1458 : vector<8x4xf32>
    %1461 = arith.addf %1405, %1460 : vector<8x4xf32>
    %1462 = arith.truncf %1461 : vector<8x4xf32> to vector<8x4xbf16>
    %cst_372 = arith.constant dense<0.000000e+00> : vector<8x32xf32>
    %1463 = tpu.matmul %1462, %1, %cst_372 {dimension_numbers = #tpu.dot_dimension_numbers<[1], [0], [0], [1], [0, 0, 1, 1], [], []>} : vector<8x4xbf16>, vector<4x32xbf16>, vector<8x32xf32> -> vector<8x32xf32>
    %1464 = vector.broadcast %1406 : vector<1x32xf32> to vector<8x32xf32>
    %1465 = arith.addf %1463, %1464 : vector<8x32xf32>
    %cst_373 = arith.constant 0.000000e+00 : f32
    %1466 = vector.broadcast %cst_373 : f32 to vector<8x32xf32>
    %1467 = arith.cmpf ogt, %1465, %1466 : vector<8x32xf32>
    %1468 = math.exp %1465 : vector<8x32xf32>
    %cst_374 = arith.constant 1.000000e+00 : f32
    %1469 = vector.broadcast %cst_374 : f32 to vector<8x32xf32>
    %1470 = arith.subf %1468, %1469 : vector<8x32xf32>
    %1471 = arith.select %1467, %1465, %1470 : vector<8x32xi1>, vector<8x32xf32>
    %1472 = arith.truncf %1471 : vector<8x32xf32> to vector<8x32xbf16>
    %cst_375 = arith.constant dense<0.000000e+00> : vector<8x32xf32>
    %1473 = tpu.matmul %1472, %3, %cst_375 {dimension_numbers = #tpu.dot_dimension_numbers<[1], [0], [0], [1], [0, 0, 1, 1], [], []>} : vector<8x32xbf16>, vector<32x32xbf16>, vector<8x32xf32> -> vector<8x32xf32>
    %1474 = vector.broadcast %8 : vector<1x32xf32> to vector<8x32xf32>
    %1475 = arith.addf %1473, %1474 : vector<8x32xf32>
    %cst_376 = arith.constant 0.000000e+00 : f32
    %1476 = vector.broadcast %cst_376 : f32 to vector<8x32xf32>
    %1477 = arith.cmpf ogt, %1475, %1476 : vector<8x32xf32>
    %1478 = math.exp %1475 : vector<8x32xf32>
    %cst_377 = arith.constant 1.000000e+00 : f32
    %1479 = vector.broadcast %cst_377 : f32 to vector<8x32xf32>
    %1480 = arith.subf %1478, %1479 : vector<8x32xf32>
    %1481 = arith.select %1477, %1475, %1480 : vector<8x32xi1>, vector<8x32xf32>
    %1482 = arith.truncf %1481 : vector<8x32xf32> to vector<8x32xbf16>
    %cst_378 = arith.constant dense<0.000000e+00> : vector<8x4xf32>
    %1483 = tpu.matmul %1482, %5, %cst_378 {dimension_numbers = #tpu.dot_dimension_numbers<[1], [0], [0], [1], [0, 0, 1, 1], [], []>} : vector<8x32xbf16>, vector<32x4xbf16>, vector<8x4xf32> -> vector<8x4xf32>
    %1484 = vector.broadcast %9 : vector<1x4xf32> to vector<8x4xf32>
    %1485 = arith.addf %1483, %1484 : vector<8x4xf32>
    %1486 = vector.broadcast %17 : f32 to vector<8x4xf32>
    %1487 = arith.mulf %1486, %1485 : vector<8x4xf32>
    %1488 = arith.addf %1405, %1487 : vector<8x4xf32>
    %1489 = arith.truncf %1488 : vector<8x4xf32> to vector<8x4xbf16>
    %cst_379 = arith.constant dense<0.000000e+00> : vector<8x32xf32>
    %1490 = tpu.matmul %1489, %1, %cst_379 {dimension_numbers = #tpu.dot_dimension_numbers<[1], [0], [0], [1], [0, 0, 1, 1], [], []>} : vector<8x4xbf16>, vector<4x32xbf16>, vector<8x32xf32> -> vector<8x32xf32>
    %1491 = vector.broadcast %1407 : vector<1x32xf32> to vector<8x32xf32>
    %1492 = arith.addf %1490, %1491 : vector<8x32xf32>
    %cst_380 = arith.constant 0.000000e+00 : f32
    %1493 = vector.broadcast %cst_380 : f32 to vector<8x32xf32>
    %1494 = arith.cmpf ogt, %1492, %1493 : vector<8x32xf32>
    %1495 = math.exp %1492 : vector<8x32xf32>
    %cst_381 = arith.constant 1.000000e+00 : f32
    %1496 = vector.broadcast %cst_381 : f32 to vector<8x32xf32>
    %1497 = arith.subf %1495, %1496 : vector<8x32xf32>
    %1498 = arith.select %1494, %1492, %1497 : vector<8x32xi1>, vector<8x32xf32>
    %1499 = arith.truncf %1498 : vector<8x32xf32> to vector<8x32xbf16>
    %cst_382 = arith.constant dense<0.000000e+00> : vector<8x32xf32>
    %1500 = tpu.matmul %1499, %3, %cst_382 {dimension_numbers = #tpu.dot_dimension_numbers<[1], [0], [0], [1], [0, 0, 1, 1], [], []>} : vector<8x32xbf16>, vector<32x32xbf16>, vector<8x32xf32> -> vector<8x32xf32>
    %1501 = vector.broadcast %8 : vector<1x32xf32> to vector<8x32xf32>
    %1502 = arith.addf %1500, %1501 : vector<8x32xf32>
    %cst_383 = arith.constant 0.000000e+00 : f32
    %1503 = vector.broadcast %cst_383 : f32 to vector<8x32xf32>
    %1504 = arith.cmpf ogt, %1502, %1503 : vector<8x32xf32>
    %1505 = math.exp %1502 : vector<8x32xf32>
    %cst_384 = arith.constant 1.000000e+00 : f32
    %1506 = vector.broadcast %cst_384 : f32 to vector<8x32xf32>
    %1507 = arith.subf %1505, %1506 : vector<8x32xf32>
    %1508 = arith.select %1504, %1502, %1507 : vector<8x32xi1>, vector<8x32xf32>
    %1509 = arith.truncf %1508 : vector<8x32xf32> to vector<8x32xbf16>
    %cst_385 = arith.constant dense<0.000000e+00> : vector<8x4xf32>
    %1510 = tpu.matmul %1509, %5, %cst_385 {dimension_numbers = #tpu.dot_dimension_numbers<[1], [0], [0], [1], [0, 0, 1, 1], [], []>} : vector<8x32xbf16>, vector<32x4xbf16>, vector<8x4xf32> -> vector<8x4xf32>
    %1511 = vector.broadcast %9 : vector<1x4xf32> to vector<8x4xf32>
    %1512 = arith.addf %1510, %1511 : vector<8x4xf32>
    %1513 = arith.addf %1431, %1512 : vector<8x4xf32>
    %1514 = vector.broadcast %19 : f32 to vector<8x4xf32>
    %1515 = arith.mulf %1514, %1513 : vector<8x4xf32>
    %1516 = arith.addf %1405, %1515 : vector<8x4xf32>
    %1517 = arith.addf %1458, %1485 : vector<8x4xf32>
    %1518 = vector.broadcast %20 : f32 to vector<8x4xf32>
    %1519 = arith.mulf %1518, %1517 : vector<8x4xf32>
    %1520 = arith.addf %1516, %1519 : vector<8x4xf32>
    %c13_i32 = arith.constant 13 : i32
    %1521 = arith.addf %1407, %22 : vector<1x32xf32>
    %1522 = arith.addf %1521, %22 : vector<1x32xf32>
    %1523 = arith.truncf %1520 : vector<8x4xf32> to vector<8x4xbf16>
    %cst_386 = arith.constant dense<0.000000e+00> : vector<8x32xf32>
    %1524 = tpu.matmul %1523, %1, %cst_386 {dimension_numbers = #tpu.dot_dimension_numbers<[1], [0], [0], [1], [0, 0, 1, 1], [], []>} : vector<8x4xbf16>, vector<4x32xbf16>, vector<8x32xf32> -> vector<8x32xf32>
    %1525 = vector.broadcast %1407 : vector<1x32xf32> to vector<8x32xf32>
    %1526 = arith.addf %1524, %1525 : vector<8x32xf32>
    %cst_387 = arith.constant 0.000000e+00 : f32
    %1527 = vector.broadcast %cst_387 : f32 to vector<8x32xf32>
    %1528 = arith.cmpf ogt, %1526, %1527 : vector<8x32xf32>
    %1529 = math.exp %1526 : vector<8x32xf32>
    %cst_388 = arith.constant 1.000000e+00 : f32
    %1530 = vector.broadcast %cst_388 : f32 to vector<8x32xf32>
    %1531 = arith.subf %1529, %1530 : vector<8x32xf32>
    %1532 = arith.select %1528, %1526, %1531 : vector<8x32xi1>, vector<8x32xf32>
    %1533 = arith.truncf %1532 : vector<8x32xf32> to vector<8x32xbf16>
    %cst_389 = arith.constant dense<0.000000e+00> : vector<8x32xf32>
    %1534 = tpu.matmul %1533, %3, %cst_389 {dimension_numbers = #tpu.dot_dimension_numbers<[1], [0], [0], [1], [0, 0, 1, 1], [], []>} : vector<8x32xbf16>, vector<32x32xbf16>, vector<8x32xf32> -> vector<8x32xf32>
    %1535 = vector.broadcast %8 : vector<1x32xf32> to vector<8x32xf32>
    %1536 = arith.addf %1534, %1535 : vector<8x32xf32>
    %cst_390 = arith.constant 0.000000e+00 : f32
    %1537 = vector.broadcast %cst_390 : f32 to vector<8x32xf32>
    %1538 = arith.cmpf ogt, %1536, %1537 : vector<8x32xf32>
    %1539 = math.exp %1536 : vector<8x32xf32>
    %cst_391 = arith.constant 1.000000e+00 : f32
    %1540 = vector.broadcast %cst_391 : f32 to vector<8x32xf32>
    %1541 = arith.subf %1539, %1540 : vector<8x32xf32>
    %1542 = arith.select %1538, %1536, %1541 : vector<8x32xi1>, vector<8x32xf32>
    %1543 = arith.truncf %1542 : vector<8x32xf32> to vector<8x32xbf16>
    %cst_392 = arith.constant dense<0.000000e+00> : vector<8x4xf32>
    %1544 = tpu.matmul %1543, %5, %cst_392 {dimension_numbers = #tpu.dot_dimension_numbers<[1], [0], [0], [1], [0, 0, 1, 1], [], []>} : vector<8x32xbf16>, vector<32x4xbf16>, vector<8x4xf32> -> vector<8x4xf32>
    %1545 = vector.broadcast %9 : vector<1x4xf32> to vector<8x4xf32>
    %1546 = arith.addf %1544, %1545 : vector<8x4xf32>
    %1547 = vector.broadcast %18 : f32 to vector<8x4xf32>
    %1548 = arith.mulf %1547, %1546 : vector<8x4xf32>
    %1549 = arith.addf %1520, %1548 : vector<8x4xf32>
    %1550 = arith.truncf %1549 : vector<8x4xf32> to vector<8x4xbf16>
    %cst_393 = arith.constant dense<0.000000e+00> : vector<8x32xf32>
    %1551 = tpu.matmul %1550, %1, %cst_393 {dimension_numbers = #tpu.dot_dimension_numbers<[1], [0], [0], [1], [0, 0, 1, 1], [], []>} : vector<8x4xbf16>, vector<4x32xbf16>, vector<8x32xf32> -> vector<8x32xf32>
    %1552 = vector.broadcast %1521 : vector<1x32xf32> to vector<8x32xf32>
    %1553 = arith.addf %1551, %1552 : vector<8x32xf32>
    %cst_394 = arith.constant 0.000000e+00 : f32
    %1554 = vector.broadcast %cst_394 : f32 to vector<8x32xf32>
    %1555 = arith.cmpf ogt, %1553, %1554 : vector<8x32xf32>
    %1556 = math.exp %1553 : vector<8x32xf32>
    %cst_395 = arith.constant 1.000000e+00 : f32
    %1557 = vector.broadcast %cst_395 : f32 to vector<8x32xf32>
    %1558 = arith.subf %1556, %1557 : vector<8x32xf32>
    %1559 = arith.select %1555, %1553, %1558 : vector<8x32xi1>, vector<8x32xf32>
    %1560 = arith.truncf %1559 : vector<8x32xf32> to vector<8x32xbf16>
    %cst_396 = arith.constant dense<0.000000e+00> : vector<8x32xf32>
    %1561 = tpu.matmul %1560, %3, %cst_396 {dimension_numbers = #tpu.dot_dimension_numbers<[1], [0], [0], [1], [0, 0, 1, 1], [], []>} : vector<8x32xbf16>, vector<32x32xbf16>, vector<8x32xf32> -> vector<8x32xf32>
    %1562 = vector.broadcast %8 : vector<1x32xf32> to vector<8x32xf32>
    %1563 = arith.addf %1561, %1562 : vector<8x32xf32>
    %cst_397 = arith.constant 0.000000e+00 : f32
    %1564 = vector.broadcast %cst_397 : f32 to vector<8x32xf32>
    %1565 = arith.cmpf ogt, %1563, %1564 : vector<8x32xf32>
    %1566 = math.exp %1563 : vector<8x32xf32>
    %cst_398 = arith.constant 1.000000e+00 : f32
    %1567 = vector.broadcast %cst_398 : f32 to vector<8x32xf32>
    %1568 = arith.subf %1566, %1567 : vector<8x32xf32>
    %1569 = arith.select %1565, %1563, %1568 : vector<8x32xi1>, vector<8x32xf32>
    %1570 = arith.truncf %1569 : vector<8x32xf32> to vector<8x32xbf16>
    %cst_399 = arith.constant dense<0.000000e+00> : vector<8x4xf32>
    %1571 = tpu.matmul %1570, %5, %cst_399 {dimension_numbers = #tpu.dot_dimension_numbers<[1], [0], [0], [1], [0, 0, 1, 1], [], []>} : vector<8x32xbf16>, vector<32x4xbf16>, vector<8x4xf32> -> vector<8x4xf32>
    %1572 = vector.broadcast %9 : vector<1x4xf32> to vector<8x4xf32>
    %1573 = arith.addf %1571, %1572 : vector<8x4xf32>
    %1574 = vector.broadcast %18 : f32 to vector<8x4xf32>
    %1575 = arith.mulf %1574, %1573 : vector<8x4xf32>
    %1576 = arith.addf %1520, %1575 : vector<8x4xf32>
    %1577 = arith.truncf %1576 : vector<8x4xf32> to vector<8x4xbf16>
    %cst_400 = arith.constant dense<0.000000e+00> : vector<8x32xf32>
    %1578 = tpu.matmul %1577, %1, %cst_400 {dimension_numbers = #tpu.dot_dimension_numbers<[1], [0], [0], [1], [0, 0, 1, 1], [], []>} : vector<8x4xbf16>, vector<4x32xbf16>, vector<8x32xf32> -> vector<8x32xf32>
    %1579 = vector.broadcast %1521 : vector<1x32xf32> to vector<8x32xf32>
    %1580 = arith.addf %1578, %1579 : vector<8x32xf32>
    %cst_401 = arith.constant 0.000000e+00 : f32
    %1581 = vector.broadcast %cst_401 : f32 to vector<8x32xf32>
    %1582 = arith.cmpf ogt, %1580, %1581 : vector<8x32xf32>
    %1583 = math.exp %1580 : vector<8x32xf32>
    %cst_402 = arith.constant 1.000000e+00 : f32
    %1584 = vector.broadcast %cst_402 : f32 to vector<8x32xf32>
    %1585 = arith.subf %1583, %1584 : vector<8x32xf32>
    %1586 = arith.select %1582, %1580, %1585 : vector<8x32xi1>, vector<8x32xf32>
    %1587 = arith.truncf %1586 : vector<8x32xf32> to vector<8x32xbf16>
    %cst_403 = arith.constant dense<0.000000e+00> : vector<8x32xf32>
    %1588 = tpu.matmul %1587, %3, %cst_403 {dimension_numbers = #tpu.dot_dimension_numbers<[1], [0], [0], [1], [0, 0, 1, 1], [], []>} : vector<8x32xbf16>, vector<32x32xbf16>, vector<8x32xf32> -> vector<8x32xf32>
    %1589 = vector.broadcast %8 : vector<1x32xf32> to vector<8x32xf32>
    %1590 = arith.addf %1588, %1589 : vector<8x32xf32>
    %cst_404 = arith.constant 0.000000e+00 : f32
    %1591 = vector.broadcast %cst_404 : f32 to vector<8x32xf32>
    %1592 = arith.cmpf ogt, %1590, %1591 : vector<8x32xf32>
    %1593 = math.exp %1590 : vector<8x32xf32>
    %cst_405 = arith.constant 1.000000e+00 : f32
    %1594 = vector.broadcast %cst_405 : f32 to vector<8x32xf32>
    %1595 = arith.subf %1593, %1594 : vector<8x32xf32>
    %1596 = arith.select %1592, %1590, %1595 : vector<8x32xi1>, vector<8x32xf32>
    %1597 = arith.truncf %1596 : vector<8x32xf32> to vector<8x32xbf16>
    %cst_406 = arith.constant dense<0.000000e+00> : vector<8x4xf32>
    %1598 = tpu.matmul %1597, %5, %cst_406 {dimension_numbers = #tpu.dot_dimension_numbers<[1], [0], [0], [1], [0, 0, 1, 1], [], []>} : vector<8x32xbf16>, vector<32x4xbf16>, vector<8x4xf32> -> vector<8x4xf32>
    %1599 = vector.broadcast %9 : vector<1x4xf32> to vector<8x4xf32>
    %1600 = arith.addf %1598, %1599 : vector<8x4xf32>
    %1601 = vector.broadcast %17 : f32 to vector<8x4xf32>
    %1602 = arith.mulf %1601, %1600 : vector<8x4xf32>
    %1603 = arith.addf %1520, %1602 : vector<8x4xf32>
    %1604 = arith.truncf %1603 : vector<8x4xf32> to vector<8x4xbf16>
    %cst_407 = arith.constant dense<0.000000e+00> : vector<8x32xf32>
    %1605 = tpu.matmul %1604, %1, %cst_407 {dimension_numbers = #tpu.dot_dimension_numbers<[1], [0], [0], [1], [0, 0, 1, 1], [], []>} : vector<8x4xbf16>, vector<4x32xbf16>, vector<8x32xf32> -> vector<8x32xf32>
    %1606 = vector.broadcast %1522 : vector<1x32xf32> to vector<8x32xf32>
    %1607 = arith.addf %1605, %1606 : vector<8x32xf32>
    %cst_408 = arith.constant 0.000000e+00 : f32
    %1608 = vector.broadcast %cst_408 : f32 to vector<8x32xf32>
    %1609 = arith.cmpf ogt, %1607, %1608 : vector<8x32xf32>
    %1610 = math.exp %1607 : vector<8x32xf32>
    %cst_409 = arith.constant 1.000000e+00 : f32
    %1611 = vector.broadcast %cst_409 : f32 to vector<8x32xf32>
    %1612 = arith.subf %1610, %1611 : vector<8x32xf32>
    %1613 = arith.select %1609, %1607, %1612 : vector<8x32xi1>, vector<8x32xf32>
    %1614 = arith.truncf %1613 : vector<8x32xf32> to vector<8x32xbf16>
    %cst_410 = arith.constant dense<0.000000e+00> : vector<8x32xf32>
    %1615 = tpu.matmul %1614, %3, %cst_410 {dimension_numbers = #tpu.dot_dimension_numbers<[1], [0], [0], [1], [0, 0, 1, 1], [], []>} : vector<8x32xbf16>, vector<32x32xbf16>, vector<8x32xf32> -> vector<8x32xf32>
    %1616 = vector.broadcast %8 : vector<1x32xf32> to vector<8x32xf32>
    %1617 = arith.addf %1615, %1616 : vector<8x32xf32>
    %cst_411 = arith.constant 0.000000e+00 : f32
    %1618 = vector.broadcast %cst_411 : f32 to vector<8x32xf32>
    %1619 = arith.cmpf ogt, %1617, %1618 : vector<8x32xf32>
    %1620 = math.exp %1617 : vector<8x32xf32>
    %cst_412 = arith.constant 1.000000e+00 : f32
    %1621 = vector.broadcast %cst_412 : f32 to vector<8x32xf32>
    %1622 = arith.subf %1620, %1621 : vector<8x32xf32>
    %1623 = arith.select %1619, %1617, %1622 : vector<8x32xi1>, vector<8x32xf32>
    %1624 = arith.truncf %1623 : vector<8x32xf32> to vector<8x32xbf16>
    %cst_413 = arith.constant dense<0.000000e+00> : vector<8x4xf32>
    %1625 = tpu.matmul %1624, %5, %cst_413 {dimension_numbers = #tpu.dot_dimension_numbers<[1], [0], [0], [1], [0, 0, 1, 1], [], []>} : vector<8x32xbf16>, vector<32x4xbf16>, vector<8x4xf32> -> vector<8x4xf32>
    %1626 = vector.broadcast %9 : vector<1x4xf32> to vector<8x4xf32>
    %1627 = arith.addf %1625, %1626 : vector<8x4xf32>
    %1628 = arith.addf %1546, %1627 : vector<8x4xf32>
    %1629 = vector.broadcast %19 : f32 to vector<8x4xf32>
    %1630 = arith.mulf %1629, %1628 : vector<8x4xf32>
    %1631 = arith.addf %1520, %1630 : vector<8x4xf32>
    %1632 = arith.addf %1573, %1600 : vector<8x4xf32>
    %1633 = vector.broadcast %20 : f32 to vector<8x4xf32>
    %1634 = arith.mulf %1633, %1632 : vector<8x4xf32>
    %1635 = arith.addf %1631, %1634 : vector<8x4xf32>
    %c14_i32 = arith.constant 14 : i32
    %1636 = arith.addf %1522, %22 : vector<1x32xf32>
    %1637 = arith.addf %1636, %22 : vector<1x32xf32>
    %1638 = arith.truncf %1635 : vector<8x4xf32> to vector<8x4xbf16>
    %cst_414 = arith.constant dense<0.000000e+00> : vector<8x32xf32>
    %1639 = tpu.matmul %1638, %1, %cst_414 {dimension_numbers = #tpu.dot_dimension_numbers<[1], [0], [0], [1], [0, 0, 1, 1], [], []>} : vector<8x4xbf16>, vector<4x32xbf16>, vector<8x32xf32> -> vector<8x32xf32>
    %1640 = vector.broadcast %1522 : vector<1x32xf32> to vector<8x32xf32>
    %1641 = arith.addf %1639, %1640 : vector<8x32xf32>
    %cst_415 = arith.constant 0.000000e+00 : f32
    %1642 = vector.broadcast %cst_415 : f32 to vector<8x32xf32>
    %1643 = arith.cmpf ogt, %1641, %1642 : vector<8x32xf32>
    %1644 = math.exp %1641 : vector<8x32xf32>
    %cst_416 = arith.constant 1.000000e+00 : f32
    %1645 = vector.broadcast %cst_416 : f32 to vector<8x32xf32>
    %1646 = arith.subf %1644, %1645 : vector<8x32xf32>
    %1647 = arith.select %1643, %1641, %1646 : vector<8x32xi1>, vector<8x32xf32>
    %1648 = arith.truncf %1647 : vector<8x32xf32> to vector<8x32xbf16>
    %cst_417 = arith.constant dense<0.000000e+00> : vector<8x32xf32>
    %1649 = tpu.matmul %1648, %3, %cst_417 {dimension_numbers = #tpu.dot_dimension_numbers<[1], [0], [0], [1], [0, 0, 1, 1], [], []>} : vector<8x32xbf16>, vector<32x32xbf16>, vector<8x32xf32> -> vector<8x32xf32>
    %1650 = vector.broadcast %8 : vector<1x32xf32> to vector<8x32xf32>
    %1651 = arith.addf %1649, %1650 : vector<8x32xf32>
    %cst_418 = arith.constant 0.000000e+00 : f32
    %1652 = vector.broadcast %cst_418 : f32 to vector<8x32xf32>
    %1653 = arith.cmpf ogt, %1651, %1652 : vector<8x32xf32>
    %1654 = math.exp %1651 : vector<8x32xf32>
    %cst_419 = arith.constant 1.000000e+00 : f32
    %1655 = vector.broadcast %cst_419 : f32 to vector<8x32xf32>
    %1656 = arith.subf %1654, %1655 : vector<8x32xf32>
    %1657 = arith.select %1653, %1651, %1656 : vector<8x32xi1>, vector<8x32xf32>
    %1658 = arith.truncf %1657 : vector<8x32xf32> to vector<8x32xbf16>
    %cst_420 = arith.constant dense<0.000000e+00> : vector<8x4xf32>
    %1659 = tpu.matmul %1658, %5, %cst_420 {dimension_numbers = #tpu.dot_dimension_numbers<[1], [0], [0], [1], [0, 0, 1, 1], [], []>} : vector<8x32xbf16>, vector<32x4xbf16>, vector<8x4xf32> -> vector<8x4xf32>
    %1660 = vector.broadcast %9 : vector<1x4xf32> to vector<8x4xf32>
    %1661 = arith.addf %1659, %1660 : vector<8x4xf32>
    %1662 = vector.broadcast %18 : f32 to vector<8x4xf32>
    %1663 = arith.mulf %1662, %1661 : vector<8x4xf32>
    %1664 = arith.addf %1635, %1663 : vector<8x4xf32>
    %1665 = arith.truncf %1664 : vector<8x4xf32> to vector<8x4xbf16>
    %cst_421 = arith.constant dense<0.000000e+00> : vector<8x32xf32>
    %1666 = tpu.matmul %1665, %1, %cst_421 {dimension_numbers = #tpu.dot_dimension_numbers<[1], [0], [0], [1], [0, 0, 1, 1], [], []>} : vector<8x4xbf16>, vector<4x32xbf16>, vector<8x32xf32> -> vector<8x32xf32>
    %1667 = vector.broadcast %1636 : vector<1x32xf32> to vector<8x32xf32>
    %1668 = arith.addf %1666, %1667 : vector<8x32xf32>
    %cst_422 = arith.constant 0.000000e+00 : f32
    %1669 = vector.broadcast %cst_422 : f32 to vector<8x32xf32>
    %1670 = arith.cmpf ogt, %1668, %1669 : vector<8x32xf32>
    %1671 = math.exp %1668 : vector<8x32xf32>
    %cst_423 = arith.constant 1.000000e+00 : f32
    %1672 = vector.broadcast %cst_423 : f32 to vector<8x32xf32>
    %1673 = arith.subf %1671, %1672 : vector<8x32xf32>
    %1674 = arith.select %1670, %1668, %1673 : vector<8x32xi1>, vector<8x32xf32>
    %1675 = arith.truncf %1674 : vector<8x32xf32> to vector<8x32xbf16>
    %cst_424 = arith.constant dense<0.000000e+00> : vector<8x32xf32>
    %1676 = tpu.matmul %1675, %3, %cst_424 {dimension_numbers = #tpu.dot_dimension_numbers<[1], [0], [0], [1], [0, 0, 1, 1], [], []>} : vector<8x32xbf16>, vector<32x32xbf16>, vector<8x32xf32> -> vector<8x32xf32>
    %1677 = vector.broadcast %8 : vector<1x32xf32> to vector<8x32xf32>
    %1678 = arith.addf %1676, %1677 : vector<8x32xf32>
    %cst_425 = arith.constant 0.000000e+00 : f32
    %1679 = vector.broadcast %cst_425 : f32 to vector<8x32xf32>
    %1680 = arith.cmpf ogt, %1678, %1679 : vector<8x32xf32>
    %1681 = math.exp %1678 : vector<8x32xf32>
    %cst_426 = arith.constant 1.000000e+00 : f32
    %1682 = vector.broadcast %cst_426 : f32 to vector<8x32xf32>
    %1683 = arith.subf %1681, %1682 : vector<8x32xf32>
    %1684 = arith.select %1680, %1678, %1683 : vector<8x32xi1>, vector<8x32xf32>
    %1685 = arith.truncf %1684 : vector<8x32xf32> to vector<8x32xbf16>
    %cst_427 = arith.constant dense<0.000000e+00> : vector<8x4xf32>
    %1686 = tpu.matmul %1685, %5, %cst_427 {dimension_numbers = #tpu.dot_dimension_numbers<[1], [0], [0], [1], [0, 0, 1, 1], [], []>} : vector<8x32xbf16>, vector<32x4xbf16>, vector<8x4xf32> -> vector<8x4xf32>
    %1687 = vector.broadcast %9 : vector<1x4xf32> to vector<8x4xf32>
    %1688 = arith.addf %1686, %1687 : vector<8x4xf32>
    %1689 = vector.broadcast %18 : f32 to vector<8x4xf32>
    %1690 = arith.mulf %1689, %1688 : vector<8x4xf32>
    %1691 = arith.addf %1635, %1690 : vector<8x4xf32>
    %1692 = arith.truncf %1691 : vector<8x4xf32> to vector<8x4xbf16>
    %cst_428 = arith.constant dense<0.000000e+00> : vector<8x32xf32>
    %1693 = tpu.matmul %1692, %1, %cst_428 {dimension_numbers = #tpu.dot_dimension_numbers<[1], [0], [0], [1], [0, 0, 1, 1], [], []>} : vector<8x4xbf16>, vector<4x32xbf16>, vector<8x32xf32> -> vector<8x32xf32>
    %1694 = vector.broadcast %1636 : vector<1x32xf32> to vector<8x32xf32>
    %1695 = arith.addf %1693, %1694 : vector<8x32xf32>
    %cst_429 = arith.constant 0.000000e+00 : f32
    %1696 = vector.broadcast %cst_429 : f32 to vector<8x32xf32>
    %1697 = arith.cmpf ogt, %1695, %1696 : vector<8x32xf32>
    %1698 = math.exp %1695 : vector<8x32xf32>
    %cst_430 = arith.constant 1.000000e+00 : f32
    %1699 = vector.broadcast %cst_430 : f32 to vector<8x32xf32>
    %1700 = arith.subf %1698, %1699 : vector<8x32xf32>
    %1701 = arith.select %1697, %1695, %1700 : vector<8x32xi1>, vector<8x32xf32>
    %1702 = arith.truncf %1701 : vector<8x32xf32> to vector<8x32xbf16>
    %cst_431 = arith.constant dense<0.000000e+00> : vector<8x32xf32>
    %1703 = tpu.matmul %1702, %3, %cst_431 {dimension_numbers = #tpu.dot_dimension_numbers<[1], [0], [0], [1], [0, 0, 1, 1], [], []>} : vector<8x32xbf16>, vector<32x32xbf16>, vector<8x32xf32> -> vector<8x32xf32>
    %1704 = vector.broadcast %8 : vector<1x32xf32> to vector<8x32xf32>
    %1705 = arith.addf %1703, %1704 : vector<8x32xf32>
    %cst_432 = arith.constant 0.000000e+00 : f32
    %1706 = vector.broadcast %cst_432 : f32 to vector<8x32xf32>
    %1707 = arith.cmpf ogt, %1705, %1706 : vector<8x32xf32>
    %1708 = math.exp %1705 : vector<8x32xf32>
    %cst_433 = arith.constant 1.000000e+00 : f32
    %1709 = vector.broadcast %cst_433 : f32 to vector<8x32xf32>
    %1710 = arith.subf %1708, %1709 : vector<8x32xf32>
    %1711 = arith.select %1707, %1705, %1710 : vector<8x32xi1>, vector<8x32xf32>
    %1712 = arith.truncf %1711 : vector<8x32xf32> to vector<8x32xbf16>
    %cst_434 = arith.constant dense<0.000000e+00> : vector<8x4xf32>
    %1713 = tpu.matmul %1712, %5, %cst_434 {dimension_numbers = #tpu.dot_dimension_numbers<[1], [0], [0], [1], [0, 0, 1, 1], [], []>} : vector<8x32xbf16>, vector<32x4xbf16>, vector<8x4xf32> -> vector<8x4xf32>
    %1714 = vector.broadcast %9 : vector<1x4xf32> to vector<8x4xf32>
    %1715 = arith.addf %1713, %1714 : vector<8x4xf32>
    %1716 = vector.broadcast %17 : f32 to vector<8x4xf32>
    %1717 = arith.mulf %1716, %1715 : vector<8x4xf32>
    %1718 = arith.addf %1635, %1717 : vector<8x4xf32>
    %1719 = arith.truncf %1718 : vector<8x4xf32> to vector<8x4xbf16>
    %cst_435 = arith.constant dense<0.000000e+00> : vector<8x32xf32>
    %1720 = tpu.matmul %1719, %1, %cst_435 {dimension_numbers = #tpu.dot_dimension_numbers<[1], [0], [0], [1], [0, 0, 1, 1], [], []>} : vector<8x4xbf16>, vector<4x32xbf16>, vector<8x32xf32> -> vector<8x32xf32>
    %1721 = vector.broadcast %1637 : vector<1x32xf32> to vector<8x32xf32>
    %1722 = arith.addf %1720, %1721 : vector<8x32xf32>
    %cst_436 = arith.constant 0.000000e+00 : f32
    %1723 = vector.broadcast %cst_436 : f32 to vector<8x32xf32>
    %1724 = arith.cmpf ogt, %1722, %1723 : vector<8x32xf32>
    %1725 = math.exp %1722 : vector<8x32xf32>
    %cst_437 = arith.constant 1.000000e+00 : f32
    %1726 = vector.broadcast %cst_437 : f32 to vector<8x32xf32>
    %1727 = arith.subf %1725, %1726 : vector<8x32xf32>
    %1728 = arith.select %1724, %1722, %1727 : vector<8x32xi1>, vector<8x32xf32>
    %1729 = arith.truncf %1728 : vector<8x32xf32> to vector<8x32xbf16>
    %cst_438 = arith.constant dense<0.000000e+00> : vector<8x32xf32>
    %1730 = tpu.matmul %1729, %3, %cst_438 {dimension_numbers = #tpu.dot_dimension_numbers<[1], [0], [0], [1], [0, 0, 1, 1], [], []>} : vector<8x32xbf16>, vector<32x32xbf16>, vector<8x32xf32> -> vector<8x32xf32>
    %1731 = vector.broadcast %8 : vector<1x32xf32> to vector<8x32xf32>
    %1732 = arith.addf %1730, %1731 : vector<8x32xf32>
    %cst_439 = arith.constant 0.000000e+00 : f32
    %1733 = vector.broadcast %cst_439 : f32 to vector<8x32xf32>
    %1734 = arith.cmpf ogt, %1732, %1733 : vector<8x32xf32>
    %1735 = math.exp %1732 : vector<8x32xf32>
    %cst_440 = arith.constant 1.000000e+00 : f32
    %1736 = vector.broadcast %cst_440 : f32 to vector<8x32xf32>
    %1737 = arith.subf %1735, %1736 : vector<8x32xf32>
    %1738 = arith.select %1734, %1732, %1737 : vector<8x32xi1>, vector<8x32xf32>
    %1739 = arith.truncf %1738 : vector<8x32xf32> to vector<8x32xbf16>
    %cst_441 = arith.constant dense<0.000000e+00> : vector<8x4xf32>
    %1740 = tpu.matmul %1739, %5, %cst_441 {dimension_numbers = #tpu.dot_dimension_numbers<[1], [0], [0], [1], [0, 0, 1, 1], [], []>} : vector<8x32xbf16>, vector<32x4xbf16>, vector<8x4xf32> -> vector<8x4xf32>
    %1741 = vector.broadcast %9 : vector<1x4xf32> to vector<8x4xf32>
    %1742 = arith.addf %1740, %1741 : vector<8x4xf32>
    %1743 = arith.addf %1661, %1742 : vector<8x4xf32>
    %1744 = vector.broadcast %19 : f32 to vector<8x4xf32>
    %1745 = arith.mulf %1744, %1743 : vector<8x4xf32>
    %1746 = arith.addf %1635, %1745 : vector<8x4xf32>
    %1747 = arith.addf %1688, %1715 : vector<8x4xf32>
    %1748 = vector.broadcast %20 : f32 to vector<8x4xf32>
    %1749 = arith.mulf %1748, %1747 : vector<8x4xf32>
    %1750 = arith.addf %1746, %1749 : vector<8x4xf32>
    %c15_i32 = arith.constant 15 : i32
    %1751 = arith.addf %1637, %22 : vector<1x32xf32>
    %1752 = arith.addf %1751, %22 : vector<1x32xf32>
    %1753 = arith.truncf %1750 : vector<8x4xf32> to vector<8x4xbf16>
    %cst_442 = arith.constant dense<0.000000e+00> : vector<8x32xf32>
    %1754 = tpu.matmul %1753, %1, %cst_442 {dimension_numbers = #tpu.dot_dimension_numbers<[1], [0], [0], [1], [0, 0, 1, 1], [], []>} : vector<8x4xbf16>, vector<4x32xbf16>, vector<8x32xf32> -> vector<8x32xf32>
    %1755 = vector.broadcast %1637 : vector<1x32xf32> to vector<8x32xf32>
    %1756 = arith.addf %1754, %1755 : vector<8x32xf32>
    %cst_443 = arith.constant 0.000000e+00 : f32
    %1757 = vector.broadcast %cst_443 : f32 to vector<8x32xf32>
    %1758 = arith.cmpf ogt, %1756, %1757 : vector<8x32xf32>
    %1759 = math.exp %1756 : vector<8x32xf32>
    %cst_444 = arith.constant 1.000000e+00 : f32
    %1760 = vector.broadcast %cst_444 : f32 to vector<8x32xf32>
    %1761 = arith.subf %1759, %1760 : vector<8x32xf32>
    %1762 = arith.select %1758, %1756, %1761 : vector<8x32xi1>, vector<8x32xf32>
    %1763 = arith.truncf %1762 : vector<8x32xf32> to vector<8x32xbf16>
    %cst_445 = arith.constant dense<0.000000e+00> : vector<8x32xf32>
    %1764 = tpu.matmul %1763, %3, %cst_445 {dimension_numbers = #tpu.dot_dimension_numbers<[1], [0], [0], [1], [0, 0, 1, 1], [], []>} : vector<8x32xbf16>, vector<32x32xbf16>, vector<8x32xf32> -> vector<8x32xf32>
    %1765 = vector.broadcast %8 : vector<1x32xf32> to vector<8x32xf32>
    %1766 = arith.addf %1764, %1765 : vector<8x32xf32>
    %cst_446 = arith.constant 0.000000e+00 : f32
    %1767 = vector.broadcast %cst_446 : f32 to vector<8x32xf32>
    %1768 = arith.cmpf ogt, %1766, %1767 : vector<8x32xf32>
    %1769 = math.exp %1766 : vector<8x32xf32>
    %cst_447 = arith.constant 1.000000e+00 : f32
    %1770 = vector.broadcast %cst_447 : f32 to vector<8x32xf32>
    %1771 = arith.subf %1769, %1770 : vector<8x32xf32>
    %1772 = arith.select %1768, %1766, %1771 : vector<8x32xi1>, vector<8x32xf32>
    %1773 = arith.truncf %1772 : vector<8x32xf32> to vector<8x32xbf16>
    %cst_448 = arith.constant dense<0.000000e+00> : vector<8x4xf32>
    %1774 = tpu.matmul %1773, %5, %cst_448 {dimension_numbers = #tpu.dot_dimension_numbers<[1], [0], [0], [1], [0, 0, 1, 1], [], []>} : vector<8x32xbf16>, vector<32x4xbf16>, vector<8x4xf32> -> vector<8x4xf32>
    %1775 = vector.broadcast %9 : vector<1x4xf32> to vector<8x4xf32>
    %1776 = arith.addf %1774, %1775 : vector<8x4xf32>
    %1777 = vector.broadcast %18 : f32 to vector<8x4xf32>
    %1778 = arith.mulf %1777, %1776 : vector<8x4xf32>
    %1779 = arith.addf %1750, %1778 : vector<8x4xf32>
    %1780 = arith.truncf %1779 : vector<8x4xf32> to vector<8x4xbf16>
    %cst_449 = arith.constant dense<0.000000e+00> : vector<8x32xf32>
    %1781 = tpu.matmul %1780, %1, %cst_449 {dimension_numbers = #tpu.dot_dimension_numbers<[1], [0], [0], [1], [0, 0, 1, 1], [], []>} : vector<8x4xbf16>, vector<4x32xbf16>, vector<8x32xf32> -> vector<8x32xf32>
    %1782 = vector.broadcast %1751 : vector<1x32xf32> to vector<8x32xf32>
    %1783 = arith.addf %1781, %1782 : vector<8x32xf32>
    %cst_450 = arith.constant 0.000000e+00 : f32
    %1784 = vector.broadcast %cst_450 : f32 to vector<8x32xf32>
    %1785 = arith.cmpf ogt, %1783, %1784 : vector<8x32xf32>
    %1786 = math.exp %1783 : vector<8x32xf32>
    %cst_451 = arith.constant 1.000000e+00 : f32
    %1787 = vector.broadcast %cst_451 : f32 to vector<8x32xf32>
    %1788 = arith.subf %1786, %1787 : vector<8x32xf32>
    %1789 = arith.select %1785, %1783, %1788 : vector<8x32xi1>, vector<8x32xf32>
    %1790 = arith.truncf %1789 : vector<8x32xf32> to vector<8x32xbf16>
    %cst_452 = arith.constant dense<0.000000e+00> : vector<8x32xf32>
    %1791 = tpu.matmul %1790, %3, %cst_452 {dimension_numbers = #tpu.dot_dimension_numbers<[1], [0], [0], [1], [0, 0, 1, 1], [], []>} : vector<8x32xbf16>, vector<32x32xbf16>, vector<8x32xf32> -> vector<8x32xf32>
    %1792 = vector.broadcast %8 : vector<1x32xf32> to vector<8x32xf32>
    %1793 = arith.addf %1791, %1792 : vector<8x32xf32>
    %cst_453 = arith.constant 0.000000e+00 : f32
    %1794 = vector.broadcast %cst_453 : f32 to vector<8x32xf32>
    %1795 = arith.cmpf ogt, %1793, %1794 : vector<8x32xf32>
    %1796 = math.exp %1793 : vector<8x32xf32>
    %cst_454 = arith.constant 1.000000e+00 : f32
    %1797 = vector.broadcast %cst_454 : f32 to vector<8x32xf32>
    %1798 = arith.subf %1796, %1797 : vector<8x32xf32>
    %1799 = arith.select %1795, %1793, %1798 : vector<8x32xi1>, vector<8x32xf32>
    %1800 = arith.truncf %1799 : vector<8x32xf32> to vector<8x32xbf16>
    %cst_455 = arith.constant dense<0.000000e+00> : vector<8x4xf32>
    %1801 = tpu.matmul %1800, %5, %cst_455 {dimension_numbers = #tpu.dot_dimension_numbers<[1], [0], [0], [1], [0, 0, 1, 1], [], []>} : vector<8x32xbf16>, vector<32x4xbf16>, vector<8x4xf32> -> vector<8x4xf32>
    %1802 = vector.broadcast %9 : vector<1x4xf32> to vector<8x4xf32>
    %1803 = arith.addf %1801, %1802 : vector<8x4xf32>
    %1804 = vector.broadcast %18 : f32 to vector<8x4xf32>
    %1805 = arith.mulf %1804, %1803 : vector<8x4xf32>
    %1806 = arith.addf %1750, %1805 : vector<8x4xf32>
    %1807 = arith.truncf %1806 : vector<8x4xf32> to vector<8x4xbf16>
    %cst_456 = arith.constant dense<0.000000e+00> : vector<8x32xf32>
    %1808 = tpu.matmul %1807, %1, %cst_456 {dimension_numbers = #tpu.dot_dimension_numbers<[1], [0], [0], [1], [0, 0, 1, 1], [], []>} : vector<8x4xbf16>, vector<4x32xbf16>, vector<8x32xf32> -> vector<8x32xf32>
    %1809 = vector.broadcast %1751 : vector<1x32xf32> to vector<8x32xf32>
    %1810 = arith.addf %1808, %1809 : vector<8x32xf32>
    %cst_457 = arith.constant 0.000000e+00 : f32
    %1811 = vector.broadcast %cst_457 : f32 to vector<8x32xf32>
    %1812 = arith.cmpf ogt, %1810, %1811 : vector<8x32xf32>
    %1813 = math.exp %1810 : vector<8x32xf32>
    %cst_458 = arith.constant 1.000000e+00 : f32
    %1814 = vector.broadcast %cst_458 : f32 to vector<8x32xf32>
    %1815 = arith.subf %1813, %1814 : vector<8x32xf32>
    %1816 = arith.select %1812, %1810, %1815 : vector<8x32xi1>, vector<8x32xf32>
    %1817 = arith.truncf %1816 : vector<8x32xf32> to vector<8x32xbf16>
    %cst_459 = arith.constant dense<0.000000e+00> : vector<8x32xf32>
    %1818 = tpu.matmul %1817, %3, %cst_459 {dimension_numbers = #tpu.dot_dimension_numbers<[1], [0], [0], [1], [0, 0, 1, 1], [], []>} : vector<8x32xbf16>, vector<32x32xbf16>, vector<8x32xf32> -> vector<8x32xf32>
    %1819 = vector.broadcast %8 : vector<1x32xf32> to vector<8x32xf32>
    %1820 = arith.addf %1818, %1819 : vector<8x32xf32>
    %cst_460 = arith.constant 0.000000e+00 : f32
    %1821 = vector.broadcast %cst_460 : f32 to vector<8x32xf32>
    %1822 = arith.cmpf ogt, %1820, %1821 : vector<8x32xf32>
    %1823 = math.exp %1820 : vector<8x32xf32>
    %cst_461 = arith.constant 1.000000e+00 : f32
    %1824 = vector.broadcast %cst_461 : f32 to vector<8x32xf32>
    %1825 = arith.subf %1823, %1824 : vector<8x32xf32>
    %1826 = arith.select %1822, %1820, %1825 : vector<8x32xi1>, vector<8x32xf32>
    %1827 = arith.truncf %1826 : vector<8x32xf32> to vector<8x32xbf16>
    %cst_462 = arith.constant dense<0.000000e+00> : vector<8x4xf32>
    %1828 = tpu.matmul %1827, %5, %cst_462 {dimension_numbers = #tpu.dot_dimension_numbers<[1], [0], [0], [1], [0, 0, 1, 1], [], []>} : vector<8x32xbf16>, vector<32x4xbf16>, vector<8x4xf32> -> vector<8x4xf32>
    %1829 = vector.broadcast %9 : vector<1x4xf32> to vector<8x4xf32>
    %1830 = arith.addf %1828, %1829 : vector<8x4xf32>
    %1831 = vector.broadcast %17 : f32 to vector<8x4xf32>
    %1832 = arith.mulf %1831, %1830 : vector<8x4xf32>
    %1833 = arith.addf %1750, %1832 : vector<8x4xf32>
    %1834 = arith.truncf %1833 : vector<8x4xf32> to vector<8x4xbf16>
    %cst_463 = arith.constant dense<0.000000e+00> : vector<8x32xf32>
    %1835 = tpu.matmul %1834, %1, %cst_463 {dimension_numbers = #tpu.dot_dimension_numbers<[1], [0], [0], [1], [0, 0, 1, 1], [], []>} : vector<8x4xbf16>, vector<4x32xbf16>, vector<8x32xf32> -> vector<8x32xf32>
    %1836 = vector.broadcast %1752 : vector<1x32xf32> to vector<8x32xf32>
    %1837 = arith.addf %1835, %1836 : vector<8x32xf32>
    %cst_464 = arith.constant 0.000000e+00 : f32
    %1838 = vector.broadcast %cst_464 : f32 to vector<8x32xf32>
    %1839 = arith.cmpf ogt, %1837, %1838 : vector<8x32xf32>
    %1840 = math.exp %1837 : vector<8x32xf32>
    %cst_465 = arith.constant 1.000000e+00 : f32
    %1841 = vector.broadcast %cst_465 : f32 to vector<8x32xf32>
    %1842 = arith.subf %1840, %1841 : vector<8x32xf32>
    %1843 = arith.select %1839, %1837, %1842 : vector<8x32xi1>, vector<8x32xf32>
    %1844 = arith.truncf %1843 : vector<8x32xf32> to vector<8x32xbf16>
    %cst_466 = arith.constant dense<0.000000e+00> : vector<8x32xf32>
    %1845 = tpu.matmul %1844, %3, %cst_466 {dimension_numbers = #tpu.dot_dimension_numbers<[1], [0], [0], [1], [0, 0, 1, 1], [], []>} : vector<8x32xbf16>, vector<32x32xbf16>, vector<8x32xf32> -> vector<8x32xf32>
    %1846 = vector.broadcast %8 : vector<1x32xf32> to vector<8x32xf32>
    %1847 = arith.addf %1845, %1846 : vector<8x32xf32>
    %cst_467 = arith.constant 0.000000e+00 : f32
    %1848 = vector.broadcast %cst_467 : f32 to vector<8x32xf32>
    %1849 = arith.cmpf ogt, %1847, %1848 : vector<8x32xf32>
    %1850 = math.exp %1847 : vector<8x32xf32>
    %cst_468 = arith.constant 1.000000e+00 : f32
    %1851 = vector.broadcast %cst_468 : f32 to vector<8x32xf32>
    %1852 = arith.subf %1850, %1851 : vector<8x32xf32>
    %1853 = arith.select %1849, %1847, %1852 : vector<8x32xi1>, vector<8x32xf32>
    %1854 = arith.truncf %1853 : vector<8x32xf32> to vector<8x32xbf16>
    %cst_469 = arith.constant dense<0.000000e+00> : vector<8x4xf32>
    %1855 = tpu.matmul %1854, %5, %cst_469 {dimension_numbers = #tpu.dot_dimension_numbers<[1], [0], [0], [1], [0, 0, 1, 1], [], []>} : vector<8x32xbf16>, vector<32x4xbf16>, vector<8x4xf32> -> vector<8x4xf32>
    %1856 = vector.broadcast %9 : vector<1x4xf32> to vector<8x4xf32>
    %1857 = arith.addf %1855, %1856 : vector<8x4xf32>
    %1858 = arith.addf %1776, %1857 : vector<8x4xf32>
    %1859 = vector.broadcast %19 : f32 to vector<8x4xf32>
    %1860 = arith.mulf %1859, %1858 : vector<8x4xf32>
    %1861 = arith.addf %1750, %1860 : vector<8x4xf32>
    %1862 = arith.addf %1803, %1830 : vector<8x4xf32>
    %1863 = vector.broadcast %20 : f32 to vector<8x4xf32>
    %1864 = arith.mulf %1863, %1862 : vector<8x4xf32>
    %1865 = arith.addf %1861, %1864 : vector<8x4xf32>
    %c16_i32 = arith.constant 16 : i32
    %1866 = arith.addf %1752, %22 : vector<1x32xf32>
    %1867 = arith.addf %1866, %22 : vector<1x32xf32>
    %1868 = arith.truncf %1865 : vector<8x4xf32> to vector<8x4xbf16>
    %cst_470 = arith.constant dense<0.000000e+00> : vector<8x32xf32>
    %1869 = tpu.matmul %1868, %1, %cst_470 {dimension_numbers = #tpu.dot_dimension_numbers<[1], [0], [0], [1], [0, 0, 1, 1], [], []>} : vector<8x4xbf16>, vector<4x32xbf16>, vector<8x32xf32> -> vector<8x32xf32>
    %1870 = vector.broadcast %1752 : vector<1x32xf32> to vector<8x32xf32>
    %1871 = arith.addf %1869, %1870 : vector<8x32xf32>
    %cst_471 = arith.constant 0.000000e+00 : f32
    %1872 = vector.broadcast %cst_471 : f32 to vector<8x32xf32>
    %1873 = arith.cmpf ogt, %1871, %1872 : vector<8x32xf32>
    %1874 = math.exp %1871 : vector<8x32xf32>
    %cst_472 = arith.constant 1.000000e+00 : f32
    %1875 = vector.broadcast %cst_472 : f32 to vector<8x32xf32>
    %1876 = arith.subf %1874, %1875 : vector<8x32xf32>
    %1877 = arith.select %1873, %1871, %1876 : vector<8x32xi1>, vector<8x32xf32>
    %1878 = arith.truncf %1877 : vector<8x32xf32> to vector<8x32xbf16>
    %cst_473 = arith.constant dense<0.000000e+00> : vector<8x32xf32>
    %1879 = tpu.matmul %1878, %3, %cst_473 {dimension_numbers = #tpu.dot_dimension_numbers<[1], [0], [0], [1], [0, 0, 1, 1], [], []>} : vector<8x32xbf16>, vector<32x32xbf16>, vector<8x32xf32> -> vector<8x32xf32>
    %1880 = vector.broadcast %8 : vector<1x32xf32> to vector<8x32xf32>
    %1881 = arith.addf %1879, %1880 : vector<8x32xf32>
    %cst_474 = arith.constant 0.000000e+00 : f32
    %1882 = vector.broadcast %cst_474 : f32 to vector<8x32xf32>
    %1883 = arith.cmpf ogt, %1881, %1882 : vector<8x32xf32>
    %1884 = math.exp %1881 : vector<8x32xf32>
    %cst_475 = arith.constant 1.000000e+00 : f32
    %1885 = vector.broadcast %cst_475 : f32 to vector<8x32xf32>
    %1886 = arith.subf %1884, %1885 : vector<8x32xf32>
    %1887 = arith.select %1883, %1881, %1886 : vector<8x32xi1>, vector<8x32xf32>
    %1888 = arith.truncf %1887 : vector<8x32xf32> to vector<8x32xbf16>
    %cst_476 = arith.constant dense<0.000000e+00> : vector<8x4xf32>
    %1889 = tpu.matmul %1888, %5, %cst_476 {dimension_numbers = #tpu.dot_dimension_numbers<[1], [0], [0], [1], [0, 0, 1, 1], [], []>} : vector<8x32xbf16>, vector<32x4xbf16>, vector<8x4xf32> -> vector<8x4xf32>
    %1890 = vector.broadcast %9 : vector<1x4xf32> to vector<8x4xf32>
    %1891 = arith.addf %1889, %1890 : vector<8x4xf32>
    %1892 = vector.broadcast %18 : f32 to vector<8x4xf32>
    %1893 = arith.mulf %1892, %1891 : vector<8x4xf32>
    %1894 = arith.addf %1865, %1893 : vector<8x4xf32>
    %1895 = arith.truncf %1894 : vector<8x4xf32> to vector<8x4xbf16>
    %cst_477 = arith.constant dense<0.000000e+00> : vector<8x32xf32>
    %1896 = tpu.matmul %1895, %1, %cst_477 {dimension_numbers = #tpu.dot_dimension_numbers<[1], [0], [0], [1], [0, 0, 1, 1], [], []>} : vector<8x4xbf16>, vector<4x32xbf16>, vector<8x32xf32> -> vector<8x32xf32>
    %1897 = vector.broadcast %1866 : vector<1x32xf32> to vector<8x32xf32>
    %1898 = arith.addf %1896, %1897 : vector<8x32xf32>
    %cst_478 = arith.constant 0.000000e+00 : f32
    %1899 = vector.broadcast %cst_478 : f32 to vector<8x32xf32>
    %1900 = arith.cmpf ogt, %1898, %1899 : vector<8x32xf32>
    %1901 = math.exp %1898 : vector<8x32xf32>
    %cst_479 = arith.constant 1.000000e+00 : f32
    %1902 = vector.broadcast %cst_479 : f32 to vector<8x32xf32>
    %1903 = arith.subf %1901, %1902 : vector<8x32xf32>
    %1904 = arith.select %1900, %1898, %1903 : vector<8x32xi1>, vector<8x32xf32>
    %1905 = arith.truncf %1904 : vector<8x32xf32> to vector<8x32xbf16>
    %cst_480 = arith.constant dense<0.000000e+00> : vector<8x32xf32>
    %1906 = tpu.matmul %1905, %3, %cst_480 {dimension_numbers = #tpu.dot_dimension_numbers<[1], [0], [0], [1], [0, 0, 1, 1], [], []>} : vector<8x32xbf16>, vector<32x32xbf16>, vector<8x32xf32> -> vector<8x32xf32>
    %1907 = vector.broadcast %8 : vector<1x32xf32> to vector<8x32xf32>
    %1908 = arith.addf %1906, %1907 : vector<8x32xf32>
    %cst_481 = arith.constant 0.000000e+00 : f32
    %1909 = vector.broadcast %cst_481 : f32 to vector<8x32xf32>
    %1910 = arith.cmpf ogt, %1908, %1909 : vector<8x32xf32>
    %1911 = math.exp %1908 : vector<8x32xf32>
    %cst_482 = arith.constant 1.000000e+00 : f32
    %1912 = vector.broadcast %cst_482 : f32 to vector<8x32xf32>
    %1913 = arith.subf %1911, %1912 : vector<8x32xf32>
    %1914 = arith.select %1910, %1908, %1913 : vector<8x32xi1>, vector<8x32xf32>
    %1915 = arith.truncf %1914 : vector<8x32xf32> to vector<8x32xbf16>
    %cst_483 = arith.constant dense<0.000000e+00> : vector<8x4xf32>
    %1916 = tpu.matmul %1915, %5, %cst_483 {dimension_numbers = #tpu.dot_dimension_numbers<[1], [0], [0], [1], [0, 0, 1, 1], [], []>} : vector<8x32xbf16>, vector<32x4xbf16>, vector<8x4xf32> -> vector<8x4xf32>
    %1917 = vector.broadcast %9 : vector<1x4xf32> to vector<8x4xf32>
    %1918 = arith.addf %1916, %1917 : vector<8x4xf32>
    %1919 = vector.broadcast %18 : f32 to vector<8x4xf32>
    %1920 = arith.mulf %1919, %1918 : vector<8x4xf32>
    %1921 = arith.addf %1865, %1920 : vector<8x4xf32>
    %1922 = arith.truncf %1921 : vector<8x4xf32> to vector<8x4xbf16>
    %cst_484 = arith.constant dense<0.000000e+00> : vector<8x32xf32>
    %1923 = tpu.matmul %1922, %1, %cst_484 {dimension_numbers = #tpu.dot_dimension_numbers<[1], [0], [0], [1], [0, 0, 1, 1], [], []>} : vector<8x4xbf16>, vector<4x32xbf16>, vector<8x32xf32> -> vector<8x32xf32>
    %1924 = vector.broadcast %1866 : vector<1x32xf32> to vector<8x32xf32>
    %1925 = arith.addf %1923, %1924 : vector<8x32xf32>
    %cst_485 = arith.constant 0.000000e+00 : f32
    %1926 = vector.broadcast %cst_485 : f32 to vector<8x32xf32>
    %1927 = arith.cmpf ogt, %1925, %1926 : vector<8x32xf32>
    %1928 = math.exp %1925 : vector<8x32xf32>
    %cst_486 = arith.constant 1.000000e+00 : f32
    %1929 = vector.broadcast %cst_486 : f32 to vector<8x32xf32>
    %1930 = arith.subf %1928, %1929 : vector<8x32xf32>
    %1931 = arith.select %1927, %1925, %1930 : vector<8x32xi1>, vector<8x32xf32>
    %1932 = arith.truncf %1931 : vector<8x32xf32> to vector<8x32xbf16>
    %cst_487 = arith.constant dense<0.000000e+00> : vector<8x32xf32>
    %1933 = tpu.matmul %1932, %3, %cst_487 {dimension_numbers = #tpu.dot_dimension_numbers<[1], [0], [0], [1], [0, 0, 1, 1], [], []>} : vector<8x32xbf16>, vector<32x32xbf16>, vector<8x32xf32> -> vector<8x32xf32>
    %1934 = vector.broadcast %8 : vector<1x32xf32> to vector<8x32xf32>
    %1935 = arith.addf %1933, %1934 : vector<8x32xf32>
    %cst_488 = arith.constant 0.000000e+00 : f32
    %1936 = vector.broadcast %cst_488 : f32 to vector<8x32xf32>
    %1937 = arith.cmpf ogt, %1935, %1936 : vector<8x32xf32>
    %1938 = math.exp %1935 : vector<8x32xf32>
    %cst_489 = arith.constant 1.000000e+00 : f32
    %1939 = vector.broadcast %cst_489 : f32 to vector<8x32xf32>
    %1940 = arith.subf %1938, %1939 : vector<8x32xf32>
    %1941 = arith.select %1937, %1935, %1940 : vector<8x32xi1>, vector<8x32xf32>
    %1942 = arith.truncf %1941 : vector<8x32xf32> to vector<8x32xbf16>
    %cst_490 = arith.constant dense<0.000000e+00> : vector<8x4xf32>
    %1943 = tpu.matmul %1942, %5, %cst_490 {dimension_numbers = #tpu.dot_dimension_numbers<[1], [0], [0], [1], [0, 0, 1, 1], [], []>} : vector<8x32xbf16>, vector<32x4xbf16>, vector<8x4xf32> -> vector<8x4xf32>
    %1944 = vector.broadcast %9 : vector<1x4xf32> to vector<8x4xf32>
    %1945 = arith.addf %1943, %1944 : vector<8x4xf32>
    %1946 = vector.broadcast %17 : f32 to vector<8x4xf32>
    %1947 = arith.mulf %1946, %1945 : vector<8x4xf32>
    %1948 = arith.addf %1865, %1947 : vector<8x4xf32>
    %1949 = arith.truncf %1948 : vector<8x4xf32> to vector<8x4xbf16>
    %cst_491 = arith.constant dense<0.000000e+00> : vector<8x32xf32>
    %1950 = tpu.matmul %1949, %1, %cst_491 {dimension_numbers = #tpu.dot_dimension_numbers<[1], [0], [0], [1], [0, 0, 1, 1], [], []>} : vector<8x4xbf16>, vector<4x32xbf16>, vector<8x32xf32> -> vector<8x32xf32>
    %1951 = vector.broadcast %1867 : vector<1x32xf32> to vector<8x32xf32>
    %1952 = arith.addf %1950, %1951 : vector<8x32xf32>
    %cst_492 = arith.constant 0.000000e+00 : f32
    %1953 = vector.broadcast %cst_492 : f32 to vector<8x32xf32>
    %1954 = arith.cmpf ogt, %1952, %1953 : vector<8x32xf32>
    %1955 = math.exp %1952 : vector<8x32xf32>
    %cst_493 = arith.constant 1.000000e+00 : f32
    %1956 = vector.broadcast %cst_493 : f32 to vector<8x32xf32>
    %1957 = arith.subf %1955, %1956 : vector<8x32xf32>
    %1958 = arith.select %1954, %1952, %1957 : vector<8x32xi1>, vector<8x32xf32>
    %1959 = arith.truncf %1958 : vector<8x32xf32> to vector<8x32xbf16>
    %cst_494 = arith.constant dense<0.000000e+00> : vector<8x32xf32>
    %1960 = tpu.matmul %1959, %3, %cst_494 {dimension_numbers = #tpu.dot_dimension_numbers<[1], [0], [0], [1], [0, 0, 1, 1], [], []>} : vector<8x32xbf16>, vector<32x32xbf16>, vector<8x32xf32> -> vector<8x32xf32>
    %1961 = vector.broadcast %8 : vector<1x32xf32> to vector<8x32xf32>
    %1962 = arith.addf %1960, %1961 : vector<8x32xf32>
    %cst_495 = arith.constant 0.000000e+00 : f32
    %1963 = vector.broadcast %cst_495 : f32 to vector<8x32xf32>
    %1964 = arith.cmpf ogt, %1962, %1963 : vector<8x32xf32>
    %1965 = math.exp %1962 : vector<8x32xf32>
    %cst_496 = arith.constant 1.000000e+00 : f32
    %1966 = vector.broadcast %cst_496 : f32 to vector<8x32xf32>
    %1967 = arith.subf %1965, %1966 : vector<8x32xf32>
    %1968 = arith.select %1964, %1962, %1967 : vector<8x32xi1>, vector<8x32xf32>
    %1969 = arith.truncf %1968 : vector<8x32xf32> to vector<8x32xbf16>
    %cst_497 = arith.constant dense<0.000000e+00> : vector<8x4xf32>
    %1970 = tpu.matmul %1969, %5, %cst_497 {dimension_numbers = #tpu.dot_dimension_numbers<[1], [0], [0], [1], [0, 0, 1, 1], [], []>} : vector<8x32xbf16>, vector<32x4xbf16>, vector<8x4xf32> -> vector<8x4xf32>
    %1971 = vector.broadcast %9 : vector<1x4xf32> to vector<8x4xf32>
    %1972 = arith.addf %1970, %1971 : vector<8x4xf32>
    %1973 = arith.addf %1891, %1972 : vector<8x4xf32>
    %1974 = vector.broadcast %19 : f32 to vector<8x4xf32>
    %1975 = arith.mulf %1974, %1973 : vector<8x4xf32>
    %1976 = arith.addf %1865, %1975 : vector<8x4xf32>
    %1977 = arith.addf %1918, %1945 : vector<8x4xf32>
    %1978 = vector.broadcast %20 : f32 to vector<8x4xf32>
    %1979 = arith.mulf %1978, %1977 : vector<8x4xf32>
    %1980 = arith.addf %1976, %1979 : vector<8x4xf32>
    %c17_i32 = arith.constant 17 : i32
    %1981 = arith.addf %1867, %22 : vector<1x32xf32>
    %1982 = arith.addf %1981, %22 : vector<1x32xf32>
    %1983 = arith.truncf %1980 : vector<8x4xf32> to vector<8x4xbf16>
    %cst_498 = arith.constant dense<0.000000e+00> : vector<8x32xf32>
    %1984 = tpu.matmul %1983, %1, %cst_498 {dimension_numbers = #tpu.dot_dimension_numbers<[1], [0], [0], [1], [0, 0, 1, 1], [], []>} : vector<8x4xbf16>, vector<4x32xbf16>, vector<8x32xf32> -> vector<8x32xf32>
    %1985 = vector.broadcast %1867 : vector<1x32xf32> to vector<8x32xf32>
    %1986 = arith.addf %1984, %1985 : vector<8x32xf32>
    %cst_499 = arith.constant 0.000000e+00 : f32
    %1987 = vector.broadcast %cst_499 : f32 to vector<8x32xf32>
    %1988 = arith.cmpf ogt, %1986, %1987 : vector<8x32xf32>
    %1989 = math.exp %1986 : vector<8x32xf32>
    %cst_500 = arith.constant 1.000000e+00 : f32
    %1990 = vector.broadcast %cst_500 : f32 to vector<8x32xf32>
    %1991 = arith.subf %1989, %1990 : vector<8x32xf32>
    %1992 = arith.select %1988, %1986, %1991 : vector<8x32xi1>, vector<8x32xf32>
    %1993 = arith.truncf %1992 : vector<8x32xf32> to vector<8x32xbf16>
    %cst_501 = arith.constant dense<0.000000e+00> : vector<8x32xf32>
    %1994 = tpu.matmul %1993, %3, %cst_501 {dimension_numbers = #tpu.dot_dimension_numbers<[1], [0], [0], [1], [0, 0, 1, 1], [], []>} : vector<8x32xbf16>, vector<32x32xbf16>, vector<8x32xf32> -> vector<8x32xf32>
    %1995 = vector.broadcast %8 : vector<1x32xf32> to vector<8x32xf32>
    %1996 = arith.addf %1994, %1995 : vector<8x32xf32>
    %cst_502 = arith.constant 0.000000e+00 : f32
    %1997 = vector.broadcast %cst_502 : f32 to vector<8x32xf32>
    %1998 = arith.cmpf ogt, %1996, %1997 : vector<8x32xf32>
    %1999 = math.exp %1996 : vector<8x32xf32>
    %cst_503 = arith.constant 1.000000e+00 : f32
    %2000 = vector.broadcast %cst_503 : f32 to vector<8x32xf32>
    %2001 = arith.subf %1999, %2000 : vector<8x32xf32>
    %2002 = arith.select %1998, %1996, %2001 : vector<8x32xi1>, vector<8x32xf32>
    %2003 = arith.truncf %2002 : vector<8x32xf32> to vector<8x32xbf16>
    %cst_504 = arith.constant dense<0.000000e+00> : vector<8x4xf32>
    %2004 = tpu.matmul %2003, %5, %cst_504 {dimension_numbers = #tpu.dot_dimension_numbers<[1], [0], [0], [1], [0, 0, 1, 1], [], []>} : vector<8x32xbf16>, vector<32x4xbf16>, vector<8x4xf32> -> vector<8x4xf32>
    %2005 = vector.broadcast %9 : vector<1x4xf32> to vector<8x4xf32>
    %2006 = arith.addf %2004, %2005 : vector<8x4xf32>
    %2007 = vector.broadcast %18 : f32 to vector<8x4xf32>
    %2008 = arith.mulf %2007, %2006 : vector<8x4xf32>
    %2009 = arith.addf %1980, %2008 : vector<8x4xf32>
    %2010 = arith.truncf %2009 : vector<8x4xf32> to vector<8x4xbf16>
    %cst_505 = arith.constant dense<0.000000e+00> : vector<8x32xf32>
    %2011 = tpu.matmul %2010, %1, %cst_505 {dimension_numbers = #tpu.dot_dimension_numbers<[1], [0], [0], [1], [0, 0, 1, 1], [], []>} : vector<8x4xbf16>, vector<4x32xbf16>, vector<8x32xf32> -> vector<8x32xf32>
    %2012 = vector.broadcast %1981 : vector<1x32xf32> to vector<8x32xf32>
    %2013 = arith.addf %2011, %2012 : vector<8x32xf32>
    %cst_506 = arith.constant 0.000000e+00 : f32
    %2014 = vector.broadcast %cst_506 : f32 to vector<8x32xf32>
    %2015 = arith.cmpf ogt, %2013, %2014 : vector<8x32xf32>
    %2016 = math.exp %2013 : vector<8x32xf32>
    %cst_507 = arith.constant 1.000000e+00 : f32
    %2017 = vector.broadcast %cst_507 : f32 to vector<8x32xf32>
    %2018 = arith.subf %2016, %2017 : vector<8x32xf32>
    %2019 = arith.select %2015, %2013, %2018 : vector<8x32xi1>, vector<8x32xf32>
    %2020 = arith.truncf %2019 : vector<8x32xf32> to vector<8x32xbf16>
    %cst_508 = arith.constant dense<0.000000e+00> : vector<8x32xf32>
    %2021 = tpu.matmul %2020, %3, %cst_508 {dimension_numbers = #tpu.dot_dimension_numbers<[1], [0], [0], [1], [0, 0, 1, 1], [], []>} : vector<8x32xbf16>, vector<32x32xbf16>, vector<8x32xf32> -> vector<8x32xf32>
    %2022 = vector.broadcast %8 : vector<1x32xf32> to vector<8x32xf32>
    %2023 = arith.addf %2021, %2022 : vector<8x32xf32>
    %cst_509 = arith.constant 0.000000e+00 : f32
    %2024 = vector.broadcast %cst_509 : f32 to vector<8x32xf32>
    %2025 = arith.cmpf ogt, %2023, %2024 : vector<8x32xf32>
    %2026 = math.exp %2023 : vector<8x32xf32>
    %cst_510 = arith.constant 1.000000e+00 : f32
    %2027 = vector.broadcast %cst_510 : f32 to vector<8x32xf32>
    %2028 = arith.subf %2026, %2027 : vector<8x32xf32>
    %2029 = arith.select %2025, %2023, %2028 : vector<8x32xi1>, vector<8x32xf32>
    %2030 = arith.truncf %2029 : vector<8x32xf32> to vector<8x32xbf16>
    %cst_511 = arith.constant dense<0.000000e+00> : vector<8x4xf32>
    %2031 = tpu.matmul %2030, %5, %cst_511 {dimension_numbers = #tpu.dot_dimension_numbers<[1], [0], [0], [1], [0, 0, 1, 1], [], []>} : vector<8x32xbf16>, vector<32x4xbf16>, vector<8x4xf32> -> vector<8x4xf32>
    %2032 = vector.broadcast %9 : vector<1x4xf32> to vector<8x4xf32>
    %2033 = arith.addf %2031, %2032 : vector<8x4xf32>
    %2034 = vector.broadcast %18 : f32 to vector<8x4xf32>
    %2035 = arith.mulf %2034, %2033 : vector<8x4xf32>
    %2036 = arith.addf %1980, %2035 : vector<8x4xf32>
    %2037 = arith.truncf %2036 : vector<8x4xf32> to vector<8x4xbf16>
    %cst_512 = arith.constant dense<0.000000e+00> : vector<8x32xf32>
    %2038 = tpu.matmul %2037, %1, %cst_512 {dimension_numbers = #tpu.dot_dimension_numbers<[1], [0], [0], [1], [0, 0, 1, 1], [], []>} : vector<8x4xbf16>, vector<4x32xbf16>, vector<8x32xf32> -> vector<8x32xf32>
    %2039 = vector.broadcast %1981 : vector<1x32xf32> to vector<8x32xf32>
    %2040 = arith.addf %2038, %2039 : vector<8x32xf32>
    %cst_513 = arith.constant 0.000000e+00 : f32
    %2041 = vector.broadcast %cst_513 : f32 to vector<8x32xf32>
    %2042 = arith.cmpf ogt, %2040, %2041 : vector<8x32xf32>
    %2043 = math.exp %2040 : vector<8x32xf32>
    %cst_514 = arith.constant 1.000000e+00 : f32
    %2044 = vector.broadcast %cst_514 : f32 to vector<8x32xf32>
    %2045 = arith.subf %2043, %2044 : vector<8x32xf32>
    %2046 = arith.select %2042, %2040, %2045 : vector<8x32xi1>, vector<8x32xf32>
    %2047 = arith.truncf %2046 : vector<8x32xf32> to vector<8x32xbf16>
    %cst_515 = arith.constant dense<0.000000e+00> : vector<8x32xf32>
    %2048 = tpu.matmul %2047, %3, %cst_515 {dimension_numbers = #tpu.dot_dimension_numbers<[1], [0], [0], [1], [0, 0, 1, 1], [], []>} : vector<8x32xbf16>, vector<32x32xbf16>, vector<8x32xf32> -> vector<8x32xf32>
    %2049 = vector.broadcast %8 : vector<1x32xf32> to vector<8x32xf32>
    %2050 = arith.addf %2048, %2049 : vector<8x32xf32>
    %cst_516 = arith.constant 0.000000e+00 : f32
    %2051 = vector.broadcast %cst_516 : f32 to vector<8x32xf32>
    %2052 = arith.cmpf ogt, %2050, %2051 : vector<8x32xf32>
    %2053 = math.exp %2050 : vector<8x32xf32>
    %cst_517 = arith.constant 1.000000e+00 : f32
    %2054 = vector.broadcast %cst_517 : f32 to vector<8x32xf32>
    %2055 = arith.subf %2053, %2054 : vector<8x32xf32>
    %2056 = arith.select %2052, %2050, %2055 : vector<8x32xi1>, vector<8x32xf32>
    %2057 = arith.truncf %2056 : vector<8x32xf32> to vector<8x32xbf16>
    %cst_518 = arith.constant dense<0.000000e+00> : vector<8x4xf32>
    %2058 = tpu.matmul %2057, %5, %cst_518 {dimension_numbers = #tpu.dot_dimension_numbers<[1], [0], [0], [1], [0, 0, 1, 1], [], []>} : vector<8x32xbf16>, vector<32x4xbf16>, vector<8x4xf32> -> vector<8x4xf32>
    %2059 = vector.broadcast %9 : vector<1x4xf32> to vector<8x4xf32>
    %2060 = arith.addf %2058, %2059 : vector<8x4xf32>
    %2061 = vector.broadcast %17 : f32 to vector<8x4xf32>
    %2062 = arith.mulf %2061, %2060 : vector<8x4xf32>
    %2063 = arith.addf %1980, %2062 : vector<8x4xf32>
    %2064 = arith.truncf %2063 : vector<8x4xf32> to vector<8x4xbf16>
    %cst_519 = arith.constant dense<0.000000e+00> : vector<8x32xf32>
    %2065 = tpu.matmul %2064, %1, %cst_519 {dimension_numbers = #tpu.dot_dimension_numbers<[1], [0], [0], [1], [0, 0, 1, 1], [], []>} : vector<8x4xbf16>, vector<4x32xbf16>, vector<8x32xf32> -> vector<8x32xf32>
    %2066 = vector.broadcast %1982 : vector<1x32xf32> to vector<8x32xf32>
    %2067 = arith.addf %2065, %2066 : vector<8x32xf32>
    %cst_520 = arith.constant 0.000000e+00 : f32
    %2068 = vector.broadcast %cst_520 : f32 to vector<8x32xf32>
    %2069 = arith.cmpf ogt, %2067, %2068 : vector<8x32xf32>
    %2070 = math.exp %2067 : vector<8x32xf32>
    %cst_521 = arith.constant 1.000000e+00 : f32
    %2071 = vector.broadcast %cst_521 : f32 to vector<8x32xf32>
    %2072 = arith.subf %2070, %2071 : vector<8x32xf32>
    %2073 = arith.select %2069, %2067, %2072 : vector<8x32xi1>, vector<8x32xf32>
    %2074 = arith.truncf %2073 : vector<8x32xf32> to vector<8x32xbf16>
    %cst_522 = arith.constant dense<0.000000e+00> : vector<8x32xf32>
    %2075 = tpu.matmul %2074, %3, %cst_522 {dimension_numbers = #tpu.dot_dimension_numbers<[1], [0], [0], [1], [0, 0, 1, 1], [], []>} : vector<8x32xbf16>, vector<32x32xbf16>, vector<8x32xf32> -> vector<8x32xf32>
    %2076 = vector.broadcast %8 : vector<1x32xf32> to vector<8x32xf32>
    %2077 = arith.addf %2075, %2076 : vector<8x32xf32>
    %cst_523 = arith.constant 0.000000e+00 : f32
    %2078 = vector.broadcast %cst_523 : f32 to vector<8x32xf32>
    %2079 = arith.cmpf ogt, %2077, %2078 : vector<8x32xf32>
    %2080 = math.exp %2077 : vector<8x32xf32>
    %cst_524 = arith.constant 1.000000e+00 : f32
    %2081 = vector.broadcast %cst_524 : f32 to vector<8x32xf32>
    %2082 = arith.subf %2080, %2081 : vector<8x32xf32>
    %2083 = arith.select %2079, %2077, %2082 : vector<8x32xi1>, vector<8x32xf32>
    %2084 = arith.truncf %2083 : vector<8x32xf32> to vector<8x32xbf16>
    %cst_525 = arith.constant dense<0.000000e+00> : vector<8x4xf32>
    %2085 = tpu.matmul %2084, %5, %cst_525 {dimension_numbers = #tpu.dot_dimension_numbers<[1], [0], [0], [1], [0, 0, 1, 1], [], []>} : vector<8x32xbf16>, vector<32x4xbf16>, vector<8x4xf32> -> vector<8x4xf32>
    %2086 = vector.broadcast %9 : vector<1x4xf32> to vector<8x4xf32>
    %2087 = arith.addf %2085, %2086 : vector<8x4xf32>
    %2088 = arith.addf %2006, %2087 : vector<8x4xf32>
    %2089 = vector.broadcast %19 : f32 to vector<8x4xf32>
    %2090 = arith.mulf %2089, %2088 : vector<8x4xf32>
    %2091 = arith.addf %1980, %2090 : vector<8x4xf32>
    %2092 = arith.addf %2033, %2060 : vector<8x4xf32>
    %2093 = vector.broadcast %20 : f32 to vector<8x4xf32>
    %2094 = arith.mulf %2093, %2092 : vector<8x4xf32>
    %2095 = arith.addf %2091, %2094 : vector<8x4xf32>
    %c18_i32 = arith.constant 18 : i32
    %2096 = arith.addf %1982, %22 : vector<1x32xf32>
    %2097 = arith.addf %2096, %22 : vector<1x32xf32>
    %2098 = arith.truncf %2095 : vector<8x4xf32> to vector<8x4xbf16>
    %cst_526 = arith.constant dense<0.000000e+00> : vector<8x32xf32>
    %2099 = tpu.matmul %2098, %1, %cst_526 {dimension_numbers = #tpu.dot_dimension_numbers<[1], [0], [0], [1], [0, 0, 1, 1], [], []>} : vector<8x4xbf16>, vector<4x32xbf16>, vector<8x32xf32> -> vector<8x32xf32>
    %2100 = vector.broadcast %1982 : vector<1x32xf32> to vector<8x32xf32>
    %2101 = arith.addf %2099, %2100 : vector<8x32xf32>
    %cst_527 = arith.constant 0.000000e+00 : f32
    %2102 = vector.broadcast %cst_527 : f32 to vector<8x32xf32>
    %2103 = arith.cmpf ogt, %2101, %2102 : vector<8x32xf32>
    %2104 = math.exp %2101 : vector<8x32xf32>
    %cst_528 = arith.constant 1.000000e+00 : f32
    %2105 = vector.broadcast %cst_528 : f32 to vector<8x32xf32>
    %2106 = arith.subf %2104, %2105 : vector<8x32xf32>
    %2107 = arith.select %2103, %2101, %2106 : vector<8x32xi1>, vector<8x32xf32>
    %2108 = arith.truncf %2107 : vector<8x32xf32> to vector<8x32xbf16>
    %cst_529 = arith.constant dense<0.000000e+00> : vector<8x32xf32>
    %2109 = tpu.matmul %2108, %3, %cst_529 {dimension_numbers = #tpu.dot_dimension_numbers<[1], [0], [0], [1], [0, 0, 1, 1], [], []>} : vector<8x32xbf16>, vector<32x32xbf16>, vector<8x32xf32> -> vector<8x32xf32>
    %2110 = vector.broadcast %8 : vector<1x32xf32> to vector<8x32xf32>
    %2111 = arith.addf %2109, %2110 : vector<8x32xf32>
    %cst_530 = arith.constant 0.000000e+00 : f32
    %2112 = vector.broadcast %cst_530 : f32 to vector<8x32xf32>
    %2113 = arith.cmpf ogt, %2111, %2112 : vector<8x32xf32>
    %2114 = math.exp %2111 : vector<8x32xf32>
    %cst_531 = arith.constant 1.000000e+00 : f32
    %2115 = vector.broadcast %cst_531 : f32 to vector<8x32xf32>
    %2116 = arith.subf %2114, %2115 : vector<8x32xf32>
    %2117 = arith.select %2113, %2111, %2116 : vector<8x32xi1>, vector<8x32xf32>
    %2118 = arith.truncf %2117 : vector<8x32xf32> to vector<8x32xbf16>
    %cst_532 = arith.constant dense<0.000000e+00> : vector<8x4xf32>
    %2119 = tpu.matmul %2118, %5, %cst_532 {dimension_numbers = #tpu.dot_dimension_numbers<[1], [0], [0], [1], [0, 0, 1, 1], [], []>} : vector<8x32xbf16>, vector<32x4xbf16>, vector<8x4xf32> -> vector<8x4xf32>
    %2120 = vector.broadcast %9 : vector<1x4xf32> to vector<8x4xf32>
    %2121 = arith.addf %2119, %2120 : vector<8x4xf32>
    %2122 = vector.broadcast %18 : f32 to vector<8x4xf32>
    %2123 = arith.mulf %2122, %2121 : vector<8x4xf32>
    %2124 = arith.addf %2095, %2123 : vector<8x4xf32>
    %2125 = arith.truncf %2124 : vector<8x4xf32> to vector<8x4xbf16>
    %cst_533 = arith.constant dense<0.000000e+00> : vector<8x32xf32>
    %2126 = tpu.matmul %2125, %1, %cst_533 {dimension_numbers = #tpu.dot_dimension_numbers<[1], [0], [0], [1], [0, 0, 1, 1], [], []>} : vector<8x4xbf16>, vector<4x32xbf16>, vector<8x32xf32> -> vector<8x32xf32>
    %2127 = vector.broadcast %2096 : vector<1x32xf32> to vector<8x32xf32>
    %2128 = arith.addf %2126, %2127 : vector<8x32xf32>
    %cst_534 = arith.constant 0.000000e+00 : f32
    %2129 = vector.broadcast %cst_534 : f32 to vector<8x32xf32>
    %2130 = arith.cmpf ogt, %2128, %2129 : vector<8x32xf32>
    %2131 = math.exp %2128 : vector<8x32xf32>
    %cst_535 = arith.constant 1.000000e+00 : f32
    %2132 = vector.broadcast %cst_535 : f32 to vector<8x32xf32>
    %2133 = arith.subf %2131, %2132 : vector<8x32xf32>
    %2134 = arith.select %2130, %2128, %2133 : vector<8x32xi1>, vector<8x32xf32>
    %2135 = arith.truncf %2134 : vector<8x32xf32> to vector<8x32xbf16>
    %cst_536 = arith.constant dense<0.000000e+00> : vector<8x32xf32>
    %2136 = tpu.matmul %2135, %3, %cst_536 {dimension_numbers = #tpu.dot_dimension_numbers<[1], [0], [0], [1], [0, 0, 1, 1], [], []>} : vector<8x32xbf16>, vector<32x32xbf16>, vector<8x32xf32> -> vector<8x32xf32>
    %2137 = vector.broadcast %8 : vector<1x32xf32> to vector<8x32xf32>
    %2138 = arith.addf %2136, %2137 : vector<8x32xf32>
    %cst_537 = arith.constant 0.000000e+00 : f32
    %2139 = vector.broadcast %cst_537 : f32 to vector<8x32xf32>
    %2140 = arith.cmpf ogt, %2138, %2139 : vector<8x32xf32>
    %2141 = math.exp %2138 : vector<8x32xf32>
    %cst_538 = arith.constant 1.000000e+00 : f32
    %2142 = vector.broadcast %cst_538 : f32 to vector<8x32xf32>
    %2143 = arith.subf %2141, %2142 : vector<8x32xf32>
    %2144 = arith.select %2140, %2138, %2143 : vector<8x32xi1>, vector<8x32xf32>
    %2145 = arith.truncf %2144 : vector<8x32xf32> to vector<8x32xbf16>
    %cst_539 = arith.constant dense<0.000000e+00> : vector<8x4xf32>
    %2146 = tpu.matmul %2145, %5, %cst_539 {dimension_numbers = #tpu.dot_dimension_numbers<[1], [0], [0], [1], [0, 0, 1, 1], [], []>} : vector<8x32xbf16>, vector<32x4xbf16>, vector<8x4xf32> -> vector<8x4xf32>
    %2147 = vector.broadcast %9 : vector<1x4xf32> to vector<8x4xf32>
    %2148 = arith.addf %2146, %2147 : vector<8x4xf32>
    %2149 = vector.broadcast %18 : f32 to vector<8x4xf32>
    %2150 = arith.mulf %2149, %2148 : vector<8x4xf32>
    %2151 = arith.addf %2095, %2150 : vector<8x4xf32>
    %2152 = arith.truncf %2151 : vector<8x4xf32> to vector<8x4xbf16>
    %cst_540 = arith.constant dense<0.000000e+00> : vector<8x32xf32>
    %2153 = tpu.matmul %2152, %1, %cst_540 {dimension_numbers = #tpu.dot_dimension_numbers<[1], [0], [0], [1], [0, 0, 1, 1], [], []>} : vector<8x4xbf16>, vector<4x32xbf16>, vector<8x32xf32> -> vector<8x32xf32>
    %2154 = vector.broadcast %2096 : vector<1x32xf32> to vector<8x32xf32>
    %2155 = arith.addf %2153, %2154 : vector<8x32xf32>
    %cst_541 = arith.constant 0.000000e+00 : f32
    %2156 = vector.broadcast %cst_541 : f32 to vector<8x32xf32>
    %2157 = arith.cmpf ogt, %2155, %2156 : vector<8x32xf32>
    %2158 = math.exp %2155 : vector<8x32xf32>
    %cst_542 = arith.constant 1.000000e+00 : f32
    %2159 = vector.broadcast %cst_542 : f32 to vector<8x32xf32>
    %2160 = arith.subf %2158, %2159 : vector<8x32xf32>
    %2161 = arith.select %2157, %2155, %2160 : vector<8x32xi1>, vector<8x32xf32>
    %2162 = arith.truncf %2161 : vector<8x32xf32> to vector<8x32xbf16>
    %cst_543 = arith.constant dense<0.000000e+00> : vector<8x32xf32>
    %2163 = tpu.matmul %2162, %3, %cst_543 {dimension_numbers = #tpu.dot_dimension_numbers<[1], [0], [0], [1], [0, 0, 1, 1], [], []>} : vector<8x32xbf16>, vector<32x32xbf16>, vector<8x32xf32> -> vector<8x32xf32>
    %2164 = vector.broadcast %8 : vector<1x32xf32> to vector<8x32xf32>
    %2165 = arith.addf %2163, %2164 : vector<8x32xf32>
    %cst_544 = arith.constant 0.000000e+00 : f32
    %2166 = vector.broadcast %cst_544 : f32 to vector<8x32xf32>
    %2167 = arith.cmpf ogt, %2165, %2166 : vector<8x32xf32>
    %2168 = math.exp %2165 : vector<8x32xf32>
    %cst_545 = arith.constant 1.000000e+00 : f32
    %2169 = vector.broadcast %cst_545 : f32 to vector<8x32xf32>
    %2170 = arith.subf %2168, %2169 : vector<8x32xf32>
    %2171 = arith.select %2167, %2165, %2170 : vector<8x32xi1>, vector<8x32xf32>
    %2172 = arith.truncf %2171 : vector<8x32xf32> to vector<8x32xbf16>
    %cst_546 = arith.constant dense<0.000000e+00> : vector<8x4xf32>
    %2173 = tpu.matmul %2172, %5, %cst_546 {dimension_numbers = #tpu.dot_dimension_numbers<[1], [0], [0], [1], [0, 0, 1, 1], [], []>} : vector<8x32xbf16>, vector<32x4xbf16>, vector<8x4xf32> -> vector<8x4xf32>
    %2174 = vector.broadcast %9 : vector<1x4xf32> to vector<8x4xf32>
    %2175 = arith.addf %2173, %2174 : vector<8x4xf32>
    %2176 = vector.broadcast %17 : f32 to vector<8x4xf32>
    %2177 = arith.mulf %2176, %2175 : vector<8x4xf32>
    %2178 = arith.addf %2095, %2177 : vector<8x4xf32>
    %2179 = arith.truncf %2178 : vector<8x4xf32> to vector<8x4xbf16>
    %cst_547 = arith.constant dense<0.000000e+00> : vector<8x32xf32>
    %2180 = tpu.matmul %2179, %1, %cst_547 {dimension_numbers = #tpu.dot_dimension_numbers<[1], [0], [0], [1], [0, 0, 1, 1], [], []>} : vector<8x4xbf16>, vector<4x32xbf16>, vector<8x32xf32> -> vector<8x32xf32>
    %2181 = vector.broadcast %2097 : vector<1x32xf32> to vector<8x32xf32>
    %2182 = arith.addf %2180, %2181 : vector<8x32xf32>
    %cst_548 = arith.constant 0.000000e+00 : f32
    %2183 = vector.broadcast %cst_548 : f32 to vector<8x32xf32>
    %2184 = arith.cmpf ogt, %2182, %2183 : vector<8x32xf32>
    %2185 = math.exp %2182 : vector<8x32xf32>
    %cst_549 = arith.constant 1.000000e+00 : f32
    %2186 = vector.broadcast %cst_549 : f32 to vector<8x32xf32>
    %2187 = arith.subf %2185, %2186 : vector<8x32xf32>
    %2188 = arith.select %2184, %2182, %2187 : vector<8x32xi1>, vector<8x32xf32>
    %2189 = arith.truncf %2188 : vector<8x32xf32> to vector<8x32xbf16>
    %cst_550 = arith.constant dense<0.000000e+00> : vector<8x32xf32>
    %2190 = tpu.matmul %2189, %3, %cst_550 {dimension_numbers = #tpu.dot_dimension_numbers<[1], [0], [0], [1], [0, 0, 1, 1], [], []>} : vector<8x32xbf16>, vector<32x32xbf16>, vector<8x32xf32> -> vector<8x32xf32>
    %2191 = vector.broadcast %8 : vector<1x32xf32> to vector<8x32xf32>
    %2192 = arith.addf %2190, %2191 : vector<8x32xf32>
    %cst_551 = arith.constant 0.000000e+00 : f32
    %2193 = vector.broadcast %cst_551 : f32 to vector<8x32xf32>
    %2194 = arith.cmpf ogt, %2192, %2193 : vector<8x32xf32>
    %2195 = math.exp %2192 : vector<8x32xf32>
    %cst_552 = arith.constant 1.000000e+00 : f32
    %2196 = vector.broadcast %cst_552 : f32 to vector<8x32xf32>
    %2197 = arith.subf %2195, %2196 : vector<8x32xf32>
    %2198 = arith.select %2194, %2192, %2197 : vector<8x32xi1>, vector<8x32xf32>
    %2199 = arith.truncf %2198 : vector<8x32xf32> to vector<8x32xbf16>
    %cst_553 = arith.constant dense<0.000000e+00> : vector<8x4xf32>
    %2200 = tpu.matmul %2199, %5, %cst_553 {dimension_numbers = #tpu.dot_dimension_numbers<[1], [0], [0], [1], [0, 0, 1, 1], [], []>} : vector<8x32xbf16>, vector<32x4xbf16>, vector<8x4xf32> -> vector<8x4xf32>
    %2201 = vector.broadcast %9 : vector<1x4xf32> to vector<8x4xf32>
    %2202 = arith.addf %2200, %2201 : vector<8x4xf32>
    %2203 = arith.addf %2121, %2202 : vector<8x4xf32>
    %2204 = vector.broadcast %19 : f32 to vector<8x4xf32>
    %2205 = arith.mulf %2204, %2203 : vector<8x4xf32>
    %2206 = arith.addf %2095, %2205 : vector<8x4xf32>
    %2207 = arith.addf %2148, %2175 : vector<8x4xf32>
    %2208 = vector.broadcast %20 : f32 to vector<8x4xf32>
    %2209 = arith.mulf %2208, %2207 : vector<8x4xf32>
    %2210 = arith.addf %2206, %2209 : vector<8x4xf32>
    %c19_i32 = arith.constant 19 : i32
    %2211 = arith.addf %2097, %22 : vector<1x32xf32>
    %2212 = arith.addf %2211, %22 : vector<1x32xf32>
    %2213 = arith.truncf %2210 : vector<8x4xf32> to vector<8x4xbf16>
    %cst_554 = arith.constant dense<0.000000e+00> : vector<8x32xf32>
    %2214 = tpu.matmul %2213, %1, %cst_554 {dimension_numbers = #tpu.dot_dimension_numbers<[1], [0], [0], [1], [0, 0, 1, 1], [], []>} : vector<8x4xbf16>, vector<4x32xbf16>, vector<8x32xf32> -> vector<8x32xf32>
    %2215 = vector.broadcast %2097 : vector<1x32xf32> to vector<8x32xf32>
    %2216 = arith.addf %2214, %2215 : vector<8x32xf32>
    %cst_555 = arith.constant 0.000000e+00 : f32
    %2217 = vector.broadcast %cst_555 : f32 to vector<8x32xf32>
    %2218 = arith.cmpf ogt, %2216, %2217 : vector<8x32xf32>
    %2219 = math.exp %2216 : vector<8x32xf32>
    %cst_556 = arith.constant 1.000000e+00 : f32
    %2220 = vector.broadcast %cst_556 : f32 to vector<8x32xf32>
    %2221 = arith.subf %2219, %2220 : vector<8x32xf32>
    %2222 = arith.select %2218, %2216, %2221 : vector<8x32xi1>, vector<8x32xf32>
    %2223 = arith.truncf %2222 : vector<8x32xf32> to vector<8x32xbf16>
    %cst_557 = arith.constant dense<0.000000e+00> : vector<8x32xf32>
    %2224 = tpu.matmul %2223, %3, %cst_557 {dimension_numbers = #tpu.dot_dimension_numbers<[1], [0], [0], [1], [0, 0, 1, 1], [], []>} : vector<8x32xbf16>, vector<32x32xbf16>, vector<8x32xf32> -> vector<8x32xf32>
    %2225 = vector.broadcast %8 : vector<1x32xf32> to vector<8x32xf32>
    %2226 = arith.addf %2224, %2225 : vector<8x32xf32>
    %cst_558 = arith.constant 0.000000e+00 : f32
    %2227 = vector.broadcast %cst_558 : f32 to vector<8x32xf32>
    %2228 = arith.cmpf ogt, %2226, %2227 : vector<8x32xf32>
    %2229 = math.exp %2226 : vector<8x32xf32>
    %cst_559 = arith.constant 1.000000e+00 : f32
    %2230 = vector.broadcast %cst_559 : f32 to vector<8x32xf32>
    %2231 = arith.subf %2229, %2230 : vector<8x32xf32>
    %2232 = arith.select %2228, %2226, %2231 : vector<8x32xi1>, vector<8x32xf32>
    %2233 = arith.truncf %2232 : vector<8x32xf32> to vector<8x32xbf16>
    %cst_560 = arith.constant dense<0.000000e+00> : vector<8x4xf32>
    %2234 = tpu.matmul %2233, %5, %cst_560 {dimension_numbers = #tpu.dot_dimension_numbers<[1], [0], [0], [1], [0, 0, 1, 1], [], []>} : vector<8x32xbf16>, vector<32x4xbf16>, vector<8x4xf32> -> vector<8x4xf32>
    %2235 = vector.broadcast %9 : vector<1x4xf32> to vector<8x4xf32>
    %2236 = arith.addf %2234, %2235 : vector<8x4xf32>
    %2237 = vector.broadcast %18 : f32 to vector<8x4xf32>
    %2238 = arith.mulf %2237, %2236 : vector<8x4xf32>
    %2239 = arith.addf %2210, %2238 : vector<8x4xf32>
    %2240 = arith.truncf %2239 : vector<8x4xf32> to vector<8x4xbf16>
    %cst_561 = arith.constant dense<0.000000e+00> : vector<8x32xf32>
    %2241 = tpu.matmul %2240, %1, %cst_561 {dimension_numbers = #tpu.dot_dimension_numbers<[1], [0], [0], [1], [0, 0, 1, 1], [], []>} : vector<8x4xbf16>, vector<4x32xbf16>, vector<8x32xf32> -> vector<8x32xf32>
    %2242 = vector.broadcast %2211 : vector<1x32xf32> to vector<8x32xf32>
    %2243 = arith.addf %2241, %2242 : vector<8x32xf32>
    %cst_562 = arith.constant 0.000000e+00 : f32
    %2244 = vector.broadcast %cst_562 : f32 to vector<8x32xf32>
    %2245 = arith.cmpf ogt, %2243, %2244 : vector<8x32xf32>
    %2246 = math.exp %2243 : vector<8x32xf32>
    %cst_563 = arith.constant 1.000000e+00 : f32
    %2247 = vector.broadcast %cst_563 : f32 to vector<8x32xf32>
    %2248 = arith.subf %2246, %2247 : vector<8x32xf32>
    %2249 = arith.select %2245, %2243, %2248 : vector<8x32xi1>, vector<8x32xf32>
    %2250 = arith.truncf %2249 : vector<8x32xf32> to vector<8x32xbf16>
    %cst_564 = arith.constant dense<0.000000e+00> : vector<8x32xf32>
    %2251 = tpu.matmul %2250, %3, %cst_564 {dimension_numbers = #tpu.dot_dimension_numbers<[1], [0], [0], [1], [0, 0, 1, 1], [], []>} : vector<8x32xbf16>, vector<32x32xbf16>, vector<8x32xf32> -> vector<8x32xf32>
    %2252 = vector.broadcast %8 : vector<1x32xf32> to vector<8x32xf32>
    %2253 = arith.addf %2251, %2252 : vector<8x32xf32>
    %cst_565 = arith.constant 0.000000e+00 : f32
    %2254 = vector.broadcast %cst_565 : f32 to vector<8x32xf32>
    %2255 = arith.cmpf ogt, %2253, %2254 : vector<8x32xf32>
    %2256 = math.exp %2253 : vector<8x32xf32>
    %cst_566 = arith.constant 1.000000e+00 : f32
    %2257 = vector.broadcast %cst_566 : f32 to vector<8x32xf32>
    %2258 = arith.subf %2256, %2257 : vector<8x32xf32>
    %2259 = arith.select %2255, %2253, %2258 : vector<8x32xi1>, vector<8x32xf32>
    %2260 = arith.truncf %2259 : vector<8x32xf32> to vector<8x32xbf16>
    %cst_567 = arith.constant dense<0.000000e+00> : vector<8x4xf32>
    %2261 = tpu.matmul %2260, %5, %cst_567 {dimension_numbers = #tpu.dot_dimension_numbers<[1], [0], [0], [1], [0, 0, 1, 1], [], []>} : vector<8x32xbf16>, vector<32x4xbf16>, vector<8x4xf32> -> vector<8x4xf32>
    %2262 = vector.broadcast %9 : vector<1x4xf32> to vector<8x4xf32>
    %2263 = arith.addf %2261, %2262 : vector<8x4xf32>
    %2264 = vector.broadcast %18 : f32 to vector<8x4xf32>
    %2265 = arith.mulf %2264, %2263 : vector<8x4xf32>
    %2266 = arith.addf %2210, %2265 : vector<8x4xf32>
    %2267 = arith.truncf %2266 : vector<8x4xf32> to vector<8x4xbf16>
    %cst_568 = arith.constant dense<0.000000e+00> : vector<8x32xf32>
    %2268 = tpu.matmul %2267, %1, %cst_568 {dimension_numbers = #tpu.dot_dimension_numbers<[1], [0], [0], [1], [0, 0, 1, 1], [], []>} : vector<8x4xbf16>, vector<4x32xbf16>, vector<8x32xf32> -> vector<8x32xf32>
    %2269 = vector.broadcast %2211 : vector<1x32xf32> to vector<8x32xf32>
    %2270 = arith.addf %2268, %2269 : vector<8x32xf32>
    %cst_569 = arith.constant 0.000000e+00 : f32
    %2271 = vector.broadcast %cst_569 : f32 to vector<8x32xf32>
    %2272 = arith.cmpf ogt, %2270, %2271 : vector<8x32xf32>
    %2273 = math.exp %2270 : vector<8x32xf32>
    %cst_570 = arith.constant 1.000000e+00 : f32
    %2274 = vector.broadcast %cst_570 : f32 to vector<8x32xf32>
    %2275 = arith.subf %2273, %2274 : vector<8x32xf32>
    %2276 = arith.select %2272, %2270, %2275 : vector<8x32xi1>, vector<8x32xf32>
    %2277 = arith.truncf %2276 : vector<8x32xf32> to vector<8x32xbf16>
    %cst_571 = arith.constant dense<0.000000e+00> : vector<8x32xf32>
    %2278 = tpu.matmul %2277, %3, %cst_571 {dimension_numbers = #tpu.dot_dimension_numbers<[1], [0], [0], [1], [0, 0, 1, 1], [], []>} : vector<8x32xbf16>, vector<32x32xbf16>, vector<8x32xf32> -> vector<8x32xf32>
    %2279 = vector.broadcast %8 : vector<1x32xf32> to vector<8x32xf32>
    %2280 = arith.addf %2278, %2279 : vector<8x32xf32>
    %cst_572 = arith.constant 0.000000e+00 : f32
    %2281 = vector.broadcast %cst_572 : f32 to vector<8x32xf32>
    %2282 = arith.cmpf ogt, %2280, %2281 : vector<8x32xf32>
    %2283 = math.exp %2280 : vector<8x32xf32>
    %cst_573 = arith.constant 1.000000e+00 : f32
    %2284 = vector.broadcast %cst_573 : f32 to vector<8x32xf32>
    %2285 = arith.subf %2283, %2284 : vector<8x32xf32>
    %2286 = arith.select %2282, %2280, %2285 : vector<8x32xi1>, vector<8x32xf32>
    %2287 = arith.truncf %2286 : vector<8x32xf32> to vector<8x32xbf16>
    %cst_574 = arith.constant dense<0.000000e+00> : vector<8x4xf32>
    %2288 = tpu.matmul %2287, %5, %cst_574 {dimension_numbers = #tpu.dot_dimension_numbers<[1], [0], [0], [1], [0, 0, 1, 1], [], []>} : vector<8x32xbf16>, vector<32x4xbf16>, vector<8x4xf32> -> vector<8x4xf32>
    %2289 = vector.broadcast %9 : vector<1x4xf32> to vector<8x4xf32>
    %2290 = arith.addf %2288, %2289 : vector<8x4xf32>
    %2291 = vector.broadcast %17 : f32 to vector<8x4xf32>
    %2292 = arith.mulf %2291, %2290 : vector<8x4xf32>
    %2293 = arith.addf %2210, %2292 : vector<8x4xf32>
    %2294 = arith.truncf %2293 : vector<8x4xf32> to vector<8x4xbf16>
    %cst_575 = arith.constant dense<0.000000e+00> : vector<8x32xf32>
    %2295 = tpu.matmul %2294, %1, %cst_575 {dimension_numbers = #tpu.dot_dimension_numbers<[1], [0], [0], [1], [0, 0, 1, 1], [], []>} : vector<8x4xbf16>, vector<4x32xbf16>, vector<8x32xf32> -> vector<8x32xf32>
    %2296 = vector.broadcast %2212 : vector<1x32xf32> to vector<8x32xf32>
    %2297 = arith.addf %2295, %2296 : vector<8x32xf32>
    %cst_576 = arith.constant 0.000000e+00 : f32
    %2298 = vector.broadcast %cst_576 : f32 to vector<8x32xf32>
    %2299 = arith.cmpf ogt, %2297, %2298 : vector<8x32xf32>
    %2300 = math.exp %2297 : vector<8x32xf32>
    %cst_577 = arith.constant 1.000000e+00 : f32
    %2301 = vector.broadcast %cst_577 : f32 to vector<8x32xf32>
    %2302 = arith.subf %2300, %2301 : vector<8x32xf32>
    %2303 = arith.select %2299, %2297, %2302 : vector<8x32xi1>, vector<8x32xf32>
    %2304 = arith.truncf %2303 : vector<8x32xf32> to vector<8x32xbf16>
    %cst_578 = arith.constant dense<0.000000e+00> : vector<8x32xf32>
    %2305 = tpu.matmul %2304, %3, %cst_578 {dimension_numbers = #tpu.dot_dimension_numbers<[1], [0], [0], [1], [0, 0, 1, 1], [], []>} : vector<8x32xbf16>, vector<32x32xbf16>, vector<8x32xf32> -> vector<8x32xf32>
    %2306 = vector.broadcast %8 : vector<1x32xf32> to vector<8x32xf32>
    %2307 = arith.addf %2305, %2306 : vector<8x32xf32>
    %cst_579 = arith.constant 0.000000e+00 : f32
    %2308 = vector.broadcast %cst_579 : f32 to vector<8x32xf32>
    %2309 = arith.cmpf ogt, %2307, %2308 : vector<8x32xf32>
    %2310 = math.exp %2307 : vector<8x32xf32>
    %cst_580 = arith.constant 1.000000e+00 : f32
    %2311 = vector.broadcast %cst_580 : f32 to vector<8x32xf32>
    %2312 = arith.subf %2310, %2311 : vector<8x32xf32>
    %2313 = arith.select %2309, %2307, %2312 : vector<8x32xi1>, vector<8x32xf32>
    %2314 = arith.truncf %2313 : vector<8x32xf32> to vector<8x32xbf16>
    %cst_581 = arith.constant dense<0.000000e+00> : vector<8x4xf32>
    %2315 = tpu.matmul %2314, %5, %cst_581 {dimension_numbers = #tpu.dot_dimension_numbers<[1], [0], [0], [1], [0, 0, 1, 1], [], []>} : vector<8x32xbf16>, vector<32x4xbf16>, vector<8x4xf32> -> vector<8x4xf32>
    %2316 = vector.broadcast %9 : vector<1x4xf32> to vector<8x4xf32>
    %2317 = arith.addf %2315, %2316 : vector<8x4xf32>
    %2318 = arith.addf %2236, %2317 : vector<8x4xf32>
    %2319 = vector.broadcast %19 : f32 to vector<8x4xf32>
    %2320 = arith.mulf %2319, %2318 : vector<8x4xf32>
    %2321 = arith.addf %2210, %2320 : vector<8x4xf32>
    %2322 = arith.addf %2263, %2290 : vector<8x4xf32>
    %2323 = vector.broadcast %20 : f32 to vector<8x4xf32>
    %2324 = arith.mulf %2323, %2322 : vector<8x4xf32>
    %2325 = arith.addf %2321, %2324 : vector<8x4xf32>
    %c1_582 = arith.constant 1 : index
    %c0_583 = arith.constant 0 : index
    %c0_584 = arith.constant 0 : index
    %2326 = vector.load %arg9[%c1_582, %c0_583, %c0_584] : memref<2x8x4xf32, #tpu.memory_space<vmem>>, vector<1x8x4xf32>
    %2327 = vector.shape_cast %2326 : vector<1x8x4xf32> to vector<8x4xf32>
    %2328 = vector.shape_cast %2325 : vector<8x4xf32> to vector<1x8x4xf32>
    tpu.vector_store %arg9[%c1_582, %c0_583, %c0_584], %2328 {strides = array<i32>} : memref<2x8x4xf32, #tpu.memory_space<vmem>>, vector<1x8x4xf32>,
    return
  }
}

</mosaic_0001>

<llo_original>
// kernel: tpu_custom_call.1
$region0: #{tpu_custom_call.1}
  #allocation0 [shape = 'u32[]', space=smem, size = 0x4, offset = 0x4, fixed_abs, tag = 'smem constant byte address 0x4 - core index']
  #allocation1 [shape = 'u32[72,128]{1,0:T(1,128)}', space=vmem, size = 0x9000, scoped, tag = 'internal scratch']
  %s0 = inlined_call_operand.vmem [shape: f32[2], index: 0, kind: input, shape index: {}]
  %s1 = inlined_call_operand.vmem [shape: f32[8,4], index: 1, kind: input, shape index: {}]
  %s2 = inlined_call_operand.vmem [shape: f32[4,32], index: 2, kind: input, shape index: {}]
  %s3 = inlined_call_operand.vmem [shape: f32[1,32], index: 3, kind: input, shape index: {}]
  %s4 = inlined_call_operand.vmem [shape: f32[1,32], index: 4, kind: input, shape index: {}]
  %s5 = inlined_call_operand.vmem [shape: f32[32,32], index: 5, kind: input, shape index: {}]
  %s6 = inlined_call_operand.vmem [shape: f32[1,32], index: 6, kind: input, shape index: {}]
  %s7 = inlined_call_operand.vmem [shape: f32[32,4], index: 7, kind: input, shape index: {}]
  %s8 = inlined_call_operand.vmem [shape: f32[1,4], index: 8, kind: input, shape index: {}]
  %s9 = inlined_call_operand.vmem [shape: f32[2,8,4], index: 9, kind: output, shape index: {}]
  %s10 = sld [smem:[#allocation0]]
  $region50: #{tpu_custom_call.1} parent=0
    _
  %s12 = ssub.s32 1, %s10
  %s13 = scalar_select 0, %s12, %s10
  $region1: #{tpu_custom_call.1} parent=0
    #allocation2 [shape = 'u8[512]{0}', space=smem, size = 0x200, scoped, tag = 'input window, operand 0, single buffered']
    #allocation3 [shape = 's32[1]{0}', space=sflag, size = 0x4, scoped, tag = 'scoped memory for tpu_custom_call.1']
    %14 = vsyncpa [#allocation3], 0
    // Predicated region
    $region2: #{tpu_custom_call.1} parent=1 // pred_check
      _
    $region3: #{tpu_custom_call.1} parent=1 // pred_check_branch
      %16 = sbr.rel (0) target = $region5
    $region4: #{tpu_custom_call.1} parent=1 // pred_region
      %18 = vsyncadd [#allocation3], 0
      %s20 = sshll.u32 %s0, 4
      %s21 = int_to_ptr.vmem [resolvable:$true] %s20
      %23 = dma.vmem_to_smem %s21, 16, [#allocation2], [#allocation3]
    $region5: #{tpu_custom_call.1} parent=1 // pred_fallthru
      _
    // Predicated region
    $region6: #{tpu_custom_call.1} parent=1 // pred_check
      _
    $region7: #{tpu_custom_call.1} parent=1 // pred_check_branch
      %25 = sbr.rel (0) target = $region9
    $region8: #{tpu_custom_call.1} parent=1 // pred_region
      _
    $region9: #{tpu_custom_call.1} parent=1 // pred_fallthru
      _
    // Predicated region
    $region10: #{tpu_custom_call.1} parent=1 // pred_check
      _
    $region11: #{tpu_custom_call.1} parent=1 // pred_check_branch
      %27 = sbr.rel (0) target = $region13
    $region12: #{tpu_custom_call.1} parent=1 // pred_region
      _
    $region13: #{tpu_custom_call.1} parent=1 // pred_fallthru
      _
    // Predicated region
    $region14: #{tpu_custom_call.1} parent=1 // pred_check
      _
    $region15: #{tpu_custom_call.1} parent=1 // pred_check_branch
      %29 = sbr.rel (0) target = $region17
    $region16: #{tpu_custom_call.1} parent=1 // pred_region
      _
    $region17: #{tpu_custom_call.1} parent=1 // pred_fallthru
      _
    // Predicated region
    $region18: #{tpu_custom_call.1} parent=1 // pred_check
      _
    $region19: #{tpu_custom_call.1} parent=1 // pred_check_branch
      %31 = sbr.rel (0) target = $region21
    $region20: #{tpu_custom_call.1} parent=1 // pred_region
      _
    $region21: #{tpu_custom_call.1} parent=1 // pred_fallthru
      _
    // Predicated region
    $region22: #{tpu_custom_call.1} parent=1 // pred_check
      _
    $region23: #{tpu_custom_call.1} parent=1 // pred_check_branch
      %33 = sbr.rel (0) target = $region25
    $region24: #{tpu_custom_call.1} parent=1 // pred_region
      _
    $region25: #{tpu_custom_call.1} parent=1 // pred_fallthru
      _
    // Predicated region
    $region26: #{tpu_custom_call.1} parent=1 // pred_check
      _
    $region27: #{tpu_custom_call.1} parent=1 // pred_check_branch
      %35 = sbr.rel (0) target = $region29
    $region28: #{tpu_custom_call.1} parent=1 // pred_region
      _
    $region29: #{tpu_custom_call.1} parent=1 // pred_fallthru
      _
    // Predicated region
    $region30: #{tpu_custom_call.1} parent=1 // pred_check
      _
    $region31: #{tpu_custom_call.1} parent=1 // pred_check_branch
      %37 = sbr.rel (0) target = $region33
    $region32: #{tpu_custom_call.1} parent=1 // pred_region
      _
    $region33: #{tpu_custom_call.1} parent=1 // pred_fallthru
      _
    // Predicated region
    $region34: #{tpu_custom_call.1} parent=1 // pred_check
      _
    $region35: #{tpu_custom_call.1} parent=1 // pred_check_branch
      %39 = sbr.rel (0) target = $region37
    $region36: #{tpu_custom_call.1} parent=1 // pred_region
      _
    $region37: #{tpu_custom_call.1} parent=1 // pred_fallthru
      _
    // Predicated region
    $region38: #{tpu_custom_call.1} parent=1 // pred_check
      _
    $region39: #{tpu_custom_call.1} parent=1 // pred_check_branch
      %41 = sbr.rel (0) target = $region41
    $region40: #{tpu_custom_call.1} parent=1 // pred_region
      %43 = dma.done [#allocation3], 16
    $region41: #{tpu_custom_call.1} parent=1 // pred_fallthru
      _
    %44 = sfence
    %v46 = vld [vmem:[%s2] sm:$0xf]
    %v47 = vpack.c.bf16 %v46, %v46
    %v48 = vld [vmem:[%s5] sm:$0xff]
    %v49 = vld [vmem:[%s5 + $0x8] sm:$0xff]
    %v50 = vld [vmem:[%s5 + $0x10] sm:$0xff]
    %v51 = vld [vmem:[%s5 + $0x18] sm:$0xff]
    %v52 = vpack.c.bf16 %v49, %v48
    %v53 = vpack.c.bf16 %v51, %v50
    %v54 = vld [vmem:[%s7] sm:$0xff]
    %v55 = vld [vmem:[%s7 + $0x8] sm:$0xff]
    %v56 = vld [vmem:[%s7 + $0x10] sm:$0xff]
    %v57 = vld [vmem:[%s7 + $0x18] sm:$0xff]
    %v58 = vpack.c.bf16 %v55, %v54
    %v59 = vpack.c.bf16 %v57, %v56
    %v60 = vld [vmem:[%s3] sm:$0x1]
    %v61 = vld [vmem:[%s4] sm:$0x1]
    %v62 = vld [vmem:[%s6] sm:$0x1]
    %v63 = vld [vmem:[%s8] sm:$0x1]
    %v64 = vld [vmem:[%s1] sm:$0xff]
    %vm65 = vcmask 31744
    %66 = vst.msk [vmem:[%s9] sm:$0xff] %vm65, %v64
    %s67 = sld [smem:[#allocation2]]
    %s68 = sld [smem:[#allocation2 + $0x1]]
    %s69 = ssub.f32 %s68, %s67
    %v70 = vrcp.pop 20.0
    %v71 = vmul.f32 20.0, %v70
    %v72 = vsub.f32 1.0, %v71
    %v73 = vmul.f32 %v70, %v72
    %v74 = vadd.f32 %v70, %v73
    %vm75 = vweird.f32 %v70
    %v76 = vsel %vm75, %v70, %v74
    %s77 = vtos %v76
    %s78 = smul.f32 %s69, %s77
    %s79 = smul.f32 %s78, 0.5
    %s80 = smul.f32 %s78, 0.16666667
    %s81 = smul.f32 %s78, 0.33333334
    %v82 = vstv %s79
    %v83 = vmul.f32 %v82, %v60
    %v84 = vstv %s67
    %v85 = vmul.f32 %v84, %v60
    %v86 = vadd.f32 %v85, %v61
    %v87 = vadd.f32 %v86, %v83
    %v88 = vadd.f32 %v87, %v83
    %v89 = vpack.c.bf16 %v64, %v64
    %v91 = vperm.slane %v86, 0
    %v94 = vsel %vm65, %v89, 0
    %vm96 = vcmask 1041408
    %v98 = vsel %vm96, %v47, 0
    %100 = vmatpush.bf16.msra.mxu0 0
    %101 = vmatpush.bf16.msra.mxu0 0
    %102 = vmatpush.bf16.msra.mxu0 0
    %103 = vmatpush.bf16.msra.mxu0 0
    %104 = vmatpush.bf16.msra.mxu0 0
    %105 = vmatpush.bf16.msra.mxu0 0
    %106 = vmatpush.bf16.msra.mxu0 0
    %107 = vmatpush.bf16.msra.mxu0 %v98
    %108 = vmatmul.bf16.gmra.mxu0 %v94
    %v109 = vpop.f32.mrf.mxu0
    %v110 = vadd.f32 %v91, %v109
    %v111 = vpop.f32.mrf.mxu0
    %112 = vdwg.mxu0
    %vm113 = vcmp.gt.f32.partialorder %v110, 0.0
    %v114 = vmul.f32 %v110, 1.442695
    %v115 = vpow.pop %v114
    %v116 = vsub.f32 %v115, 1.0
    %v117 = vsel %vm113, %v110, %v116
    %v118 = vpack.c.bf16 %v117, %v117
    %v120 = vperm.slane %v62, 0
    %vm122 = vcmask 261120
    %v124 = vsel %vm122, %v118, 0
    %126 = vmatpush.bf16.msra.mxu0 0
    %127 = vmatpush.bf16.msra.mxu0 0
    %128 = vmatpush.bf16.msra.mxu0 0
    %129 = vmatpush.bf16.msra.mxu0 0
    %130 = vmatpush.bf16.msra.mxu0 0
    %131 = vmatpush.bf16.msra.mxu0 0
    %132 = vmatpush.bf16.msra.mxu0 %v53
    %133 = vmatpush.bf16.msra.mxu0 %v52
    %134 = vmatmul.bf16.gmra.mxu0 %v124
    %v135 = vpop.f32.mrf.mxu0
    %v136 = vadd.f32 %v120, %v135
    %v137 = vpop.f32.mrf.mxu0
    %138 = vdwg.mxu0
    %vm139 = vcmp.gt.f32.partialorder %v136, 0.0
    %v140 = vmul.f32 %v136, 1.442695
    %v141 = vpow.pop %v140
    %v142 = vsub.f32 %v141, 1.0
    %v143 = vsel %vm139, %v136, %v142
    %v144 = vpack.c.bf16 %v143, %v143
    %v146 = vperm.slane %v63, 0
    %v149 = vsel %vm122, %v144, 0
    %151 = vmatpush.bf16.msra.mxu0 0
    %152 = vmatpush.bf16.msra.mxu0 0
    %153 = vmatpush.bf16.msra.mxu0 0
    %154 = vmatpush.bf16.msra.mxu0 0
    %155 = vmatpush.bf16.msra.mxu0 0
    %156 = vmatpush.bf16.msra.mxu0 0
    %157 = vmatpush.bf16.msra.mxu0 %v59
    %158 = vmatpush.bf16.msra.mxu0 %v58
    %159 = vmatmul.bf16.gmra.mxu0 %v149
    %v160 = vpop.f32.mrf.mxu0
    %v161 = vadd.f32 %v146, %v160
    %v162 = vpop.f32.mrf.mxu0
    %163 = vdwg.mxu0
    %v164 = vmul.f32 %v82, %v161
    %v165 = vadd.f32 %v64, %v164
    %v166 = vpack.c.bf16 %v165, %v165
    %v168 = vperm.slane %v87, 0
    %v171 = vsel %vm65, %v166, 0
    %173 = vmatpush.bf16.msra.mxu0 0
    %174 = vmatpush.bf16.msra.mxu0 0
    %175 = vmatpush.bf16.msra.mxu0 0
    %176 = vmatpush.bf16.msra.mxu0 0
    %177 = vmatpush.bf16.msra.mxu0 0
    %178 = vmatpush.bf16.msra.mxu0 0
    %179 = vmatpush.bf16.msra.mxu0 0
    %180 = vmatpush.bf16.msra.mxu0 %v98
    %181 = vmatmul.bf16.gmra.mxu0 %v171
    %v182 = vpop.f32.mrf.mxu0
    %v183 = vadd.f32 %v168, %v182
    %v184 = vpop.f32.mrf.mxu0
    %185 = vdwg.mxu0
    %vm186 = vcmp.gt.f32.partialorder %v183, 0.0
    %v187 = vmul.f32 %v183, 1.442695
    %v188 = vpow.pop %v187
    %v189 = vsub.f32 %v188, 1.0
    %v190 = vsel %vm186, %v183, %v189
    %v191 = vpack.c.bf16 %v190, %v190
    %v193 = vsel %vm122, %v191, 0
    %195 = vmatpush.bf16.msra.mxu0 0
    %196 = vmatpush.bf16.msra.mxu0 0
    %197 = vmatpush.bf16.msra.mxu0 0
    %198 = vmatpush.bf16.msra.mxu0 0
    %199 = vmatpush.bf16.msra.mxu0 0
    %200 = vmatpush.bf16.msra.mxu0 0
    %201 = vmatpush.bf16.msra.mxu0 %v53
    %202 = vmatpush.bf16.msra.mxu0 %v52
    %203 = vmatmul.bf16.gmra.mxu0 %v193
    %v204 = vpop.f32.mrf.mxu0
    %v205 = vadd.f32 %v120, %v204
    %v206 = vpop.f32.mrf.mxu0
    %207 = vdwg.mxu0
    %vm208 = vcmp.gt.f32.partialorder %v205, 0.0
    %v209 = vmul.f32 %v205, 1.442695
    %v210 = vpow.pop %v209
    %v211 = vsub.f32 %v210, 1.0
    %v212 = vsel %vm208, %v205, %v211
    %v213 = vpack.c.bf16 %v212, %v212
    %v215 = vsel %vm122, %v213, 0
    %217 = vmatpush.bf16.msra.mxu0 0
    %218 = vmatpush.bf16.msra.mxu0 0
    %219 = vmatpush.bf16.msra.mxu0 0
    %220 = vmatpush.bf16.msra.mxu0 0
    %221 = vmatpush.bf16.msra.mxu0 0
    %222 = vmatpush.bf16.msra.mxu0 0
    %223 = vmatpush.bf16.msra.mxu0 %v59
    %224 = vmatpush.bf16.msra.mxu0 %v58
    %225 = vmatmul.bf16.gmra.mxu0 %v215
    %v226 = vpop.f32.mrf.mxu0
    %v227 = vadd.f32 %v146, %v226
    %v228 = vpop.f32.mrf.mxu0
    %229 = vdwg.mxu0
    %v230 = vmul.f32 %v82, %v227
    %v231 = vadd.f32 %v64, %v230
    %v232 = vpack.c.bf16 %v231, %v231
    %v234 = vsel %vm65, %v232, 0
    %236 = vmatpush.bf16.msra.mxu0 0
    %237 = vmatpush.bf16.msra.mxu0 0
    %238 = vmatpush.bf16.msra.mxu0 0
    %239 = vmatpush.bf16.msra.mxu0 0
    %240 = vmatpush.bf16.msra.mxu0 0
    %241 = vmatpush.bf16.msra.mxu0 0
    %242 = vmatpush.bf16.msra.mxu0 0
    %243 = vmatpush.bf16.msra.mxu0 %v98
    %244 = vmatmul.bf16.gmra.mxu0 %v234
    %v245 = vpop.f32.mrf.mxu0
    %v246 = vadd.f32 %v168, %v245
    %v247 = vpop.f32.mrf.mxu0
    %248 = vdwg.mxu0
    %vm249 = vcmp.gt.f32.partialorder %v246, 0.0
    %v250 = vmul.f32 %v246, 1.442695
    %v251 = vpow.pop %v250
    %v252 = vsub.f32 %v251, 1.0
    %v253 = vsel %vm249, %v246, %v252
    %v254 = vpack.c.bf16 %v253, %v253
    %v256 = vsel %vm122, %v254, 0
    %258 = vmatpush.bf16.msra.mxu0 0
    %259 = vmatpush.bf16.msra.mxu0 0
    %260 = vmatpush.bf16.msra.mxu0 0
    %261 = vmatpush.bf16.msra.mxu0 0
    %262 = vmatpush.bf16.msra.mxu0 0
    %263 = vmatpush.bf16.msra.mxu0 0
    %264 = vmatpush.bf16.msra.mxu0 %v53
    %265 = vmatpush.bf16.msra.mxu0 %v52
    %266 = vmatmul.bf16.gmra.mxu0 %v256
    %v267 = vpop.f32.mrf.mxu0
    %v268 = vadd.f32 %v120, %v267
    %v269 = vpop.f32.mrf.mxu0
    %270 = vdwg.mxu0
    %vm271 = vcmp.gt.f32.partialorder %v268, 0.0
    %v272 = vmul.f32 %v268, 1.442695
    %v273 = vpow.pop %v272
    %v274 = vsub.f32 %v273, 1.0
    %v275 = vsel %vm271, %v268, %v274
    %v276 = vpack.c.bf16 %v275, %v275
    %v278 = vsel %vm122, %v276, 0
    %280 = vmatpush.bf16.msra.mxu0 0
    %281 = vmatpush.bf16.msra.mxu0 0
    %282 = vmatpush.bf16.msra.mxu0 0
    %283 = vmatpush.bf16.msra.mxu0 0
    %284 = vmatpush.bf16.msra.mxu0 0
    %285 = vmatpush.bf16.msra.mxu0 0
    %286 = vmatpush.bf16.msra.mxu0 %v59
    %287 = vmatpush.bf16.msra.mxu0 %v58
    %288 = vmatmul.bf16.gmra.mxu0 %v278
    %v289 = vpop.f32.mrf.mxu0
    %v290 = vadd.f32 %v146, %v289
    %v291 = vpop.f32.mrf.mxu0
    %292 = vdwg.mxu0
    %v293 = vstv %s78
    %v294 = vmul.f32 %v293, %v290
    %v295 = vadd.f32 %v64, %v294
    %v296 = vpack.c.bf16 %v295, %v295
    %v298 = vperm.slane %v88, 0
    %v301 = vsel %vm65, %v296, 0
    %303 = vmatpush.bf16.msra.mxu0 0
    %304 = vmatpush.bf16.msra.mxu0 0
    %305 = vmatpush.bf16.msra.mxu0 0
    %306 = vmatpush.bf16.msra.mxu0 0
    %307 = vmatpush.bf16.msra.mxu0 0
    %308 = vmatpush.bf16.msra.mxu0 0
    %309 = vmatpush.bf16.msra.mxu0 0
    %310 = vmatpush.bf16.msra.mxu0 %v98
    %311 = vmatmul.bf16.gmra.mxu0 %v301
    %v312 = vpop.f32.mrf.mxu0
    %v313 = vadd.f32 %v298, %v312
    %v314 = vpop.f32.mrf.mxu0
    %315 = vdwg.mxu0
    %vm316 = vcmp.gt.f32.partialorder %v313, 0.0
    %v317 = vmul.f32 %v313, 1.442695
    %v318 = vpow.pop %v317
    %v319 = vsub.f32 %v318, 1.0
    %v320 = vsel %vm316, %v313, %v319
    %v321 = vpack.c.bf16 %v320, %v320
    %v323 = vsel %vm122, %v321, 0
    %325 = vmatpush.bf16.msra.mxu0 0
    %326 = vmatpush.bf16.msra.mxu0 0
    %327 = vmatpush.bf16.msra.mxu0 0
    %328 = vmatpush.bf16.msra.mxu0 0
    %329 = vmatpush.bf16.msra.mxu0 0
    %330 = vmatpush.bf16.msra.mxu0 0
    %331 = vmatpush.bf16.msra.mxu0 %v53
    %332 = vmatpush.bf16.msra.mxu0 %v52
    %333 = vmatmul.bf16.gmra.mxu0 %v323
    %v334 = vpop.f32.mrf.mxu0
    %v335 = vadd.f32 %v120, %v334
    %v336 = vpop.f32.mrf.mxu0
    %337 = vdwg.mxu0
    %vm338 = vcmp.gt.f32.partialorder %v335, 0.0
    %v339 = vmul.f32 %v335, 1.442695
    %v340 = vpow.pop %v339
    %v341 = vsub.f32 %v340, 1.0
    %v342 = vsel %vm338, %v335, %v341
    %v343 = vpack.c.bf16 %v342, %v342
    %v345 = vsel %vm122, %v343, 0
    %347 = vmatpush.bf16.msra.mxu0 0
    %348 = vmatpush.bf16.msra.mxu0 0
    %349 = vmatpush.bf16.msra.mxu0 0
    %350 = vmatpush.bf16.msra.mxu0 0
    %351 = vmatpush.bf16.msra.mxu0 0
    %352 = vmatpush.bf16.msra.mxu0 0
    %353 = vmatpush.bf16.msra.mxu0 %v59
    %354 = vmatpush.bf16.msra.mxu0 %v58
    %355 = vmatmul.bf16.gmra.mxu0 %v345
    %v356 = vpop.f32.mrf.mxu0
    %v357 = vadd.f32 %v146, %v356
    %v358 = vpop.f32.mrf.mxu0
    %359 = vdwg.mxu0
    %v360 = vadd.f32 %v161, %v357
    %v361 = vstv %s80
    %v362 = vmul.f32 %v361, %v360
    %v363 = vadd.f32 %v64, %v362
    %v364 = vadd.f32 %v227, %v290
    %v365 = vstv %s81
    %v366 = vmul.f32 %v365, %v364
    %v367 = vadd.f32 %v363, %v366
    %v368 = vadd.f32 %v88, %v83
    %v369 = vadd.f32 %v368, %v83
    %v370 = vpack.c.bf16 %v367, %v367
    %v372 = vsel %vm65, %v370, 0
    %374 = vmatpush.bf16.msra.mxu0 0
    %375 = vmatpush.bf16.msra.mxu0 0
    %376 = vmatpush.bf16.msra.mxu0 0
    %377 = vmatpush.bf16.msra.mxu0 0
    %378 = vmatpush.bf16.msra.mxu0 0
    %379 = vmatpush.bf16.msra.mxu0 0
    %380 = vmatpush.bf16.msra.mxu0 0
    %381 = vmatpush.bf16.msra.mxu0 %v98
    %382 = vmatmul.bf16.gmra.mxu0 %v372
    %v383 = vpop.f32.mrf.mxu0
    %v384 = vadd.f32 %v298, %v383
    %v385 = vpop.f32.mrf.mxu0
    %386 = vdwg.mxu0
    %vm387 = vcmp.gt.f32.partialorder %v384, 0.0
    %v388 = vmul.f32 %v384, 1.442695
    %v389 = vpow.pop %v388
    %v390 = vsub.f32 %v389, 1.0
    %v391 = vsel %vm387, %v384, %v390
    %v392 = vpack.c.bf16 %v391, %v391
    %v394 = vsel %vm122, %v392, 0
    %396 = vmatpush.bf16.msra.mxu0 0
    %397 = vmatpush.bf16.msra.mxu0 0
    %398 = vmatpush.bf16.msra.mxu0 0
    %399 = vmatpush.bf16.msra.mxu0 0
    %400 = vmatpush.bf16.msra.mxu0 0
    %401 = vmatpush.bf16.msra.mxu0 0
    %402 = vmatpush.bf16.msra.mxu0 %v53
    %403 = vmatpush.bf16.msra.mxu0 %v52
    %404 = vmatmul.bf16.gmra.mxu0 %v394
    %v405 = vpop.f32.mrf.mxu0
    %v406 = vadd.f32 %v120, %v405
    %v407 = vpop.f32.mrf.mxu0
    %408 = vdwg.mxu0
    %vm409 = vcmp.gt.f32.partialorder %v406, 0.0
    %v410 = vmul.f32 %v406, 1.442695
    %v411 = vpow.pop %v410
    %v412 = vsub.f32 %v411, 1.0
    %v413 = vsel %vm409, %v406, %v412
    %v414 = vpack.c.bf16 %v413, %v413
    %v416 = vsel %vm122, %v414, 0
    %418 = vmatpush.bf16.msra.mxu0 0
    %419 = vmatpush.bf16.msra.mxu0 0
    %420 = vmatpush.bf16.msra.mxu0 0
    %421 = vmatpush.bf16.msra.mxu0 0
    %422 = vmatpush.bf16.msra.mxu0 0
    %423 = vmatpush.bf16.msra.mxu0 0
    %424 = vmatpush.bf16.msra.mxu0 %v59
    %425 = vmatpush.bf16.msra.mxu0 %v58
    %426 = vmatmul.bf16.gmra.mxu0 %v416
    %v427 = vpop.f32.mrf.mxu0
    %v428 = vadd.f32 %v146, %v427
    %v429 = vpop.f32.mrf.mxu0
    %430 = vdwg.mxu0
    %v431 = vmul.f32 %v82, %v428
    %v432 = vadd.f32 %v367, %v431
    %v433 = vpack.c.bf16 %v432, %v432
    %v435 = vperm.slane %v368, 0
    %v438 = vsel %vm65, %v433, 0
    %440 = vmatpush.bf16.msra.mxu0 0
    %441 = vmatpush.bf16.msra.mxu0 0
    %442 = vmatpush.bf16.msra.mxu0 0
    %443 = vmatpush.bf16.msra.mxu0 0
    %444 = vmatpush.bf16.msra.mxu0 0
    %445 = vmatpush.bf16.msra.mxu0 0
    %446 = vmatpush.bf16.msra.mxu0 0
    %447 = vmatpush.bf16.msra.mxu0 %v98
    %448 = vmatmul.bf16.gmra.mxu0 %v438
    %v449 = vpop.f32.mrf.mxu0
    %v450 = vadd.f32 %v435, %v449
    %v451 = vpop.f32.mrf.mxu0
    %452 = vdwg.mxu0
    %vm453 = vcmp.gt.f32.partialorder %v450, 0.0
    %v454 = vmul.f32 %v450, 1.442695
    %v455 = vpow.pop %v454
    %v456 = vsub.f32 %v455, 1.0
    %v457 = vsel %vm453, %v450, %v456
    %v458 = vpack.c.bf16 %v457, %v457
    %v460 = vsel %vm122, %v458, 0
    %462 = vmatpush.bf16.msra.mxu0 0
    %463 = vmatpush.bf16.msra.mxu0 0
    %464 = vmatpush.bf16.msra.mxu0 0
    %465 = vmatpush.bf16.msra.mxu0 0
    %466 = vmatpush.bf16.msra.mxu0 0
    %467 = vmatpush.bf16.msra.mxu0 0
    %468 = vmatpush.bf16.msra.mxu0 %v53
    %469 = vmatpush.bf16.msra.mxu0 %v52
    %470 = vmatmul.bf16.gmra.mxu0 %v460
    %v471 = vpop.f32.mrf.mxu0
    %v472 = vadd.f32 %v120, %v471
    %v473 = vpop.f32.mrf.mxu0
    %474 = vdwg.mxu0
    %vm475 = vcmp.gt.f32.partialorder %v472, 0.0
    %v476 = vmul.f32 %v472, 1.442695
    %v477 = vpow.pop %v476
    %v478 = vsub.f32 %v477, 1.0
    %v479 = vsel %vm475, %v472, %v478
    %v480 = vpack.c.bf16 %v479, %v479
    %v482 = vsel %vm122, %v480, 0
    %484 = vmatpush.bf16.msra.mxu0 0
    %485 = vmatpush.bf16.msra.mxu0 0
    %486 = vmatpush.bf16.msra.mxu0 0
    %487 = vmatpush.bf16.msra.mxu0 0
    %488 = vmatpush.bf16.msra.mxu0 0
    %489 = vmatpush.bf16.msra.mxu0 0
    %490 = vmatpush.bf16.msra.mxu0 %v59
    %491 = vmatpush.bf16.msra.mxu0 %v58
    %492 = vmatmul.bf16.gmra.mxu0 %v482
    %v493 = vpop.f32.mrf.mxu0
    %v494 = vadd.f32 %v146, %v493
    %v495 = vpop.f32.mrf.mxu0
    %496 = vdwg.mxu0
    %v497 = vmul.f32 %v82, %v494
    %v498 = vadd.f32 %v367, %v497
    %v499 = vpack.c.bf16 %v498, %v498
    %v501 = vsel %vm65, %v499, 0
    %503 = vmatpush.bf16.msra.mxu0 0
    %504 = vmatpush.bf16.msra.mxu0 0
    %505 = vmatpush.bf16.msra.mxu0 0
    %506 = vmatpush.bf16.msra.mxu0 0
    %507 = vmatpush.bf16.msra.mxu0 0
    %508 = vmatpush.bf16.msra.mxu0 0
    %509 = vmatpush.bf16.msra.mxu0 0
    %510 = vmatpush.bf16.msra.mxu0 %v98
    %511 = vmatmul.bf16.gmra.mxu0 %v501
    %v512 = vpop.f32.mrf.mxu0
    %v513 = vadd.f32 %v435, %v512
    %v514 = vpop.f32.mrf.mxu0
    %515 = vdwg.mxu0
    %vm516 = vcmp.gt.f32.partialorder %v513, 0.0
    %v517 = vmul.f32 %v513, 1.442695
    %v518 = vpow.pop %v517
    %v519 = vsub.f32 %v518, 1.0
    %v520 = vsel %vm516, %v513, %v519
    %v521 = vpack.c.bf16 %v520, %v520
    %v523 = vsel %vm122, %v521, 0
    %525 = vmatpush.bf16.msra.mxu0 0
    %526 = vmatpush.bf16.msra.mxu0 0
    %527 = vmatpush.bf16.msra.mxu0 0
    %528 = vmatpush.bf16.msra.mxu0 0
    %529 = vmatpush.bf16.msra.mxu0 0
    %530 = vmatpush.bf16.msra.mxu0 0
    %531 = vmatpush.bf16.msra.mxu0 %v53
    %532 = vmatpush.bf16.msra.mxu0 %v52
    %533 = vmatmul.bf16.gmra.mxu0 %v523
    %v534 = vpop.f32.mrf.mxu0
    %v535 = vadd.f32 %v120, %v534
    %v536 = vpop.f32.mrf.mxu0
    %537 = vdwg.mxu0
    %vm538 = vcmp.gt.f32.partialorder %v535, 0.0
    %v539 = vmul.f32 %v535, 1.442695
    %v540 = vpow.pop %v539
    %v541 = vsub.f32 %v540, 1.0
    %v542 = vsel %vm538, %v535, %v541
    %v543 = vpack.c.bf16 %v542, %v542
    %v545 = vsel %vm122, %v543, 0
    %547 = vmatpush.bf16.msra.mxu0 0
    %548 = vmatpush.bf16.msra.mxu0 0
    %549 = vmatpush.bf16.msra.mxu0 0
    %550 = vmatpush.bf16.msra.mxu0 0
    %551 = vmatpush.bf16.msra.mxu0 0
    %552 = vmatpush.bf16.msra.mxu0 0
    %553 = vmatpush.bf16.msra.mxu0 %v59
    %554 = vmatpush.bf16.msra.mxu0 %v58
    %555 = vmatmul.bf16.gmra.mxu0 %v545
    %v556 = vpop.f32.mrf.mxu0
    %v557 = vadd.f32 %v146, %v556
    %v558 = vpop.f32.mrf.mxu0
    %559 = vdwg.mxu0
    %v560 = vmul.f32 %v293, %v557
    %v561 = vadd.f32 %v367, %v560
    %v562 = vpack.c.bf16 %v561, %v561
    %v564 = vperm.slane %v369, 0
    %v567 = vsel %vm65, %v562, 0
    %569 = vmatpush.bf16.msra.mxu0 0
    %570 = vmatpush.bf16.msra.mxu0 0
    %571 = vmatpush.bf16.msra.mxu0 0
    %572 = vmatpush.bf16.msra.mxu0 0
    %573 = vmatpush.bf16.msra.mxu0 0
    %574 = vmatpush.bf16.msra.mxu0 0
    %575 = vmatpush.bf16.msra.mxu0 0
    %576 = vmatpush.bf16.msra.mxu0 %v98
    %577 = vmatmul.bf16.gmra.mxu0 %v567
    %v578 = vpop.f32.mrf.mxu0
    %v579 = vadd.f32 %v564, %v578
    %v580 = vpop.f32.mrf.mxu0
    %581 = vdwg.mxu0
    %vm582 = vcmp.gt.f32.partialorder %v579, 0.0
    %v583 = vmul.f32 %v579, 1.442695
    %v584 = vpow.pop %v583
    %v585 = vsub.f32 %v584, 1.0
    %v586 = vsel %vm582, %v579, %v585
    %v587 = vpack.c.bf16 %v586, %v586
    %v589 = vsel %vm122, %v587, 0
    %591 = vmatpush.bf16.msra.mxu0 0
    %592 = vmatpush.bf16.msra.mxu0 0
    %593 = vmatpush.bf16.msra.mxu0 0
    %594 = vmatpush.bf16.msra.mxu0 0
    %595 = vmatpush.bf16.msra.mxu0 0
    %596 = vmatpush.bf16.msra.mxu0 0
    %597 = vmatpush.bf16.msra.mxu0 %v53
    %598 = vmatpush.bf16.msra.mxu0 %v52
    %599 = vmatmul.bf16.gmra.mxu0 %v589
    %v600 = vpop.f32.mrf.mxu0
    %v601 = vadd.f32 %v120, %v600
    %v602 = vpop.f32.mrf.mxu0
    %603 = vdwg.mxu0
    %vm604 = vcmp.gt.f32.partialorder %v601, 0.0
    %v605 = vmul.f32 %v601, 1.442695
    %v606 = vpow.pop %v605
    %v607 = vsub.f32 %v606, 1.0
    %v608 = vsel %vm604, %v601, %v607
    %v609 = vpack.c.bf16 %v608, %v608
    %v611 = vsel %vm122, %v609, 0
    %613 = vmatpush.bf16.msra.mxu0 0
    %614 = vmatpush.bf16.msra.mxu0 0
    %615 = vmatpush.bf16.msra.mxu0 0
    %616 = vmatpush.bf16.msra.mxu0 0
    %617 = vmatpush.bf16.msra.mxu0 0
    %618 = vmatpush.bf16.msra.mxu0 0
    %619 = vmatpush.bf16.msra.mxu0 %v59
    %620 = vmatpush.bf16.msra.mxu0 %v58
    %621 = vmatmul.bf16.gmra.mxu0 %v611
    %v622 = vpop.f32.mrf.mxu0
    %v623 = vadd.f32 %v146, %v622
    %v624 = vpop.f32.mrf.mxu0
    %625 = vdwg.mxu0
    %v626 = vadd.f32 %v428, %v623
    %v627 = vmul.f32 %v361, %v626
    %v628 = vadd.f32 %v367, %v627
    %v629 = vadd.f32 %v494, %v557
    %v630 = vmul.f32 %v365, %v629
    %v631 = vadd.f32 %v628, %v630
    %v632 = vadd.f32 %v369, %v83
    %v633 = vadd.f32 %v632, %v83
    %v634 = vpack.c.bf16 %v631, %v631
    %v636 = vsel %vm65, %v634, 0
    %638 = vmatpush.bf16.msra.mxu0 0
    %639 = vmatpush.bf16.msra.mxu0 0
    %640 = vmatpush.bf16.msra.mxu0 0
    %641 = vmatpush.bf16.msra.mxu0 0
    %642 = vmatpush.bf16.msra.mxu0 0
    %643 = vmatpush.bf16.msra.mxu0 0
    %644 = vmatpush.bf16.msra.mxu0 0
    %645 = vmatpush.bf16.msra.mxu0 %v98
    %646 = vmatmul.bf16.gmra.mxu0 %v636
    %v647 = vpop.f32.mrf.mxu0
    %v648 = vadd.f32 %v564, %v647
    %v649 = vpop.f32.mrf.mxu0
    %650 = vdwg.mxu0
    %vm651 = vcmp.gt.f32.partialorder %v648, 0.0
    %v652 = vmul.f32 %v648, 1.442695
    %v653 = vpow.pop %v652
    %v654 = vsub.f32 %v653, 1.0
    %v655 = vsel %vm651, %v648, %v654
    %v656 = vpack.c.bf16 %v655, %v655
    %v658 = vsel %vm122, %v656, 0
    %660 = vmatpush.bf16.msra.mxu0 0
    %661 = vmatpush.bf16.msra.mxu0 0
    %662 = vmatpush.bf16.msra.mxu0 0
    %663 = vmatpush.bf16.msra.mxu0 0
    %664 = vmatpush.bf16.msra.mxu0 0
    %665 = vmatpush.bf16.msra.mxu0 0
    %666 = vmatpush.bf16.msra.mxu0 %v53
    %667 = vmatpush.bf16.msra.mxu0 %v52
    %668 = vmatmul.bf16.gmra.mxu0 %v658
    %v669 = vpop.f32.mrf.mxu0
    %v670 = vadd.f32 %v120, %v669
    %v671 = vpop.f32.mrf.mxu0
    %672 = vdwg.mxu0
    %vm673 = vcmp.gt.f32.partialorder %v670, 0.0
    %v674 = vmul.f32 %v670, 1.442695
    %v675 = vpow.pop %v674
    %v676 = vsub.f32 %v675, 1.0
    %v677 = vsel %vm673, %v670, %v676
    %v678 = vpack.c.bf16 %v677, %v677
    %v680 = vsel %vm122, %v678, 0
    %682 = vmatpush.bf16.msra.mxu0 0
    %683 = vmatpush.bf16.msra.mxu0 0
    %684 = vmatpush.bf16.msra.mxu0 0
    %685 = vmatpush.bf16.msra.mxu0 0
    %686 = vmatpush.bf16.msra.mxu0 0
    %687 = vmatpush.bf16.msra.mxu0 0
    %688 = vmatpush.bf16.msra.mxu0 %v59
    %689 = vmatpush.bf16.msra.mxu0 %v58
    %690 = vmatmul.bf16.gmra.mxu0 %v680
    %v691 = vpop.f32.mrf.mxu0
    %v692 = vadd.f32 %v146, %v691
    %v693 = vpop.f32.mrf.mxu0
    %694 = vdwg.mxu0
    %v695 = vmul.f32 %v82, %v692
    %v696 = vadd.f32 %v631, %v695
    %v697 = vpack.c.bf16 %v696, %v696
    %v699 = vperm.slane %v632, 0
    %v702 = vsel %vm65, %v697, 0
    %704 = vmatpush.bf16.msra.mxu0 0
    %705 = vmatpush.bf16.msra.mxu0 0
    %706 = vmatpush.bf16.msra.mxu0 0
    %707 = vmatpush.bf16.msra.mxu0 0
    %708 = vmatpush.bf16.msra.mxu0 0
    %709 = vmatpush.bf16.msra.mxu0 0
    %710 = vmatpush.bf16.msra.mxu0 0
    %711 = vmatpush.bf16.msra.mxu0 %v98
    %712 = vmatmul.bf16.gmra.mxu0 %v702
    %v713 = vpop.f32.mrf.mxu0
    %v714 = vadd.f32 %v699, %v713
    %v715 = vpop.f32.mrf.mxu0
    %716 = vdwg.mxu0
    %vm717 = vcmp.gt.f32.partialorder %v714, 0.0
    %v718 = vmul.f32 %v714, 1.442695
    %v719 = vpow.pop %v718
    %v720 = vsub.f32 %v719, 1.0
    %v721 = vsel %vm717, %v714, %v720
    %v722 = vpack.c.bf16 %v721, %v721
    %v724 = vsel %vm122, %v722, 0
    %726 = vmatpush.bf16.msra.mxu0 0
    %727 = vmatpush.bf16.msra.mxu0 0
    %728 = vmatpush.bf16.msra.mxu0 0
    %729 = vmatpush.bf16.msra.mxu0 0
    %730 = vmatpush.bf16.msra.mxu0 0
    %731 = vmatpush.bf16.msra.mxu0 0
    %732 = vmatpush.bf16.msra.mxu0 %v53
    %733 = vmatpush.bf16.msra.mxu0 %v52
    %734 = vmatmul.bf16.gmra.mxu0 %v724
    %v735 = vpop.f32.mrf.mxu0
    %v736 = vadd.f32 %v120, %v735
    %v737 = vpop.f32.mrf.mxu0
    %738 = vdwg.mxu0
    %vm739 = vcmp.gt.f32.partialorder %v736, 0.0
    %v740 = vmul.f32 %v736, 1.442695
    %v741 = vpow.pop %v740
    %v742 = vsub.f32 %v741, 1.0
    %v743 = vsel %vm739, %v736, %v742
    %v744 = vpack.c.bf16 %v743, %v743
    %v746 = vsel %vm122, %v744, 0
    %748 = vmatpush.bf16.msra.mxu0 0
    %749 = vmatpush.bf16.msra.mxu0 0
    %750 = vmatpush.bf16.msra.mxu0 0
    %751 = vmatpush.bf16.msra.mxu0 0
    %752 = vmatpush.bf16.msra.mxu0 0
    %753 = vmatpush.bf16.msra.mxu0 0
    %754 = vmatpush.bf16.msra.mxu0 %v59
    %755 = vmatpush.bf16.msra.mxu0 %v58
    %756 = vmatmul.bf16.gmra.mxu0 %v746
    %v757 = vpop.f32.mrf.mxu0
    %v758 = vadd.f32 %v146, %v757
    %v759 = vpop.f32.mrf.mxu0
    %760 = vdwg.mxu0
    %v761 = vmul.f32 %v82, %v758
    %v762 = vadd.f32 %v631, %v761
    %v763 = vpack.c.bf16 %v762, %v762
    %v765 = vsel %vm65, %v763, 0
    %767 = vmatpush.bf16.msra.mxu0 0
    %768 = vmatpush.bf16.msra.mxu0 0
    %769 = vmatpush.bf16.msra.mxu0 0
    %770 = vmatpush.bf16.msra.mxu0 0
    %771 = vmatpush.bf16.msra.mxu0 0
    %772 = vmatpush.bf16.msra.mxu0 0
    %773 = vmatpush.bf16.msra.mxu0 0
    %774 = vmatpush.bf16.msra.mxu0 %v98
    %775 = vmatmul.bf16.gmra.mxu0 %v765
    %v776 = vpop.f32.mrf.mxu0
    %v777 = vadd.f32 %v699, %v776
    %v778 = vpop.f32.mrf.mxu0
    %779 = vdwg.mxu0
    %vm780 = vcmp.gt.f32.partialorder %v777, 0.0
    %v781 = vmul.f32 %v777, 1.442695
    %v782 = vpow.pop %v781
    %v783 = vsub.f32 %v782, 1.0
    %v784 = vsel %vm780, %v777, %v783
    %v785 = vpack.c.bf16 %v784, %v784
    %v787 = vsel %vm122, %v785, 0
    %789 = vmatpush.bf16.msra.mxu0 0
    %790 = vmatpush.bf16.msra.mxu0 0
    %791 = vmatpush.bf16.msra.mxu0 0
    %792 = vmatpush.bf16.msra.mxu0 0
    %793 = vmatpush.bf16.msra.mxu0 0
    %794 = vmatpush.bf16.msra.mxu0 0
    %795 = vmatpush.bf16.msra.mxu0 %v53
    %796 = vmatpush.bf16.msra.mxu0 %v52
    %797 = vmatmul.bf16.gmra.mxu0 %v787
    %v798 = vpop.f32.mrf.mxu0
    %v799 = vadd.f32 %v120, %v798
    %v800 = vpop.f32.mrf.mxu0
    %801 = vdwg.mxu0
    %vm802 = vcmp.gt.f32.partialorder %v799, 0.0
    %v803 = vmul.f32 %v799, 1.442695
    %v804 = vpow.pop %v803
    %v805 = vsub.f32 %v804, 1.0
    %v806 = vsel %vm802, %v799, %v805
    %v807 = vpack.c.bf16 %v806, %v806
    %v809 = vsel %vm122, %v807, 0
    %811 = vmatpush.bf16.msra.mxu0 0
    %812 = vmatpush.bf16.msra.mxu0 0
    %813 = vmatpush.bf16.msra.mxu0 0
    %814 = vmatpush.bf16.msra.mxu0 0
    %815 = vmatpush.bf16.msra.mxu0 0
    %816 = vmatpush.bf16.msra.mxu0 0
    %817 = vmatpush.bf16.msra.mxu0 %v59
    %818 = vmatpush.bf16.msra.mxu0 %v58
    %819 = vmatmul.bf16.gmra.mxu0 %v809
    %v820 = vpop.f32.mrf.mxu0
    %v821 = vadd.f32 %v146, %v820
    %v822 = vpop.f32.mrf.mxu0
    %823 = vdwg.mxu0
    %v824 = vmul.f32 %v293, %v821
    %v825 = vadd.f32 %v631, %v824
    %v826 = vpack.c.bf16 %v825, %v825
    %v828 = vperm.slane %v633, 0
    %v831 = vsel %vm65, %v826, 0
    %833 = vmatpush.bf16.msra.mxu0 0
    %834 = vmatpush.bf16.msra.mxu0 0
    %835 = vmatpush.bf16.msra.mxu0 0
    %836 = vmatpush.bf16.msra.mxu0 0
    %837 = vmatpush.bf16.msra.mxu0 0
    %838 = vmatpush.bf16.msra.mxu0 0
    %839 = vmatpush.bf16.msra.mxu0 0
    %840 = vmatpush.bf16.msra.mxu0 %v98
    %841 = vmatmul.bf16.gmra.mxu0 %v831
    %v842 = vpop.f32.mrf.mxu0
    %v843 = vadd.f32 %v828, %v842
    %v844 = vpop.f32.mrf.mxu0
    %845 = vdwg.mxu0
    %vm846 = vcmp.gt.f32.partialorder %v843, 0.0
    %v847 = vmul.f32 %v843, 1.442695
    %v848 = vpow.pop %v847
    %v849 = vsub.f32 %v848, 1.0
    %v850 = vsel %vm846, %v843, %v849
    %v851 = vpack.c.bf16 %v850, %v850
    %v853 = vsel %vm122, %v851, 0
    %855 = vmatpush.bf16.msra.mxu0 0
    %856 = vmatpush.bf16.msra.mxu0 0
    %857 = vmatpush.bf16.msra.mxu0 0
    %858 = vmatpush.bf16.msra.mxu0 0
    %859 = vmatpush.bf16.msra.mxu0 0
    %860 = vmatpush.bf16.msra.mxu0 0
    %861 = vmatpush.bf16.msra.mxu0 %v53
    %862 = vmatpush.bf16.msra.mxu0 %v52
    %863 = vmatmul.bf16.gmra.mxu0 %v853
    %v864 = vpop.f32.mrf.mxu0
    %v865 = vadd.f32 %v120, %v864
    %v866 = vpop.f32.mrf.mxu0
    %867 = vdwg.mxu0
    %vm868 = vcmp.gt.f32.partialorder %v865, 0.0
    %v869 = vmul.f32 %v865, 1.442695
    %v870 = vpow.pop %v869
    %v871 = vsub.f32 %v870, 1.0
    %v872 = vsel %vm868, %v865, %v871
    %v873 = vpack.c.bf16 %v872, %v872
    %v875 = vsel %vm122, %v873, 0
    %877 = vmatpush.bf16.msra.mxu0 0
    %878 = vmatpush.bf16.msra.mxu0 0
    %879 = vmatpush.bf16.msra.mxu0 0
    %880 = vmatpush.bf16.msra.mxu0 0
    %881 = vmatpush.bf16.msra.mxu0 0
    %882 = vmatpush.bf16.msra.mxu0 0
    %883 = vmatpush.bf16.msra.mxu0 %v59
    %884 = vmatpush.bf16.msra.mxu0 %v58
    %885 = vmatmul.bf16.gmra.mxu0 %v875
    %v886 = vpop.f32.mrf.mxu0
    %v887 = vadd.f32 %v146, %v886
    %v888 = vpop.f32.mrf.mxu0
    %889 = vdwg.mxu0
    %v890 = vadd.f32 %v692, %v887
    %v891 = vmul.f32 %v361, %v890
    %v892 = vadd.f32 %v631, %v891
    %v893 = vadd.f32 %v758, %v821
    %v894 = vmul.f32 %v365, %v893
    %v895 = vadd.f32 %v892, %v894
    %v896 = vadd.f32 %v633, %v83
    %v897 = vadd.f32 %v896, %v83
    %v898 = vpack.c.bf16 %v895, %v895
    %v900 = vsel %vm65, %v898, 0
    %902 = vmatpush.bf16.msra.mxu0 0
    %903 = vmatpush.bf16.msra.mxu0 0
    %904 = vmatpush.bf16.msra.mxu0 0
    %905 = vmatpush.bf16.msra.mxu0 0
    %906 = vmatpush.bf16.msra.mxu0 0
    %907 = vmatpush.bf16.msra.mxu0 0
    %908 = vmatpush.bf16.msra.mxu0 0
    %909 = vmatpush.bf16.msra.mxu0 %v98
    %910 = vmatmul.bf16.gmra.mxu0 %v900
    %v911 = vpop.f32.mrf.mxu0
    %v912 = vadd.f32 %v828, %v911
    %v913 = vpop.f32.mrf.mxu0
    %914 = vdwg.mxu0
    %vm915 = vcmp.gt.f32.partialorder %v912, 0.0
    %v916 = vmul.f32 %v912, 1.442695
    %v917 = vpow.pop %v916
    %v918 = vsub.f32 %v917, 1.0
    %v919 = vsel %vm915, %v912, %v918
    %v920 = vpack.c.bf16 %v919, %v919
    %v922 = vsel %vm122, %v920, 0
    %924 = vmatpush.bf16.msra.mxu0 0
    %925 = vmatpush.bf16.msra.mxu0 0
    %926 = vmatpush.bf16.msra.mxu0 0
    %927 = vmatpush.bf16.msra.mxu0 0
    %928 = vmatpush.bf16.msra.mxu0 0
    %929 = vmatpush.bf16.msra.mxu0 0
    %930 = vmatpush.bf16.msra.mxu0 %v53
    %931 = vmatpush.bf16.msra.mxu0 %v52
    %932 = vmatmul.bf16.gmra.mxu0 %v922
    %v933 = vpop.f32.mrf.mxu0
    %v934 = vadd.f32 %v120, %v933
    %v935 = vpop.f32.mrf.mxu0
    %936 = vdwg.mxu0
    %vm937 = vcmp.gt.f32.partialorder %v934, 0.0
    %v938 = vmul.f32 %v934, 1.442695
    %v939 = vpow.pop %v938
    %v940 = vsub.f32 %v939, 1.0
    %v941 = vsel %vm937, %v934, %v940
    %v942 = vpack.c.bf16 %v941, %v941
    %v944 = vsel %vm122, %v942, 0
    %946 = vmatpush.bf16.msra.mxu0 0
    %947 = vmatpush.bf16.msra.mxu0 0
    %948 = vmatpush.bf16.msra.mxu0 0
    %949 = vmatpush.bf16.msra.mxu0 0
    %950 = vmatpush.bf16.msra.mxu0 0
    %951 = vmatpush.bf16.msra.mxu0 0
    %952 = vmatpush.bf16.msra.mxu0 %v59
    %953 = vmatpush.bf16.msra.mxu0 %v58
    %954 = vmatmul.bf16.gmra.mxu0 %v944
    %v955 = vpop.f32.mrf.mxu0
    %v956 = vadd.f32 %v146, %v955
    %v957 = vpop.f32.mrf.mxu0
    %958 = vdwg.mxu0
    %v959 = vmul.f32 %v82, %v956
    %v960 = vadd.f32 %v895, %v959
    %v961 = vpack.c.bf16 %v960, %v960
    %v963 = vperm.slane %v896, 0
    %v966 = vsel %vm65, %v961, 0
    %968 = vmatpush.bf16.msra.mxu0 0
    %969 = vmatpush.bf16.msra.mxu0 0
    %970 = vmatpush.bf16.msra.mxu0 0
    %971 = vmatpush.bf16.msra.mxu0 0
    %972 = vmatpush.bf16.msra.mxu0 0
    %973 = vmatpush.bf16.msra.mxu0 0
    %974 = vmatpush.bf16.msra.mxu0 0
    %975 = vmatpush.bf16.msra.mxu0 %v98
    %976 = vmatmul.bf16.gmra.mxu0 %v966
    %v977 = vpop.f32.mrf.mxu0
    %v978 = vadd.f32 %v963, %v977
    %v979 = vpop.f32.mrf.mxu0
    %980 = vdwg.mxu0
    %vm981 = vcmp.gt.f32.partialorder %v978, 0.0
    %v982 = vmul.f32 %v978, 1.442695
    %v983 = vpow.pop %v982
    %v984 = vsub.f32 %v983, 1.0
    %v985 = vsel %vm981, %v978, %v984
    %v986 = vpack.c.bf16 %v985, %v985
    %v988 = vsel %vm122, %v986, 0
    %990 = vmatpush.bf16.msra.mxu0 0
    %991 = vmatpush.bf16.msra.mxu0 0
    %992 = vmatpush.bf16.msra.mxu0 0
    %993 = vmatpush.bf16.msra.mxu0 0
    %994 = vmatpush.bf16.msra.mxu0 0
    %995 = vmatpush.bf16.msra.mxu0 0
    %996 = vmatpush.bf16.msra.mxu0 %v53
    %997 = vmatpush.bf16.msra.mxu0 %v52
    %998 = vmatmul.bf16.gmra.mxu0 %v988
    %v999 = vpop.f32.mrf.mxu0
    %v1000 = vadd.f32 %v120, %v999
    %v1001 = vpop.f32.mrf.mxu0
    %1002 = vdwg.mxu0
    %vm1003 = vcmp.gt.f32.partialorder %v1000, 0.0
    %v1004 = vmul.f32 %v1000, 1.442695
    %v1005 = vpow.pop %v1004
    %v1006 = vsub.f32 %v1005, 1.0
    %v1007 = vsel %vm1003, %v1000, %v1006
    %v1008 = vpack.c.bf16 %v1007, %v1007
    %v1010 = vsel %vm122, %v1008, 0
    %1012 = vmatpush.bf16.msra.mxu0 0
    %1013 = vmatpush.bf16.msra.mxu0 0
    %1014 = vmatpush.bf16.msra.mxu0 0
    %1015 = vmatpush.bf16.msra.mxu0 0
    %1016 = vmatpush.bf16.msra.mxu0 0
    %1017 = vmatpush.bf16.msra.mxu0 0
    %1018 = vmatpush.bf16.msra.mxu0 %v59
    %1019 = vmatpush.bf16.msra.mxu0 %v58
    %1020 = vmatmul.bf16.gmra.mxu0 %v1010
    %v1021 = vpop.f32.mrf.mxu0
    %v1022 = vadd.f32 %v146, %v1021
    %v1023 = vpop.f32.mrf.mxu0
    %1024 = vdwg.mxu0
    %v1025 = vmul.f32 %v82, %v1022
    %v1026 = vadd.f32 %v895, %v1025
    %v1027 = vpack.c.bf16 %v1026, %v1026
    %v1029 = vsel %vm65, %v1027, 0
    %1031 = vmatpush.bf16.msra.mxu0 0
    %1032 = vmatpush.bf16.msra.mxu0 0
    %1033 = vmatpush.bf16.msra.mxu0 0
    %1034 = vmatpush.bf16.msra.mxu0 0
    %1035 = vmatpush.bf16.msra.mxu0 0
    %1036 = vmatpush.bf16.msra.mxu0 0
    %1037 = vmatpush.bf16.msra.mxu0 0
    %1038 = vmatpush.bf16.msra.mxu0 %v98
    %1039 = vmatmul.bf16.gmra.mxu0 %v1029
    %v1040 = vpop.f32.mrf.mxu0
    %v1041 = vadd.f32 %v963, %v1040
    %v1042 = vpop.f32.mrf.mxu0
    %1043 = vdwg.mxu0
    %vm1044 = vcmp.gt.f32.partialorder %v1041, 0.0
    %v1045 = vmul.f32 %v1041, 1.442695
    %v1046 = vpow.pop %v1045
    %v1047 = vsub.f32 %v1046, 1.0
    %v1048 = vsel %vm1044, %v1041, %v1047
    %v1049 = vpack.c.bf16 %v1048, %v1048
    %v1051 = vsel %vm122, %v1049, 0
    %1053 = vmatpush.bf16.msra.mxu0 0
    %1054 = vmatpush.bf16.msra.mxu0 0
    %1055 = vmatpush.bf16.msra.mxu0 0
    %1056 = vmatpush.bf16.msra.mxu0 0
    %1057 = vmatpush.bf16.msra.mxu0 0
    %1058 = vmatpush.bf16.msra.mxu0 0
    %1059 = vmatpush.bf16.msra.mxu0 %v53
    %1060 = vmatpush.bf16.msra.mxu0 %v52
    %1061 = vmatmul.bf16.gmra.mxu0 %v1051
    %v1062 = vpop.f32.mrf.mxu0
    %v1063 = vadd.f32 %v120, %v1062
    %v1064 = vpop.f32.mrf.mxu0
    %1065 = vdwg.mxu0
    %vm1066 = vcmp.gt.f32.partialorder %v1063, 0.0
    %v1067 = vmul.f32 %v1063, 1.442695
    %v1068 = vpow.pop %v1067
    %v1069 = vsub.f32 %v1068, 1.0
    %v1070 = vsel %vm1066, %v1063, %v1069
    %v1071 = vpack.c.bf16 %v1070, %v1070
    %v1073 = vsel %vm122, %v1071, 0
    %1075 = vmatpush.bf16.msra.mxu0 0
    %1076 = vmatpush.bf16.msra.mxu0 0
    %1077 = vmatpush.bf16.msra.mxu0 0
    %1078 = vmatpush.bf16.msra.mxu0 0
    %1079 = vmatpush.bf16.msra.mxu0 0
    %1080 = vmatpush.bf16.msra.mxu0 0
    %1081 = vmatpush.bf16.msra.mxu0 %v59
    %1082 = vmatpush.bf16.msra.mxu0 %v58
    %1083 = vmatmul.bf16.gmra.mxu0 %v1073
    %v1084 = vpop.f32.mrf.mxu0
    %v1085 = vadd.f32 %v146, %v1084
    %v1086 = vpop.f32.mrf.mxu0
    %1087 = vdwg.mxu0
    %v1088 = vmul.f32 %v293, %v1085
    %v1089 = vadd.f32 %v895, %v1088
    %v1090 = vpack.c.bf16 %v1089, %v1089
    %v1092 = vperm.slane %v897, 0
    %v1095 = vsel %vm65, %v1090, 0
    %1097 = vmatpush.bf16.msra.mxu0 0
    %1098 = vmatpush.bf16.msra.mxu0 0
    %1099 = vmatpush.bf16.msra.mxu0 0
    %1100 = vmatpush.bf16.msra.mxu0 0
    %1101 = vmatpush.bf16.msra.mxu0 0
    %1102 = vmatpush.bf16.msra.mxu0 0
    %1103 = vmatpush.bf16.msra.mxu0 0
    %1104 = vmatpush.bf16.msra.mxu0 %v98
    %1105 = vmatmul.bf16.gmra.mxu0 %v1095
    %v1106 = vpop.f32.mrf.mxu0
    %v1107 = vadd.f32 %v1092, %v1106
    %v1108 = vpop.f32.mrf.mxu0
    %1109 = vdwg.mxu0
    %vm1110 = vcmp.gt.f32.partialorder %v1107, 0.0
    %v1111 = vmul.f32 %v1107, 1.442695
    %v1112 = vpow.pop %v1111
    %v1113 = vsub.f32 %v1112, 1.0
    %v1114 = vsel %vm1110, %v1107, %v1113
    %v1115 = vpack.c.bf16 %v1114, %v1114
    %v1117 = vsel %vm122, %v1115, 0
    %1119 = vmatpush.bf16.msra.mxu0 0
    %1120 = vmatpush.bf16.msra.mxu0 0
    %1121 = vmatpush.bf16.msra.mxu0 0
    %1122 = vmatpush.bf16.msra.mxu0 0
    %1123 = vmatpush.bf16.msra.mxu0 0
    %1124 = vmatpush.bf16.msra.mxu0 0
    %1125 = vmatpush.bf16.msra.mxu0 %v53
    %1126 = vmatpush.bf16.msra.mxu0 %v52
    %1127 = vmatmul.bf16.gmra.mxu0 %v1117
    %v1128 = vpop.f32.mrf.mxu0
    %v1129 = vadd.f32 %v120, %v1128
    %v1130 = vpop.f32.mrf.mxu0
    %1131 = vdwg.mxu0
    %vm1132 = vcmp.gt.f32.partialorder %v1129, 0.0
    %v1133 = vmul.f32 %v1129, 1.442695
    %v1134 = vpow.pop %v1133
    %v1135 = vsub.f32 %v1134, 1.0
    %v1136 = vsel %vm1132, %v1129, %v1135
    %v1137 = vpack.c.bf16 %v1136, %v1136
    %v1139 = vsel %vm122, %v1137, 0
    %1141 = vmatpush.bf16.msra.mxu0 0
    %1142 = vmatpush.bf16.msra.mxu0 0
    %1143 = vmatpush.bf16.msra.mxu0 0
    %1144 = vmatpush.bf16.msra.mxu0 0
    %1145 = vmatpush.bf16.msra.mxu0 0
    %1146 = vmatpush.bf16.msra.mxu0 0
    %1147 = vmatpush.bf16.msra.mxu0 %v59
    %1148 = vmatpush.bf16.msra.mxu0 %v58
    %1149 = vmatmul.bf16.gmra.mxu0 %v1139
    %v1150 = vpop.f32.mrf.mxu0
    %v1151 = vadd.f32 %v146, %v1150
    %v1152 = vpop.f32.mrf.mxu0
    %1153 = vdwg.mxu0
    %v1154 = vadd.f32 %v956, %v1151
    %v1155 = vmul.f32 %v361, %v1154
    %v1156 = vadd.f32 %v895, %v1155
    %v1157 = vadd.f32 %v1022, %v1085
    %v1158 = vmul.f32 %v365, %v1157
    %v1159 = vadd.f32 %v1156, %v1158
    %v1160 = vadd.f32 %v897, %v83
    %v1161 = vadd.f32 %v1160, %v83
    %v1162 = vpack.c.bf16 %v1159, %v1159
    %v1164 = vsel %vm65, %v1162, 0
    %1166 = vmatpush.bf16.msra.mxu0 0
    %1167 = vmatpush.bf16.msra.mxu0 0
    %1168 = vmatpush.bf16.msra.mxu0 0
    %1169 = vmatpush.bf16.msra.mxu0 0
    %1170 = vmatpush.bf16.msra.mxu0 0
    %1171 = vmatpush.bf16.msra.mxu0 0
    %1172 = vmatpush.bf16.msra.mxu0 0
    %1173 = vmatpush.bf16.msra.mxu0 %v98
    %1174 = vmatmul.bf16.gmra.mxu0 %v1164
    %v1175 = vpop.f32.mrf.mxu0
    %v1176 = vadd.f32 %v1092, %v1175
    %v1177 = vpop.f32.mrf.mxu0
    %1178 = vdwg.mxu0
    %vm1179 = vcmp.gt.f32.partialorder %v1176, 0.0
    %v1180 = vmul.f32 %v1176, 1.442695
    %v1181 = vpow.pop %v1180
    %v1182 = vsub.f32 %v1181, 1.0
    %v1183 = vsel %vm1179, %v1176, %v1182
    %v1184 = vpack.c.bf16 %v1183, %v1183
    %v1186 = vsel %vm122, %v1184, 0
    %1188 = vmatpush.bf16.msra.mxu0 0
    %1189 = vmatpush.bf16.msra.mxu0 0
    %1190 = vmatpush.bf16.msra.mxu0 0
    %1191 = vmatpush.bf16.msra.mxu0 0
    %1192 = vmatpush.bf16.msra.mxu0 0
    %1193 = vmatpush.bf16.msra.mxu0 0
    %1194 = vmatpush.bf16.msra.mxu0 %v53
    %1195 = vmatpush.bf16.msra.mxu0 %v52
    %1196 = vmatmul.bf16.gmra.mxu0 %v1186
    %v1197 = vpop.f32.mrf.mxu0
    %v1198 = vadd.f32 %v120, %v1197
    %v1199 = vpop.f32.mrf.mxu0
    %1200 = vdwg.mxu0
    %vm1201 = vcmp.gt.f32.partialorder %v1198, 0.0
    %v1202 = vmul.f32 %v1198, 1.442695
    %v1203 = vpow.pop %v1202
    %v1204 = vsub.f32 %v1203, 1.0
    %v1205 = vsel %vm1201, %v1198, %v1204
    %v1206 = vpack.c.bf16 %v1205, %v1205
    %v1208 = vsel %vm122, %v1206, 0
    %1210 = vmatpush.bf16.msra.mxu0 0
    %1211 = vmatpush.bf16.msra.mxu0 0
    %1212 = vmatpush.bf16.msra.mxu0 0
    %1213 = vmatpush.bf16.msra.mxu0 0
    %1214 = vmatpush.bf16.msra.mxu0 0
    %1215 = vmatpush.bf16.msra.mxu0 0
    %1216 = vmatpush.bf16.msra.mxu0 %v59
    %1217 = vmatpush.bf16.msra.mxu0 %v58
    %1218 = vmatmul.bf16.gmra.mxu0 %v1208
    %v1219 = vpop.f32.mrf.mxu0
    %v1220 = vadd.f32 %v146, %v1219
    %v1221 = vpop.f32.mrf.mxu0
    %1222 = vdwg.mxu0
    %v1223 = vmul.f32 %v82, %v1220
    %v1224 = vadd.f32 %v1159, %v1223
    %v1225 = vpack.c.bf16 %v1224, %v1224
    %v1227 = vperm.slane %v1160, 0
    %v1230 = vsel %vm65, %v1225, 0
    %1232 = vmatpush.bf16.msra.mxu0 0
    %1233 = vmatpush.bf16.msra.mxu0 0
    %1234 = vmatpush.bf16.msra.mxu0 0
    %1235 = vmatpush.bf16.msra.mxu0 0
    %1236 = vmatpush.bf16.msra.mxu0 0
    %1237 = vmatpush.bf16.msra.mxu0 0
    %1238 = vmatpush.bf16.msra.mxu0 0
    %1239 = vmatpush.bf16.msra.mxu0 %v98
    %1240 = vmatmul.bf16.gmra.mxu0 %v1230
    %v1241 = vpop.f32.mrf.mxu0
    %v1242 = vadd.f32 %v1227, %v1241
    %v1243 = vpop.f32.mrf.mxu0
    %1244 = vdwg.mxu0
    %vm1245 = vcmp.gt.f32.partialorder %v1242, 0.0
    %v1246 = vmul.f32 %v1242, 1.442695
    %v1247 = vpow.pop %v1246
    %v1248 = vsub.f32 %v1247, 1.0
    %v1249 = vsel %vm1245, %v1242, %v1248
    %v1250 = vpack.c.bf16 %v1249, %v1249
    %v1252 = vsel %vm122, %v1250, 0
    %1254 = vmatpush.bf16.msra.mxu0 0
    %1255 = vmatpush.bf16.msra.mxu0 0
    %1256 = vmatpush.bf16.msra.mxu0 0
    %1257 = vmatpush.bf16.msra.mxu0 0
    %1258 = vmatpush.bf16.msra.mxu0 0
    %1259 = vmatpush.bf16.msra.mxu0 0
    %1260 = vmatpush.bf16.msra.mxu0 %v53
    %1261 = vmatpush.bf16.msra.mxu0 %v52
    %1262 = vmatmul.bf16.gmra.mxu0 %v1252
    %v1263 = vpop.f32.mrf.mxu0
    %v1264 = vadd.f32 %v120, %v1263
    %v1265 = vpop.f32.mrf.mxu0
    %1266 = vdwg.mxu0
    %vm1267 = vcmp.gt.f32.partialorder %v1264, 0.0
    %v1268 = vmul.f32 %v1264, 1.442695
    %v1269 = vpow.pop %v1268
    %v1270 = vsub.f32 %v1269, 1.0
    %v1271 = vsel %vm1267, %v1264, %v1270
    %v1272 = vpack.c.bf16 %v1271, %v1271
    %v1274 = vsel %vm122, %v1272, 0
    %1276 = vmatpush.bf16.msra.mxu0 0
    %1277 = vmatpush.bf16.msra.mxu0 0
    %1278 = vmatpush.bf16.msra.mxu0 0
    %1279 = vmatpush.bf16.msra.mxu0 0
    %1280 = vmatpush.bf16.msra.mxu0 0
    %1281 = vmatpush.bf16.msra.mxu0 0
    %1282 = vmatpush.bf16.msra.mxu0 %v59
    %1283 = vmatpush.bf16.msra.mxu0 %v58
    %1284 = vmatmul.bf16.gmra.mxu0 %v1274
    %v1285 = vpop.f32.mrf.mxu0
    %v1286 = vadd.f32 %v146, %v1285
    %v1287 = vpop.f32.mrf.mxu0
    %1288 = vdwg.mxu0
    %v1289 = vmul.f32 %v82, %v1286
    %v1290 = vadd.f32 %v1159, %v1289
    %v1291 = vpack.c.bf16 %v1290, %v1290
    %v1293 = vsel %vm65, %v1291, 0
    %1295 = vmatpush.bf16.msra.mxu0 0
    %1296 = vmatpush.bf16.msra.mxu0 0
    %1297 = vmatpush.bf16.msra.mxu0 0
    %1298 = vmatpush.bf16.msra.mxu0 0
    %1299 = vmatpush.bf16.msra.mxu0 0
    %1300 = vmatpush.bf16.msra.mxu0 0
    %1301 = vmatpush.bf16.msra.mxu0 0
    %1302 = vmatpush.bf16.msra.mxu0 %v98
    %1303 = vmatmul.bf16.gmra.mxu0 %v1293
    %v1304 = vpop.f32.mrf.mxu0
    %v1305 = vadd.f32 %v1227, %v1304
    %v1306 = vpop.f32.mrf.mxu0
    %1307 = vdwg.mxu0
    %vm1308 = vcmp.gt.f32.partialorder %v1305, 0.0
    %v1309 = vmul.f32 %v1305, 1.442695
    %v1310 = vpow.pop %v1309
    %v1311 = vsub.f32 %v1310, 1.0
    %v1312 = vsel %vm1308, %v1305, %v1311
    %v1313 = vpack.c.bf16 %v1312, %v1312
    %v1315 = vsel %vm122, %v1313, 0
    %1317 = vmatpush.bf16.msra.mxu0 0
    %1318 = vmatpush.bf16.msra.mxu0 0
    %1319 = vmatpush.bf16.msra.mxu0 0
    %1320 = vmatpush.bf16.msra.mxu0 0
    %1321 = vmatpush.bf16.msra.mxu0 0
    %1322 = vmatpush.bf16.msra.mxu0 0
    %1323 = vmatpush.bf16.msra.mxu0 %v53
    %1324 = vmatpush.bf16.msra.mxu0 %v52
    %1325 = vmatmul.bf16.gmra.mxu0 %v1315
    %v1326 = vpop.f32.mrf.mxu0
    %v1327 = vadd.f32 %v120, %v1326
    %v1328 = vpop.f32.mrf.mxu0
    %1329 = vdwg.mxu0
    %vm1330 = vcmp.gt.f32.partialorder %v1327, 0.0
    %v1331 = vmul.f32 %v1327, 1.442695
    %v1332 = vpow.pop %v1331
    %v1333 = vsub.f32 %v1332, 1.0
    %v1334 = vsel %vm1330, %v1327, %v1333
    %v1335 = vpack.c.bf16 %v1334, %v1334
    %v1337 = vsel %vm122, %v1335, 0
    %1339 = vmatpush.bf16.msra.mxu0 0
    %1340 = vmatpush.bf16.msra.mxu0 0
    %1341 = vmatpush.bf16.msra.mxu0 0
    %1342 = vmatpush.bf16.msra.mxu0 0
    %1343 = vmatpush.bf16.msra.mxu0 0
    %1344 = vmatpush.bf16.msra.mxu0 0
    %1345 = vmatpush.bf16.msra.mxu0 %v59
    %1346 = vmatpush.bf16.msra.mxu0 %v58
    %1347 = vmatmul.bf16.gmra.mxu0 %v1337
    %v1348 = vpop.f32.mrf.mxu0
    %v1349 = vadd.f32 %v146, %v1348
    %v1350 = vpop.f32.mrf.mxu0
    %1351 = vdwg.mxu0
    %v1352 = vmul.f32 %v293, %v1349
    %v1353 = vadd.f32 %v1159, %v1352
    %v1354 = vpack.c.bf16 %v1353, %v1353
    %v1356 = vperm.slane %v1161, 0
    %v1359 = vsel %vm65, %v1354, 0
    %1361 = vmatpush.bf16.msra.mxu0 0
    %1362 = vmatpush.bf16.msra.mxu0 0
    %1363 = vmatpush.bf16.msra.mxu0 0
    %1364 = vmatpush.bf16.msra.mxu0 0
    %1365 = vmatpush.bf16.msra.mxu0 0
    %1366 = vmatpush.bf16.msra.mxu0 0
    %1367 = vmatpush.bf16.msra.mxu0 0
    %1368 = vmatpush.bf16.msra.mxu0 %v98
    %1369 = vmatmul.bf16.gmra.mxu0 %v1359
    %v1370 = vpop.f32.mrf.mxu0
    %v1371 = vadd.f32 %v1356, %v1370
    %v1372 = vpop.f32.mrf.mxu0
    %1373 = vdwg.mxu0
    %vm1374 = vcmp.gt.f32.partialorder %v1371, 0.0
    %v1375 = vmul.f32 %v1371, 1.442695
    %v1376 = vpow.pop %v1375
    %v1377 = vsub.f32 %v1376, 1.0
    %v1378 = vsel %vm1374, %v1371, %v1377
    %v1379 = vpack.c.bf16 %v1378, %v1378
    %v1381 = vsel %vm122, %v1379, 0
    %1383 = vmatpush.bf16.msra.mxu0 0
    %1384 = vmatpush.bf16.msra.mxu0 0
    %1385 = vmatpush.bf16.msra.mxu0 0
    %1386 = vmatpush.bf16.msra.mxu0 0
    %1387 = vmatpush.bf16.msra.mxu0 0
    %1388 = vmatpush.bf16.msra.mxu0 0
    %1389 = vmatpush.bf16.msra.mxu0 %v53
    %1390 = vmatpush.bf16.msra.mxu0 %v52
    %1391 = vmatmul.bf16.gmra.mxu0 %v1381
    %v1392 = vpop.f32.mrf.mxu0
    %v1393 = vadd.f32 %v120, %v1392
    %v1394 = vpop.f32.mrf.mxu0
    %1395 = vdwg.mxu0
    %vm1396 = vcmp.gt.f32.partialorder %v1393, 0.0
    %v1397 = vmul.f32 %v1393, 1.442695
    %v1398 = vpow.pop %v1397
    %v1399 = vsub.f32 %v1398, 1.0
    %v1400 = vsel %vm1396, %v1393, %v1399
    %v1401 = vpack.c.bf16 %v1400, %v1400
    %v1403 = vsel %vm122, %v1401, 0
    %1405 = vmatpush.bf16.msra.mxu0 0
    %1406 = vmatpush.bf16.msra.mxu0 0
    %1407 = vmatpush.bf16.msra.mxu0 0
    %1408 = vmatpush.bf16.msra.mxu0 0
    %1409 = vmatpush.bf16.msra.mxu0 0
    %1410 = vmatpush.bf16.msra.mxu0 0
    %1411 = vmatpush.bf16.msra.mxu0 %v59
    %1412 = vmatpush.bf16.msra.mxu0 %v58
    %1413 = vmatmul.bf16.gmra.mxu0 %v1403
    %v1414 = vpop.f32.mrf.mxu0
    %v1415 = vadd.f32 %v146, %v1414
    %v1416 = vpop.f32.mrf.mxu0
    %1417 = vdwg.mxu0
    %v1418 = vadd.f32 %v1220, %v1415
    %v1419 = vmul.f32 %v361, %v1418
    %v1420 = vadd.f32 %v1159, %v1419
    %v1421 = vadd.f32 %v1286, %v1349
    %v1422 = vmul.f32 %v365, %v1421
    %v1423 = vadd.f32 %v1420, %v1422
    %v1424 = vadd.f32 %v1161, %v83
    %v1425 = vadd.f32 %v1424, %v83
    %v1426 = vpack.c.bf16 %v1423, %v1423
    %v1428 = vsel %vm65, %v1426, 0
    %1430 = vmatpush.bf16.msra.mxu0 0
    %1431 = vmatpush.bf16.msra.mxu0 0
    %1432 = vmatpush.bf16.msra.mxu0 0
    %1433 = vmatpush.bf16.msra.mxu0 0
    %1434 = vmatpush.bf16.msra.mxu0 0
    %1435 = vmatpush.bf16.msra.mxu0 0
    %1436 = vmatpush.bf16.msra.mxu0 0
    %1437 = vmatpush.bf16.msra.mxu0 %v98
    %1438 = vmatmul.bf16.gmra.mxu0 %v1428
    %v1439 = vpop.f32.mrf.mxu0
    %v1440 = vadd.f32 %v1356, %v1439
    %v1441 = vpop.f32.mrf.mxu0
    %1442 = vdwg.mxu0
    %vm1443 = vcmp.gt.f32.partialorder %v1440, 0.0
    %v1444 = vmul.f32 %v1440, 1.442695
    %v1445 = vpow.pop %v1444
    %v1446 = vsub.f32 %v1445, 1.0
    %v1447 = vsel %vm1443, %v1440, %v1446
    %v1448 = vpack.c.bf16 %v1447, %v1447
    %v1450 = vsel %vm122, %v1448, 0
    %1452 = vmatpush.bf16.msra.mxu0 0
    %1453 = vmatpush.bf16.msra.mxu0 0
    %1454 = vmatpush.bf16.msra.mxu0 0
    %1455 = vmatpush.bf16.msra.mxu0 0
    %1456 = vmatpush.bf16.msra.mxu0 0
    %1457 = vmatpush.bf16.msra.mxu0 0
    %1458 = vmatpush.bf16.msra.mxu0 %v53
    %1459 = vmatpush.bf16.msra.mxu0 %v52
    %1460 = vmatmul.bf16.gmra.mxu0 %v1450
    %v1461 = vpop.f32.mrf.mxu0
    %v1462 = vadd.f32 %v120, %v1461
    %v1463 = vpop.f32.mrf.mxu0
    %1464 = vdwg.mxu0
    %vm1465 = vcmp.gt.f32.partialorder %v1462, 0.0
    %v1466 = vmul.f32 %v1462, 1.442695
    %v1467 = vpow.pop %v1466
    %v1468 = vsub.f32 %v1467, 1.0
    %v1469 = vsel %vm1465, %v1462, %v1468
    %v1470 = vpack.c.bf16 %v1469, %v1469
    %v1472 = vsel %vm122, %v1470, 0
    %1474 = vmatpush.bf16.msra.mxu0 0
    %1475 = vmatpush.bf16.msra.mxu0 0
    %1476 = vmatpush.bf16.msra.mxu0 0
    %1477 = vmatpush.bf16.msra.mxu0 0
    %1478 = vmatpush.bf16.msra.mxu0 0
    %1479 = vmatpush.bf16.msra.mxu0 0
    %1480 = vmatpush.bf16.msra.mxu0 %v59
    %1481 = vmatpush.bf16.msra.mxu0 %v58
    %1482 = vmatmul.bf16.gmra.mxu0 %v1472
    %v1483 = vpop.f32.mrf.mxu0
    %v1484 = vadd.f32 %v146, %v1483
    %v1485 = vpop.f32.mrf.mxu0
    %1486 = vdwg.mxu0
    %v1487 = vmul.f32 %v82, %v1484
    %v1488 = vadd.f32 %v1423, %v1487
    %v1489 = vpack.c.bf16 %v1488, %v1488
    %v1491 = vperm.slane %v1424, 0
    %v1494 = vsel %vm65, %v1489, 0
    %1496 = vmatpush.bf16.msra.mxu0 0
    %1497 = vmatpush.bf16.msra.mxu0 0
    %1498 = vmatpush.bf16.msra.mxu0 0
    %1499 = vmatpush.bf16.msra.mxu0 0
    %1500 = vmatpush.bf16.msra.mxu0 0
    %1501 = vmatpush.bf16.msra.mxu0 0
    %1502 = vmatpush.bf16.msra.mxu0 0
    %1503 = vmatpush.bf16.msra.mxu0 %v98
    %1504 = vmatmul.bf16.gmra.mxu0 %v1494
    %v1505 = vpop.f32.mrf.mxu0
    %v1506 = vadd.f32 %v1491, %v1505
    %v1507 = vpop.f32.mrf.mxu0
    %1508 = vdwg.mxu0
    %vm1509 = vcmp.gt.f32.partialorder %v1506, 0.0
    %v1510 = vmul.f32 %v1506, 1.442695
    %v1511 = vpow.pop %v1510
    %v1512 = vsub.f32 %v1511, 1.0
    %v1513 = vsel %vm1509, %v1506, %v1512
    %v1514 = vpack.c.bf16 %v1513, %v1513
    %v1516 = vsel %vm122, %v1514, 0
    %1518 = vmatpush.bf16.msra.mxu0 0
    %1519 = vmatpush.bf16.msra.mxu0 0
    %1520 = vmatpush.bf16.msra.mxu0 0
    %1521 = vmatpush.bf16.msra.mxu0 0
    %1522 = vmatpush.bf16.msra.mxu0 0
    %1523 = vmatpush.bf16.msra.mxu0 0
    %1524 = vmatpush.bf16.msra.mxu0 %v53
    %1525 = vmatpush.bf16.msra.mxu0 %v52
    %1526 = vmatmul.bf16.gmra.mxu0 %v1516
    %v1527 = vpop.f32.mrf.mxu0
    %v1528 = vadd.f32 %v120, %v1527
    %v1529 = vpop.f32.mrf.mxu0
    %1530 = vdwg.mxu0
    %vm1531 = vcmp.gt.f32.partialorder %v1528, 0.0
    %v1532 = vmul.f32 %v1528, 1.442695
    %v1533 = vpow.pop %v1532
    %v1534 = vsub.f32 %v1533, 1.0
    %v1535 = vsel %vm1531, %v1528, %v1534
    %v1536 = vpack.c.bf16 %v1535, %v1535
    %v1538 = vsel %vm122, %v1536, 0
    %1540 = vmatpush.bf16.msra.mxu0 0
    %1541 = vmatpush.bf16.msra.mxu0 0
    %1542 = vmatpush.bf16.msra.mxu0 0
    %1543 = vmatpush.bf16.msra.mxu0 0
    %1544 = vmatpush.bf16.msra.mxu0 0
    %1545 = vmatpush.bf16.msra.mxu0 0
    %1546 = vmatpush.bf16.msra.mxu0 %v59
    %1547 = vmatpush.bf16.msra.mxu0 %v58
    %1548 = vmatmul.bf16.gmra.mxu0 %v1538
    %v1549 = vpop.f32.mrf.mxu0
    %v1550 = vadd.f32 %v146, %v1549
    %v1551 = vpop.f32.mrf.mxu0
    %1552 = vdwg.mxu0
    %v1553 = vmul.f32 %v82, %v1550
    %v1554 = vadd.f32 %v1423, %v1553
    %v1555 = vpack.c.bf16 %v1554, %v1554
    %v1557 = vsel %vm65, %v1555, 0
    %1559 = vmatpush.bf16.msra.mxu0 0
    %1560 = vmatpush.bf16.msra.mxu0 0
    %1561 = vmatpush.bf16.msra.mxu0 0
    %1562 = vmatpush.bf16.msra.mxu0 0
    %1563 = vmatpush.bf16.msra.mxu0 0
    %1564 = vmatpush.bf16.msra.mxu0 0
    %1565 = vmatpush.bf16.msra.mxu0 0
    %1566 = vmatpush.bf16.msra.mxu0 %v98
    %1567 = vmatmul.bf16.gmra.mxu0 %v1557
    %v1568 = vpop.f32.mrf.mxu0
    %v1569 = vadd.f32 %v1491, %v1568
    %v1570 = vpop.f32.mrf.mxu0
    %1571 = vdwg.mxu0
    %vm1572 = vcmp.gt.f32.partialorder %v1569, 0.0
    %v1573 = vmul.f32 %v1569, 1.442695
    %v1574 = vpow.pop %v1573
    %v1575 = vsub.f32 %v1574, 1.0
    %v1576 = vsel %vm1572, %v1569, %v1575
    %v1577 = vpack.c.bf16 %v1576, %v1576
    %v1579 = vsel %vm122, %v1577, 0
    %1581 = vmatpush.bf16.msra.mxu0 0
    %1582 = vmatpush.bf16.msra.mxu0 0
    %1583 = vmatpush.bf16.msra.mxu0 0
    %1584 = vmatpush.bf16.msra.mxu0 0
    %1585 = vmatpush.bf16.msra.mxu0 0
    %1586 = vmatpush.bf16.msra.mxu0 0
    %1587 = vmatpush.bf16.msra.mxu0 %v53
    %1588 = vmatpush.bf16.msra.mxu0 %v52
    %1589 = vmatmul.bf16.gmra.mxu0 %v1579
    %v1590 = vpop.f32.mrf.mxu0
    %v1591 = vadd.f32 %v120, %v1590
    %v1592 = vpop.f32.mrf.mxu0
    %1593 = vdwg.mxu0
    %vm1594 = vcmp.gt.f32.partialorder %v1591, 0.0
    %v1595 = vmul.f32 %v1591, 1.442695
    %v1596 = vpow.pop %v1595
    %v1597 = vsub.f32 %v1596, 1.0
    %v1598 = vsel %vm1594, %v1591, %v1597
    %v1599 = vpack.c.bf16 %v1598, %v1598
    %v1601 = vsel %vm122, %v1599, 0
    %1603 = vmatpush.bf16.msra.mxu0 0
    %1604 = vmatpush.bf16.msra.mxu0 0
    %1605 = vmatpush.bf16.msra.mxu0 0
    %1606 = vmatpush.bf16.msra.mxu0 0
    %1607 = vmatpush.bf16.msra.mxu0 0
    %1608 = vmatpush.bf16.msra.mxu0 0
    %1609 = vmatpush.bf16.msra.mxu0 %v59
    %1610 = vmatpush.bf16.msra.mxu0 %v58
    %1611 = vmatmul.bf16.gmra.mxu0 %v1601
    %v1612 = vpop.f32.mrf.mxu0
    %v1613 = vadd.f32 %v146, %v1612
    %v1614 = vpop.f32.mrf.mxu0
    %1615 = vdwg.mxu0
    %v1616 = vmul.f32 %v293, %v1613
    %v1617 = vadd.f32 %v1423, %v1616
    %v1618 = vpack.c.bf16 %v1617, %v1617
    %v1620 = vperm.slane %v1425, 0
    %v1623 = vsel %vm65, %v1618, 0
    %1625 = vmatpush.bf16.msra.mxu0 0
    %1626 = vmatpush.bf16.msra.mxu0 0
    %1627 = vmatpush.bf16.msra.mxu0 0
    %1628 = vmatpush.bf16.msra.mxu0 0
    %1629 = vmatpush.bf16.msra.mxu0 0
    %1630 = vmatpush.bf16.msra.mxu0 0
    %1631 = vmatpush.bf16.msra.mxu0 0
    %1632 = vmatpush.bf16.msra.mxu0 %v98
    %1633 = vmatmul.bf16.gmra.mxu0 %v1623
    %v1634 = vpop.f32.mrf.mxu0
    %v1635 = vadd.f32 %v1620, %v1634
    %v1636 = vpop.f32.mrf.mxu0
    %1637 = vdwg.mxu0
    %vm1638 = vcmp.gt.f32.partialorder %v1635, 0.0
    %v1639 = vmul.f32 %v1635, 1.442695
    %v1640 = vpow.pop %v1639
    %v1641 = vsub.f32 %v1640, 1.0
    %v1642 = vsel %vm1638, %v1635, %v1641
    %v1643 = vpack.c.bf16 %v1642, %v1642
    %v1645 = vsel %vm122, %v1643, 0
    %1647 = vmatpush.bf16.msra.mxu0 0
    %1648 = vmatpush.bf16.msra.mxu0 0
    %1649 = vmatpush.bf16.msra.mxu0 0
    %1650 = vmatpush.bf16.msra.mxu0 0
    %1651 = vmatpush.bf16.msra.mxu0 0
    %1652 = vmatpush.bf16.msra.mxu0 0
    %1653 = vmatpush.bf16.msra.mxu0 %v53
    %1654 = vmatpush.bf16.msra.mxu0 %v52
    %1655 = vmatmul.bf16.gmra.mxu0 %v1645
    %v1656 = vpop.f32.mrf.mxu0
    %v1657 = vadd.f32 %v120, %v1656
    %v1658 = vpop.f32.mrf.mxu0
    %1659 = vdwg.mxu0
    %vm1660 = vcmp.gt.f32.partialorder %v1657, 0.0
    %v1661 = vmul.f32 %v1657, 1.442695
    %v1662 = vpow.pop %v1661
    %v1663 = vsub.f32 %v1662, 1.0
    %v1664 = vsel %vm1660, %v1657, %v1663
    %v1665 = vpack.c.bf16 %v1664, %v1664
    %v1667 = vsel %vm122, %v1665, 0
    %1669 = vmatpush.bf16.msra.mxu0 0
    %1670 = vmatpush.bf16.msra.mxu0 0
    %1671 = vmatpush.bf16.msra.mxu0 0
    %1672 = vmatpush.bf16.msra.mxu0 0
    %1673 = vmatpush.bf16.msra.mxu0 0
    %1674 = vmatpush.bf16.msra.mxu0 0
    %1675 = vmatpush.bf16.msra.mxu0 %v59
    %1676 = vmatpush.bf16.msra.mxu0 %v58
    %1677 = vmatmul.bf16.gmra.mxu0 %v1667
    %v1678 = vpop.f32.mrf.mxu0
    %v1679 = vadd.f32 %v146, %v1678
    %v1680 = vpop.f32.mrf.mxu0
    %1681 = vdwg.mxu0
    %v1682 = vadd.f32 %v1484, %v1679
    %v1683 = vmul.f32 %v361, %v1682
    %v1684 = vadd.f32 %v1423, %v1683
    %v1685 = vadd.f32 %v1550, %v1613
    %v1686 = vmul.f32 %v365, %v1685
    %v1687 = vadd.f32 %v1684, %v1686
    %v1688 = vadd.f32 %v1425, %v83
    %v1689 = vadd.f32 %v1688, %v83
    %v1690 = vpack.c.bf16 %v1687, %v1687
    %v1692 = vsel %vm65, %v1690, 0
    %1694 = vmatpush.bf16.msra.mxu0 0
    %1695 = vmatpush.bf16.msra.mxu0 0
    %1696 = vmatpush.bf16.msra.mxu0 0
    %1697 = vmatpush.bf16.msra.mxu0 0
    %1698 = vmatpush.bf16.msra.mxu0 0
    %1699 = vmatpush.bf16.msra.mxu0 0
    %1700 = vmatpush.bf16.msra.mxu0 0
    %1701 = vmatpush.bf16.msra.mxu0 %v98
    %1702 = vmatmul.bf16.gmra.mxu0 %v1692
    %v1703 = vpop.f32.mrf.mxu0
    %v1704 = vadd.f32 %v1620, %v1703
    %v1705 = vpop.f32.mrf.mxu0
    %1706 = vdwg.mxu0
    %vm1707 = vcmp.gt.f32.partialorder %v1704, 0.0
    %v1708 = vmul.f32 %v1704, 1.442695
    %v1709 = vpow.pop %v1708
    %v1710 = vsub.f32 %v1709, 1.0
    %v1711 = vsel %vm1707, %v1704, %v1710
    %v1712 = vpack.c.bf16 %v1711, %v1711
    %v1714 = vsel %vm122, %v1712, 0
    %1716 = vmatpush.bf16.msra.mxu0 0
    %1717 = vmatpush.bf16.msra.mxu0 0
    %1718 = vmatpush.bf16.msra.mxu0 0
    %1719 = vmatpush.bf16.msra.mxu0 0
    %1720 = vmatpush.bf16.msra.mxu0 0
    %1721 = vmatpush.bf16.msra.mxu0 0
    %1722 = vmatpush.bf16.msra.mxu0 %v53
    %1723 = vmatpush.bf16.msra.mxu0 %v52
    %1724 = vmatmul.bf16.gmra.mxu0 %v1714
    %v1725 = vpop.f32.mrf.mxu0
    %v1726 = vadd.f32 %v120, %v1725
    %v1727 = vpop.f32.mrf.mxu0
    %1728 = vdwg.mxu0
    %vm1729 = vcmp.gt.f32.partialorder %v1726, 0.0
    %v1730 = vmul.f32 %v1726, 1.442695
    %v1731 = vpow.pop %v1730
    %v1732 = vsub.f32 %v1731, 1.0
    %v1733 = vsel %vm1729, %v1726, %v1732
    %v1734 = vpack.c.bf16 %v1733, %v1733
    %v1736 = vsel %vm122, %v1734, 0
    %1738 = vmatpush.bf16.msra.mxu0 0
    %1739 = vmatpush.bf16.msra.mxu0 0
    %1740 = vmatpush.bf16.msra.mxu0 0
    %1741 = vmatpush.bf16.msra.mxu0 0
    %1742 = vmatpush.bf16.msra.mxu0 0
    %1743 = vmatpush.bf16.msra.mxu0 0
    %1744 = vmatpush.bf16.msra.mxu0 %v59
    %1745 = vmatpush.bf16.msra.mxu0 %v58
    %1746 = vmatmul.bf16.gmra.mxu0 %v1736
    %v1747 = vpop.f32.mrf.mxu0
    %v1748 = vadd.f32 %v146, %v1747
    %v1749 = vpop.f32.mrf.mxu0
    %1750 = vdwg.mxu0
    %v1751 = vmul.f32 %v82, %v1748
    %v1752 = vadd.f32 %v1687, %v1751
    %v1753 = vpack.c.bf16 %v1752, %v1752
    %v1755 = vperm.slane %v1688, 0
    %v1758 = vsel %vm65, %v1753, 0
    %1760 = vmatpush.bf16.msra.mxu0 0
    %1761 = vmatpush.bf16.msra.mxu0 0
    %1762 = vmatpush.bf16.msra.mxu0 0
    %1763 = vmatpush.bf16.msra.mxu0 0
    %1764 = vmatpush.bf16.msra.mxu0 0
    %1765 = vmatpush.bf16.msra.mxu0 0
    %1766 = vmatpush.bf16.msra.mxu0 0
    %1767 = vmatpush.bf16.msra.mxu0 %v98
    %1768 = vmatmul.bf16.gmra.mxu0 %v1758
    %v1769 = vpop.f32.mrf.mxu0
    %v1770 = vadd.f32 %v1755, %v1769
    %v1771 = vpop.f32.mrf.mxu0
    %1772 = vdwg.mxu0
    %vm1773 = vcmp.gt.f32.partialorder %v1770, 0.0
    %v1774 = vmul.f32 %v1770, 1.442695
    %v1775 = vpow.pop %v1774
    %v1776 = vsub.f32 %v1775, 1.0
    %v1777 = vsel %vm1773, %v1770, %v1776
    %v1778 = vpack.c.bf16 %v1777, %v1777
    %v1780 = vsel %vm122, %v1778, 0
    %1782 = vmatpush.bf16.msra.mxu0 0
    %1783 = vmatpush.bf16.msra.mxu0 0
    %1784 = vmatpush.bf16.msra.mxu0 0
    %1785 = vmatpush.bf16.msra.mxu0 0
    %1786 = vmatpush.bf16.msra.mxu0 0
    %1787 = vmatpush.bf16.msra.mxu0 0
    %1788 = vmatpush.bf16.msra.mxu0 %v53
    %1789 = vmatpush.bf16.msra.mxu0 %v52
    %1790 = vmatmul.bf16.gmra.mxu0 %v1780
    %v1791 = vpop.f32.mrf.mxu0
    %v1792 = vadd.f32 %v120, %v1791
    %v1793 = vpop.f32.mrf.mxu0
    %1794 = vdwg.mxu0
    %vm1795 = vcmp.gt.f32.partialorder %v1792, 0.0
    %v1796 = vmul.f32 %v1792, 1.442695
    %v1797 = vpow.pop %v1796
    %v1798 = vsub.f32 %v1797, 1.0
    %v1799 = vsel %vm1795, %v1792, %v1798
    %v1800 = vpack.c.bf16 %v1799, %v1799
    %v1802 = vsel %vm122, %v1800, 0
    %1804 = vmatpush.bf16.msra.mxu0 0
    %1805 = vmatpush.bf16.msra.mxu0 0
    %1806 = vmatpush.bf16.msra.mxu0 0
    %1807 = vmatpush.bf16.msra.mxu0 0
    %1808 = vmatpush.bf16.msra.mxu0 0
    %1809 = vmatpush.bf16.msra.mxu0 0
    %1810 = vmatpush.bf16.msra.mxu0 %v59
    %1811 = vmatpush.bf16.msra.mxu0 %v58
    %1812 = vmatmul.bf16.gmra.mxu0 %v1802
    %v1813 = vpop.f32.mrf.mxu0
    %v1814 = vadd.f32 %v146, %v1813
    %v1815 = vpop.f32.mrf.mxu0
    %1816 = vdwg.mxu0
    %v1817 = vmul.f32 %v82, %v1814
    %v1818 = vadd.f32 %v1687, %v1817
    %v1819 = vpack.c.bf16 %v1818, %v1818
    %v1821 = vsel %vm65, %v1819, 0
    %1823 = vmatpush.bf16.msra.mxu0 0
    %1824 = vmatpush.bf16.msra.mxu0 0
    %1825 = vmatpush.bf16.msra.mxu0 0
    %1826 = vmatpush.bf16.msra.mxu0 0
    %1827 = vmatpush.bf16.msra.mxu0 0
    %1828 = vmatpush.bf16.msra.mxu0 0
    %1829 = vmatpush.bf16.msra.mxu0 0
    %1830 = vmatpush.bf16.msra.mxu0 %v98
    %1831 = vmatmul.bf16.gmra.mxu0 %v1821
    %v1832 = vpop.f32.mrf.mxu0
    %v1833 = vadd.f32 %v1755, %v1832
    %v1834 = vpop.f32.mrf.mxu0
    %1835 = vdwg.mxu0
    %vm1836 = vcmp.gt.f32.partialorder %v1833, 0.0
    %v1837 = vmul.f32 %v1833, 1.442695
    %v1838 = vpow.pop %v1837
    %v1839 = vsub.f32 %v1838, 1.0
    %v1840 = vsel %vm1836, %v1833, %v1839
    %v1841 = vpack.c.bf16 %v1840, %v1840
    %v1843 = vsel %vm122, %v1841, 0
    %1845 = vmatpush.bf16.msra.mxu0 0
    %1846 = vmatpush.bf16.msra.mxu0 0
    %1847 = vmatpush.bf16.msra.mxu0 0
    %1848 = vmatpush.bf16.msra.mxu0 0
    %1849 = vmatpush.bf16.msra.mxu0 0
    %1850 = vmatpush.bf16.msra.mxu0 0
    %1851 = vmatpush.bf16.msra.mxu0 %v53
    %1852 = vmatpush.bf16.msra.mxu0 %v52
    %1853 = vmatmul.bf16.gmra.mxu0 %v1843
    %v1854 = vpop.f32.mrf.mxu0
    %v1855 = vadd.f32 %v120, %v1854
    %v1856 = vpop.f32.mrf.mxu0
    %1857 = vdwg.mxu0
    %vm1858 = vcmp.gt.f32.partialorder %v1855, 0.0
    %v1859 = vmul.f32 %v1855, 1.442695
    %v1860 = vpow.pop %v1859
    %v1861 = vsub.f32 %v1860, 1.0
    %v1862 = vsel %vm1858, %v1855, %v1861
    %v1863 = vpack.c.bf16 %v1862, %v1862
    %v1865 = vsel %vm122, %v1863, 0
    %1867 = vmatpush.bf16.msra.mxu0 0
    %1868 = vmatpush.bf16.msra.mxu0 0
    %1869 = vmatpush.bf16.msra.mxu0 0
    %1870 = vmatpush.bf16.msra.mxu0 0
    %1871 = vmatpush.bf16.msra.mxu0 0
    %1872 = vmatpush.bf16.msra.mxu0 0
    %1873 = vmatpush.bf16.msra.mxu0 %v59
    %1874 = vmatpush.bf16.msra.mxu0 %v58
    %1875 = vmatmul.bf16.gmra.mxu0 %v1865
    %v1876 = vpop.f32.mrf.mxu0
    %v1877 = vadd.f32 %v146, %v1876
    %v1878 = vpop.f32.mrf.mxu0
    %1879 = vdwg.mxu0
    %v1880 = vmul.f32 %v293, %v1877
    %v1881 = vadd.f32 %v1687, %v1880
    %v1882 = vpack.c.bf16 %v1881, %v1881
    %v1884 = vperm.slane %v1689, 0
    %v1887 = vsel %vm65, %v1882, 0
    %1889 = vmatpush.bf16.msra.mxu0 0
    %1890 = vmatpush.bf16.msra.mxu0 0
    %1891 = vmatpush.bf16.msra.mxu0 0
    %1892 = vmatpush.bf16.msra.mxu0 0
    %1893 = vmatpush.bf16.msra.mxu0 0
    %1894 = vmatpush.bf16.msra.mxu0 0
    %1895 = vmatpush.bf16.msra.mxu0 0
    %1896 = vmatpush.bf16.msra.mxu0 %v98
    %1897 = vmatmul.bf16.gmra.mxu0 %v1887
    %v1898 = vpop.f32.mrf.mxu0
    %v1899 = vadd.f32 %v1884, %v1898
    %v1900 = vpop.f32.mrf.mxu0
    %1901 = vdwg.mxu0
    %vm1902 = vcmp.gt.f32.partialorder %v1899, 0.0
    %v1903 = vmul.f32 %v1899, 1.442695
    %v1904 = vpow.pop %v1903
    %v1905 = vsub.f32 %v1904, 1.0
    %v1906 = vsel %vm1902, %v1899, %v1905
    %v1907 = vpack.c.bf16 %v1906, %v1906
    %v1909 = vsel %vm122, %v1907, 0
    %1911 = vmatpush.bf16.msra.mxu0 0
    %1912 = vmatpush.bf16.msra.mxu0 0
    %1913 = vmatpush.bf16.msra.mxu0 0
    %1914 = vmatpush.bf16.msra.mxu0 0
    %1915 = vmatpush.bf16.msra.mxu0 0
    %1916 = vmatpush.bf16.msra.mxu0 0
    %1917 = vmatpush.bf16.msra.mxu0 %v53
    %1918 = vmatpush.bf16.msra.mxu0 %v52
    %1919 = vmatmul.bf16.gmra.mxu0 %v1909
    %v1920 = vpop.f32.mrf.mxu0
    %v1921 = vadd.f32 %v120, %v1920
    %v1922 = vpop.f32.mrf.mxu0
    %1923 = vdwg.mxu0
    %vm1924 = vcmp.gt.f32.partialorder %v1921, 0.0
    %v1925 = vmul.f32 %v1921, 1.442695
    %v1926 = vpow.pop %v1925
    %v1927 = vsub.f32 %v1926, 1.0
    %v1928 = vsel %vm1924, %v1921, %v1927
    %v1929 = vpack.c.bf16 %v1928, %v1928
    %v1931 = vsel %vm122, %v1929, 0
    %1933 = vmatpush.bf16.msra.mxu0 0
    %1934 = vmatpush.bf16.msra.mxu0 0
    %1935 = vmatpush.bf16.msra.mxu0 0
    %1936 = vmatpush.bf16.msra.mxu0 0
    %1937 = vmatpush.bf16.msra.mxu0 0
    %1938 = vmatpush.bf16.msra.mxu0 0
    %1939 = vmatpush.bf16.msra.mxu0 %v59
    %1940 = vmatpush.bf16.msra.mxu0 %v58
    %1941 = vmatmul.bf16.gmra.mxu0 %v1931
    %v1942 = vpop.f32.mrf.mxu0
    %v1943 = vadd.f32 %v146, %v1942
    %v1944 = vpop.f32.mrf.mxu0
    %1945 = vdwg.mxu0
    %v1946 = vadd.f32 %v1748, %v1943
    %v1947 = vmul.f32 %v361, %v1946
    %v1948 = vadd.f32 %v1687, %v1947
    %v1949 = vadd.f32 %v1814, %v1877
    %v1950 = vmul.f32 %v365, %v1949
    %v1951 = vadd.f32 %v1948, %v1950
    %v1952 = vadd.f32 %v1689, %v83
    %v1953 = vadd.f32 %v1952, %v83
    %v1954 = vpack.c.bf16 %v1951, %v1951
    %v1956 = vsel %vm65, %v1954, 0
    %1958 = vmatpush.bf16.msra.mxu0 0
    %1959 = vmatpush.bf16.msra.mxu0 0
    %1960 = vmatpush.bf16.msra.mxu0 0
    %1961 = vmatpush.bf16.msra.mxu0 0
    %1962 = vmatpush.bf16.msra.mxu0 0
    %1963 = vmatpush.bf16.msra.mxu0 0
    %1964 = vmatpush.bf16.msra.mxu0 0
    %1965 = vmatpush.bf16.msra.mxu0 %v98
    %1966 = vmatmul.bf16.gmra.mxu0 %v1956
    %v1967 = vpop.f32.mrf.mxu0
    %v1968 = vadd.f32 %v1884, %v1967
    %v1969 = vpop.f32.mrf.mxu0
    %1970 = vdwg.mxu0
    %vm1971 = vcmp.gt.f32.partialorder %v1968, 0.0
    %v1972 = vmul.f32 %v1968, 1.442695
    %v1973 = vpow.pop %v1972
    %v1974 = vsub.f32 %v1973, 1.0
    %v1975 = vsel %vm1971, %v1968, %v1974
    %v1976 = vpack.c.bf16 %v1975, %v1975
    %v1978 = vsel %vm122, %v1976, 0
    %1980 = vmatpush.bf16.msra.mxu0 0
    %1981 = vmatpush.bf16.msra.mxu0 0
    %1982 = vmatpush.bf16.msra.mxu0 0
    %1983 = vmatpush.bf16.msra.mxu0 0
    %1984 = vmatpush.bf16.msra.mxu0 0
    %1985 = vmatpush.bf16.msra.mxu0 0
    %1986 = vmatpush.bf16.msra.mxu0 %v53
    %1987 = vmatpush.bf16.msra.mxu0 %v52
    %1988 = vmatmul.bf16.gmra.mxu0 %v1978
    %v1989 = vpop.f32.mrf.mxu0
    %v1990 = vadd.f32 %v120, %v1989
    %v1991 = vpop.f32.mrf.mxu0
    %1992 = vdwg.mxu0
    %vm1993 = vcmp.gt.f32.partialorder %v1990, 0.0
    %v1994 = vmul.f32 %v1990, 1.442695
    %v1995 = vpow.pop %v1994
    %v1996 = vsub.f32 %v1995, 1.0
    %v1997 = vsel %vm1993, %v1990, %v1996
    %v1998 = vpack.c.bf16 %v1997, %v1997
    %v2000 = vsel %vm122, %v1998, 0
    %2002 = vmatpush.bf16.msra.mxu0 0
    %2003 = vmatpush.bf16.msra.mxu0 0
    %2004 = vmatpush.bf16.msra.mxu0 0
    %2005 = vmatpush.bf16.msra.mxu0 0
    %2006 = vmatpush.bf16.msra.mxu0 0
    %2007 = vmatpush.bf16.msra.mxu0 0
    %2008 = vmatpush.bf16.msra.mxu0 %v59
    %2009 = vmatpush.bf16.msra.mxu0 %v58
    %2010 = vmatmul.bf16.gmra.mxu0 %v2000
    %v2011 = vpop.f32.mrf.mxu0
    %v2012 = vadd.f32 %v146, %v2011
    %v2013 = vpop.f32.mrf.mxu0
    %2014 = vdwg.mxu0
    %v2015 = vmul.f32 %v82, %v2012
    %v2016 = vadd.f32 %v1951, %v2015
    %v2017 = vpack.c.bf16 %v2016, %v2016
    %v2019 = vperm.slane %v1952, 0
    %v2022 = vsel %vm65, %v2017, 0
    %2024 = vmatpush.bf16.msra.mxu0 0
    %2025 = vmatpush.bf16.msra.mxu0 0
    %2026 = vmatpush.bf16.msra.mxu0 0
    %2027 = vmatpush.bf16.msra.mxu0 0
    %2028 = vmatpush.bf16.msra.mxu0 0
    %2029 = vmatpush.bf16.msra.mxu0 0
    %2030 = vmatpush.bf16.msra.mxu0 0
    %2031 = vmatpush.bf16.msra.mxu0 %v98
    %2032 = vmatmul.bf16.gmra.mxu0 %v2022
    %v2033 = vpop.f32.mrf.mxu0
    %v2034 = vadd.f32 %v2019, %v2033
    %v2035 = vpop.f32.mrf.mxu0
    %2036 = vdwg.mxu0
    %vm2037 = vcmp.gt.f32.partialorder %v2034, 0.0
    %v2038 = vmul.f32 %v2034, 1.442695
    %v2039 = vpow.pop %v2038
    %v2040 = vsub.f32 %v2039, 1.0
    %v2041 = vsel %vm2037, %v2034, %v2040
    %v2042 = vpack.c.bf16 %v2041, %v2041
    %v2044 = vsel %vm122, %v2042, 0
    %2046 = vmatpush.bf16.msra.mxu0 0
    %2047 = vmatpush.bf16.msra.mxu0 0
    %2048 = vmatpush.bf16.msra.mxu0 0
    %2049 = vmatpush.bf16.msra.mxu0 0
    %2050 = vmatpush.bf16.msra.mxu0 0
    %2051 = vmatpush.bf16.msra.mxu0 0
    %2052 = vmatpush.bf16.msra.mxu0 %v53
    %2053 = vmatpush.bf16.msra.mxu0 %v52
    %2054 = vmatmul.bf16.gmra.mxu0 %v2044
    %v2055 = vpop.f32.mrf.mxu0
    %v2056 = vadd.f32 %v120, %v2055
    %v2057 = vpop.f32.mrf.mxu0
    %2058 = vdwg.mxu0
    %vm2059 = vcmp.gt.f32.partialorder %v2056, 0.0
    %v2060 = vmul.f32 %v2056, 1.442695
    %v2061 = vpow.pop %v2060
    %v2062 = vsub.f32 %v2061, 1.0
    %v2063 = vsel %vm2059, %v2056, %v2062
    %v2064 = vpack.c.bf16 %v2063, %v2063
    %v2066 = vsel %vm122, %v2064, 0
    %2068 = vmatpush.bf16.msra.mxu0 0
    %2069 = vmatpush.bf16.msra.mxu0 0
    %2070 = vmatpush.bf16.msra.mxu0 0
    %2071 = vmatpush.bf16.msra.mxu0 0
    %2072 = vmatpush.bf16.msra.mxu0 0
    %2073 = vmatpush.bf16.msra.mxu0 0
    %2074 = vmatpush.bf16.msra.mxu0 %v59
    %2075 = vmatpush.bf16.msra.mxu0 %v58
    %2076 = vmatmul.bf16.gmra.mxu0 %v2066
    %v2077 = vpop.f32.mrf.mxu0
    %v2078 = vadd.f32 %v146, %v2077
    %v2079 = vpop.f32.mrf.mxu0
    %2080 = vdwg.mxu0
    %v2081 = vmul.f32 %v82, %v2078
    %v2082 = vadd.f32 %v1951, %v2081
    %v2083 = vpack.c.bf16 %v2082, %v2082
    %v2085 = vsel %vm65, %v2083, 0
    %2087 = vmatpush.bf16.msra.mxu0 0
    %2088 = vmatpush.bf16.msra.mxu0 0
    %2089 = vmatpush.bf16.msra.mxu0 0
    %2090 = vmatpush.bf16.msra.mxu0 0
    %2091 = vmatpush.bf16.msra.mxu0 0
    %2092 = vmatpush.bf16.msra.mxu0 0
    %2093 = vmatpush.bf16.msra.mxu0 0
    %2094 = vmatpush.bf16.msra.mxu0 %v98
    %2095 = vmatmul.bf16.gmra.mxu0 %v2085
    %v2096 = vpop.f32.mrf.mxu0
    %v2097 = vadd.f32 %v2019, %v2096
    %v2098 = vpop.f32.mrf.mxu0
    %2099 = vdwg.mxu0
    %vm2100 = vcmp.gt.f32.partialorder %v2097, 0.0
    %v2101 = vmul.f32 %v2097, 1.442695
    %v2102 = vpow.pop %v2101
    %v2103 = vsub.f32 %v2102, 1.0
    %v2104 = vsel %vm2100, %v2097, %v2103
    %v2105 = vpack.c.bf16 %v2104, %v2104
    %v2107 = vsel %vm122, %v2105, 0
    %2109 = vmatpush.bf16.msra.mxu0 0
    %2110 = vmatpush.bf16.msra.mxu0 0
    %2111 = vmatpush.bf16.msra.mxu0 0
    %2112 = vmatpush.bf16.msra.mxu0 0
    %2113 = vmatpush.bf16.msra.mxu0 0
    %2114 = vmatpush.bf16.msra.mxu0 0
    %2115 = vmatpush.bf16.msra.mxu0 %v53
    %2116 = vmatpush.bf16.msra.mxu0 %v52
    %2117 = vmatmul.bf16.gmra.mxu0 %v2107
    %v2118 = vpop.f32.mrf.mxu0
    %v2119 = vadd.f32 %v120, %v2118
    %v2120 = vpop.f32.mrf.mxu0
    %2121 = vdwg.mxu0
    %vm2122 = vcmp.gt.f32.partialorder %v2119, 0.0
    %v2123 = vmul.f32 %v2119, 1.442695
    %v2124 = vpow.pop %v2123
    %v2125 = vsub.f32 %v2124, 1.0
    %v2126 = vsel %vm2122, %v2119, %v2125
    %v2127 = vpack.c.bf16 %v2126, %v2126
    %v2129 = vsel %vm122, %v2127, 0
    %2131 = vmatpush.bf16.msra.mxu0 0
    %2132 = vmatpush.bf16.msra.mxu0 0
    %2133 = vmatpush.bf16.msra.mxu0 0
    %2134 = vmatpush.bf16.msra.mxu0 0
    %2135 = vmatpush.bf16.msra.mxu0 0
    %2136 = vmatpush.bf16.msra.mxu0 0
    %2137 = vmatpush.bf16.msra.mxu0 %v59
    %2138 = vmatpush.bf16.msra.mxu0 %v58
    %2139 = vmatmul.bf16.gmra.mxu0 %v2129
    %v2140 = vpop.f32.mrf.mxu0
    %v2141 = vadd.f32 %v146, %v2140
    %v2142 = vpop.f32.mrf.mxu0
    %2143 = vdwg.mxu0
    %v2144 = vmul.f32 %v293, %v2141
    %v2145 = vadd.f32 %v1951, %v2144
    %v2146 = vpack.c.bf16 %v2145, %v2145
    %v2148 = vperm.slane %v1953, 0
    %v2151 = vsel %vm65, %v2146, 0
    %2153 = vmatpush.bf16.msra.mxu0 0
    %2154 = vmatpush.bf16.msra.mxu0 0
    %2155 = vmatpush.bf16.msra.mxu0 0
    %2156 = vmatpush.bf16.msra.mxu0 0
    %2157 = vmatpush.bf16.msra.mxu0 0
    %2158 = vmatpush.bf16.msra.mxu0 0
    %2159 = vmatpush.bf16.msra.mxu0 0
    %2160 = vmatpush.bf16.msra.mxu0 %v98
    %2161 = vmatmul.bf16.gmra.mxu0 %v2151
    %v2162 = vpop.f32.mrf.mxu0
    %v2163 = vadd.f32 %v2148, %v2162
    %v2164 = vpop.f32.mrf.mxu0
    %2165 = vdwg.mxu0
    %vm2166 = vcmp.gt.f32.partialorder %v2163, 0.0
    %v2167 = vmul.f32 %v2163, 1.442695
    %v2168 = vpow.pop %v2167
    %v2169 = vsub.f32 %v2168, 1.0
    %v2170 = vsel %vm2166, %v2163, %v2169
    %v2171 = vpack.c.bf16 %v2170, %v2170
    %v2173 = vsel %vm122, %v2171, 0
    %2175 = vmatpush.bf16.msra.mxu0 0
    %2176 = vmatpush.bf16.msra.mxu0 0
    %2177 = vmatpush.bf16.msra.mxu0 0
    %2178 = vmatpush.bf16.msra.mxu0 0
    %2179 = vmatpush.bf16.msra.mxu0 0
    %2180 = vmatpush.bf16.msra.mxu0 0
    %2181 = vmatpush.bf16.msra.mxu0 %v53
    %2182 = vmatpush.bf16.msra.mxu0 %v52
    %2183 = vmatmul.bf16.gmra.mxu0 %v2173
    %v2184 = vpop.f32.mrf.mxu0
    %v2185 = vadd.f32 %v120, %v2184
    %v2186 = vpop.f32.mrf.mxu0
    %2187 = vdwg.mxu0
    %vm2188 = vcmp.gt.f32.partialorder %v2185, 0.0
    %v2189 = vmul.f32 %v2185, 1.442695
    %v2190 = vpow.pop %v2189
    %v2191 = vsub.f32 %v2190, 1.0
    %v2192 = vsel %vm2188, %v2185, %v2191
    %v2193 = vpack.c.bf16 %v2192, %v2192
    %v2195 = vsel %vm122, %v2193, 0
    %2197 = vmatpush.bf16.msra.mxu0 0
    %2198 = vmatpush.bf16.msra.mxu0 0
    %2199 = vmatpush.bf16.msra.mxu0 0
    %2200 = vmatpush.bf16.msra.mxu0 0
    %2201 = vmatpush.bf16.msra.mxu0 0
    %2202 = vmatpush.bf16.msra.mxu0 0
    %2203 = vmatpush.bf16.msra.mxu0 %v59
    %2204 = vmatpush.bf16.msra.mxu0 %v58
    %2205 = vmatmul.bf16.gmra.mxu0 %v2195
    %v2206 = vpop.f32.mrf.mxu0
    %v2207 = vadd.f32 %v146, %v2206
    %v2208 = vpop.f32.mrf.mxu0
    %2209 = vdwg.mxu0
    %v2210 = vadd.f32 %v2012, %v2207
    %v2211 = vmul.f32 %v361, %v2210
    %v2212 = vadd.f32 %v1951, %v2211
    %v2213 = vadd.f32 %v2078, %v2141
    %v2214 = vmul.f32 %v365, %v2213
    %v2215 = vadd.f32 %v2212, %v2214
    %v2216 = vadd.f32 %v1953, %v83
    %v2217 = vadd.f32 %v2216, %v83
    %v2218 = vpack.c.bf16 %v2215, %v2215
    %v2220 = vsel %vm65, %v2218, 0
    %2222 = vmatpush.bf16.msra.mxu0 0
    %2223 = vmatpush.bf16.msra.mxu0 0
    %2224 = vmatpush.bf16.msra.mxu0 0
    %2225 = vmatpush.bf16.msra.mxu0 0
    %2226 = vmatpush.bf16.msra.mxu0 0
    %2227 = vmatpush.bf16.msra.mxu0 0
    %2228 = vmatpush.bf16.msra.mxu0 0
    %2229 = vmatpush.bf16.msra.mxu0 %v98
    %2230 = vmatmul.bf16.gmra.mxu0 %v2220
    %v2231 = vpop.f32.mrf.mxu0
    %v2232 = vadd.f32 %v2148, %v2231
    %v2233 = vpop.f32.mrf.mxu0
    %2234 = vdwg.mxu0
    %vm2235 = vcmp.gt.f32.partialorder %v2232, 0.0
    %v2236 = vmul.f32 %v2232, 1.442695
    %v2237 = vpow.pop %v2236
    %v2238 = vsub.f32 %v2237, 1.0
    %v2239 = vsel %vm2235, %v2232, %v2238
    %v2240 = vpack.c.bf16 %v2239, %v2239
    %v2242 = vsel %vm122, %v2240, 0
    %2244 = vmatpush.bf16.msra.mxu0 0
    %2245 = vmatpush.bf16.msra.mxu0 0
    %2246 = vmatpush.bf16.msra.mxu0 0
    %2247 = vmatpush.bf16.msra.mxu0 0
    %2248 = vmatpush.bf16.msra.mxu0 0
    %2249 = vmatpush.bf16.msra.mxu0 0
    %2250 = vmatpush.bf16.msra.mxu0 %v53
    %2251 = vmatpush.bf16.msra.mxu0 %v52
    %2252 = vmatmul.bf16.gmra.mxu0 %v2242
    %v2253 = vpop.f32.mrf.mxu0
    %v2254 = vadd.f32 %v120, %v2253
    %v2255 = vpop.f32.mrf.mxu0
    %2256 = vdwg.mxu0
    %vm2257 = vcmp.gt.f32.partialorder %v2254, 0.0
    %v2258 = vmul.f32 %v2254, 1.442695
    %v2259 = vpow.pop %v2258
    %v2260 = vsub.f32 %v2259, 1.0
    %v2261 = vsel %vm2257, %v2254, %v2260
    %v2262 = vpack.c.bf16 %v2261, %v2261
    %v2264 = vsel %vm122, %v2262, 0
    %2266 = vmatpush.bf16.msra.mxu0 0
    %2267 = vmatpush.bf16.msra.mxu0 0
    %2268 = vmatpush.bf16.msra.mxu0 0
    %2269 = vmatpush.bf16.msra.mxu0 0
    %2270 = vmatpush.bf16.msra.mxu0 0
    %2271 = vmatpush.bf16.msra.mxu0 0
    %2272 = vmatpush.bf16.msra.mxu0 %v59
    %2273 = vmatpush.bf16.msra.mxu0 %v58
    %2274 = vmatmul.bf16.gmra.mxu0 %v2264
    %v2275 = vpop.f32.mrf.mxu0
    %v2276 = vadd.f32 %v146, %v2275
    %v2277 = vpop.f32.mrf.mxu0
    %2278 = vdwg.mxu0
    %v2279 = vmul.f32 %v82, %v2276
    %v2280 = vadd.f32 %v2215, %v2279
    %v2281 = vpack.c.bf16 %v2280, %v2280
    %v2283 = vperm.slane %v2216, 0
    %v2286 = vsel %vm65, %v2281, 0
    %2288 = vmatpush.bf16.msra.mxu0 0
    %2289 = vmatpush.bf16.msra.mxu0 0
    %2290 = vmatpush.bf16.msra.mxu0 0
    %2291 = vmatpush.bf16.msra.mxu0 0
    %2292 = vmatpush.bf16.msra.mxu0 0
    %2293 = vmatpush.bf16.msra.mxu0 0
    %2294 = vmatpush.bf16.msra.mxu0 0
    %2295 = vmatpush.bf16.msra.mxu0 %v98
    %2296 = vmatmul.bf16.gmra.mxu0 %v2286
    %v2297 = vpop.f32.mrf.mxu0
    %v2298 = vadd.f32 %v2283, %v2297
    %v2299 = vpop.f32.mrf.mxu0
    %2300 = vdwg.mxu0
    %vm2301 = vcmp.gt.f32.partialorder %v2298, 0.0
    %v2302 = vmul.f32 %v2298, 1.442695
    %v2303 = vpow.pop %v2302
    %v2304 = vsub.f32 %v2303, 1.0
    %v2305 = vsel %vm2301, %v2298, %v2304
    %v2306 = vpack.c.bf16 %v2305, %v2305
    %v2308 = vsel %vm122, %v2306, 0
    %2310 = vmatpush.bf16.msra.mxu0 0
    %2311 = vmatpush.bf16.msra.mxu0 0
    %2312 = vmatpush.bf16.msra.mxu0 0
    %2313 = vmatpush.bf16.msra.mxu0 0
    %2314 = vmatpush.bf16.msra.mxu0 0
    %2315 = vmatpush.bf16.msra.mxu0 0
    %2316 = vmatpush.bf16.msra.mxu0 %v53
    %2317 = vmatpush.bf16.msra.mxu0 %v52
    %2318 = vmatmul.bf16.gmra.mxu0 %v2308
    %v2319 = vpop.f32.mrf.mxu0
    %v2320 = vadd.f32 %v120, %v2319
    %v2321 = vpop.f32.mrf.mxu0
    %2322 = vdwg.mxu0
    %vm2323 = vcmp.gt.f32.partialorder %v2320, 0.0
    %v2324 = vmul.f32 %v2320, 1.442695
    %v2325 = vpow.pop %v2324
    %v2326 = vsub.f32 %v2325, 1.0
    %v2327 = vsel %vm2323, %v2320, %v2326
    %v2328 = vpack.c.bf16 %v2327, %v2327
    %v2330 = vsel %vm122, %v2328, 0
    %2332 = vmatpush.bf16.msra.mxu0 0
    %2333 = vmatpush.bf16.msra.mxu0 0
    %2334 = vmatpush.bf16.msra.mxu0 0
    %2335 = vmatpush.bf16.msra.mxu0 0
    %2336 = vmatpush.bf16.msra.mxu0 0
    %2337 = vmatpush.bf16.msra.mxu0 0
    %2338 = vmatpush.bf16.msra.mxu0 %v59
    %2339 = vmatpush.bf16.msra.mxu0 %v58
    %2340 = vmatmul.bf16.gmra.mxu0 %v2330
    %v2341 = vpop.f32.mrf.mxu0
    %v2342 = vadd.f32 %v146, %v2341
    %v2343 = vpop.f32.mrf.mxu0
    %2344 = vdwg.mxu0
    %v2345 = vmul.f32 %v82, %v2342
    %v2346 = vadd.f32 %v2215, %v2345
    %v2347 = vpack.c.bf16 %v2346, %v2346
    %v2349 = vsel %vm65, %v2347, 0
    %2351 = vmatpush.bf16.msra.mxu0 0
    %2352 = vmatpush.bf16.msra.mxu0 0
    %2353 = vmatpush.bf16.msra.mxu0 0
    %2354 = vmatpush.bf16.msra.mxu0 0
    %2355 = vmatpush.bf16.msra.mxu0 0
    %2356 = vmatpush.bf16.msra.mxu0 0
    %2357 = vmatpush.bf16.msra.mxu0 0
    %2358 = vmatpush.bf16.msra.mxu0 %v98
    %2359 = vmatmul.bf16.gmra.mxu0 %v2349
    %v2360 = vpop.f32.mrf.mxu0
    %v2361 = vadd.f32 %v2283, %v2360
    %v2362 = vpop.f32.mrf.mxu0
    %2363 = vdwg.mxu0
    %vm2364 = vcmp.gt.f32.partialorder %v2361, 0.0
    %v2365 = vmul.f32 %v2361, 1.442695
    %v2366 = vpow.pop %v2365
    %v2367 = vsub.f32 %v2366, 1.0
    %v2368 = vsel %vm2364, %v2361, %v2367
    %v2369 = vpack.c.bf16 %v2368, %v2368
    %v2371 = vsel %vm122, %v2369, 0
    %2373 = vmatpush.bf16.msra.mxu0 0
    %2374 = vmatpush.bf16.msra.mxu0 0
    %2375 = vmatpush.bf16.msra.mxu0 0
    %2376 = vmatpush.bf16.msra.mxu0 0
    %2377 = vmatpush.bf16.msra.mxu0 0
    %2378 = vmatpush.bf16.msra.mxu0 0
    %2379 = vmatpush.bf16.msra.mxu0 %v53
    %2380 = vmatpush.bf16.msra.mxu0 %v52
    %2381 = vmatmul.bf16.gmra.mxu0 %v2371
    %v2382 = vpop.f32.mrf.mxu0
    %v2383 = vadd.f32 %v120, %v2382
    %v2384 = vpop.f32.mrf.mxu0
    %2385 = vdwg.mxu0
    %vm2386 = vcmp.gt.f32.partialorder %v2383, 0.0
    %v2387 = vmul.f32 %v2383, 1.442695
    %v2388 = vpow.pop %v2387
    %v2389 = vsub.f32 %v2388, 1.0
    %v2390 = vsel %vm2386, %v2383, %v2389
    %v2391 = vpack.c.bf16 %v2390, %v2390
    %v2393 = vsel %vm122, %v2391, 0
    %2395 = vmatpush.bf16.msra.mxu0 0
    %2396 = vmatpush.bf16.msra.mxu0 0
    %2397 = vmatpush.bf16.msra.mxu0 0
    %2398 = vmatpush.bf16.msra.mxu0 0
    %2399 = vmatpush.bf16.msra.mxu0 0
    %2400 = vmatpush.bf16.msra.mxu0 0
    %2401 = vmatpush.bf16.msra.mxu0 %v59
    %2402 = vmatpush.bf16.msra.mxu0 %v58
    %2403 = vmatmul.bf16.gmra.mxu0 %v2393
    %v2404 = vpop.f32.mrf.mxu0
    %v2405 = vadd.f32 %v146, %v2404
    %v2406 = vpop.f32.mrf.mxu0
    %2407 = vdwg.mxu0
    %v2408 = vmul.f32 %v293, %v2405
    %v2409 = vadd.f32 %v2215, %v2408
    %v2410 = vpack.c.bf16 %v2409, %v2409
    %v2412 = vperm.slane %v2217, 0
    %v2415 = vsel %vm65, %v2410, 0
    %2417 = vmatpush.bf16.msra.mxu0 0
    %2418 = vmatpush.bf16.msra.mxu0 0
    %2419 = vmatpush.bf16.msra.mxu0 0
    %2420 = vmatpush.bf16.msra.mxu0 0
    %2421 = vmatpush.bf16.msra.mxu0 0
    %2422 = vmatpush.bf16.msra.mxu0 0
    %2423 = vmatpush.bf16.msra.mxu0 0
    %2424 = vmatpush.bf16.msra.mxu0 %v98
    %2425 = vmatmul.bf16.gmra.mxu0 %v2415
    %v2426 = vpop.f32.mrf.mxu0
    %v2427 = vadd.f32 %v2412, %v2426
    %v2428 = vpop.f32.mrf.mxu0
    %2429 = vdwg.mxu0
    %vm2430 = vcmp.gt.f32.partialorder %v2427, 0.0
    %v2431 = vmul.f32 %v2427, 1.442695
    %v2432 = vpow.pop %v2431
    %v2433 = vsub.f32 %v2432, 1.0
    %v2434 = vsel %vm2430, %v2427, %v2433
    %v2435 = vpack.c.bf16 %v2434, %v2434
    %v2437 = vsel %vm122, %v2435, 0
    %2439 = vmatpush.bf16.msra.mxu0 0
    %2440 = vmatpush.bf16.msra.mxu0 0
    %2441 = vmatpush.bf16.msra.mxu0 0
    %2442 = vmatpush.bf16.msra.mxu0 0
    %2443 = vmatpush.bf16.msra.mxu0 0
    %2444 = vmatpush.bf16.msra.mxu0 0
    %2445 = vmatpush.bf16.msra.mxu0 %v53
    %2446 = vmatpush.bf16.msra.mxu0 %v52
    %2447 = vmatmul.bf16.gmra.mxu0 %v2437
    %v2448 = vpop.f32.mrf.mxu0
    %v2449 = vadd.f32 %v120, %v2448
    %v2450 = vpop.f32.mrf.mxu0
    %2451 = vdwg.mxu0
    %vm2452 = vcmp.gt.f32.partialorder %v2449, 0.0
    %v2453 = vmul.f32 %v2449, 1.442695
    %v2454 = vpow.pop %v2453
    %v2455 = vsub.f32 %v2454, 1.0
    %v2456 = vsel %vm2452, %v2449, %v2455
    %v2457 = vpack.c.bf16 %v2456, %v2456
    %v2459 = vsel %vm122, %v2457, 0
    %2461 = vmatpush.bf16.msra.mxu0 0
    %2462 = vmatpush.bf16.msra.mxu0 0
    %2463 = vmatpush.bf16.msra.mxu0 0
    %2464 = vmatpush.bf16.msra.mxu0 0
    %2465 = vmatpush.bf16.msra.mxu0 0
    %2466 = vmatpush.bf16.msra.mxu0 0
    %2467 = vmatpush.bf16.msra.mxu0 %v59
    %2468 = vmatpush.bf16.msra.mxu0 %v58
    %2469 = vmatmul.bf16.gmra.mxu0 %v2459
    %v2470 = vpop.f32.mrf.mxu0
    %v2471 = vadd.f32 %v146, %v2470
    %v2472 = vpop.f32.mrf.mxu0
    %2473 = vdwg.mxu0
    %v2474 = vadd.f32 %v2276, %v2471
    %v2475 = vmul.f32 %v361, %v2474
    %v2476 = vadd.f32 %v2215, %v2475
    %v2477 = vadd.f32 %v2342, %v2405
    %v2478 = vmul.f32 %v365, %v2477
    %v2479 = vadd.f32 %v2476, %v2478
    %v2480 = vadd.f32 %v2217, %v83
    %v2481 = vadd.f32 %v2480, %v83
    %v2482 = vpack.c.bf16 %v2479, %v2479
    %v2484 = vsel %vm65, %v2482, 0
    %2486 = vmatpush.bf16.msra.mxu0 0
    %2487 = vmatpush.bf16.msra.mxu0 0
    %2488 = vmatpush.bf16.msra.mxu0 0
    %2489 = vmatpush.bf16.msra.mxu0 0
    %2490 = vmatpush.bf16.msra.mxu0 0
    %2491 = vmatpush.bf16.msra.mxu0 0
    %2492 = vmatpush.bf16.msra.mxu0 0
    %2493 = vmatpush.bf16.msra.mxu0 %v98
    %2494 = vmatmul.bf16.gmra.mxu0 %v2484
    %v2495 = vpop.f32.mrf.mxu0
    %v2496 = vadd.f32 %v2412, %v2495
    %v2497 = vpop.f32.mrf.mxu0
    %2498 = vdwg.mxu0
    %vm2499 = vcmp.gt.f32.partialorder %v2496, 0.0
    %v2500 = vmul.f32 %v2496, 1.442695
    %v2501 = vpow.pop %v2500
    %v2502 = vsub.f32 %v2501, 1.0
    %v2503 = vsel %vm2499, %v2496, %v2502
    %v2504 = vpack.c.bf16 %v2503, %v2503
    %v2506 = vsel %vm122, %v2504, 0
    %2508 = vmatpush.bf16.msra.mxu0 0
    %2509 = vmatpush.bf16.msra.mxu0 0
    %2510 = vmatpush.bf16.msra.mxu0 0
    %2511 = vmatpush.bf16.msra.mxu0 0
    %2512 = vmatpush.bf16.msra.mxu0 0
    %2513 = vmatpush.bf16.msra.mxu0 0
    %2514 = vmatpush.bf16.msra.mxu0 %v53
    %2515 = vmatpush.bf16.msra.mxu0 %v52
    %2516 = vmatmul.bf16.gmra.mxu0 %v2506
    %v2517 = vpop.f32.mrf.mxu0
    %v2518 = vadd.f32 %v120, %v2517
    %v2519 = vpop.f32.mrf.mxu0
    %2520 = vdwg.mxu0
    %vm2521 = vcmp.gt.f32.partialorder %v2518, 0.0
    %v2522 = vmul.f32 %v2518, 1.442695
    %v2523 = vpow.pop %v2522
    %v2524 = vsub.f32 %v2523, 1.0
    %v2525 = vsel %vm2521, %v2518, %v2524
    %v2526 = vpack.c.bf16 %v2525, %v2525
    %v2528 = vsel %vm122, %v2526, 0
    %2530 = vmatpush.bf16.msra.mxu0 0
    %2531 = vmatpush.bf16.msra.mxu0 0
    %2532 = vmatpush.bf16.msra.mxu0 0
    %2533 = vmatpush.bf16.msra.mxu0 0
    %2534 = vmatpush.bf16.msra.mxu0 0
    %2535 = vmatpush.bf16.msra.mxu0 0
    %2536 = vmatpush.bf16.msra.mxu0 %v59
    %2537 = vmatpush.bf16.msra.mxu0 %v58
    %2538 = vmatmul.bf16.gmra.mxu0 %v2528
    %v2539 = vpop.f32.mrf.mxu0
    %v2540 = vadd.f32 %v146, %v2539
    %v2541 = vpop.f32.mrf.mxu0
    %2542 = vdwg.mxu0
    %v2543 = vmul.f32 %v82, %v2540
    %v2544 = vadd.f32 %v2479, %v2543
    %v2545 = vpack.c.bf16 %v2544, %v2544
    %v2547 = vperm.slane %v2480, 0
    %v2550 = vsel %vm65, %v2545, 0
    %2552 = vmatpush.bf16.msra.mxu0 0
    %2553 = vmatpush.bf16.msra.mxu0 0
    %2554 = vmatpush.bf16.msra.mxu0 0
    %2555 = vmatpush.bf16.msra.mxu0 0
    %2556 = vmatpush.bf16.msra.mxu0 0
    %2557 = vmatpush.bf16.msra.mxu0 0
    %2558 = vmatpush.bf16.msra.mxu0 0
    %2559 = vmatpush.bf16.msra.mxu0 %v98
    %2560 = vmatmul.bf16.gmra.mxu0 %v2550
    %v2561 = vpop.f32.mrf.mxu0
    %v2562 = vadd.f32 %v2547, %v2561
    %v2563 = vpop.f32.mrf.mxu0
    %2564 = vdwg.mxu0
    %vm2565 = vcmp.gt.f32.partialorder %v2562, 0.0
    %v2566 = vmul.f32 %v2562, 1.442695
    %v2567 = vpow.pop %v2566
    %v2568 = vsub.f32 %v2567, 1.0
    %v2569 = vsel %vm2565, %v2562, %v2568
    %v2570 = vpack.c.bf16 %v2569, %v2569
    %v2572 = vsel %vm122, %v2570, 0
    %2574 = vmatpush.bf16.msra.mxu0 0
    %2575 = vmatpush.bf16.msra.mxu0 0
    %2576 = vmatpush.bf16.msra.mxu0 0
    %2577 = vmatpush.bf16.msra.mxu0 0
    %2578 = vmatpush.bf16.msra.mxu0 0
    %2579 = vmatpush.bf16.msra.mxu0 0
    %2580 = vmatpush.bf16.msra.mxu0 %v53
    %2581 = vmatpush.bf16.msra.mxu0 %v52
    %2582 = vmatmul.bf16.gmra.mxu0 %v2572
    %v2583 = vpop.f32.mrf.mxu0
    %v2584 = vadd.f32 %v120, %v2583
    %v2585 = vpop.f32.mrf.mxu0
    %2586 = vdwg.mxu0
    %vm2587 = vcmp.gt.f32.partialorder %v2584, 0.0
    %v2588 = vmul.f32 %v2584, 1.442695
    %v2589 = vpow.pop %v2588
    %v2590 = vsub.f32 %v2589, 1.0
    %v2591 = vsel %vm2587, %v2584, %v2590
    %v2592 = vpack.c.bf16 %v2591, %v2591
    %v2594 = vsel %vm122, %v2592, 0
    %2596 = vmatpush.bf16.msra.mxu0 0
    %2597 = vmatpush.bf16.msra.mxu0 0
    %2598 = vmatpush.bf16.msra.mxu0 0
    %2599 = vmatpush.bf16.msra.mxu0 0
    %2600 = vmatpush.bf16.msra.mxu0 0
    %2601 = vmatpush.bf16.msra.mxu0 0
    %2602 = vmatpush.bf16.msra.mxu0 %v59
    %2603 = vmatpush.bf16.msra.mxu0 %v58
    %2604 = vmatmul.bf16.gmra.mxu0 %v2594
    %v2605 = vpop.f32.mrf.mxu0
    %v2606 = vadd.f32 %v146, %v2605
    %v2607 = vpop.f32.mrf.mxu0
    %2608 = vdwg.mxu0
    %v2609 = vmul.f32 %v82, %v2606
    %v2610 = vadd.f32 %v2479, %v2609
    %v2611 = vpack.c.bf16 %v2610, %v2610
    %v2613 = vsel %vm65, %v2611, 0
    %2615 = vmatpush.bf16.msra.mxu0 0
    %2616 = vmatpush.bf16.msra.mxu0 0
    %2617 = vmatpush.bf16.msra.mxu0 0
    %2618 = vmatpush.bf16.msra.mxu0 0
    %2619 = vmatpush.bf16.msra.mxu0 0
    %2620 = vmatpush.bf16.msra.mxu0 0
    %2621 = vmatpush.bf16.msra.mxu0 0
    %2622 = vmatpush.bf16.msra.mxu0 %v98
    %2623 = vmatmul.bf16.gmra.mxu0 %v2613
    %v2624 = vpop.f32.mrf.mxu0
    %v2625 = vadd.f32 %v2547, %v2624
    %v2626 = vpop.f32.mrf.mxu0
    %2627 = vdwg.mxu0
    %vm2628 = vcmp.gt.f32.partialorder %v2625, 0.0
    %v2629 = vmul.f32 %v2625, 1.442695
    %v2630 = vpow.pop %v2629
    %v2631 = vsub.f32 %v2630, 1.0
    %v2632 = vsel %vm2628, %v2625, %v2631
    %v2633 = vpack.c.bf16 %v2632, %v2632
    %v2635 = vsel %vm122, %v2633, 0
    %2637 = vmatpush.bf16.msra.mxu0 0
    %2638 = vmatpush.bf16.msra.mxu0 0
    %2639 = vmatpush.bf16.msra.mxu0 0
    %2640 = vmatpush.bf16.msra.mxu0 0
    %2641 = vmatpush.bf16.msra.mxu0 0
    %2642 = vmatpush.bf16.msra.mxu0 0
    %2643 = vmatpush.bf16.msra.mxu0 %v53
    %2644 = vmatpush.bf16.msra.mxu0 %v52
    %2645 = vmatmul.bf16.gmra.mxu0 %v2635
    %v2646 = vpop.f32.mrf.mxu0
    %v2647 = vadd.f32 %v120, %v2646
    %v2648 = vpop.f32.mrf.mxu0
    %2649 = vdwg.mxu0
    %vm2650 = vcmp.gt.f32.partialorder %v2647, 0.0
    %v2651 = vmul.f32 %v2647, 1.442695
    %v2652 = vpow.pop %v2651
    %v2653 = vsub.f32 %v2652, 1.0
    %v2654 = vsel %vm2650, %v2647, %v2653
    %v2655 = vpack.c.bf16 %v2654, %v2654
    %v2657 = vsel %vm122, %v2655, 0
    %2659 = vmatpush.bf16.msra.mxu0 0
    %2660 = vmatpush.bf16.msra.mxu0 0
    %2661 = vmatpush.bf16.msra.mxu0 0
    %2662 = vmatpush.bf16.msra.mxu0 0
    %2663 = vmatpush.bf16.msra.mxu0 0
    %2664 = vmatpush.bf16.msra.mxu0 0
    %2665 = vmatpush.bf16.msra.mxu0 %v59
    %2666 = vmatpush.bf16.msra.mxu0 %v58
    %2667 = vmatmul.bf16.gmra.mxu0 %v2657
    %v2668 = vpop.f32.mrf.mxu0
    %v2669 = vadd.f32 %v146, %v2668
    %v2670 = vpop.f32.mrf.mxu0
    %2671 = vdwg.mxu0
    %v2672 = vmul.f32 %v293, %v2669
    %v2673 = vadd.f32 %v2479, %v2672
    %v2674 = vpack.c.bf16 %v2673, %v2673
    %v2676 = vperm.slane %v2481, 0
    %v2679 = vsel %vm65, %v2674, 0
    %2681 = vmatpush.bf16.msra.mxu0 0
    %2682 = vmatpush.bf16.msra.mxu0 0
    %2683 = vmatpush.bf16.msra.mxu0 0
    %2684 = vmatpush.bf16.msra.mxu0 0
    %2685 = vmatpush.bf16.msra.mxu0 0
    %2686 = vmatpush.bf16.msra.mxu0 0
    %2687 = vmatpush.bf16.msra.mxu0 0
    %2688 = vmatpush.bf16.msra.mxu0 %v98
    %2689 = vmatmul.bf16.gmra.mxu0 %v2679
    %v2690 = vpop.f32.mrf.mxu0
    %v2691 = vadd.f32 %v2676, %v2690
    %v2692 = vpop.f32.mrf.mxu0
    %2693 = vdwg.mxu0
    %vm2694 = vcmp.gt.f32.partialorder %v2691, 0.0
    %v2695 = vmul.f32 %v2691, 1.442695
    %v2696 = vpow.pop %v2695
    %v2697 = vsub.f32 %v2696, 1.0
    %v2698 = vsel %vm2694, %v2691, %v2697
    %v2699 = vpack.c.bf16 %v2698, %v2698
    %v2701 = vsel %vm122, %v2699, 0
    %2703 = vmatpush.bf16.msra.mxu0 0
    %2704 = vmatpush.bf16.msra.mxu0 0
    %2705 = vmatpush.bf16.msra.mxu0 0
    %2706 = vmatpush.bf16.msra.mxu0 0
    %2707 = vmatpush.bf16.msra.mxu0 0
    %2708 = vmatpush.bf16.msra.mxu0 0
    %2709 = vmatpush.bf16.msra.mxu0 %v53
    %2710 = vmatpush.bf16.msra.mxu0 %v52
    %2711 = vmatmul.bf16.gmra.mxu0 %v2701
    %v2712 = vpop.f32.mrf.mxu0
    %v2713 = vadd.f32 %v120, %v2712
    %v2714 = vpop.f32.mrf.mxu0
    %2715 = vdwg.mxu0
    %vm2716 = vcmp.gt.f32.partialorder %v2713, 0.0
    %v2717 = vmul.f32 %v2713, 1.442695
    %v2718 = vpow.pop %v2717
    %v2719 = vsub.f32 %v2718, 1.0
    %v2720 = vsel %vm2716, %v2713, %v2719
    %v2721 = vpack.c.bf16 %v2720, %v2720
    %v2723 = vsel %vm122, %v2721, 0
    %2725 = vmatpush.bf16.msra.mxu0 0
    %2726 = vmatpush.bf16.msra.mxu0 0
    %2727 = vmatpush.bf16.msra.mxu0 0
    %2728 = vmatpush.bf16.msra.mxu0 0
    %2729 = vmatpush.bf16.msra.mxu0 0
    %2730 = vmatpush.bf16.msra.mxu0 0
    %2731 = vmatpush.bf16.msra.mxu0 %v59
    %2732 = vmatpush.bf16.msra.mxu0 %v58
    %2733 = vmatmul.bf16.gmra.mxu0 %v2723
    %v2734 = vpop.f32.mrf.mxu0
    %v2735 = vadd.f32 %v146, %v2734
    %v2736 = vpop.f32.mrf.mxu0
    %2737 = vdwg.mxu0
    %v2738 = vadd.f32 %v2540, %v2735
    %v2739 = vmul.f32 %v361, %v2738
    %v2740 = vadd.f32 %v2479, %v2739
    %v2741 = vadd.f32 %v2606, %v2669
    %v2742 = vmul.f32 %v365, %v2741
    %v2743 = vadd.f32 %v2740, %v2742
    %v2744 = vadd.f32 %v2481, %v83
    %v2745 = vadd.f32 %v2744, %v83
    %v2746 = vpack.c.bf16 %v2743, %v2743
    %v2748 = vsel %vm65, %v2746, 0
    %2750 = vmatpush.bf16.msra.mxu0 0
    %2751 = vmatpush.bf16.msra.mxu0 0
    %2752 = vmatpush.bf16.msra.mxu0 0
    %2753 = vmatpush.bf16.msra.mxu0 0
    %2754 = vmatpush.bf16.msra.mxu0 0
    %2755 = vmatpush.bf16.msra.mxu0 0
    %2756 = vmatpush.bf16.msra.mxu0 0
    %2757 = vmatpush.bf16.msra.mxu0 %v98
    %2758 = vmatmul.bf16.gmra.mxu0 %v2748
    %v2759 = vpop.f32.mrf.mxu0
    %v2760 = vadd.f32 %v2676, %v2759
    %v2761 = vpop.f32.mrf.mxu0
    %2762 = vdwg.mxu0
    %vm2763 = vcmp.gt.f32.partialorder %v2760, 0.0
    %v2764 = vmul.f32 %v2760, 1.442695
    %v2765 = vpow.pop %v2764
    %v2766 = vsub.f32 %v2765, 1.0
    %v2767 = vsel %vm2763, %v2760, %v2766
    %v2768 = vpack.c.bf16 %v2767, %v2767
    %v2770 = vsel %vm122, %v2768, 0
    %2772 = vmatpush.bf16.msra.mxu0 0
    %2773 = vmatpush.bf16.msra.mxu0 0
    %2774 = vmatpush.bf16.msra.mxu0 0
    %2775 = vmatpush.bf16.msra.mxu0 0
    %2776 = vmatpush.bf16.msra.mxu0 0
    %2777 = vmatpush.bf16.msra.mxu0 0
    %2778 = vmatpush.bf16.msra.mxu0 %v53
    %2779 = vmatpush.bf16.msra.mxu0 %v52
    %2780 = vmatmul.bf16.gmra.mxu0 %v2770
    %v2781 = vpop.f32.mrf.mxu0
    %v2782 = vadd.f32 %v120, %v2781
    %v2783 = vpop.f32.mrf.mxu0
    %2784 = vdwg.mxu0
    %vm2785 = vcmp.gt.f32.partialorder %v2782, 0.0
    %v2786 = vmul.f32 %v2782, 1.442695
    %v2787 = vpow.pop %v2786
    %v2788 = vsub.f32 %v2787, 1.0
    %v2789 = vsel %vm2785, %v2782, %v2788
    %v2790 = vpack.c.bf16 %v2789, %v2789
    %v2792 = vsel %vm122, %v2790, 0
    %2794 = vmatpush.bf16.msra.mxu0 0
    %2795 = vmatpush.bf16.msra.mxu0 0
    %2796 = vmatpush.bf16.msra.mxu0 0
    %2797 = vmatpush.bf16.msra.mxu0 0
    %2798 = vmatpush.bf16.msra.mxu0 0
    %2799 = vmatpush.bf16.msra.mxu0 0
    %2800 = vmatpush.bf16.msra.mxu0 %v59
    %2801 = vmatpush.bf16.msra.mxu0 %v58
    %2802 = vmatmul.bf16.gmra.mxu0 %v2792
    %v2803 = vpop.f32.mrf.mxu0
    %v2804 = vadd.f32 %v146, %v2803
    %v2805 = vpop.f32.mrf.mxu0
    %2806 = vdwg.mxu0
    %v2807 = vmul.f32 %v82, %v2804
    %v2808 = vadd.f32 %v2743, %v2807
    %v2809 = vpack.c.bf16 %v2808, %v2808
    %v2811 = vperm.slane %v2744, 0
    %v2814 = vsel %vm65, %v2809, 0
    %2816 = vmatpush.bf16.msra.mxu0 0
    %2817 = vmatpush.bf16.msra.mxu0 0
    %2818 = vmatpush.bf16.msra.mxu0 0
    %2819 = vmatpush.bf16.msra.mxu0 0
    %2820 = vmatpush.bf16.msra.mxu0 0
    %2821 = vmatpush.bf16.msra.mxu0 0
    %2822 = vmatpush.bf16.msra.mxu0 0
    %2823 = vmatpush.bf16.msra.mxu0 %v98
    %2824 = vmatmul.bf16.gmra.mxu0 %v2814
    %v2825 = vpop.f32.mrf.mxu0
    %v2826 = vadd.f32 %v2811, %v2825
    %v2827 = vpop.f32.mrf.mxu0
    %2828 = vdwg.mxu0
    %vm2829 = vcmp.gt.f32.partialorder %v2826, 0.0
    %v2830 = vmul.f32 %v2826, 1.442695
    %v2831 = vpow.pop %v2830
    %v2832 = vsub.f32 %v2831, 1.0
    %v2833 = vsel %vm2829, %v2826, %v2832
    %v2834 = vpack.c.bf16 %v2833, %v2833
    %v2836 = vsel %vm122, %v2834, 0
    %2838 = vmatpush.bf16.msra.mxu0 0
    %2839 = vmatpush.bf16.msra.mxu0 0
    %2840 = vmatpush.bf16.msra.mxu0 0
    %2841 = vmatpush.bf16.msra.mxu0 0
    %2842 = vmatpush.bf16.msra.mxu0 0
    %2843 = vmatpush.bf16.msra.mxu0 0
    %2844 = vmatpush.bf16.msra.mxu0 %v53
    %2845 = vmatpush.bf16.msra.mxu0 %v52
    %2846 = vmatmul.bf16.gmra.mxu0 %v2836
    %v2847 = vpop.f32.mrf.mxu0
    %v2848 = vadd.f32 %v120, %v2847
    %v2849 = vpop.f32.mrf.mxu0
    %2850 = vdwg.mxu0
    %vm2851 = vcmp.gt.f32.partialorder %v2848, 0.0
    %v2852 = vmul.f32 %v2848, 1.442695
    %v2853 = vpow.pop %v2852
    %v2854 = vsub.f32 %v2853, 1.0
    %v2855 = vsel %vm2851, %v2848, %v2854
    %v2856 = vpack.c.bf16 %v2855, %v2855
    %v2858 = vsel %vm122, %v2856, 0
    %2860 = vmatpush.bf16.msra.mxu0 0
    %2861 = vmatpush.bf16.msra.mxu0 0
    %2862 = vmatpush.bf16.msra.mxu0 0
    %2863 = vmatpush.bf16.msra.mxu0 0
    %2864 = vmatpush.bf16.msra.mxu0 0
    %2865 = vmatpush.bf16.msra.mxu0 0
    %2866 = vmatpush.bf16.msra.mxu0 %v59
    %2867 = vmatpush.bf16.msra.mxu0 %v58
    %2868 = vmatmul.bf16.gmra.mxu0 %v2858
    %v2869 = vpop.f32.mrf.mxu0
    %v2870 = vadd.f32 %v146, %v2869
    %v2871 = vpop.f32.mrf.mxu0
    %2872 = vdwg.mxu0
    %v2873 = vmul.f32 %v82, %v2870
    %v2874 = vadd.f32 %v2743, %v2873
    %v2875 = vpack.c.bf16 %v2874, %v2874
    %v2877 = vsel %vm65, %v2875, 0
    %2879 = vmatpush.bf16.msra.mxu0 0
    %2880 = vmatpush.bf16.msra.mxu0 0
    %2881 = vmatpush.bf16.msra.mxu0 0
    %2882 = vmatpush.bf16.msra.mxu0 0
    %2883 = vmatpush.bf16.msra.mxu0 0
    %2884 = vmatpush.bf16.msra.mxu0 0
    %2885 = vmatpush.bf16.msra.mxu0 0
    %2886 = vmatpush.bf16.msra.mxu0 %v98
    %2887 = vmatmul.bf16.gmra.mxu0 %v2877
    %v2888 = vpop.f32.mrf.mxu0
    %v2889 = vadd.f32 %v2811, %v2888
    %v2890 = vpop.f32.mrf.mxu0
    %2891 = vdwg.mxu0
    %vm2892 = vcmp.gt.f32.partialorder %v2889, 0.0
    %v2893 = vmul.f32 %v2889, 1.442695
    %v2894 = vpow.pop %v2893
    %v2895 = vsub.f32 %v2894, 1.0
    %v2896 = vsel %vm2892, %v2889, %v2895
    %v2897 = vpack.c.bf16 %v2896, %v2896
    %v2899 = vsel %vm122, %v2897, 0
    %2901 = vmatpush.bf16.msra.mxu0 0
    %2902 = vmatpush.bf16.msra.mxu0 0
    %2903 = vmatpush.bf16.msra.mxu0 0
    %2904 = vmatpush.bf16.msra.mxu0 0
    %2905 = vmatpush.bf16.msra.mxu0 0
    %2906 = vmatpush.bf16.msra.mxu0 0
    %2907 = vmatpush.bf16.msra.mxu0 %v53
    %2908 = vmatpush.bf16.msra.mxu0 %v52
    %2909 = vmatmul.bf16.gmra.mxu0 %v2899
    %v2910 = vpop.f32.mrf.mxu0
    %v2911 = vadd.f32 %v120, %v2910
    %v2912 = vpop.f32.mrf.mxu0
    %2913 = vdwg.mxu0
    %vm2914 = vcmp.gt.f32.partialorder %v2911, 0.0
    %v2915 = vmul.f32 %v2911, 1.442695
    %v2916 = vpow.pop %v2915
    %v2917 = vsub.f32 %v2916, 1.0
    %v2918 = vsel %vm2914, %v2911, %v2917
    %v2919 = vpack.c.bf16 %v2918, %v2918
    %v2921 = vsel %vm122, %v2919, 0
    %2923 = vmatpush.bf16.msra.mxu0 0
    %2924 = vmatpush.bf16.msra.mxu0 0
    %2925 = vmatpush.bf16.msra.mxu0 0
    %2926 = vmatpush.bf16.msra.mxu0 0
    %2927 = vmatpush.bf16.msra.mxu0 0
    %2928 = vmatpush.bf16.msra.mxu0 0
    %2929 = vmatpush.bf16.msra.mxu0 %v59
    %2930 = vmatpush.bf16.msra.mxu0 %v58
    %2931 = vmatmul.bf16.gmra.mxu0 %v2921
    %v2932 = vpop.f32.mrf.mxu0
    %v2933 = vadd.f32 %v146, %v2932
    %v2934 = vpop.f32.mrf.mxu0
    %2935 = vdwg.mxu0
    %v2936 = vmul.f32 %v293, %v2933
    %v2937 = vadd.f32 %v2743, %v2936
    %v2938 = vpack.c.bf16 %v2937, %v2937
    %v2940 = vperm.slane %v2745, 0
    %v2943 = vsel %vm65, %v2938, 0
    %2945 = vmatpush.bf16.msra.mxu0 0
    %2946 = vmatpush.bf16.msra.mxu0 0
    %2947 = vmatpush.bf16.msra.mxu0 0
    %2948 = vmatpush.bf16.msra.mxu0 0
    %2949 = vmatpush.bf16.msra.mxu0 0
    %2950 = vmatpush.bf16.msra.mxu0 0
    %2951 = vmatpush.bf16.msra.mxu0 0
    %2952 = vmatpush.bf16.msra.mxu0 %v98
    %2953 = vmatmul.bf16.gmra.mxu0 %v2943
    %v2954 = vpop.f32.mrf.mxu0
    %v2955 = vadd.f32 %v2940, %v2954
    %v2956 = vpop.f32.mrf.mxu0
    %2957 = vdwg.mxu0
    %vm2958 = vcmp.gt.f32.partialorder %v2955, 0.0
    %v2959 = vmul.f32 %v2955, 1.442695
    %v2960 = vpow.pop %v2959
    %v2961 = vsub.f32 %v2960, 1.0
    %v2962 = vsel %vm2958, %v2955, %v2961
    %v2963 = vpack.c.bf16 %v2962, %v2962
    %v2965 = vsel %vm122, %v2963, 0
    %2967 = vmatpush.bf16.msra.mxu0 0
    %2968 = vmatpush.bf16.msra.mxu0 0
    %2969 = vmatpush.bf16.msra.mxu0 0
    %2970 = vmatpush.bf16.msra.mxu0 0
    %2971 = vmatpush.bf16.msra.mxu0 0
    %2972 = vmatpush.bf16.msra.mxu0 0
    %2973 = vmatpush.bf16.msra.mxu0 %v53
    %2974 = vmatpush.bf16.msra.mxu0 %v52
    %2975 = vmatmul.bf16.gmra.mxu0 %v2965
    %v2976 = vpop.f32.mrf.mxu0
    %v2977 = vadd.f32 %v120, %v2976
    %v2978 = vpop.f32.mrf.mxu0
    %2979 = vdwg.mxu0
    %vm2980 = vcmp.gt.f32.partialorder %v2977, 0.0
    %v2981 = vmul.f32 %v2977, 1.442695
    %v2982 = vpow.pop %v2981
    %v2983 = vsub.f32 %v2982, 1.0
    %v2984 = vsel %vm2980, %v2977, %v2983
    %v2985 = vpack.c.bf16 %v2984, %v2984
    %v2987 = vsel %vm122, %v2985, 0
    %2989 = vmatpush.bf16.msra.mxu0 0
    %2990 = vmatpush.bf16.msra.mxu0 0
    %2991 = vmatpush.bf16.msra.mxu0 0
    %2992 = vmatpush.bf16.msra.mxu0 0
    %2993 = vmatpush.bf16.msra.mxu0 0
    %2994 = vmatpush.bf16.msra.mxu0 0
    %2995 = vmatpush.bf16.msra.mxu0 %v59
    %2996 = vmatpush.bf16.msra.mxu0 %v58
    %2997 = vmatmul.bf16.gmra.mxu0 %v2987
    %v2998 = vpop.f32.mrf.mxu0
    %v2999 = vadd.f32 %v146, %v2998
    %v3000 = vpop.f32.mrf.mxu0
    %3001 = vdwg.mxu0
    %v3002 = vadd.f32 %v2804, %v2999
    %v3003 = vmul.f32 %v361, %v3002
    %v3004 = vadd.f32 %v2743, %v3003
    %v3005 = vadd.f32 %v2870, %v2933
    %v3006 = vmul.f32 %v365, %v3005
    %v3007 = vadd.f32 %v3004, %v3006
    %v3008 = vadd.f32 %v2745, %v83
    %v3009 = vadd.f32 %v3008, %v83
    %v3010 = vpack.c.bf16 %v3007, %v3007
    %v3012 = vsel %vm65, %v3010, 0
    %3014 = vmatpush.bf16.msra.mxu0 0
    %3015 = vmatpush.bf16.msra.mxu0 0
    %3016 = vmatpush.bf16.msra.mxu0 0
    %3017 = vmatpush.bf16.msra.mxu0 0
    %3018 = vmatpush.bf16.msra.mxu0 0
    %3019 = vmatpush.bf16.msra.mxu0 0
    %3020 = vmatpush.bf16.msra.mxu0 0
    %3021 = vmatpush.bf16.msra.mxu0 %v98
    %3022 = vmatmul.bf16.gmra.mxu0 %v3012
    %v3023 = vpop.f32.mrf.mxu0
    %v3024 = vadd.f32 %v2940, %v3023
    %v3025 = vpop.f32.mrf.mxu0
    %3026 = vdwg.mxu0
    %vm3027 = vcmp.gt.f32.partialorder %v3024, 0.0
    %v3028 = vmul.f32 %v3024, 1.442695
    %v3029 = vpow.pop %v3028
    %v3030 = vsub.f32 %v3029, 1.0
    %v3031 = vsel %vm3027, %v3024, %v3030
    %v3032 = vpack.c.bf16 %v3031, %v3031
    %v3034 = vsel %vm122, %v3032, 0
    %3036 = vmatpush.bf16.msra.mxu0 0
    %3037 = vmatpush.bf16.msra.mxu0 0
    %3038 = vmatpush.bf16.msra.mxu0 0
    %3039 = vmatpush.bf16.msra.mxu0 0
    %3040 = vmatpush.bf16.msra.mxu0 0
    %3041 = vmatpush.bf16.msra.mxu0 0
    %3042 = vmatpush.bf16.msra.mxu0 %v53
    %3043 = vmatpush.bf16.msra.mxu0 %v52
    %3044 = vmatmul.bf16.gmra.mxu0 %v3034
    %v3045 = vpop.f32.mrf.mxu0
    %v3046 = vadd.f32 %v120, %v3045
    %v3047 = vpop.f32.mrf.mxu0
    %3048 = vdwg.mxu0
    %vm3049 = vcmp.gt.f32.partialorder %v3046, 0.0
    %v3050 = vmul.f32 %v3046, 1.442695
    %v3051 = vpow.pop %v3050
    %v3052 = vsub.f32 %v3051, 1.0
    %v3053 = vsel %vm3049, %v3046, %v3052
    %v3054 = vpack.c.bf16 %v3053, %v3053
    %v3056 = vsel %vm122, %v3054, 0
    %3058 = vmatpush.bf16.msra.mxu0 0
    %3059 = vmatpush.bf16.msra.mxu0 0
    %3060 = vmatpush.bf16.msra.mxu0 0
    %3061 = vmatpush.bf16.msra.mxu0 0
    %3062 = vmatpush.bf16.msra.mxu0 0
    %3063 = vmatpush.bf16.msra.mxu0 0
    %3064 = vmatpush.bf16.msra.mxu0 %v59
    %3065 = vmatpush.bf16.msra.mxu0 %v58
    %3066 = vmatmul.bf16.gmra.mxu0 %v3056
    %v3067 = vpop.f32.mrf.mxu0
    %v3068 = vadd.f32 %v146, %v3067
    %v3069 = vpop.f32.mrf.mxu0
    %3070 = vdwg.mxu0
    %v3071 = vmul.f32 %v82, %v3068
    %v3072 = vadd.f32 %v3007, %v3071
    %v3073 = vpack.c.bf16 %v3072, %v3072
    %v3075 = vperm.slane %v3008, 0
    %v3078 = vsel %vm65, %v3073, 0
    %3080 = vmatpush.bf16.msra.mxu0 0
    %3081 = vmatpush.bf16.msra.mxu0 0
    %3082 = vmatpush.bf16.msra.mxu0 0
    %3083 = vmatpush.bf16.msra.mxu0 0
    %3084 = vmatpush.bf16.msra.mxu0 0
    %3085 = vmatpush.bf16.msra.mxu0 0
    %3086 = vmatpush.bf16.msra.mxu0 0
    %3087 = vmatpush.bf16.msra.mxu0 %v98
    %3088 = vmatmul.bf16.gmra.mxu0 %v3078
    %v3089 = vpop.f32.mrf.mxu0
    %v3090 = vadd.f32 %v3075, %v3089
    %v3091 = vpop.f32.mrf.mxu0
    %3092 = vdwg.mxu0
    %vm3093 = vcmp.gt.f32.partialorder %v3090, 0.0
    %v3094 = vmul.f32 %v3090, 1.442695
    %v3095 = vpow.pop %v3094
    %v3096 = vsub.f32 %v3095, 1.0
    %v3097 = vsel %vm3093, %v3090, %v3096
    %v3098 = vpack.c.bf16 %v3097, %v3097
    %v3100 = vsel %vm122, %v3098, 0
    %3102 = vmatpush.bf16.msra.mxu0 0
    %3103 = vmatpush.bf16.msra.mxu0 0
    %3104 = vmatpush.bf16.msra.mxu0 0
    %3105 = vmatpush.bf16.msra.mxu0 0
    %3106 = vmatpush.bf16.msra.mxu0 0
    %3107 = vmatpush.bf16.msra.mxu0 0
    %3108 = vmatpush.bf16.msra.mxu0 %v53
    %3109 = vmatpush.bf16.msra.mxu0 %v52
    %3110 = vmatmul.bf16.gmra.mxu0 %v3100
    %v3111 = vpop.f32.mrf.mxu0
    %v3112 = vadd.f32 %v120, %v3111
    %v3113 = vpop.f32.mrf.mxu0
    %3114 = vdwg.mxu0
    %vm3115 = vcmp.gt.f32.partialorder %v3112, 0.0
    %v3116 = vmul.f32 %v3112, 1.442695
    %v3117 = vpow.pop %v3116
    %v3118 = vsub.f32 %v3117, 1.0
    %v3119 = vsel %vm3115, %v3112, %v3118
    %v3120 = vpack.c.bf16 %v3119, %v3119
    %v3122 = vsel %vm122, %v3120, 0
    %3124 = vmatpush.bf16.msra.mxu0 0
    %3125 = vmatpush.bf16.msra.mxu0 0
    %3126 = vmatpush.bf16.msra.mxu0 0
    %3127 = vmatpush.bf16.msra.mxu0 0
    %3128 = vmatpush.bf16.msra.mxu0 0
    %3129 = vmatpush.bf16.msra.mxu0 0
    %3130 = vmatpush.bf16.msra.mxu0 %v59
    %3131 = vmatpush.bf16.msra.mxu0 %v58
    %3132 = vmatmul.bf16.gmra.mxu0 %v3122
    %v3133 = vpop.f32.mrf.mxu0
    %v3134 = vadd.f32 %v146, %v3133
    %v3135 = vpop.f32.mrf.mxu0
    %3136 = vdwg.mxu0
    %v3137 = vmul.f32 %v82, %v3134
    %v3138 = vadd.f32 %v3007, %v3137
    %v3139 = vpack.c.bf16 %v3138, %v3138
    %v3141 = vsel %vm65, %v3139, 0
    %3143 = vmatpush.bf16.msra.mxu0 0
    %3144 = vmatpush.bf16.msra.mxu0 0
    %3145 = vmatpush.bf16.msra.mxu0 0
    %3146 = vmatpush.bf16.msra.mxu0 0
    %3147 = vmatpush.bf16.msra.mxu0 0
    %3148 = vmatpush.bf16.msra.mxu0 0
    %3149 = vmatpush.bf16.msra.mxu0 0
    %3150 = vmatpush.bf16.msra.mxu0 %v98
    %3151 = vmatmul.bf16.gmra.mxu0 %v3141
    %v3152 = vpop.f32.mrf.mxu0
    %v3153 = vadd.f32 %v3075, %v3152
    %v3154 = vpop.f32.mrf.mxu0
    %3155 = vdwg.mxu0
    %vm3156 = vcmp.gt.f32.partialorder %v3153, 0.0
    %v3157 = vmul.f32 %v3153, 1.442695
    %v3158 = vpow.pop %v3157
    %v3159 = vsub.f32 %v3158, 1.0
    %v3160 = vsel %vm3156, %v3153, %v3159
    %v3161 = vpack.c.bf16 %v3160, %v3160
    %v3163 = vsel %vm122, %v3161, 0
    %3165 = vmatpush.bf16.msra.mxu0 0
    %3166 = vmatpush.bf16.msra.mxu0 0
    %3167 = vmatpush.bf16.msra.mxu0 0
    %3168 = vmatpush.bf16.msra.mxu0 0
    %3169 = vmatpush.bf16.msra.mxu0 0
    %3170 = vmatpush.bf16.msra.mxu0 0
    %3171 = vmatpush.bf16.msra.mxu0 %v53
    %3172 = vmatpush.bf16.msra.mxu0 %v52
    %3173 = vmatmul.bf16.gmra.mxu0 %v3163
    %v3174 = vpop.f32.mrf.mxu0
    %v3175 = vadd.f32 %v120, %v3174
    %v3176 = vpop.f32.mrf.mxu0
    %3177 = vdwg.mxu0
    %vm3178 = vcmp.gt.f32.partialorder %v3175, 0.0
    %v3179 = vmul.f32 %v3175, 1.442695
    %v3180 = vpow.pop %v3179
    %v3181 = vsub.f32 %v3180, 1.0
    %v3182 = vsel %vm3178, %v3175, %v3181
    %v3183 = vpack.c.bf16 %v3182, %v3182
    %v3185 = vsel %vm122, %v3183, 0
    %3187 = vmatpush.bf16.msra.mxu0 0
    %3188 = vmatpush.bf16.msra.mxu0 0
    %3189 = vmatpush.bf16.msra.mxu0 0
    %3190 = vmatpush.bf16.msra.mxu0 0
    %3191 = vmatpush.bf16.msra.mxu0 0
    %3192 = vmatpush.bf16.msra.mxu0 0
    %3193 = vmatpush.bf16.msra.mxu0 %v59
    %3194 = vmatpush.bf16.msra.mxu0 %v58
    %3195 = vmatmul.bf16.gmra.mxu0 %v3185
    %v3196 = vpop.f32.mrf.mxu0
    %v3197 = vadd.f32 %v146, %v3196
    %v3198 = vpop.f32.mrf.mxu0
    %3199 = vdwg.mxu0
    %v3200 = vmul.f32 %v293, %v3197
    %v3201 = vadd.f32 %v3007, %v3200
    %v3202 = vpack.c.bf16 %v3201, %v3201
    %v3204 = vperm.slane %v3009, 0
    %v3207 = vsel %vm65, %v3202, 0
    %3209 = vmatpush.bf16.msra.mxu0 0
    %3210 = vmatpush.bf16.msra.mxu0 0
    %3211 = vmatpush.bf16.msra.mxu0 0
    %3212 = vmatpush.bf16.msra.mxu0 0
    %3213 = vmatpush.bf16.msra.mxu0 0
    %3214 = vmatpush.bf16.msra.mxu0 0
    %3215 = vmatpush.bf16.msra.mxu0 0
    %3216 = vmatpush.bf16.msra.mxu0 %v98
    %3217 = vmatmul.bf16.gmra.mxu0 %v3207
    %v3218 = vpop.f32.mrf.mxu0
    %v3219 = vadd.f32 %v3204, %v3218
    %v3220 = vpop.f32.mrf.mxu0
    %3221 = vdwg.mxu0
    %vm3222 = vcmp.gt.f32.partialorder %v3219, 0.0
    %v3223 = vmul.f32 %v3219, 1.442695
    %v3224 = vpow.pop %v3223
    %v3225 = vsub.f32 %v3224, 1.0
    %v3226 = vsel %vm3222, %v3219, %v3225
    %v3227 = vpack.c.bf16 %v3226, %v3226
    %v3229 = vsel %vm122, %v3227, 0
    %3231 = vmatpush.bf16.msra.mxu0 0
    %3232 = vmatpush.bf16.msra.mxu0 0
    %3233 = vmatpush.bf16.msra.mxu0 0
    %3234 = vmatpush.bf16.msra.mxu0 0
    %3235 = vmatpush.bf16.msra.mxu0 0
    %3236 = vmatpush.bf16.msra.mxu0 0
    %3237 = vmatpush.bf16.msra.mxu0 %v53
    %3238 = vmatpush.bf16.msra.mxu0 %v52
    %3239 = vmatmul.bf16.gmra.mxu0 %v3229
    %v3240 = vpop.f32.mrf.mxu0
    %v3241 = vadd.f32 %v120, %v3240
    %v3242 = vpop.f32.mrf.mxu0
    %3243 = vdwg.mxu0
    %vm3244 = vcmp.gt.f32.partialorder %v3241, 0.0
    %v3245 = vmul.f32 %v3241, 1.442695
    %v3246 = vpow.pop %v3245
    %v3247 = vsub.f32 %v3246, 1.0
    %v3248 = vsel %vm3244, %v3241, %v3247
    %v3249 = vpack.c.bf16 %v3248, %v3248
    %v3251 = vsel %vm122, %v3249, 0
    %3253 = vmatpush.bf16.msra.mxu0 0
    %3254 = vmatpush.bf16.msra.mxu0 0
    %3255 = vmatpush.bf16.msra.mxu0 0
    %3256 = vmatpush.bf16.msra.mxu0 0
    %3257 = vmatpush.bf16.msra.mxu0 0
    %3258 = vmatpush.bf16.msra.mxu0 0
    %3259 = vmatpush.bf16.msra.mxu0 %v59
    %3260 = vmatpush.bf16.msra.mxu0 %v58
    %3261 = vmatmul.bf16.gmra.mxu0 %v3251
    %v3262 = vpop.f32.mrf.mxu0
    %v3263 = vadd.f32 %v146, %v3262
    %v3264 = vpop.f32.mrf.mxu0
    %3265 = vdwg.mxu0
    %v3266 = vadd.f32 %v3068, %v3263
    %v3267 = vmul.f32 %v361, %v3266
    %v3268 = vadd.f32 %v3007, %v3267
    %v3269 = vadd.f32 %v3134, %v3197
    %v3270 = vmul.f32 %v365, %v3269
    %v3271 = vadd.f32 %v3268, %v3270
    %v3272 = vadd.f32 %v3009, %v83
    %v3273 = vadd.f32 %v3272, %v83
    %v3274 = vpack.c.bf16 %v3271, %v3271
    %v3276 = vsel %vm65, %v3274, 0
    %3278 = vmatpush.bf16.msra.mxu0 0
    %3279 = vmatpush.bf16.msra.mxu0 0
    %3280 = vmatpush.bf16.msra.mxu0 0
    %3281 = vmatpush.bf16.msra.mxu0 0
    %3282 = vmatpush.bf16.msra.mxu0 0
    %3283 = vmatpush.bf16.msra.mxu0 0
    %3284 = vmatpush.bf16.msra.mxu0 0
    %3285 = vmatpush.bf16.msra.mxu0 %v98
    %3286 = vmatmul.bf16.gmra.mxu0 %v3276
    %v3287 = vpop.f32.mrf.mxu0
    %v3288 = vadd.f32 %v3204, %v3287
    %v3289 = vpop.f32.mrf.mxu0
    %3290 = vdwg.mxu0
    %vm3291 = vcmp.gt.f32.partialorder %v3288, 0.0
    %v3292 = vmul.f32 %v3288, 1.442695
    %v3293 = vpow.pop %v3292
    %v3294 = vsub.f32 %v3293, 1.0
    %v3295 = vsel %vm3291, %v3288, %v3294
    %v3296 = vpack.c.bf16 %v3295, %v3295
    %v3298 = vsel %vm122, %v3296, 0
    %3300 = vmatpush.bf16.msra.mxu0 0
    %3301 = vmatpush.bf16.msra.mxu0 0
    %3302 = vmatpush.bf16.msra.mxu0 0
    %3303 = vmatpush.bf16.msra.mxu0 0
    %3304 = vmatpush.bf16.msra.mxu0 0
    %3305 = vmatpush.bf16.msra.mxu0 0
    %3306 = vmatpush.bf16.msra.mxu0 %v53
    %3307 = vmatpush.bf16.msra.mxu0 %v52
    %3308 = vmatmul.bf16.gmra.mxu0 %v3298
    %v3309 = vpop.f32.mrf.mxu0
    %v3310 = vadd.f32 %v120, %v3309
    %v3311 = vpop.f32.mrf.mxu0
    %3312 = vdwg.mxu0
    %vm3313 = vcmp.gt.f32.partialorder %v3310, 0.0
    %v3314 = vmul.f32 %v3310, 1.442695
    %v3315 = vpow.pop %v3314
    %v3316 = vsub.f32 %v3315, 1.0
    %v3317 = vsel %vm3313, %v3310, %v3316
    %v3318 = vpack.c.bf16 %v3317, %v3317
    %v3320 = vsel %vm122, %v3318, 0
    %3322 = vmatpush.bf16.msra.mxu0 0
    %3323 = vmatpush.bf16.msra.mxu0 0
    %3324 = vmatpush.bf16.msra.mxu0 0
    %3325 = vmatpush.bf16.msra.mxu0 0
    %3326 = vmatpush.bf16.msra.mxu0 0
    %3327 = vmatpush.bf16.msra.mxu0 0
    %3328 = vmatpush.bf16.msra.mxu0 %v59
    %3329 = vmatpush.bf16.msra.mxu0 %v58
    %3330 = vmatmul.bf16.gmra.mxu0 %v3320
    %v3331 = vpop.f32.mrf.mxu0
    %v3332 = vadd.f32 %v146, %v3331
    %v3333 = vpop.f32.mrf.mxu0
    %3334 = vdwg.mxu0
    %v3335 = vmul.f32 %v82, %v3332
    %v3336 = vadd.f32 %v3271, %v3335
    %v3337 = vpack.c.bf16 %v3336, %v3336
    %v3339 = vperm.slane %v3272, 0
    %v3342 = vsel %vm65, %v3337, 0
    %3344 = vmatpush.bf16.msra.mxu0 0
    %3345 = vmatpush.bf16.msra.mxu0 0
    %3346 = vmatpush.bf16.msra.mxu0 0
    %3347 = vmatpush.bf16.msra.mxu0 0
    %3348 = vmatpush.bf16.msra.mxu0 0
    %3349 = vmatpush.bf16.msra.mxu0 0
    %3350 = vmatpush.bf16.msra.mxu0 0
    %3351 = vmatpush.bf16.msra.mxu0 %v98
    %3352 = vmatmul.bf16.gmra.mxu0 %v3342
    %v3353 = vpop.f32.mrf.mxu0
    %v3354 = vadd.f32 %v3339, %v3353
    %v3355 = vpop.f32.mrf.mxu0
    %3356 = vdwg.mxu0
    %vm3357 = vcmp.gt.f32.partialorder %v3354, 0.0
    %v3358 = vmul.f32 %v3354, 1.442695
    %v3359 = vpow.pop %v3358
    %v3360 = vsub.f32 %v3359, 1.0
    %v3361 = vsel %vm3357, %v3354, %v3360
    %v3362 = vpack.c.bf16 %v3361, %v3361
    %v3364 = vsel %vm122, %v3362, 0
    %3366 = vmatpush.bf16.msra.mxu0 0
    %3367 = vmatpush.bf16.msra.mxu0 0
    %3368 = vmatpush.bf16.msra.mxu0 0
    %3369 = vmatpush.bf16.msra.mxu0 0
    %3370 = vmatpush.bf16.msra.mxu0 0
    %3371 = vmatpush.bf16.msra.mxu0 0
    %3372 = vmatpush.bf16.msra.mxu0 %v53
    %3373 = vmatpush.bf16.msra.mxu0 %v52
    %3374 = vmatmul.bf16.gmra.mxu0 %v3364
    %v3375 = vpop.f32.mrf.mxu0
    %v3376 = vadd.f32 %v120, %v3375
    %v3377 = vpop.f32.mrf.mxu0
    %3378 = vdwg.mxu0
    %vm3379 = vcmp.gt.f32.partialorder %v3376, 0.0
    %v3380 = vmul.f32 %v3376, 1.442695
    %v3381 = vpow.pop %v3380
    %v3382 = vsub.f32 %v3381, 1.0
    %v3383 = vsel %vm3379, %v3376, %v3382
    %v3384 = vpack.c.bf16 %v3383, %v3383
    %v3386 = vsel %vm122, %v3384, 0
    %3388 = vmatpush.bf16.msra.mxu0 0
    %3389 = vmatpush.bf16.msra.mxu0 0
    %3390 = vmatpush.bf16.msra.mxu0 0
    %3391 = vmatpush.bf16.msra.mxu0 0
    %3392 = vmatpush.bf16.msra.mxu0 0
    %3393 = vmatpush.bf16.msra.mxu0 0
    %3394 = vmatpush.bf16.msra.mxu0 %v59
    %3395 = vmatpush.bf16.msra.mxu0 %v58
    %3396 = vmatmul.bf16.gmra.mxu0 %v3386
    %v3397 = vpop.f32.mrf.mxu0
    %v3398 = vadd.f32 %v146, %v3397
    %v3399 = vpop.f32.mrf.mxu0
    %3400 = vdwg.mxu0
    %v3401 = vmul.f32 %v82, %v3398
    %v3402 = vadd.f32 %v3271, %v3401
    %v3403 = vpack.c.bf16 %v3402, %v3402
    %v3405 = vsel %vm65, %v3403, 0
    %3407 = vmatpush.bf16.msra.mxu0 0
    %3408 = vmatpush.bf16.msra.mxu0 0
    %3409 = vmatpush.bf16.msra.mxu0 0
    %3410 = vmatpush.bf16.msra.mxu0 0
    %3411 = vmatpush.bf16.msra.mxu0 0
    %3412 = vmatpush.bf16.msra.mxu0 0
    %3413 = vmatpush.bf16.msra.mxu0 0
    %3414 = vmatpush.bf16.msra.mxu0 %v98
    %3415 = vmatmul.bf16.gmra.mxu0 %v3405
    %v3416 = vpop.f32.mrf.mxu0
    %v3417 = vadd.f32 %v3339, %v3416
    %v3418 = vpop.f32.mrf.mxu0
    %3419 = vdwg.mxu0
    %vm3420 = vcmp.gt.f32.partialorder %v3417, 0.0
    %v3421 = vmul.f32 %v3417, 1.442695
    %v3422 = vpow.pop %v3421
    %v3423 = vsub.f32 %v3422, 1.0
    %v3424 = vsel %vm3420, %v3417, %v3423
    %v3425 = vpack.c.bf16 %v3424, %v3424
    %v3427 = vsel %vm122, %v3425, 0
    %3429 = vmatpush.bf16.msra.mxu0 0
    %3430 = vmatpush.bf16.msra.mxu0 0
    %3431 = vmatpush.bf16.msra.mxu0 0
    %3432 = vmatpush.bf16.msra.mxu0 0
    %3433 = vmatpush.bf16.msra.mxu0 0
    %3434 = vmatpush.bf16.msra.mxu0 0
    %3435 = vmatpush.bf16.msra.mxu0 %v53
    %3436 = vmatpush.bf16.msra.mxu0 %v52
    %3437 = vmatmul.bf16.gmra.mxu0 %v3427
    %v3438 = vpop.f32.mrf.mxu0
    %v3439 = vadd.f32 %v120, %v3438
    %v3440 = vpop.f32.mrf.mxu0
    %3441 = vdwg.mxu0
    %vm3442 = vcmp.gt.f32.partialorder %v3439, 0.0
    %v3443 = vmul.f32 %v3439, 1.442695
    %v3444 = vpow.pop %v3443
    %v3445 = vsub.f32 %v3444, 1.0
    %v3446 = vsel %vm3442, %v3439, %v3445
    %v3447 = vpack.c.bf16 %v3446, %v3446
    %v3449 = vsel %vm122, %v3447, 0
    %3451 = vmatpush.bf16.msra.mxu0 0
    %3452 = vmatpush.bf16.msra.mxu0 0
    %3453 = vmatpush.bf16.msra.mxu0 0
    %3454 = vmatpush.bf16.msra.mxu0 0
    %3455 = vmatpush.bf16.msra.mxu0 0
    %3456 = vmatpush.bf16.msra.mxu0 0
    %3457 = vmatpush.bf16.msra.mxu0 %v59
    %3458 = vmatpush.bf16.msra.mxu0 %v58
    %3459 = vmatmul.bf16.gmra.mxu0 %v3449
    %v3460 = vpop.f32.mrf.mxu0
    %v3461 = vadd.f32 %v146, %v3460
    %v3462 = vpop.f32.mrf.mxu0
    %3463 = vdwg.mxu0
    %v3464 = vmul.f32 %v293, %v3461
    %v3465 = vadd.f32 %v3271, %v3464
    %v3466 = vpack.c.bf16 %v3465, %v3465
    %v3468 = vperm.slane %v3273, 0
    %v3471 = vsel %vm65, %v3466, 0
    %3473 = vmatpush.bf16.msra.mxu0 0
    %3474 = vmatpush.bf16.msra.mxu0 0
    %3475 = vmatpush.bf16.msra.mxu0 0
    %3476 = vmatpush.bf16.msra.mxu0 0
    %3477 = vmatpush.bf16.msra.mxu0 0
    %3478 = vmatpush.bf16.msra.mxu0 0
    %3479 = vmatpush.bf16.msra.mxu0 0
    %3480 = vmatpush.bf16.msra.mxu0 %v98
    %3481 = vmatmul.bf16.gmra.mxu0 %v3471
    %v3482 = vpop.f32.mrf.mxu0
    %v3483 = vadd.f32 %v3468, %v3482
    %v3484 = vpop.f32.mrf.mxu0
    %3485 = vdwg.mxu0
    %vm3486 = vcmp.gt.f32.partialorder %v3483, 0.0
    %v3487 = vmul.f32 %v3483, 1.442695
    %v3488 = vpow.pop %v3487
    %v3489 = vsub.f32 %v3488, 1.0
    %v3490 = vsel %vm3486, %v3483, %v3489
    %v3491 = vpack.c.bf16 %v3490, %v3490
    %v3493 = vsel %vm122, %v3491, 0
    %3495 = vmatpush.bf16.msra.mxu0 0
    %3496 = vmatpush.bf16.msra.mxu0 0
    %3497 = vmatpush.bf16.msra.mxu0 0
    %3498 = vmatpush.bf16.msra.mxu0 0
    %3499 = vmatpush.bf16.msra.mxu0 0
    %3500 = vmatpush.bf16.msra.mxu0 0
    %3501 = vmatpush.bf16.msra.mxu0 %v53
    %3502 = vmatpush.bf16.msra.mxu0 %v52
    %3503 = vmatmul.bf16.gmra.mxu0 %v3493
    %v3504 = vpop.f32.mrf.mxu0
    %v3505 = vadd.f32 %v120, %v3504
    %v3506 = vpop.f32.mrf.mxu0
    %3507 = vdwg.mxu0
    %vm3508 = vcmp.gt.f32.partialorder %v3505, 0.0
    %v3509 = vmul.f32 %v3505, 1.442695
    %v3510 = vpow.pop %v3509
    %v3511 = vsub.f32 %v3510, 1.0
    %v3512 = vsel %vm3508, %v3505, %v3511
    %v3513 = vpack.c.bf16 %v3512, %v3512
    %v3515 = vsel %vm122, %v3513, 0
    %3517 = vmatpush.bf16.msra.mxu0 0
    %3518 = vmatpush.bf16.msra.mxu0 0
    %3519 = vmatpush.bf16.msra.mxu0 0
    %3520 = vmatpush.bf16.msra.mxu0 0
    %3521 = vmatpush.bf16.msra.mxu0 0
    %3522 = vmatpush.bf16.msra.mxu0 0
    %3523 = vmatpush.bf16.msra.mxu0 %v59
    %3524 = vmatpush.bf16.msra.mxu0 %v58
    %3525 = vmatmul.bf16.gmra.mxu0 %v3515
    %v3526 = vpop.f32.mrf.mxu0
    %v3527 = vadd.f32 %v146, %v3526
    %v3528 = vpop.f32.mrf.mxu0
    %3529 = vdwg.mxu0
    %v3530 = vadd.f32 %v3332, %v3527
    %v3531 = vmul.f32 %v361, %v3530
    %v3532 = vadd.f32 %v3271, %v3531
    %v3533 = vadd.f32 %v3398, %v3461
    %v3534 = vmul.f32 %v365, %v3533
    %v3535 = vadd.f32 %v3532, %v3534
    %v3536 = vadd.f32 %v3273, %v83
    %v3537 = vadd.f32 %v3536, %v83
    %v3538 = vpack.c.bf16 %v3535, %v3535
    %v3540 = vsel %vm65, %v3538, 0
    %3542 = vmatpush.bf16.msra.mxu0 0
    %3543 = vmatpush.bf16.msra.mxu0 0
    %3544 = vmatpush.bf16.msra.mxu0 0
    %3545 = vmatpush.bf16.msra.mxu0 0
    %3546 = vmatpush.bf16.msra.mxu0 0
    %3547 = vmatpush.bf16.msra.mxu0 0
    %3548 = vmatpush.bf16.msra.mxu0 0
    %3549 = vmatpush.bf16.msra.mxu0 %v98
    %3550 = vmatmul.bf16.gmra.mxu0 %v3540
    %v3551 = vpop.f32.mrf.mxu0
    %v3552 = vadd.f32 %v3468, %v3551
    %v3553 = vpop.f32.mrf.mxu0
    %3554 = vdwg.mxu0
    %vm3555 = vcmp.gt.f32.partialorder %v3552, 0.0
    %v3556 = vmul.f32 %v3552, 1.442695
    %v3557 = vpow.pop %v3556
    %v3558 = vsub.f32 %v3557, 1.0
    %v3559 = vsel %vm3555, %v3552, %v3558
    %v3560 = vpack.c.bf16 %v3559, %v3559
    %v3562 = vsel %vm122, %v3560, 0
    %3564 = vmatpush.bf16.msra.mxu0 0
    %3565 = vmatpush.bf16.msra.mxu0 0
    %3566 = vmatpush.bf16.msra.mxu0 0
    %3567 = vmatpush.bf16.msra.mxu0 0
    %3568 = vmatpush.bf16.msra.mxu0 0
    %3569 = vmatpush.bf16.msra.mxu0 0
    %3570 = vmatpush.bf16.msra.mxu0 %v53
    %3571 = vmatpush.bf16.msra.mxu0 %v52
    %3572 = vmatmul.bf16.gmra.mxu0 %v3562
    %v3573 = vpop.f32.mrf.mxu0
    %v3574 = vadd.f32 %v120, %v3573
    %v3575 = vpop.f32.mrf.mxu0
    %3576 = vdwg.mxu0
    %vm3577 = vcmp.gt.f32.partialorder %v3574, 0.0
    %v3578 = vmul.f32 %v3574, 1.442695
    %v3579 = vpow.pop %v3578
    %v3580 = vsub.f32 %v3579, 1.0
    %v3581 = vsel %vm3577, %v3574, %v3580
    %v3582 = vpack.c.bf16 %v3581, %v3581
    %v3584 = vsel %vm122, %v3582, 0
    %3586 = vmatpush.bf16.msra.mxu0 0
    %3587 = vmatpush.bf16.msra.mxu0 0
    %3588 = vmatpush.bf16.msra.mxu0 0
    %3589 = vmatpush.bf16.msra.mxu0 0
    %3590 = vmatpush.bf16.msra.mxu0 0
    %3591 = vmatpush.bf16.msra.mxu0 0
    %3592 = vmatpush.bf16.msra.mxu0 %v59
    %3593 = vmatpush.bf16.msra.mxu0 %v58
    %3594 = vmatmul.bf16.gmra.mxu0 %v3584
    %v3595 = vpop.f32.mrf.mxu0
    %v3596 = vadd.f32 %v146, %v3595
    %v3597 = vpop.f32.mrf.mxu0
    %3598 = vdwg.mxu0
    %v3599 = vmul.f32 %v82, %v3596
    %v3600 = vadd.f32 %v3535, %v3599
    %v3601 = vpack.c.bf16 %v3600, %v3600
    %v3603 = vperm.slane %v3536, 0
    %v3606 = vsel %vm65, %v3601, 0
    %3608 = vmatpush.bf16.msra.mxu0 0
    %3609 = vmatpush.bf16.msra.mxu0 0
    %3610 = vmatpush.bf16.msra.mxu0 0
    %3611 = vmatpush.bf16.msra.mxu0 0
    %3612 = vmatpush.bf16.msra.mxu0 0
    %3613 = vmatpush.bf16.msra.mxu0 0
    %3614 = vmatpush.bf16.msra.mxu0 0
    %3615 = vmatpush.bf16.msra.mxu0 %v98
    %3616 = vmatmul.bf16.gmra.mxu0 %v3606
    %v3617 = vpop.f32.mrf.mxu0
    %v3618 = vadd.f32 %v3603, %v3617
    %v3619 = vpop.f32.mrf.mxu0
    %3620 = vdwg.mxu0
    %vm3621 = vcmp.gt.f32.partialorder %v3618, 0.0
    %v3622 = vmul.f32 %v3618, 1.442695
    %v3623 = vpow.pop %v3622
    %v3624 = vsub.f32 %v3623, 1.0
    %v3625 = vsel %vm3621, %v3618, %v3624
    %v3626 = vpack.c.bf16 %v3625, %v3625
    %v3628 = vsel %vm122, %v3626, 0
    %3630 = vmatpush.bf16.msra.mxu0 0
    %3631 = vmatpush.bf16.msra.mxu0 0
    %3632 = vmatpush.bf16.msra.mxu0 0
    %3633 = vmatpush.bf16.msra.mxu0 0
    %3634 = vmatpush.bf16.msra.mxu0 0
    %3635 = vmatpush.bf16.msra.mxu0 0
    %3636 = vmatpush.bf16.msra.mxu0 %v53
    %3637 = vmatpush.bf16.msra.mxu0 %v52
    %3638 = vmatmul.bf16.gmra.mxu0 %v3628
    %v3639 = vpop.f32.mrf.mxu0
    %v3640 = vadd.f32 %v120, %v3639
    %v3641 = vpop.f32.mrf.mxu0
    %3642 = vdwg.mxu0
    %vm3643 = vcmp.gt.f32.partialorder %v3640, 0.0
    %v3644 = vmul.f32 %v3640, 1.442695
    %v3645 = vpow.pop %v3644
    %v3646 = vsub.f32 %v3645, 1.0
    %v3647 = vsel %vm3643, %v3640, %v3646
    %v3648 = vpack.c.bf16 %v3647, %v3647
    %v3650 = vsel %vm122, %v3648, 0
    %3652 = vmatpush.bf16.msra.mxu0 0
    %3653 = vmatpush.bf16.msra.mxu0 0
    %3654 = vmatpush.bf16.msra.mxu0 0
    %3655 = vmatpush.bf16.msra.mxu0 0
    %3656 = vmatpush.bf16.msra.mxu0 0
    %3657 = vmatpush.bf16.msra.mxu0 0
    %3658 = vmatpush.bf16.msra.mxu0 %v59
    %3659 = vmatpush.bf16.msra.mxu0 %v58
    %3660 = vmatmul.bf16.gmra.mxu0 %v3650
    %v3661 = vpop.f32.mrf.mxu0
    %v3662 = vadd.f32 %v146, %v3661
    %v3663 = vpop.f32.mrf.mxu0
    %3664 = vdwg.mxu0
    %v3665 = vmul.f32 %v82, %v3662
    %v3666 = vadd.f32 %v3535, %v3665
    %v3667 = vpack.c.bf16 %v3666, %v3666
    %v3669 = vsel %vm65, %v3667, 0
    %3671 = vmatpush.bf16.msra.mxu0 0
    %3672 = vmatpush.bf16.msra.mxu0 0
    %3673 = vmatpush.bf16.msra.mxu0 0
    %3674 = vmatpush.bf16.msra.mxu0 0
    %3675 = vmatpush.bf16.msra.mxu0 0
    %3676 = vmatpush.bf16.msra.mxu0 0
    %3677 = vmatpush.bf16.msra.mxu0 0
    %3678 = vmatpush.bf16.msra.mxu0 %v98
    %3679 = vmatmul.bf16.gmra.mxu0 %v3669
    %v3680 = vpop.f32.mrf.mxu0
    %v3681 = vadd.f32 %v3603, %v3680
    %v3682 = vpop.f32.mrf.mxu0
    %3683 = vdwg.mxu0
    %vm3684 = vcmp.gt.f32.partialorder %v3681, 0.0
    %v3685 = vmul.f32 %v3681, 1.442695
    %v3686 = vpow.pop %v3685
    %v3687 = vsub.f32 %v3686, 1.0
    %v3688 = vsel %vm3684, %v3681, %v3687
    %v3689 = vpack.c.bf16 %v3688, %v3688
    %v3691 = vsel %vm122, %v3689, 0
    %3693 = vmatpush.bf16.msra.mxu0 0
    %3694 = vmatpush.bf16.msra.mxu0 0
    %3695 = vmatpush.bf16.msra.mxu0 0
    %3696 = vmatpush.bf16.msra.mxu0 0
    %3697 = vmatpush.bf16.msra.mxu0 0
    %3698 = vmatpush.bf16.msra.mxu0 0
    %3699 = vmatpush.bf16.msra.mxu0 %v53
    %3700 = vmatpush.bf16.msra.mxu0 %v52
    %3701 = vmatmul.bf16.gmra.mxu0 %v3691
    %v3702 = vpop.f32.mrf.mxu0
    %v3703 = vadd.f32 %v120, %v3702
    %v3704 = vpop.f32.mrf.mxu0
    %3705 = vdwg.mxu0
    %vm3706 = vcmp.gt.f32.partialorder %v3703, 0.0
    %v3707 = vmul.f32 %v3703, 1.442695
    %v3708 = vpow.pop %v3707
    %v3709 = vsub.f32 %v3708, 1.0
    %v3710 = vsel %vm3706, %v3703, %v3709
    %v3711 = vpack.c.bf16 %v3710, %v3710
    %v3713 = vsel %vm122, %v3711, 0
    %3715 = vmatpush.bf16.msra.mxu0 0
    %3716 = vmatpush.bf16.msra.mxu0 0
    %3717 = vmatpush.bf16.msra.mxu0 0
    %3718 = vmatpush.bf16.msra.mxu0 0
    %3719 = vmatpush.bf16.msra.mxu0 0
    %3720 = vmatpush.bf16.msra.mxu0 0
    %3721 = vmatpush.bf16.msra.mxu0 %v59
    %3722 = vmatpush.bf16.msra.mxu0 %v58
    %3723 = vmatmul.bf16.gmra.mxu0 %v3713
    %v3724 = vpop.f32.mrf.mxu0
    %v3725 = vadd.f32 %v146, %v3724
    %v3726 = vpop.f32.mrf.mxu0
    %3727 = vdwg.mxu0
    %v3728 = vmul.f32 %v293, %v3725
    %v3729 = vadd.f32 %v3535, %v3728
    %v3730 = vpack.c.bf16 %v3729, %v3729
    %v3732 = vperm.slane %v3537, 0
    %v3735 = vsel %vm65, %v3730, 0
    %3737 = vmatpush.bf16.msra.mxu0 0
    %3738 = vmatpush.bf16.msra.mxu0 0
    %3739 = vmatpush.bf16.msra.mxu0 0
    %3740 = vmatpush.bf16.msra.mxu0 0
    %3741 = vmatpush.bf16.msra.mxu0 0
    %3742 = vmatpush.bf16.msra.mxu0 0
    %3743 = vmatpush.bf16.msra.mxu0 0
    %3744 = vmatpush.bf16.msra.mxu0 %v98
    %3745 = vmatmul.bf16.gmra.mxu0 %v3735
    %v3746 = vpop.f32.mrf.mxu0
    %v3747 = vadd.f32 %v3732, %v3746
    %v3748 = vpop.f32.mrf.mxu0
    %3749 = vdwg.mxu0
    %vm3750 = vcmp.gt.f32.partialorder %v3747, 0.0
    %v3751 = vmul.f32 %v3747, 1.442695
    %v3752 = vpow.pop %v3751
    %v3753 = vsub.f32 %v3752, 1.0
    %v3754 = vsel %vm3750, %v3747, %v3753
    %v3755 = vpack.c.bf16 %v3754, %v3754
    %v3757 = vsel %vm122, %v3755, 0
    %3759 = vmatpush.bf16.msra.mxu0 0
    %3760 = vmatpush.bf16.msra.mxu0 0
    %3761 = vmatpush.bf16.msra.mxu0 0
    %3762 = vmatpush.bf16.msra.mxu0 0
    %3763 = vmatpush.bf16.msra.mxu0 0
    %3764 = vmatpush.bf16.msra.mxu0 0
    %3765 = vmatpush.bf16.msra.mxu0 %v53
    %3766 = vmatpush.bf16.msra.mxu0 %v52
    %3767 = vmatmul.bf16.gmra.mxu0 %v3757
    %v3768 = vpop.f32.mrf.mxu0
    %v3769 = vadd.f32 %v120, %v3768
    %v3770 = vpop.f32.mrf.mxu0
    %3771 = vdwg.mxu0
    %vm3772 = vcmp.gt.f32.partialorder %v3769, 0.0
    %v3773 = vmul.f32 %v3769, 1.442695
    %v3774 = vpow.pop %v3773
    %v3775 = vsub.f32 %v3774, 1.0
    %v3776 = vsel %vm3772, %v3769, %v3775
    %v3777 = vpack.c.bf16 %v3776, %v3776
    %v3779 = vsel %vm122, %v3777, 0
    %3781 = vmatpush.bf16.msra.mxu0 0
    %3782 = vmatpush.bf16.msra.mxu0 0
    %3783 = vmatpush.bf16.msra.mxu0 0
    %3784 = vmatpush.bf16.msra.mxu0 0
    %3785 = vmatpush.bf16.msra.mxu0 0
    %3786 = vmatpush.bf16.msra.mxu0 0
    %3787 = vmatpush.bf16.msra.mxu0 %v59
    %3788 = vmatpush.bf16.msra.mxu0 %v58
    %3789 = vmatmul.bf16.gmra.mxu0 %v3779
    %v3790 = vpop.f32.mrf.mxu0
    %v3791 = vadd.f32 %v146, %v3790
    %v3792 = vpop.f32.mrf.mxu0
    %3793 = vdwg.mxu0
    %v3794 = vadd.f32 %v3596, %v3791
    %v3795 = vmul.f32 %v361, %v3794
    %v3796 = vadd.f32 %v3535, %v3795
    %v3797 = vadd.f32 %v3662, %v3725
    %v3798 = vmul.f32 %v365, %v3797
    %v3799 = vadd.f32 %v3796, %v3798
    %v3800 = vadd.f32 %v3537, %v83
    %v3801 = vadd.f32 %v3800, %v83
    %v3802 = vpack.c.bf16 %v3799, %v3799
    %v3804 = vsel %vm65, %v3802, 0
    %3806 = vmatpush.bf16.msra.mxu0 0
    %3807 = vmatpush.bf16.msra.mxu0 0
    %3808 = vmatpush.bf16.msra.mxu0 0
    %3809 = vmatpush.bf16.msra.mxu0 0
    %3810 = vmatpush.bf16.msra.mxu0 0
    %3811 = vmatpush.bf16.msra.mxu0 0
    %3812 = vmatpush.bf16.msra.mxu0 0
    %3813 = vmatpush.bf16.msra.mxu0 %v98
    %3814 = vmatmul.bf16.gmra.mxu0 %v3804
    %v3815 = vpop.f32.mrf.mxu0
    %v3816 = vadd.f32 %v3732, %v3815
    %v3817 = vpop.f32.mrf.mxu0
    %3818 = vdwg.mxu0
    %vm3819 = vcmp.gt.f32.partialorder %v3816, 0.0
    %v3820 = vmul.f32 %v3816, 1.442695
    %v3821 = vpow.pop %v3820
    %v3822 = vsub.f32 %v3821, 1.0
    %v3823 = vsel %vm3819, %v3816, %v3822
    %v3824 = vpack.c.bf16 %v3823, %v3823
    %v3826 = vsel %vm122, %v3824, 0
    %3828 = vmatpush.bf16.msra.mxu0 0
    %3829 = vmatpush.bf16.msra.mxu0 0
    %3830 = vmatpush.bf16.msra.mxu0 0
    %3831 = vmatpush.bf16.msra.mxu0 0
    %3832 = vmatpush.bf16.msra.mxu0 0
    %3833 = vmatpush.bf16.msra.mxu0 0
    %3834 = vmatpush.bf16.msra.mxu0 %v53
    %3835 = vmatpush.bf16.msra.mxu0 %v52
    %3836 = vmatmul.bf16.gmra.mxu0 %v3826
    %v3837 = vpop.f32.mrf.mxu0
    %v3838 = vadd.f32 %v120, %v3837
    %v3839 = vpop.f32.mrf.mxu0
    %3840 = vdwg.mxu0
    %vm3841 = vcmp.gt.f32.partialorder %v3838, 0.0
    %v3842 = vmul.f32 %v3838, 1.442695
    %v3843 = vpow.pop %v3842
    %v3844 = vsub.f32 %v3843, 1.0
    %v3845 = vsel %vm3841, %v3838, %v3844
    %v3846 = vpack.c.bf16 %v3845, %v3845
    %v3848 = vsel %vm122, %v3846, 0
    %3850 = vmatpush.bf16.msra.mxu0 0
    %3851 = vmatpush.bf16.msra.mxu0 0
    %3852 = vmatpush.bf16.msra.mxu0 0
    %3853 = vmatpush.bf16.msra.mxu0 0
    %3854 = vmatpush.bf16.msra.mxu0 0
    %3855 = vmatpush.bf16.msra.mxu0 0
    %3856 = vmatpush.bf16.msra.mxu0 %v59
    %3857 = vmatpush.bf16.msra.mxu0 %v58
    %3858 = vmatmul.bf16.gmra.mxu0 %v3848
    %v3859 = vpop.f32.mrf.mxu0
    %v3860 = vadd.f32 %v146, %v3859
    %v3861 = vpop.f32.mrf.mxu0
    %3862 = vdwg.mxu0
    %v3863 = vmul.f32 %v82, %v3860
    %v3864 = vadd.f32 %v3799, %v3863
    %v3865 = vpack.c.bf16 %v3864, %v3864
    %v3867 = vperm.slane %v3800, 0
    %v3870 = vsel %vm65, %v3865, 0
    %3872 = vmatpush.bf16.msra.mxu0 0
    %3873 = vmatpush.bf16.msra.mxu0 0
    %3874 = vmatpush.bf16.msra.mxu0 0
    %3875 = vmatpush.bf16.msra.mxu0 0
    %3876 = vmatpush.bf16.msra.mxu0 0
    %3877 = vmatpush.bf16.msra.mxu0 0
    %3878 = vmatpush.bf16.msra.mxu0 0
    %3879 = vmatpush.bf16.msra.mxu0 %v98
    %3880 = vmatmul.bf16.gmra.mxu0 %v3870
    %v3881 = vpop.f32.mrf.mxu0
    %v3882 = vadd.f32 %v3867, %v3881
    %v3883 = vpop.f32.mrf.mxu0
    %3884 = vdwg.mxu0
    %vm3885 = vcmp.gt.f32.partialorder %v3882, 0.0
    %v3886 = vmul.f32 %v3882, 1.442695
    %v3887 = vpow.pop %v3886
    %v3888 = vsub.f32 %v3887, 1.0
    %v3889 = vsel %vm3885, %v3882, %v3888
    %v3890 = vpack.c.bf16 %v3889, %v3889
    %v3892 = vsel %vm122, %v3890, 0
    %3894 = vmatpush.bf16.msra.mxu0 0
    %3895 = vmatpush.bf16.msra.mxu0 0
    %3896 = vmatpush.bf16.msra.mxu0 0
    %3897 = vmatpush.bf16.msra.mxu0 0
    %3898 = vmatpush.bf16.msra.mxu0 0
    %3899 = vmatpush.bf16.msra.mxu0 0
    %3900 = vmatpush.bf16.msra.mxu0 %v53
    %3901 = vmatpush.bf16.msra.mxu0 %v52
    %3902 = vmatmul.bf16.gmra.mxu0 %v3892
    %v3903 = vpop.f32.mrf.mxu0
    %v3904 = vadd.f32 %v120, %v3903
    %v3905 = vpop.f32.mrf.mxu0
    %3906 = vdwg.mxu0
    %vm3907 = vcmp.gt.f32.partialorder %v3904, 0.0
    %v3908 = vmul.f32 %v3904, 1.442695
    %v3909 = vpow.pop %v3908
    %v3910 = vsub.f32 %v3909, 1.0
    %v3911 = vsel %vm3907, %v3904, %v3910
    %v3912 = vpack.c.bf16 %v3911, %v3911
    %v3914 = vsel %vm122, %v3912, 0
    %3916 = vmatpush.bf16.msra.mxu0 0
    %3917 = vmatpush.bf16.msra.mxu0 0
    %3918 = vmatpush.bf16.msra.mxu0 0
    %3919 = vmatpush.bf16.msra.mxu0 0
    %3920 = vmatpush.bf16.msra.mxu0 0
    %3921 = vmatpush.bf16.msra.mxu0 0
    %3922 = vmatpush.bf16.msra.mxu0 %v59
    %3923 = vmatpush.bf16.msra.mxu0 %v58
    %3924 = vmatmul.bf16.gmra.mxu0 %v3914
    %v3925 = vpop.f32.mrf.mxu0
    %v3926 = vadd.f32 %v146, %v3925
    %v3927 = vpop.f32.mrf.mxu0
    %3928 = vdwg.mxu0
    %v3929 = vmul.f32 %v82, %v3926
    %v3930 = vadd.f32 %v3799, %v3929
    %v3931 = vpack.c.bf16 %v3930, %v3930
    %v3933 = vsel %vm65, %v3931, 0
    %3935 = vmatpush.bf16.msra.mxu0 0
    %3936 = vmatpush.bf16.msra.mxu0 0
    %3937 = vmatpush.bf16.msra.mxu0 0
    %3938 = vmatpush.bf16.msra.mxu0 0
    %3939 = vmatpush.bf16.msra.mxu0 0
    %3940 = vmatpush.bf16.msra.mxu0 0
    %3941 = vmatpush.bf16.msra.mxu0 0
    %3942 = vmatpush.bf16.msra.mxu0 %v98
    %3943 = vmatmul.bf16.gmra.mxu0 %v3933
    %v3944 = vpop.f32.mrf.mxu0
    %v3945 = vadd.f32 %v3867, %v3944
    %v3946 = vpop.f32.mrf.mxu0
    %3947 = vdwg.mxu0
    %vm3948 = vcmp.gt.f32.partialorder %v3945, 0.0
    %v3949 = vmul.f32 %v3945, 1.442695
    %v3950 = vpow.pop %v3949
    %v3951 = vsub.f32 %v3950, 1.0
    %v3952 = vsel %vm3948, %v3945, %v3951
    %v3953 = vpack.c.bf16 %v3952, %v3952
    %v3955 = vsel %vm122, %v3953, 0
    %3957 = vmatpush.bf16.msra.mxu0 0
    %3958 = vmatpush.bf16.msra.mxu0 0
    %3959 = vmatpush.bf16.msra.mxu0 0
    %3960 = vmatpush.bf16.msra.mxu0 0
    %3961 = vmatpush.bf16.msra.mxu0 0
    %3962 = vmatpush.bf16.msra.mxu0 0
    %3963 = vmatpush.bf16.msra.mxu0 %v53
    %3964 = vmatpush.bf16.msra.mxu0 %v52
    %3965 = vmatmul.bf16.gmra.mxu0 %v3955
    %v3966 = vpop.f32.mrf.mxu0
    %v3967 = vadd.f32 %v120, %v3966
    %v3968 = vpop.f32.mrf.mxu0
    %3969 = vdwg.mxu0
    %vm3970 = vcmp.gt.f32.partialorder %v3967, 0.0
    %v3971 = vmul.f32 %v3967, 1.442695
    %v3972 = vpow.pop %v3971
    %v3973 = vsub.f32 %v3972, 1.0
    %v3974 = vsel %vm3970, %v3967, %v3973
    %v3975 = vpack.c.bf16 %v3974, %v3974
    %v3977 = vsel %vm122, %v3975, 0
    %3979 = vmatpush.bf16.msra.mxu0 0
    %3980 = vmatpush.bf16.msra.mxu0 0
    %3981 = vmatpush.bf16.msra.mxu0 0
    %3982 = vmatpush.bf16.msra.mxu0 0
    %3983 = vmatpush.bf16.msra.mxu0 0
    %3984 = vmatpush.bf16.msra.mxu0 0
    %3985 = vmatpush.bf16.msra.mxu0 %v59
    %3986 = vmatpush.bf16.msra.mxu0 %v58
    %3987 = vmatmul.bf16.gmra.mxu0 %v3977
    %v3988 = vpop.f32.mrf.mxu0
    %v3989 = vadd.f32 %v146, %v3988
    %v3990 = vpop.f32.mrf.mxu0
    %3991 = vdwg.mxu0
    %v3992 = vmul.f32 %v293, %v3989
    %v3993 = vadd.f32 %v3799, %v3992
    %v3994 = vpack.c.bf16 %v3993, %v3993
    %v3996 = vperm.slane %v3801, 0
    %v3999 = vsel %vm65, %v3994, 0
    %4001 = vmatpush.bf16.msra.mxu0 0
    %4002 = vmatpush.bf16.msra.mxu0 0
    %4003 = vmatpush.bf16.msra.mxu0 0
    %4004 = vmatpush.bf16.msra.mxu0 0
    %4005 = vmatpush.bf16.msra.mxu0 0
    %4006 = vmatpush.bf16.msra.mxu0 0
    %4007 = vmatpush.bf16.msra.mxu0 0
    %4008 = vmatpush.bf16.msra.mxu0 %v98
    %4009 = vmatmul.bf16.gmra.mxu0 %v3999
    %v4010 = vpop.f32.mrf.mxu0
    %v4011 = vadd.f32 %v3996, %v4010
    %v4012 = vpop.f32.mrf.mxu0
    %4013 = vdwg.mxu0
    %vm4014 = vcmp.gt.f32.partialorder %v4011, 0.0
    %v4015 = vmul.f32 %v4011, 1.442695
    %v4016 = vpow.pop %v4015
    %v4017 = vsub.f32 %v4016, 1.0
    %v4018 = vsel %vm4014, %v4011, %v4017
    %v4019 = vpack.c.bf16 %v4018, %v4018
    %v4021 = vsel %vm122, %v4019, 0
    %4023 = vmatpush.bf16.msra.mxu0 0
    %4024 = vmatpush.bf16.msra.mxu0 0
    %4025 = vmatpush.bf16.msra.mxu0 0
    %4026 = vmatpush.bf16.msra.mxu0 0
    %4027 = vmatpush.bf16.msra.mxu0 0
    %4028 = vmatpush.bf16.msra.mxu0 0
    %4029 = vmatpush.bf16.msra.mxu0 %v53
    %4030 = vmatpush.bf16.msra.mxu0 %v52
    %4031 = vmatmul.bf16.gmra.mxu0 %v4021
    %v4032 = vpop.f32.mrf.mxu0
    %v4033 = vadd.f32 %v120, %v4032
    %v4034 = vpop.f32.mrf.mxu0
    %4035 = vdwg.mxu0
    %vm4036 = vcmp.gt.f32.partialorder %v4033, 0.0
    %v4037 = vmul.f32 %v4033, 1.442695
    %v4038 = vpow.pop %v4037
    %v4039 = vsub.f32 %v4038, 1.0
    %v4040 = vsel %vm4036, %v4033, %v4039
    %v4041 = vpack.c.bf16 %v4040, %v4040
    %v4043 = vsel %vm122, %v4041, 0
    %4045 = vmatpush.bf16.msra.mxu0 0
    %4046 = vmatpush.bf16.msra.mxu0 0
    %4047 = vmatpush.bf16.msra.mxu0 0
    %4048 = vmatpush.bf16.msra.mxu0 0
    %4049 = vmatpush.bf16.msra.mxu0 0
    %4050 = vmatpush.bf16.msra.mxu0 0
    %4051 = vmatpush.bf16.msra.mxu0 %v59
    %4052 = vmatpush.bf16.msra.mxu0 %v58
    %4053 = vmatmul.bf16.gmra.mxu0 %v4043
    %v4054 = vpop.f32.mrf.mxu0
    %v4055 = vadd.f32 %v146, %v4054
    %v4056 = vpop.f32.mrf.mxu0
    %4057 = vdwg.mxu0
    %v4058 = vadd.f32 %v3860, %v4055
    %v4059 = vmul.f32 %v361, %v4058
    %v4060 = vadd.f32 %v3799, %v4059
    %v4061 = vadd.f32 %v3926, %v3989
    %v4062 = vmul.f32 %v365, %v4061
    %v4063 = vadd.f32 %v4060, %v4062
    %v4064 = vadd.f32 %v3801, %v83
    %v4065 = vadd.f32 %v4064, %v83
    %v4066 = vpack.c.bf16 %v4063, %v4063
    %v4068 = vsel %vm65, %v4066, 0
    %4070 = vmatpush.bf16.msra.mxu0 0
    %4071 = vmatpush.bf16.msra.mxu0 0
    %4072 = vmatpush.bf16.msra.mxu0 0
    %4073 = vmatpush.bf16.msra.mxu0 0
    %4074 = vmatpush.bf16.msra.mxu0 0
    %4075 = vmatpush.bf16.msra.mxu0 0
    %4076 = vmatpush.bf16.msra.mxu0 0
    %4077 = vmatpush.bf16.msra.mxu0 %v98
    %4078 = vmatmul.bf16.gmra.mxu0 %v4068
    %v4079 = vpop.f32.mrf.mxu0
    %v4080 = vadd.f32 %v3996, %v4079
    %v4081 = vpop.f32.mrf.mxu0
    %4082 = vdwg.mxu0
    %vm4083 = vcmp.gt.f32.partialorder %v4080, 0.0
    %v4084 = vmul.f32 %v4080, 1.442695
    %v4085 = vpow.pop %v4084
    %v4086 = vsub.f32 %v4085, 1.0
    %v4087 = vsel %vm4083, %v4080, %v4086
    %v4088 = vpack.c.bf16 %v4087, %v4087
    %v4090 = vsel %vm122, %v4088, 0
    %4092 = vmatpush.bf16.msra.mxu0 0
    %4093 = vmatpush.bf16.msra.mxu0 0
    %4094 = vmatpush.bf16.msra.mxu0 0
    %4095 = vmatpush.bf16.msra.mxu0 0
    %4096 = vmatpush.bf16.msra.mxu0 0
    %4097 = vmatpush.bf16.msra.mxu0 0
    %4098 = vmatpush.bf16.msra.mxu0 %v53
    %4099 = vmatpush.bf16.msra.mxu0 %v52
    %4100 = vmatmul.bf16.gmra.mxu0 %v4090
    %v4101 = vpop.f32.mrf.mxu0
    %v4102 = vadd.f32 %v120, %v4101
    %v4103 = vpop.f32.mrf.mxu0
    %4104 = vdwg.mxu0
    %vm4105 = vcmp.gt.f32.partialorder %v4102, 0.0
    %v4106 = vmul.f32 %v4102, 1.442695
    %v4107 = vpow.pop %v4106
    %v4108 = vsub.f32 %v4107, 1.0
    %v4109 = vsel %vm4105, %v4102, %v4108
    %v4110 = vpack.c.bf16 %v4109, %v4109
    %v4112 = vsel %vm122, %v4110, 0
    %4114 = vmatpush.bf16.msra.mxu0 0
    %4115 = vmatpush.bf16.msra.mxu0 0
    %4116 = vmatpush.bf16.msra.mxu0 0
    %4117 = vmatpush.bf16.msra.mxu0 0
    %4118 = vmatpush.bf16.msra.mxu0 0
    %4119 = vmatpush.bf16.msra.mxu0 0
    %4120 = vmatpush.bf16.msra.mxu0 %v59
    %4121 = vmatpush.bf16.msra.mxu0 %v58
    %4122 = vmatmul.bf16.gmra.mxu0 %v4112
    %v4123 = vpop.f32.mrf.mxu0
    %v4124 = vadd.f32 %v146, %v4123
    %v4125 = vpop.f32.mrf.mxu0
    %4126 = vdwg.mxu0
    %v4127 = vmul.f32 %v82, %v4124
    %v4128 = vadd.f32 %v4063, %v4127
    %v4129 = vpack.c.bf16 %v4128, %v4128
    %v4131 = vperm.slane %v4064, 0
    %v4134 = vsel %vm65, %v4129, 0
    %4136 = vmatpush.bf16.msra.mxu0 0
    %4137 = vmatpush.bf16.msra.mxu0 0
    %4138 = vmatpush.bf16.msra.mxu0 0
    %4139 = vmatpush.bf16.msra.mxu0 0
    %4140 = vmatpush.bf16.msra.mxu0 0
    %4141 = vmatpush.bf16.msra.mxu0 0
    %4142 = vmatpush.bf16.msra.mxu0 0
    %4143 = vmatpush.bf16.msra.mxu0 %v98
    %4144 = vmatmul.bf16.gmra.mxu0 %v4134
    %v4145 = vpop.f32.mrf.mxu0
    %v4146 = vadd.f32 %v4131, %v4145
    %v4147 = vpop.f32.mrf.mxu0
    %4148 = vdwg.mxu0
    %vm4149 = vcmp.gt.f32.partialorder %v4146, 0.0
    %v4150 = vmul.f32 %v4146, 1.442695
    %v4151 = vpow.pop %v4150
    %v4152 = vsub.f32 %v4151, 1.0
    %v4153 = vsel %vm4149, %v4146, %v4152
    %v4154 = vpack.c.bf16 %v4153, %v4153
    %v4156 = vsel %vm122, %v4154, 0
    %4158 = vmatpush.bf16.msra.mxu0 0
    %4159 = vmatpush.bf16.msra.mxu0 0
    %4160 = vmatpush.bf16.msra.mxu0 0
    %4161 = vmatpush.bf16.msra.mxu0 0
    %4162 = vmatpush.bf16.msra.mxu0 0
    %4163 = vmatpush.bf16.msra.mxu0 0
    %4164 = vmatpush.bf16.msra.mxu0 %v53
    %4165 = vmatpush.bf16.msra.mxu0 %v52
    %4166 = vmatmul.bf16.gmra.mxu0 %v4156
    %v4167 = vpop.f32.mrf.mxu0
    %v4168 = vadd.f32 %v120, %v4167
    %v4169 = vpop.f32.mrf.mxu0
    %4170 = vdwg.mxu0
    %vm4171 = vcmp.gt.f32.partialorder %v4168, 0.0
    %v4172 = vmul.f32 %v4168, 1.442695
    %v4173 = vpow.pop %v4172
    %v4174 = vsub.f32 %v4173, 1.0
    %v4175 = vsel %vm4171, %v4168, %v4174
    %v4176 = vpack.c.bf16 %v4175, %v4175
    %v4178 = vsel %vm122, %v4176, 0
    %4180 = vmatpush.bf16.msra.mxu0 0
    %4181 = vmatpush.bf16.msra.mxu0 0
    %4182 = vmatpush.bf16.msra.mxu0 0
    %4183 = vmatpush.bf16.msra.mxu0 0
    %4184 = vmatpush.bf16.msra.mxu0 0
    %4185 = vmatpush.bf16.msra.mxu0 0
    %4186 = vmatpush.bf16.msra.mxu0 %v59
    %4187 = vmatpush.bf16.msra.mxu0 %v58
    %4188 = vmatmul.bf16.gmra.mxu0 %v4178
    %v4189 = vpop.f32.mrf.mxu0
    %v4190 = vadd.f32 %v146, %v4189
    %v4191 = vpop.f32.mrf.mxu0
    %4192 = vdwg.mxu0
    %v4193 = vmul.f32 %v82, %v4190
    %v4194 = vadd.f32 %v4063, %v4193
    %v4195 = vpack.c.bf16 %v4194, %v4194
    %v4197 = vsel %vm65, %v4195, 0
    %4199 = vmatpush.bf16.msra.mxu0 0
    %4200 = vmatpush.bf16.msra.mxu0 0
    %4201 = vmatpush.bf16.msra.mxu0 0
    %4202 = vmatpush.bf16.msra.mxu0 0
    %4203 = vmatpush.bf16.msra.mxu0 0
    %4204 = vmatpush.bf16.msra.mxu0 0
    %4205 = vmatpush.bf16.msra.mxu0 0
    %4206 = vmatpush.bf16.msra.mxu0 %v98
    %4207 = vmatmul.bf16.gmra.mxu0 %v4197
    %v4208 = vpop.f32.mrf.mxu0
    %v4209 = vadd.f32 %v4131, %v4208
    %v4210 = vpop.f32.mrf.mxu0
    %4211 = vdwg.mxu0
    %vm4212 = vcmp.gt.f32.partialorder %v4209, 0.0
    %v4213 = vmul.f32 %v4209, 1.442695
    %v4214 = vpow.pop %v4213
    %v4215 = vsub.f32 %v4214, 1.0
    %v4216 = vsel %vm4212, %v4209, %v4215
    %v4217 = vpack.c.bf16 %v4216, %v4216
    %v4219 = vsel %vm122, %v4217, 0
    %4221 = vmatpush.bf16.msra.mxu0 0
    %4222 = vmatpush.bf16.msra.mxu0 0
    %4223 = vmatpush.bf16.msra.mxu0 0
    %4224 = vmatpush.bf16.msra.mxu0 0
    %4225 = vmatpush.bf16.msra.mxu0 0
    %4226 = vmatpush.bf16.msra.mxu0 0
    %4227 = vmatpush.bf16.msra.mxu0 %v53
    %4228 = vmatpush.bf16.msra.mxu0 %v52
    %4229 = vmatmul.bf16.gmra.mxu0 %v4219
    %v4230 = vpop.f32.mrf.mxu0
    %v4231 = vadd.f32 %v120, %v4230
    %v4232 = vpop.f32.mrf.mxu0
    %4233 = vdwg.mxu0
    %vm4234 = vcmp.gt.f32.partialorder %v4231, 0.0
    %v4235 = vmul.f32 %v4231, 1.442695
    %v4236 = vpow.pop %v4235
    %v4237 = vsub.f32 %v4236, 1.0
    %v4238 = vsel %vm4234, %v4231, %v4237
    %v4239 = vpack.c.bf16 %v4238, %v4238
    %v4241 = vsel %vm122, %v4239, 0
    %4243 = vmatpush.bf16.msra.mxu0 0
    %4244 = vmatpush.bf16.msra.mxu0 0
    %4245 = vmatpush.bf16.msra.mxu0 0
    %4246 = vmatpush.bf16.msra.mxu0 0
    %4247 = vmatpush.bf16.msra.mxu0 0
    %4248 = vmatpush.bf16.msra.mxu0 0
    %4249 = vmatpush.bf16.msra.mxu0 %v59
    %4250 = vmatpush.bf16.msra.mxu0 %v58
    %4251 = vmatmul.bf16.gmra.mxu0 %v4241
    %v4252 = vpop.f32.mrf.mxu0
    %v4253 = vadd.f32 %v146, %v4252
    %v4254 = vpop.f32.mrf.mxu0
    %4255 = vdwg.mxu0
    %v4256 = vmul.f32 %v293, %v4253
    %v4257 = vadd.f32 %v4063, %v4256
    %v4258 = vpack.c.bf16 %v4257, %v4257
    %v4260 = vperm.slane %v4065, 0
    %v4263 = vsel %vm65, %v4258, 0
    %4265 = vmatpush.bf16.msra.mxu0 0
    %4266 = vmatpush.bf16.msra.mxu0 0
    %4267 = vmatpush.bf16.msra.mxu0 0
    %4268 = vmatpush.bf16.msra.mxu0 0
    %4269 = vmatpush.bf16.msra.mxu0 0
    %4270 = vmatpush.bf16.msra.mxu0 0
    %4271 = vmatpush.bf16.msra.mxu0 0
    %4272 = vmatpush.bf16.msra.mxu0 %v98
    %4273 = vmatmul.bf16.gmra.mxu0 %v4263
    %v4274 = vpop.f32.mrf.mxu0
    %v4275 = vadd.f32 %v4260, %v4274
    %v4276 = vpop.f32.mrf.mxu0
    %4277 = vdwg.mxu0
    %vm4278 = vcmp.gt.f32.partialorder %v4275, 0.0
    %v4279 = vmul.f32 %v4275, 1.442695
    %v4280 = vpow.pop %v4279
    %v4281 = vsub.f32 %v4280, 1.0
    %v4282 = vsel %vm4278, %v4275, %v4281
    %v4283 = vpack.c.bf16 %v4282, %v4282
    %v4285 = vsel %vm122, %v4283, 0
    %4287 = vmatpush.bf16.msra.mxu0 0
    %4288 = vmatpush.bf16.msra.mxu0 0
    %4289 = vmatpush.bf16.msra.mxu0 0
    %4290 = vmatpush.bf16.msra.mxu0 0
    %4291 = vmatpush.bf16.msra.mxu0 0
    %4292 = vmatpush.bf16.msra.mxu0 0
    %4293 = vmatpush.bf16.msra.mxu0 %v53
    %4294 = vmatpush.bf16.msra.mxu0 %v52
    %4295 = vmatmul.bf16.gmra.mxu0 %v4285
    %v4296 = vpop.f32.mrf.mxu0
    %v4297 = vadd.f32 %v120, %v4296
    %v4298 = vpop.f32.mrf.mxu0
    %4299 = vdwg.mxu0
    %vm4300 = vcmp.gt.f32.partialorder %v4297, 0.0
    %v4301 = vmul.f32 %v4297, 1.442695
    %v4302 = vpow.pop %v4301
    %v4303 = vsub.f32 %v4302, 1.0
    %v4304 = vsel %vm4300, %v4297, %v4303
    %v4305 = vpack.c.bf16 %v4304, %v4304
    %v4307 = vsel %vm122, %v4305, 0
    %4309 = vmatpush.bf16.msra.mxu0 0
    %4310 = vmatpush.bf16.msra.mxu0 0
    %4311 = vmatpush.bf16.msra.mxu0 0
    %4312 = vmatpush.bf16.msra.mxu0 0
    %4313 = vmatpush.bf16.msra.mxu0 0
    %4314 = vmatpush.bf16.msra.mxu0 0
    %4315 = vmatpush.bf16.msra.mxu0 %v59
    %4316 = vmatpush.bf16.msra.mxu0 %v58
    %4317 = vmatmul.bf16.gmra.mxu0 %v4307
    %v4318 = vpop.f32.mrf.mxu0
    %v4319 = vadd.f32 %v146, %v4318
    %v4320 = vpop.f32.mrf.mxu0
    %4321 = vdwg.mxu0
    %v4322 = vadd.f32 %v4124, %v4319
    %v4323 = vmul.f32 %v361, %v4322
    %v4324 = vadd.f32 %v4063, %v4323
    %v4325 = vadd.f32 %v4190, %v4253
    %v4326 = vmul.f32 %v365, %v4325
    %v4327 = vadd.f32 %v4324, %v4326
    %v4328 = vadd.f32 %v4065, %v83
    %v4329 = vadd.f32 %v4328, %v83
    %v4330 = vpack.c.bf16 %v4327, %v4327
    %v4332 = vsel %vm65, %v4330, 0
    %4334 = vmatpush.bf16.msra.mxu0 0
    %4335 = vmatpush.bf16.msra.mxu0 0
    %4336 = vmatpush.bf16.msra.mxu0 0
    %4337 = vmatpush.bf16.msra.mxu0 0
    %4338 = vmatpush.bf16.msra.mxu0 0
    %4339 = vmatpush.bf16.msra.mxu0 0
    %4340 = vmatpush.bf16.msra.mxu0 0
    %4341 = vmatpush.bf16.msra.mxu0 %v98
    %4342 = vmatmul.bf16.gmra.mxu0 %v4332
    %v4343 = vpop.f32.mrf.mxu0
    %v4344 = vadd.f32 %v4260, %v4343
    %v4345 = vpop.f32.mrf.mxu0
    %4346 = vdwg.mxu0
    %vm4347 = vcmp.gt.f32.partialorder %v4344, 0.0
    %v4348 = vmul.f32 %v4344, 1.442695
    %v4349 = vpow.pop %v4348
    %v4350 = vsub.f32 %v4349, 1.0
    %v4351 = vsel %vm4347, %v4344, %v4350
    %v4352 = vpack.c.bf16 %v4351, %v4351
    %v4354 = vsel %vm122, %v4352, 0
    %4356 = vmatpush.bf16.msra.mxu0 0
    %4357 = vmatpush.bf16.msra.mxu0 0
    %4358 = vmatpush.bf16.msra.mxu0 0
    %4359 = vmatpush.bf16.msra.mxu0 0
    %4360 = vmatpush.bf16.msra.mxu0 0
    %4361 = vmatpush.bf16.msra.mxu0 0
    %4362 = vmatpush.bf16.msra.mxu0 %v53
    %4363 = vmatpush.bf16.msra.mxu0 %v52
    %4364 = vmatmul.bf16.gmra.mxu0 %v4354
    %v4365 = vpop.f32.mrf.mxu0
    %v4366 = vadd.f32 %v120, %v4365
    %v4367 = vpop.f32.mrf.mxu0
    %4368 = vdwg.mxu0
    %vm4369 = vcmp.gt.f32.partialorder %v4366, 0.0
    %v4370 = vmul.f32 %v4366, 1.442695
    %v4371 = vpow.pop %v4370
    %v4372 = vsub.f32 %v4371, 1.0
    %v4373 = vsel %vm4369, %v4366, %v4372
    %v4374 = vpack.c.bf16 %v4373, %v4373
    %v4376 = vsel %vm122, %v4374, 0
    %4378 = vmatpush.bf16.msra.mxu0 0
    %4379 = vmatpush.bf16.msra.mxu0 0
    %4380 = vmatpush.bf16.msra.mxu0 0
    %4381 = vmatpush.bf16.msra.mxu0 0
    %4382 = vmatpush.bf16.msra.mxu0 0
    %4383 = vmatpush.bf16.msra.mxu0 0
    %4384 = vmatpush.bf16.msra.mxu0 %v59
    %4385 = vmatpush.bf16.msra.mxu0 %v58
    %4386 = vmatmul.bf16.gmra.mxu0 %v4376
    %v4387 = vpop.f32.mrf.mxu0
    %v4388 = vadd.f32 %v146, %v4387
    %v4389 = vpop.f32.mrf.mxu0
    %4390 = vdwg.mxu0
    %v4391 = vmul.f32 %v82, %v4388
    %v4392 = vadd.f32 %v4327, %v4391
    %v4393 = vpack.c.bf16 %v4392, %v4392
    %v4395 = vperm.slane %v4328, 0
    %v4398 = vsel %vm65, %v4393, 0
    %4400 = vmatpush.bf16.msra.mxu0 0
    %4401 = vmatpush.bf16.msra.mxu0 0
    %4402 = vmatpush.bf16.msra.mxu0 0
    %4403 = vmatpush.bf16.msra.mxu0 0
    %4404 = vmatpush.bf16.msra.mxu0 0
    %4405 = vmatpush.bf16.msra.mxu0 0
    %4406 = vmatpush.bf16.msra.mxu0 0
    %4407 = vmatpush.bf16.msra.mxu0 %v98
    %4408 = vmatmul.bf16.gmra.mxu0 %v4398
    %v4409 = vpop.f32.mrf.mxu0
    %v4410 = vadd.f32 %v4395, %v4409
    %v4411 = vpop.f32.mrf.mxu0
    %4412 = vdwg.mxu0
    %vm4413 = vcmp.gt.f32.partialorder %v4410, 0.0
    %v4414 = vmul.f32 %v4410, 1.442695
    %v4415 = vpow.pop %v4414
    %v4416 = vsub.f32 %v4415, 1.0
    %v4417 = vsel %vm4413, %v4410, %v4416
    %v4418 = vpack.c.bf16 %v4417, %v4417
    %v4420 = vsel %vm122, %v4418, 0
    %4422 = vmatpush.bf16.msra.mxu0 0
    %4423 = vmatpush.bf16.msra.mxu0 0
    %4424 = vmatpush.bf16.msra.mxu0 0
    %4425 = vmatpush.bf16.msra.mxu0 0
    %4426 = vmatpush.bf16.msra.mxu0 0
    %4427 = vmatpush.bf16.msra.mxu0 0
    %4428 = vmatpush.bf16.msra.mxu0 %v53
    %4429 = vmatpush.bf16.msra.mxu0 %v52
    %4430 = vmatmul.bf16.gmra.mxu0 %v4420
    %v4431 = vpop.f32.mrf.mxu0
    %v4432 = vadd.f32 %v120, %v4431
    %v4433 = vpop.f32.mrf.mxu0
    %4434 = vdwg.mxu0
    %vm4435 = vcmp.gt.f32.partialorder %v4432, 0.0
    %v4436 = vmul.f32 %v4432, 1.442695
    %v4437 = vpow.pop %v4436
    %v4438 = vsub.f32 %v4437, 1.0
    %v4439 = vsel %vm4435, %v4432, %v4438
    %v4440 = vpack.c.bf16 %v4439, %v4439
    %v4442 = vsel %vm122, %v4440, 0
    %4444 = vmatpush.bf16.msra.mxu0 0
    %4445 = vmatpush.bf16.msra.mxu0 0
    %4446 = vmatpush.bf16.msra.mxu0 0
    %4447 = vmatpush.bf16.msra.mxu0 0
    %4448 = vmatpush.bf16.msra.mxu0 0
    %4449 = vmatpush.bf16.msra.mxu0 0
    %4450 = vmatpush.bf16.msra.mxu0 %v59
    %4451 = vmatpush.bf16.msra.mxu0 %v58
    %4452 = vmatmul.bf16.gmra.mxu0 %v4442
    %v4453 = vpop.f32.mrf.mxu0
    %v4454 = vadd.f32 %v146, %v4453
    %v4455 = vpop.f32.mrf.mxu0
    %4456 = vdwg.mxu0
    %v4457 = vmul.f32 %v82, %v4454
    %v4458 = vadd.f32 %v4327, %v4457
    %v4459 = vpack.c.bf16 %v4458, %v4458
    %v4461 = vsel %vm65, %v4459, 0
    %4463 = vmatpush.bf16.msra.mxu0 0
    %4464 = vmatpush.bf16.msra.mxu0 0
    %4465 = vmatpush.bf16.msra.mxu0 0
    %4466 = vmatpush.bf16.msra.mxu0 0
    %4467 = vmatpush.bf16.msra.mxu0 0
    %4468 = vmatpush.bf16.msra.mxu0 0
    %4469 = vmatpush.bf16.msra.mxu0 0
    %4470 = vmatpush.bf16.msra.mxu0 %v98
    %4471 = vmatmul.bf16.gmra.mxu0 %v4461
    %v4472 = vpop.f32.mrf.mxu0
    %v4473 = vadd.f32 %v4395, %v4472
    %v4474 = vpop.f32.mrf.mxu0
    %4475 = vdwg.mxu0
    %vm4476 = vcmp.gt.f32.partialorder %v4473, 0.0
    %v4477 = vmul.f32 %v4473, 1.442695
    %v4478 = vpow.pop %v4477
    %v4479 = vsub.f32 %v4478, 1.0
    %v4480 = vsel %vm4476, %v4473, %v4479
    %v4481 = vpack.c.bf16 %v4480, %v4480
    %v4483 = vsel %vm122, %v4481, 0
    %4485 = vmatpush.bf16.msra.mxu0 0
    %4486 = vmatpush.bf16.msra.mxu0 0
    %4487 = vmatpush.bf16.msra.mxu0 0
    %4488 = vmatpush.bf16.msra.mxu0 0
    %4489 = vmatpush.bf16.msra.mxu0 0
    %4490 = vmatpush.bf16.msra.mxu0 0
    %4491 = vmatpush.bf16.msra.mxu0 %v53
    %4492 = vmatpush.bf16.msra.mxu0 %v52
    %4493 = vmatmul.bf16.gmra.mxu0 %v4483
    %v4494 = vpop.f32.mrf.mxu0
    %v4495 = vadd.f32 %v120, %v4494
    %v4496 = vpop.f32.mrf.mxu0
    %4497 = vdwg.mxu0
    %vm4498 = vcmp.gt.f32.partialorder %v4495, 0.0
    %v4499 = vmul.f32 %v4495, 1.442695
    %v4500 = vpow.pop %v4499
    %v4501 = vsub.f32 %v4500, 1.0
    %v4502 = vsel %vm4498, %v4495, %v4501
    %v4503 = vpack.c.bf16 %v4502, %v4502
    %v4505 = vsel %vm122, %v4503, 0
    %4507 = vmatpush.bf16.msra.mxu0 0
    %4508 = vmatpush.bf16.msra.mxu0 0
    %4509 = vmatpush.bf16.msra.mxu0 0
    %4510 = vmatpush.bf16.msra.mxu0 0
    %4511 = vmatpush.bf16.msra.mxu0 0
    %4512 = vmatpush.bf16.msra.mxu0 0
    %4513 = vmatpush.bf16.msra.mxu0 %v59
    %4514 = vmatpush.bf16.msra.mxu0 %v58
    %4515 = vmatmul.bf16.gmra.mxu0 %v4505
    %v4516 = vpop.f32.mrf.mxu0
    %v4517 = vadd.f32 %v146, %v4516
    %v4518 = vpop.f32.mrf.mxu0
    %4519 = vdwg.mxu0
    %v4520 = vmul.f32 %v293, %v4517
    %v4521 = vadd.f32 %v4327, %v4520
    %v4522 = vpack.c.bf16 %v4521, %v4521
    %v4524 = vperm.slane %v4329, 0
    %v4527 = vsel %vm65, %v4522, 0
    %4529 = vmatpush.bf16.msra.mxu0 0
    %4530 = vmatpush.bf16.msra.mxu0 0
    %4531 = vmatpush.bf16.msra.mxu0 0
    %4532 = vmatpush.bf16.msra.mxu0 0
    %4533 = vmatpush.bf16.msra.mxu0 0
    %4534 = vmatpush.bf16.msra.mxu0 0
    %4535 = vmatpush.bf16.msra.mxu0 0
    %4536 = vmatpush.bf16.msra.mxu0 %v98
    %4537 = vmatmul.bf16.gmra.mxu0 %v4527
    %v4538 = vpop.f32.mrf.mxu0
    %v4539 = vadd.f32 %v4524, %v4538
    %v4540 = vpop.f32.mrf.mxu0
    %4541 = vdwg.mxu0
    %vm4542 = vcmp.gt.f32.partialorder %v4539, 0.0
    %v4543 = vmul.f32 %v4539, 1.442695
    %v4544 = vpow.pop %v4543
    %v4545 = vsub.f32 %v4544, 1.0
    %v4546 = vsel %vm4542, %v4539, %v4545
    %v4547 = vpack.c.bf16 %v4546, %v4546
    %v4549 = vsel %vm122, %v4547, 0
    %4551 = vmatpush.bf16.msra.mxu0 0
    %4552 = vmatpush.bf16.msra.mxu0 0
    %4553 = vmatpush.bf16.msra.mxu0 0
    %4554 = vmatpush.bf16.msra.mxu0 0
    %4555 = vmatpush.bf16.msra.mxu0 0
    %4556 = vmatpush.bf16.msra.mxu0 0
    %4557 = vmatpush.bf16.msra.mxu0 %v53
    %4558 = vmatpush.bf16.msra.mxu0 %v52
    %4559 = vmatmul.bf16.gmra.mxu0 %v4549
    %v4560 = vpop.f32.mrf.mxu0
    %v4561 = vadd.f32 %v120, %v4560
    %v4562 = vpop.f32.mrf.mxu0
    %4563 = vdwg.mxu0
    %vm4564 = vcmp.gt.f32.partialorder %v4561, 0.0
    %v4565 = vmul.f32 %v4561, 1.442695
    %v4566 = vpow.pop %v4565
    %v4567 = vsub.f32 %v4566, 1.0
    %v4568 = vsel %vm4564, %v4561, %v4567
    %v4569 = vpack.c.bf16 %v4568, %v4568
    %v4571 = vsel %vm122, %v4569, 0
    %4573 = vmatpush.bf16.msra.mxu0 0
    %4574 = vmatpush.bf16.msra.mxu0 0
    %4575 = vmatpush.bf16.msra.mxu0 0
    %4576 = vmatpush.bf16.msra.mxu0 0
    %4577 = vmatpush.bf16.msra.mxu0 0
    %4578 = vmatpush.bf16.msra.mxu0 0
    %4579 = vmatpush.bf16.msra.mxu0 %v59
    %4580 = vmatpush.bf16.msra.mxu0 %v58
    %4581 = vmatmul.bf16.gmra.mxu0 %v4571
    %v4582 = vpop.f32.mrf.mxu0
    %v4583 = vadd.f32 %v146, %v4582
    %v4584 = vpop.f32.mrf.mxu0
    %4585 = vdwg.mxu0
    %v4586 = vadd.f32 %v4388, %v4583
    %v4587 = vmul.f32 %v361, %v4586
    %v4588 = vadd.f32 %v4327, %v4587
    %v4589 = vadd.f32 %v4454, %v4517
    %v4590 = vmul.f32 %v365, %v4589
    %v4591 = vadd.f32 %v4588, %v4590
    %v4592 = vadd.f32 %v4329, %v83
    %v4593 = vadd.f32 %v4592, %v83
    %v4594 = vpack.c.bf16 %v4591, %v4591
    %v4596 = vsel %vm65, %v4594, 0
    %4598 = vmatpush.bf16.msra.mxu0 0
    %4599 = vmatpush.bf16.msra.mxu0 0
    %4600 = vmatpush.bf16.msra.mxu0 0
    %4601 = vmatpush.bf16.msra.mxu0 0
    %4602 = vmatpush.bf16.msra.mxu0 0
    %4603 = vmatpush.bf16.msra.mxu0 0
    %4604 = vmatpush.bf16.msra.mxu0 0
    %4605 = vmatpush.bf16.msra.mxu0 %v98
    %4606 = vmatmul.bf16.gmra.mxu0 %v4596
    %v4607 = vpop.f32.mrf.mxu0
    %v4608 = vadd.f32 %v4524, %v4607
    %v4609 = vpop.f32.mrf.mxu0
    %4610 = vdwg.mxu0
    %vm4611 = vcmp.gt.f32.partialorder %v4608, 0.0
    %v4612 = vmul.f32 %v4608, 1.442695
    %v4613 = vpow.pop %v4612
    %v4614 = vsub.f32 %v4613, 1.0
    %v4615 = vsel %vm4611, %v4608, %v4614
    %v4616 = vpack.c.bf16 %v4615, %v4615
    %v4618 = vsel %vm122, %v4616, 0
    %4620 = vmatpush.bf16.msra.mxu0 0
    %4621 = vmatpush.bf16.msra.mxu0 0
    %4622 = vmatpush.bf16.msra.mxu0 0
    %4623 = vmatpush.bf16.msra.mxu0 0
    %4624 = vmatpush.bf16.msra.mxu0 0
    %4625 = vmatpush.bf16.msra.mxu0 0
    %4626 = vmatpush.bf16.msra.mxu0 %v53
    %4627 = vmatpush.bf16.msra.mxu0 %v52
    %4628 = vmatmul.bf16.gmra.mxu0 %v4618
    %v4629 = vpop.f32.mrf.mxu0
    %v4630 = vadd.f32 %v120, %v4629
    %v4631 = vpop.f32.mrf.mxu0
    %4632 = vdwg.mxu0
    %vm4633 = vcmp.gt.f32.partialorder %v4630, 0.0
    %v4634 = vmul.f32 %v4630, 1.442695
    %v4635 = vpow.pop %v4634
    %v4636 = vsub.f32 %v4635, 1.0
    %v4637 = vsel %vm4633, %v4630, %v4636
    %v4638 = vpack.c.bf16 %v4637, %v4637
    %v4640 = vsel %vm122, %v4638, 0
    %4642 = vmatpush.bf16.msra.mxu0 0
    %4643 = vmatpush.bf16.msra.mxu0 0
    %4644 = vmatpush.bf16.msra.mxu0 0
    %4645 = vmatpush.bf16.msra.mxu0 0
    %4646 = vmatpush.bf16.msra.mxu0 0
    %4647 = vmatpush.bf16.msra.mxu0 0
    %4648 = vmatpush.bf16.msra.mxu0 %v59
    %4649 = vmatpush.bf16.msra.mxu0 %v58
    %4650 = vmatmul.bf16.gmra.mxu0 %v4640
    %v4651 = vpop.f32.mrf.mxu0
    %v4652 = vadd.f32 %v146, %v4651
    %v4653 = vpop.f32.mrf.mxu0
    %4654 = vdwg.mxu0
    %v4655 = vmul.f32 %v82, %v4652
    %v4656 = vadd.f32 %v4591, %v4655
    %v4657 = vpack.c.bf16 %v4656, %v4656
    %v4659 = vperm.slane %v4592, 0
    %v4662 = vsel %vm65, %v4657, 0
    %4664 = vmatpush.bf16.msra.mxu0 0
    %4665 = vmatpush.bf16.msra.mxu0 0
    %4666 = vmatpush.bf16.msra.mxu0 0
    %4667 = vmatpush.bf16.msra.mxu0 0
    %4668 = vmatpush.bf16.msra.mxu0 0
    %4669 = vmatpush.bf16.msra.mxu0 0
    %4670 = vmatpush.bf16.msra.mxu0 0
    %4671 = vmatpush.bf16.msra.mxu0 %v98
    %4672 = vmatmul.bf16.gmra.mxu0 %v4662
    %v4673 = vpop.f32.mrf.mxu0
    %v4674 = vadd.f32 %v4659, %v4673
    %v4675 = vpop.f32.mrf.mxu0
    %4676 = vdwg.mxu0
    %vm4677 = vcmp.gt.f32.partialorder %v4674, 0.0
    %v4678 = vmul.f32 %v4674, 1.442695
    %v4679 = vpow.pop %v4678
    %v4680 = vsub.f32 %v4679, 1.0
    %v4681 = vsel %vm4677, %v4674, %v4680
    %v4682 = vpack.c.bf16 %v4681, %v4681
    %v4684 = vsel %vm122, %v4682, 0
    %4686 = vmatpush.bf16.msra.mxu0 0
    %4687 = vmatpush.bf16.msra.mxu0 0
    %4688 = vmatpush.bf16.msra.mxu0 0
    %4689 = vmatpush.bf16.msra.mxu0 0
    %4690 = vmatpush.bf16.msra.mxu0 0
    %4691 = vmatpush.bf16.msra.mxu0 0
    %4692 = vmatpush.bf16.msra.mxu0 %v53
    %4693 = vmatpush.bf16.msra.mxu0 %v52
    %4694 = vmatmul.bf16.gmra.mxu0 %v4684
    %v4695 = vpop.f32.mrf.mxu0
    %v4696 = vadd.f32 %v120, %v4695
    %v4697 = vpop.f32.mrf.mxu0
    %4698 = vdwg.mxu0
    %vm4699 = vcmp.gt.f32.partialorder %v4696, 0.0
    %v4700 = vmul.f32 %v4696, 1.442695
    %v4701 = vpow.pop %v4700
    %v4702 = vsub.f32 %v4701, 1.0
    %v4703 = vsel %vm4699, %v4696, %v4702
    %v4704 = vpack.c.bf16 %v4703, %v4703
    %v4706 = vsel %vm122, %v4704, 0
    %4708 = vmatpush.bf16.msra.mxu0 0
    %4709 = vmatpush.bf16.msra.mxu0 0
    %4710 = vmatpush.bf16.msra.mxu0 0
    %4711 = vmatpush.bf16.msra.mxu0 0
    %4712 = vmatpush.bf16.msra.mxu0 0
    %4713 = vmatpush.bf16.msra.mxu0 0
    %4714 = vmatpush.bf16.msra.mxu0 %v59
    %4715 = vmatpush.bf16.msra.mxu0 %v58
    %4716 = vmatmul.bf16.gmra.mxu0 %v4706
    %v4717 = vpop.f32.mrf.mxu0
    %v4718 = vadd.f32 %v146, %v4717
    %v4719 = vpop.f32.mrf.mxu0
    %4720 = vdwg.mxu0
    %v4721 = vmul.f32 %v82, %v4718
    %v4722 = vadd.f32 %v4591, %v4721
    %v4723 = vpack.c.bf16 %v4722, %v4722
    %v4725 = vsel %vm65, %v4723, 0
    %4727 = vmatpush.bf16.msra.mxu0 0
    %4728 = vmatpush.bf16.msra.mxu0 0
    %4729 = vmatpush.bf16.msra.mxu0 0
    %4730 = vmatpush.bf16.msra.mxu0 0
    %4731 = vmatpush.bf16.msra.mxu0 0
    %4732 = vmatpush.bf16.msra.mxu0 0
    %4733 = vmatpush.bf16.msra.mxu0 0
    %4734 = vmatpush.bf16.msra.mxu0 %v98
    %4735 = vmatmul.bf16.gmra.mxu0 %v4725
    %v4736 = vpop.f32.mrf.mxu0
    %v4737 = vadd.f32 %v4659, %v4736
    %v4738 = vpop.f32.mrf.mxu0
    %4739 = vdwg.mxu0
    %vm4740 = vcmp.gt.f32.partialorder %v4737, 0.0
    %v4741 = vmul.f32 %v4737, 1.442695
    %v4742 = vpow.pop %v4741
    %v4743 = vsub.f32 %v4742, 1.0
    %v4744 = vsel %vm4740, %v4737, %v4743
    %v4745 = vpack.c.bf16 %v4744, %v4744
    %v4747 = vsel %vm122, %v4745, 0
    %4749 = vmatpush.bf16.msra.mxu0 0
    %4750 = vmatpush.bf16.msra.mxu0 0
    %4751 = vmatpush.bf16.msra.mxu0 0
    %4752 = vmatpush.bf16.msra.mxu0 0
    %4753 = vmatpush.bf16.msra.mxu0 0
    %4754 = vmatpush.bf16.msra.mxu0 0
    %4755 = vmatpush.bf16.msra.mxu0 %v53
    %4756 = vmatpush.bf16.msra.mxu0 %v52
    %4757 = vmatmul.bf16.gmra.mxu0 %v4747
    %v4758 = vpop.f32.mrf.mxu0
    %v4759 = vadd.f32 %v120, %v4758
    %v4760 = vpop.f32.mrf.mxu0
    %4761 = vdwg.mxu0
    %vm4762 = vcmp.gt.f32.partialorder %v4759, 0.0
    %v4763 = vmul.f32 %v4759, 1.442695
    %v4764 = vpow.pop %v4763
    %v4765 = vsub.f32 %v4764, 1.0
    %v4766 = vsel %vm4762, %v4759, %v4765
    %v4767 = vpack.c.bf16 %v4766, %v4766
    %v4769 = vsel %vm122, %v4767, 0
    %4771 = vmatpush.bf16.msra.mxu0 0
    %4772 = vmatpush.bf16.msra.mxu0 0
    %4773 = vmatpush.bf16.msra.mxu0 0
    %4774 = vmatpush.bf16.msra.mxu0 0
    %4775 = vmatpush.bf16.msra.mxu0 0
    %4776 = vmatpush.bf16.msra.mxu0 0
    %4777 = vmatpush.bf16.msra.mxu0 %v59
    %4778 = vmatpush.bf16.msra.mxu0 %v58
    %4779 = vmatmul.bf16.gmra.mxu0 %v4769
    %v4780 = vpop.f32.mrf.mxu0
    %v4781 = vadd.f32 %v146, %v4780
    %v4782 = vpop.f32.mrf.mxu0
    %4783 = vdwg.mxu0
    %v4784 = vmul.f32 %v293, %v4781
    %v4785 = vadd.f32 %v4591, %v4784
    %v4786 = vpack.c.bf16 %v4785, %v4785
    %v4788 = vperm.slane %v4593, 0
    %v4791 = vsel %vm65, %v4786, 0
    %4793 = vmatpush.bf16.msra.mxu0 0
    %4794 = vmatpush.bf16.msra.mxu0 0
    %4795 = vmatpush.bf16.msra.mxu0 0
    %4796 = vmatpush.bf16.msra.mxu0 0
    %4797 = vmatpush.bf16.msra.mxu0 0
    %4798 = vmatpush.bf16.msra.mxu0 0
    %4799 = vmatpush.bf16.msra.mxu0 0
    %4800 = vmatpush.bf16.msra.mxu0 %v98
    %4801 = vmatmul.bf16.gmra.mxu0 %v4791
    %v4802 = vpop.f32.mrf.mxu0
    %v4803 = vadd.f32 %v4788, %v4802
    %v4804 = vpop.f32.mrf.mxu0
    %4805 = vdwg.mxu0
    %vm4806 = vcmp.gt.f32.partialorder %v4803, 0.0
    %v4807 = vmul.f32 %v4803, 1.442695
    %v4808 = vpow.pop %v4807
    %v4809 = vsub.f32 %v4808, 1.0
    %v4810 = vsel %vm4806, %v4803, %v4809
    %v4811 = vpack.c.bf16 %v4810, %v4810
    %v4813 = vsel %vm122, %v4811, 0
    %4815 = vmatpush.bf16.msra.mxu0 0
    %4816 = vmatpush.bf16.msra.mxu0 0
    %4817 = vmatpush.bf16.msra.mxu0 0
    %4818 = vmatpush.bf16.msra.mxu0 0
    %4819 = vmatpush.bf16.msra.mxu0 0
    %4820 = vmatpush.bf16.msra.mxu0 0
    %4821 = vmatpush.bf16.msra.mxu0 %v53
    %4822 = vmatpush.bf16.msra.mxu0 %v52
    %4823 = vmatmul.bf16.gmra.mxu0 %v4813
    %v4824 = vpop.f32.mrf.mxu0
    %v4825 = vadd.f32 %v120, %v4824
    %v4826 = vpop.f32.mrf.mxu0
    %4827 = vdwg.mxu0
    %vm4828 = vcmp.gt.f32.partialorder %v4825, 0.0
    %v4829 = vmul.f32 %v4825, 1.442695
    %v4830 = vpow.pop %v4829
    %v4831 = vsub.f32 %v4830, 1.0
    %v4832 = vsel %vm4828, %v4825, %v4831
    %v4833 = vpack.c.bf16 %v4832, %v4832
    %v4835 = vsel %vm122, %v4833, 0
    %4837 = vmatpush.bf16.msra.mxu0 0
    %4838 = vmatpush.bf16.msra.mxu0 0
    %4839 = vmatpush.bf16.msra.mxu0 0
    %4840 = vmatpush.bf16.msra.mxu0 0
    %4841 = vmatpush.bf16.msra.mxu0 0
    %4842 = vmatpush.bf16.msra.mxu0 0
    %4843 = vmatpush.bf16.msra.mxu0 %v59
    %4844 = vmatpush.bf16.msra.mxu0 %v58
    %4845 = vmatmul.bf16.gmra.mxu0 %v4835
    %v4846 = vpop.f32.mrf.mxu0
    %v4847 = vadd.f32 %v146, %v4846
    %v4848 = vpop.f32.mrf.mxu0
    %4849 = vdwg.mxu0
    %v4850 = vadd.f32 %v4652, %v4847
    %v4851 = vmul.f32 %v361, %v4850
    %v4852 = vadd.f32 %v4591, %v4851
    %v4853 = vadd.f32 %v4718, %v4781
    %v4854 = vmul.f32 %v365, %v4853
    %v4855 = vadd.f32 %v4852, %v4854
    %v4856 = vadd.f32 %v4593, %v83
    %v4857 = vadd.f32 %v4856, %v83
    %v4858 = vpack.c.bf16 %v4855, %v4855
    %v4860 = vsel %vm65, %v4858, 0
    %4862 = vmatpush.bf16.msra.mxu0 0
    %4863 = vmatpush.bf16.msra.mxu0 0
    %4864 = vmatpush.bf16.msra.mxu0 0
    %4865 = vmatpush.bf16.msra.mxu0 0
    %4866 = vmatpush.bf16.msra.mxu0 0
    %4867 = vmatpush.bf16.msra.mxu0 0
    %4868 = vmatpush.bf16.msra.mxu0 0
    %4869 = vmatpush.bf16.msra.mxu0 %v98
    %4870 = vmatmul.bf16.gmra.mxu0 %v4860
    %v4871 = vpop.f32.mrf.mxu0
    %v4872 = vadd.f32 %v4788, %v4871
    %v4873 = vpop.f32.mrf.mxu0
    %4874 = vdwg.mxu0
    %vm4875 = vcmp.gt.f32.partialorder %v4872, 0.0
    %v4876 = vmul.f32 %v4872, 1.442695
    %v4877 = vpow.pop %v4876
    %v4878 = vsub.f32 %v4877, 1.0
    %v4879 = vsel %vm4875, %v4872, %v4878
    %v4880 = vpack.c.bf16 %v4879, %v4879
    %v4882 = vsel %vm122, %v4880, 0
    %4884 = vmatpush.bf16.msra.mxu0 0
    %4885 = vmatpush.bf16.msra.mxu0 0
    %4886 = vmatpush.bf16.msra.mxu0 0
    %4887 = vmatpush.bf16.msra.mxu0 0
    %4888 = vmatpush.bf16.msra.mxu0 0
    %4889 = vmatpush.bf16.msra.mxu0 0
    %4890 = vmatpush.bf16.msra.mxu0 %v53
    %4891 = vmatpush.bf16.msra.mxu0 %v52
    %4892 = vmatmul.bf16.gmra.mxu0 %v4882
    %v4893 = vpop.f32.mrf.mxu0
    %v4894 = vadd.f32 %v120, %v4893
    %v4895 = vpop.f32.mrf.mxu0
    %4896 = vdwg.mxu0
    %vm4897 = vcmp.gt.f32.partialorder %v4894, 0.0
    %v4898 = vmul.f32 %v4894, 1.442695
    %v4899 = vpow.pop %v4898
    %v4900 = vsub.f32 %v4899, 1.0
    %v4901 = vsel %vm4897, %v4894, %v4900
    %v4902 = vpack.c.bf16 %v4901, %v4901
    %v4904 = vsel %vm122, %v4902, 0
    %4906 = vmatpush.bf16.msra.mxu0 0
    %4907 = vmatpush.bf16.msra.mxu0 0
    %4908 = vmatpush.bf16.msra.mxu0 0
    %4909 = vmatpush.bf16.msra.mxu0 0
    %4910 = vmatpush.bf16.msra.mxu0 0
    %4911 = vmatpush.bf16.msra.mxu0 0
    %4912 = vmatpush.bf16.msra.mxu0 %v59
    %4913 = vmatpush.bf16.msra.mxu0 %v58
    %4914 = vmatmul.bf16.gmra.mxu0 %v4904
    %v4915 = vpop.f32.mrf.mxu0
    %v4916 = vadd.f32 %v146, %v4915
    %v4917 = vpop.f32.mrf.mxu0
    %4918 = vdwg.mxu0
    %v4919 = vmul.f32 %v82, %v4916
    %v4920 = vadd.f32 %v4855, %v4919
    %v4921 = vpack.c.bf16 %v4920, %v4920
    %v4923 = vperm.slane %v4856, 0
    %v4926 = vsel %vm65, %v4921, 0
    %4928 = vmatpush.bf16.msra.mxu0 0
    %4929 = vmatpush.bf16.msra.mxu0 0
    %4930 = vmatpush.bf16.msra.mxu0 0
    %4931 = vmatpush.bf16.msra.mxu0 0
    %4932 = vmatpush.bf16.msra.mxu0 0
    %4933 = vmatpush.bf16.msra.mxu0 0
    %4934 = vmatpush.bf16.msra.mxu0 0
    %4935 = vmatpush.bf16.msra.mxu0 %v98
    %4936 = vmatmul.bf16.gmra.mxu0 %v4926
    %v4937 = vpop.f32.mrf.mxu0
    %v4938 = vadd.f32 %v4923, %v4937
    %v4939 = vpop.f32.mrf.mxu0
    %4940 = vdwg.mxu0
    %vm4941 = vcmp.gt.f32.partialorder %v4938, 0.0
    %v4942 = vmul.f32 %v4938, 1.442695
    %v4943 = vpow.pop %v4942
    %v4944 = vsub.f32 %v4943, 1.0
    %v4945 = vsel %vm4941, %v4938, %v4944
    %v4946 = vpack.c.bf16 %v4945, %v4945
    %v4948 = vsel %vm122, %v4946, 0
    %4950 = vmatpush.bf16.msra.mxu0 0
    %4951 = vmatpush.bf16.msra.mxu0 0
    %4952 = vmatpush.bf16.msra.mxu0 0
    %4953 = vmatpush.bf16.msra.mxu0 0
    %4954 = vmatpush.bf16.msra.mxu0 0
    %4955 = vmatpush.bf16.msra.mxu0 0
    %4956 = vmatpush.bf16.msra.mxu0 %v53
    %4957 = vmatpush.bf16.msra.mxu0 %v52
    %4958 = vmatmul.bf16.gmra.mxu0 %v4948
    %v4959 = vpop.f32.mrf.mxu0
    %v4960 = vadd.f32 %v120, %v4959
    %v4961 = vpop.f32.mrf.mxu0
    %4962 = vdwg.mxu0
    %vm4963 = vcmp.gt.f32.partialorder %v4960, 0.0
    %v4964 = vmul.f32 %v4960, 1.442695
    %v4965 = vpow.pop %v4964
    %v4966 = vsub.f32 %v4965, 1.0
    %v4967 = vsel %vm4963, %v4960, %v4966
    %v4968 = vpack.c.bf16 %v4967, %v4967
    %v4970 = vsel %vm122, %v4968, 0
    %4972 = vmatpush.bf16.msra.mxu0 0
    %4973 = vmatpush.bf16.msra.mxu0 0
    %4974 = vmatpush.bf16.msra.mxu0 0
    %4975 = vmatpush.bf16.msra.mxu0 0
    %4976 = vmatpush.bf16.msra.mxu0 0
    %4977 = vmatpush.bf16.msra.mxu0 0
    %4978 = vmatpush.bf16.msra.mxu0 %v59
    %4979 = vmatpush.bf16.msra.mxu0 %v58
    %4980 = vmatmul.bf16.gmra.mxu0 %v4970
    %v4981 = vpop.f32.mrf.mxu0
    %v4982 = vadd.f32 %v146, %v4981
    %v4983 = vpop.f32.mrf.mxu0
    %4984 = vdwg.mxu0
    %v4985 = vmul.f32 %v82, %v4982
    %v4986 = vadd.f32 %v4855, %v4985
    %v4987 = vpack.c.bf16 %v4986, %v4986
    %v4989 = vsel %vm65, %v4987, 0
    %4991 = vmatpush.bf16.msra.mxu0 0
    %4992 = vmatpush.bf16.msra.mxu0 0
    %4993 = vmatpush.bf16.msra.mxu0 0
    %4994 = vmatpush.bf16.msra.mxu0 0
    %4995 = vmatpush.bf16.msra.mxu0 0
    %4996 = vmatpush.bf16.msra.mxu0 0
    %4997 = vmatpush.bf16.msra.mxu0 0
    %4998 = vmatpush.bf16.msra.mxu0 %v98
    %4999 = vmatmul.bf16.gmra.mxu0 %v4989
    %v5000 = vpop.f32.mrf.mxu0
    %v5001 = vadd.f32 %v4923, %v5000
    %v5002 = vpop.f32.mrf.mxu0
    %5003 = vdwg.mxu0
    %vm5004 = vcmp.gt.f32.partialorder %v5001, 0.0
    %v5005 = vmul.f32 %v5001, 1.442695
    %v5006 = vpow.pop %v5005
    %v5007 = vsub.f32 %v5006, 1.0
    %v5008 = vsel %vm5004, %v5001, %v5007
    %v5009 = vpack.c.bf16 %v5008, %v5008
    %v5011 = vsel %vm122, %v5009, 0
    %5013 = vmatpush.bf16.msra.mxu0 0
    %5014 = vmatpush.bf16.msra.mxu0 0
    %5015 = vmatpush.bf16.msra.mxu0 0
    %5016 = vmatpush.bf16.msra.mxu0 0
    %5017 = vmatpush.bf16.msra.mxu0 0
    %5018 = vmatpush.bf16.msra.mxu0 0
    %5019 = vmatpush.bf16.msra.mxu0 %v53
    %5020 = vmatpush.bf16.msra.mxu0 %v52
    %5021 = vmatmul.bf16.gmra.mxu0 %v5011
    %v5022 = vpop.f32.mrf.mxu0
    %v5023 = vadd.f32 %v120, %v5022
    %v5024 = vpop.f32.mrf.mxu0
    %5025 = vdwg.mxu0
    %vm5026 = vcmp.gt.f32.partialorder %v5023, 0.0
    %v5027 = vmul.f32 %v5023, 1.442695
    %v5028 = vpow.pop %v5027
    %v5029 = vsub.f32 %v5028, 1.0
    %v5030 = vsel %vm5026, %v5023, %v5029
    %v5031 = vpack.c.bf16 %v5030, %v5030
    %v5033 = vsel %vm122, %v5031, 0
    %5035 = vmatpush.bf16.msra.mxu0 0
    %5036 = vmatpush.bf16.msra.mxu0 0
    %5037 = vmatpush.bf16.msra.mxu0 0
    %5038 = vmatpush.bf16.msra.mxu0 0
    %5039 = vmatpush.bf16.msra.mxu0 0
    %5040 = vmatpush.bf16.msra.mxu0 0
    %5041 = vmatpush.bf16.msra.mxu0 %v59
    %5042 = vmatpush.bf16.msra.mxu0 %v58
    %5043 = vmatmul.bf16.gmra.mxu0 %v5033
    %v5044 = vpop.f32.mrf.mxu0
    %v5045 = vadd.f32 %v146, %v5044
    %v5046 = vpop.f32.mrf.mxu0
    %5047 = vdwg.mxu0
    %v5048 = vmul.f32 %v293, %v5045
    %v5049 = vadd.f32 %v4855, %v5048
    %v5050 = vpack.c.bf16 %v5049, %v5049
    %v5052 = vperm.slane %v4857, 0
    %v5055 = vsel %vm65, %v5050, 0
    %5057 = vmatpush.bf16.msra.mxu0 0
    %5058 = vmatpush.bf16.msra.mxu0 0
    %5059 = vmatpush.bf16.msra.mxu0 0
    %5060 = vmatpush.bf16.msra.mxu0 0
    %5061 = vmatpush.bf16.msra.mxu0 0
    %5062 = vmatpush.bf16.msra.mxu0 0
    %5063 = vmatpush.bf16.msra.mxu0 0
    %5064 = vmatpush.bf16.msra.mxu0 %v98
    %5065 = vmatmul.bf16.gmra.mxu0 %v5055
    %v5066 = vpop.f32.mrf.mxu0
    %v5067 = vadd.f32 %v5052, %v5066
    %v5068 = vpop.f32.mrf.mxu0
    %5069 = vdwg.mxu0
    %vm5070 = vcmp.gt.f32.partialorder %v5067, 0.0
    %v5071 = vmul.f32 %v5067, 1.442695
    %v5072 = vpow.pop %v5071
    %v5073 = vsub.f32 %v5072, 1.0
    %v5074 = vsel %vm5070, %v5067, %v5073
    %v5075 = vpack.c.bf16 %v5074, %v5074
    %v5077 = vsel %vm122, %v5075, 0
    %5079 = vmatpush.bf16.msra.mxu0 0
    %5080 = vmatpush.bf16.msra.mxu0 0
    %5081 = vmatpush.bf16.msra.mxu0 0
    %5082 = vmatpush.bf16.msra.mxu0 0
    %5083 = vmatpush.bf16.msra.mxu0 0
    %5084 = vmatpush.bf16.msra.mxu0 0
    %5085 = vmatpush.bf16.msra.mxu0 %v53
    %5086 = vmatpush.bf16.msra.mxu0 %v52
    %5087 = vmatmul.bf16.gmra.mxu0 %v5077
    %v5088 = vpop.f32.mrf.mxu0
    %v5089 = vadd.f32 %v120, %v5088
    %v5090 = vpop.f32.mrf.mxu0
    %5091 = vdwg.mxu0
    %vm5092 = vcmp.gt.f32.partialorder %v5089, 0.0
    %v5093 = vmul.f32 %v5089, 1.442695
    %v5094 = vpow.pop %v5093
    %v5095 = vsub.f32 %v5094, 1.0
    %v5096 = vsel %vm5092, %v5089, %v5095
    %v5097 = vpack.c.bf16 %v5096, %v5096
    %v5099 = vsel %vm122, %v5097, 0
    %5101 = vmatpush.bf16.msra.mxu0 0
    %5102 = vmatpush.bf16.msra.mxu0 0
    %5103 = vmatpush.bf16.msra.mxu0 0
    %5104 = vmatpush.bf16.msra.mxu0 0
    %5105 = vmatpush.bf16.msra.mxu0 0
    %5106 = vmatpush.bf16.msra.mxu0 0
    %5107 = vmatpush.bf16.msra.mxu0 %v59
    %5108 = vmatpush.bf16.msra.mxu0 %v58
    %5109 = vmatmul.bf16.gmra.mxu0 %v5099
    %v5110 = vpop.f32.mrf.mxu0
    %v5111 = vadd.f32 %v146, %v5110
    %v5112 = vpop.f32.mrf.mxu0
    %5113 = vdwg.mxu0
    %v5114 = vadd.f32 %v4916, %v5111
    %v5115 = vmul.f32 %v361, %v5114
    %v5116 = vadd.f32 %v4855, %v5115
    %v5117 = vadd.f32 %v4982, %v5045
    %v5118 = vmul.f32 %v365, %v5117
    %v5119 = vadd.f32 %v5116, %v5118
    %v5120 = vadd.f32 %v4857, %v83
    %v5121 = vadd.f32 %v5120, %v83
    %v5122 = vpack.c.bf16 %v5119, %v5119
    %v5124 = vsel %vm65, %v5122, 0
    %5126 = vmatpush.bf16.msra.mxu0 0
    %5127 = vmatpush.bf16.msra.mxu0 0
    %5128 = vmatpush.bf16.msra.mxu0 0
    %5129 = vmatpush.bf16.msra.mxu0 0
    %5130 = vmatpush.bf16.msra.mxu0 0
    %5131 = vmatpush.bf16.msra.mxu0 0
    %5132 = vmatpush.bf16.msra.mxu0 0
    %5133 = vmatpush.bf16.msra.mxu0 %v98
    %5134 = vmatmul.bf16.gmra.mxu0 %v5124
    %v5135 = vpop.f32.mrf.mxu0
    %v5136 = vadd.f32 %v5052, %v5135
    %v5137 = vpop.f32.mrf.mxu0
    %5138 = vdwg.mxu0
    %vm5139 = vcmp.gt.f32.partialorder %v5136, 0.0
    %v5140 = vmul.f32 %v5136, 1.442695
    %v5141 = vpow.pop %v5140
    %v5142 = vsub.f32 %v5141, 1.0
    %v5143 = vsel %vm5139, %v5136, %v5142
    %v5144 = vpack.c.bf16 %v5143, %v5143
    %v5146 = vsel %vm122, %v5144, 0
    %5148 = vmatpush.bf16.msra.mxu0 0
    %5149 = vmatpush.bf16.msra.mxu0 0
    %5150 = vmatpush.bf16.msra.mxu0 0
    %5151 = vmatpush.bf16.msra.mxu0 0
    %5152 = vmatpush.bf16.msra.mxu0 0
    %5153 = vmatpush.bf16.msra.mxu0 0
    %5154 = vmatpush.bf16.msra.mxu0 %v53
    %5155 = vmatpush.bf16.msra.mxu0 %v52
    %5156 = vmatmul.bf16.gmra.mxu0 %v5146
    %v5157 = vpop.f32.mrf.mxu0
    %v5158 = vadd.f32 %v120, %v5157
    %v5159 = vpop.f32.mrf.mxu0
    %5160 = vdwg.mxu0
    %vm5161 = vcmp.gt.f32.partialorder %v5158, 0.0
    %v5162 = vmul.f32 %v5158, 1.442695
    %v5163 = vpow.pop %v5162
    %v5164 = vsub.f32 %v5163, 1.0
    %v5165 = vsel %vm5161, %v5158, %v5164
    %v5166 = vpack.c.bf16 %v5165, %v5165
    %v5168 = vsel %vm122, %v5166, 0
    %5170 = vmatpush.bf16.msra.mxu0 0
    %5171 = vmatpush.bf16.msra.mxu0 0
    %5172 = vmatpush.bf16.msra.mxu0 0
    %5173 = vmatpush.bf16.msra.mxu0 0
    %5174 = vmatpush.bf16.msra.mxu0 0
    %5175 = vmatpush.bf16.msra.mxu0 0
    %5176 = vmatpush.bf16.msra.mxu0 %v59
    %5177 = vmatpush.bf16.msra.mxu0 %v58
    %5178 = vmatmul.bf16.gmra.mxu0 %v5168
    %v5179 = vpop.f32.mrf.mxu0
    %v5180 = vadd.f32 %v146, %v5179
    %v5181 = vpop.f32.mrf.mxu0
    %5182 = vdwg.mxu0
    %v5183 = vmul.f32 %v82, %v5180
    %v5184 = vadd.f32 %v5119, %v5183
    %v5185 = vpack.c.bf16 %v5184, %v5184
    %v5187 = vperm.slane %v5120, 0
    %v5190 = vsel %vm65, %v5185, 0
    %5192 = vmatpush.bf16.msra.mxu0 0
    %5193 = vmatpush.bf16.msra.mxu0 0
    %5194 = vmatpush.bf16.msra.mxu0 0
    %5195 = vmatpush.bf16.msra.mxu0 0
    %5196 = vmatpush.bf16.msra.mxu0 0
    %5197 = vmatpush.bf16.msra.mxu0 0
    %5198 = vmatpush.bf16.msra.mxu0 0
    %5199 = vmatpush.bf16.msra.mxu0 %v98
    %5200 = vmatmul.bf16.gmra.mxu0 %v5190
    %v5201 = vpop.f32.mrf.mxu0
    %v5202 = vadd.f32 %v5187, %v5201
    %v5203 = vpop.f32.mrf.mxu0
    %5204 = vdwg.mxu0
    %vm5205 = vcmp.gt.f32.partialorder %v5202, 0.0
    %v5206 = vmul.f32 %v5202, 1.442695
    %v5207 = vpow.pop %v5206
    %v5208 = vsub.f32 %v5207, 1.0
    %v5209 = vsel %vm5205, %v5202, %v5208
    %v5210 = vpack.c.bf16 %v5209, %v5209
    %v5212 = vsel %vm122, %v5210, 0
    %5214 = vmatpush.bf16.msra.mxu0 0
    %5215 = vmatpush.bf16.msra.mxu0 0
    %5216 = vmatpush.bf16.msra.mxu0 0
    %5217 = vmatpush.bf16.msra.mxu0 0
    %5218 = vmatpush.bf16.msra.mxu0 0
    %5219 = vmatpush.bf16.msra.mxu0 0
    %5220 = vmatpush.bf16.msra.mxu0 %v53
    %5221 = vmatpush.bf16.msra.mxu0 %v52
    %5222 = vmatmul.bf16.gmra.mxu0 %v5212
    %v5223 = vpop.f32.mrf.mxu0
    %v5224 = vadd.f32 %v120, %v5223
    %v5225 = vpop.f32.mrf.mxu0
    %5226 = vdwg.mxu0
    %vm5227 = vcmp.gt.f32.partialorder %v5224, 0.0
    %v5228 = vmul.f32 %v5224, 1.442695
    %v5229 = vpow.pop %v5228
    %v5230 = vsub.f32 %v5229, 1.0
    %v5231 = vsel %vm5227, %v5224, %v5230
    %v5232 = vpack.c.bf16 %v5231, %v5231
    %v5234 = vsel %vm122, %v5232, 0
    %5236 = vmatpush.bf16.msra.mxu0 0
    %5237 = vmatpush.bf16.msra.mxu0 0
    %5238 = vmatpush.bf16.msra.mxu0 0
    %5239 = vmatpush.bf16.msra.mxu0 0
    %5240 = vmatpush.bf16.msra.mxu0 0
    %5241 = vmatpush.bf16.msra.mxu0 0
    %5242 = vmatpush.bf16.msra.mxu0 %v59
    %5243 = vmatpush.bf16.msra.mxu0 %v58
    %5244 = vmatmul.bf16.gmra.mxu0 %v5234
    %v5245 = vpop.f32.mrf.mxu0
    %v5246 = vadd.f32 %v146, %v5245
    %v5247 = vpop.f32.mrf.mxu0
    %5248 = vdwg.mxu0
    %v5249 = vmul.f32 %v82, %v5246
    %v5250 = vadd.f32 %v5119, %v5249
    %v5251 = vpack.c.bf16 %v5250, %v5250
    %v5253 = vsel %vm65, %v5251, 0
    %5255 = vmatpush.bf16.msra.mxu0 0
    %5256 = vmatpush.bf16.msra.mxu0 0
    %5257 = vmatpush.bf16.msra.mxu0 0
    %5258 = vmatpush.bf16.msra.mxu0 0
    %5259 = vmatpush.bf16.msra.mxu0 0
    %5260 = vmatpush.bf16.msra.mxu0 0
    %5261 = vmatpush.bf16.msra.mxu0 0
    %5262 = vmatpush.bf16.msra.mxu0 %v98
    %5263 = vmatmul.bf16.gmra.mxu0 %v5253
    %v5264 = vpop.f32.mrf.mxu0
    %v5265 = vadd.f32 %v5187, %v5264
    %v5266 = vpop.f32.mrf.mxu0
    %5267 = vdwg.mxu0
    %vm5268 = vcmp.gt.f32.partialorder %v5265, 0.0
    %v5269 = vmul.f32 %v5265, 1.442695
    %v5270 = vpow.pop %v5269
    %v5271 = vsub.f32 %v5270, 1.0
    %v5272 = vsel %vm5268, %v5265, %v5271
    %v5273 = vpack.c.bf16 %v5272, %v5272
    %v5275 = vsel %vm122, %v5273, 0
    %5277 = vmatpush.bf16.msra.mxu0 0
    %5278 = vmatpush.bf16.msra.mxu0 0
    %5279 = vmatpush.bf16.msra.mxu0 0
    %5280 = vmatpush.bf16.msra.mxu0 0
    %5281 = vmatpush.bf16.msra.mxu0 0
    %5282 = vmatpush.bf16.msra.mxu0 0
    %5283 = vmatpush.bf16.msra.mxu0 %v53
    %5284 = vmatpush.bf16.msra.mxu0 %v52
    %5285 = vmatmul.bf16.gmra.mxu0 %v5275
    %v5286 = vpop.f32.mrf.mxu0
    %v5287 = vadd.f32 %v120, %v5286
    %v5288 = vpop.f32.mrf.mxu0
    %5289 = vdwg.mxu0
    %vm5290 = vcmp.gt.f32.partialorder %v5287, 0.0
    %v5291 = vmul.f32 %v5287, 1.442695
    %v5292 = vpow.pop %v5291
    %v5293 = vsub.f32 %v5292, 1.0
    %v5294 = vsel %vm5290, %v5287, %v5293
    %v5295 = vpack.c.bf16 %v5294, %v5294
    %v5297 = vsel %vm122, %v5295, 0
    %5299 = vmatpush.bf16.msra.mxu0 0
    %5300 = vmatpush.bf16.msra.mxu0 0
    %5301 = vmatpush.bf16.msra.mxu0 0
    %5302 = vmatpush.bf16.msra.mxu0 0
    %5303 = vmatpush.bf16.msra.mxu0 0
    %5304 = vmatpush.bf16.msra.mxu0 0
    %5305 = vmatpush.bf16.msra.mxu0 %v59
    %5306 = vmatpush.bf16.msra.mxu0 %v58
    %5307 = vmatmul.bf16.gmra.mxu0 %v5297
    %v5308 = vpop.f32.mrf.mxu0
    %v5309 = vadd.f32 %v146, %v5308
    %v5310 = vpop.f32.mrf.mxu0
    %5311 = vdwg.mxu0
    %v5312 = vmul.f32 %v293, %v5309
    %v5313 = vadd.f32 %v5119, %v5312
    %v5314 = vpack.c.bf16 %v5313, %v5313
    %v5316 = vperm.slane %v5121, 0
    %v5319 = vsel %vm65, %v5314, 0
    %5321 = vmatpush.bf16.msra.mxu0 0
    %5322 = vmatpush.bf16.msra.mxu0 0
    %5323 = vmatpush.bf16.msra.mxu0 0
    %5324 = vmatpush.bf16.msra.mxu0 0
    %5325 = vmatpush.bf16.msra.mxu0 0
    %5326 = vmatpush.bf16.msra.mxu0 0
    %5327 = vmatpush.bf16.msra.mxu0 0
    %5328 = vmatpush.bf16.msra.mxu0 %v98
    %5329 = vmatmul.bf16.gmra.mxu0 %v5319
    %v5330 = vpop.f32.mrf.mxu0
    %v5331 = vadd.f32 %v5316, %v5330
    %v5332 = vpop.f32.mrf.mxu0
    %5333 = vdwg.mxu0
    %vm5334 = vcmp.gt.f32.partialorder %v5331, 0.0
    %v5335 = vmul.f32 %v5331, 1.442695
    %v5336 = vpow.pop %v5335
    %v5337 = vsub.f32 %v5336, 1.0
    %v5338 = vsel %vm5334, %v5331, %v5337
    %v5339 = vpack.c.bf16 %v5338, %v5338
    %v5341 = vsel %vm122, %v5339, 0
    %5343 = vmatpush.bf16.msra.mxu0 0
    %5344 = vmatpush.bf16.msra.mxu0 0
    %5345 = vmatpush.bf16.msra.mxu0 0
    %5346 = vmatpush.bf16.msra.mxu0 0
    %5347 = vmatpush.bf16.msra.mxu0 0
    %5348 = vmatpush.bf16.msra.mxu0 0
    %5349 = vmatpush.bf16.msra.mxu0 %v53
    %5350 = vmatpush.bf16.msra.mxu0 %v52
    %5351 = vmatmul.bf16.gmra.mxu0 %v5341
    %v5352 = vpop.f32.mrf.mxu0
    %v5353 = vadd.f32 %v120, %v5352
    %v5354 = vpop.f32.mrf.mxu0
    %5355 = vdwg.mxu0
    %vm5356 = vcmp.gt.f32.partialorder %v5353, 0.0
    %v5357 = vmul.f32 %v5353, 1.442695
    %v5358 = vpow.pop %v5357
    %v5359 = vsub.f32 %v5358, 1.0
    %v5360 = vsel %vm5356, %v5353, %v5359
    %v5361 = vpack.c.bf16 %v5360, %v5360
    %v5363 = vsel %vm122, %v5361, 0
    %5365 = vmatpush.bf16.msra.mxu0 0
    %5366 = vmatpush.bf16.msra.mxu0 0
    %5367 = vmatpush.bf16.msra.mxu0 0
    %5368 = vmatpush.bf16.msra.mxu0 0
    %5369 = vmatpush.bf16.msra.mxu0 0
    %5370 = vmatpush.bf16.msra.mxu0 0
    %5371 = vmatpush.bf16.msra.mxu0 %v59
    %5372 = vmatpush.bf16.msra.mxu0 %v58
    %5373 = vmatmul.bf16.gmra.mxu0 %v5363
    %v5374 = vpop.f32.mrf.mxu0
    %v5375 = vadd.f32 %v146, %v5374
    %v5376 = vpop.f32.mrf.mxu0
    %5377 = vdwg.mxu0
    %v5378 = vadd.f32 %v5180, %v5375
    %v5379 = vmul.f32 %v361, %v5378
    %v5380 = vadd.f32 %v5119, %v5379
    %v5381 = vadd.f32 %v5246, %v5309
    %v5382 = vmul.f32 %v365, %v5381
    %v5383 = vadd.f32 %v5380, %v5382
    %s5384 = scalar_lea.vmem %s9, 8
    %5385 = vst.msk [vmem:[%s5384] sm:$0xff] %vm65, %v5383
    // Predicated region
    $region42: #{tpu_custom_call.1} parent=1 // pred_check
      _
    $region43: #{tpu_custom_call.1} parent=1 // pred_check_branch
      %5387 = sbr.rel (0) target = $region45
    $region44: #{tpu_custom_call.1} parent=1 // pred_region
      _
    $region45: #{tpu_custom_call.1} parent=1 // pred_fallthru
      _
    // Predicated region
    $region46: #{tpu_custom_call.1} parent=1 // pred_check
      _
    $region47: #{tpu_custom_call.1} parent=1 // pred_check_branch
      %5389 = sbr.rel (0) target = $region49
    $region48: #{tpu_custom_call.1} parent=1 // pred_region
      _
    $region49: #{tpu_custom_call.1} parent=1 // pred_fallthru
      _
    %5390 = vsyncpa [#allocation3], 1

</llo_original>
